<compile_context>
chip_gen: v5e
topology: v5e:2x2
jax: 0.10.0
libtpu: 0.0.40
codegen_flags: <defaults>
</compile_context>

<pallas_src>
import numpy as np
import jax
import jax.numpy as jnp
from jax import lax
from jax.experimental import pallas as pl
from jax.experimental.pallas import tpu as pltpu


# ----------------------------------------------------------------------------
# Padded-flat activation layout: logical (C, H, W) stored lane-dense as
# (C, (H+3)*(W+2)): row 0 top pad, rows 1..H are [0, x[h,:], 0], rows H+1,H+2
# bottom pad (so every 3x3 / 2x2 tap is a contiguous lane slice).
# ----------------------------------------------------------------------------
def _lpad(h, w):
    return (h + 3) * (w + 2)


def _pad_to_flat(x_nchw):
    n, c, h, w = x_nchw.shape
    xp = jnp.pad(x_nchw, ((0, 0), (0, 0), (1, 2), (1, 1)))
    return xp.reshape(n, c, (h + 3) * (w + 2))


def _interior_mask(h, w):
    # (1, h*(w+2)) 0/1 mask: valid output columns of a conv computed over the
    # full padded width (zeros land exactly on the destination pad columns).
    wp = w + 2
    m = np.zeros((1, h * wp), np.float32)
    for i in range(h):
        m[0, i * wp:i * wp + w] = 1.0
    return m


# ----------------------------------------------------------------------------
# Parameters (mirror the torch module; eval-mode BatchNorm statistics).
# ----------------------------------------------------------------------------
def init_vggae_params(key, *, in_channels, enc_sizes, num_layers, out_channels):
    keys = iter(jax.random.split(key, 128))

    def conv_w(cout, cin, k):
        fan_in = cin * k * k
        return jnp.sqrt(2.0 / fan_in) * jax.random.normal(
            next(keys), (cout, cin, k, k), jnp.float32)

    def bn(c):
        return dict(
            gamma=jax.random.normal(next(keys), (c,), jnp.float32),
            beta=0.1 * jax.random.normal(next(keys), (c,), jnp.float32),
            mean=0.1 * jax.random.normal(next(keys), (c,), jnp.float32),
            var=jnp.abs(jax.random.normal(next(keys), (c,), jnp.float32)) + 0.5,
        )

    encoder = []
    c_prev = in_channels
    for c_out, nl in zip(enc_sizes, num_layers):
        layers = []
        for li in range(nl):
            cin = c_prev if li == 0 else c_out
            layers.append(dict(w=conv_w(c_out, cin, 3), bn=bn(c_out)))
        encoder.append(layers)
        c_prev = c_out

    dec_sizes = list(reversed(enc_sizes))
    dec_nl = list(reversed(num_layers))
    skip_sizes = list(reversed(enc_sizes))
    decoder = []
    for bi, (c_in_b, nl) in enumerate(zip(dec_sizes, dec_nl)):
        c_out_b = dec_sizes[bi + 1] if bi + 1 < len(dec_sizes) else out_channels
        up_w = jnp.sqrt(2.0 / (c_in_b * 16)) * jax.random.normal(
            next(keys), (c_in_b, c_in_b, 4, 4), jnp.float32)
        layers = []
        for li in range(nl):
            cin = c_in_b + (skip_sizes[bi] if li == 0 else 0)
            cout = c_out_b if li == nl - 1 else c_in_b
            layers.append(dict(w=conv_w(cout, cin, 3), bn=bn(cout)))
        decoder.append(dict(up_w=up_w, layers=layers))
    return dict(encoder=encoder, decoder=decoder)


# ----------------------------------------------------------------------------
# Fused VGGAE forward: one pallas_call over the whole network.
# ----------------------------------------------------------------------------
def build_vggae_forward(params, *, in_channels, enc_sizes, num_layers,
                        out_channels, H, W, bn_eps, last_act=False,
                        use_bf16=False):
    nb = len(enc_sizes)
    mm_dtype = jnp.bfloat16 if use_bf16 else jnp.float32

    # ---------------- constants (all weight relayouts hoisted here) ---------
    consts = []

    def add_const(a, dtype=jnp.float32):
        consts.append(jnp.asarray(a, dtype))
        return len(consts) - 1

    def fold_conv(w, bnp, splits):
        # eval-mode BN folded into the conv; columns ordered per source block,
        # tap-major (kh*3+kw), channel-minor -> matches kernel-side staging.
        scale = bnp["gamma"] / jnp.sqrt(bnp["var"] + bn_eps)
        wf = w * scale[:, None, None, None]
        bias = (bnp["beta"] - bnp["mean"] * scale).reshape(-1, 1)
        cout = w.shape[0]
        assert sum(splits) == w.shape[1]
        blocks, c0 = [], 0
        for cs in splits:
            blk = jnp.transpose(wf[:, c0:c0 + cs], (0, 2, 3, 1))
            blocks.append(blk.reshape(cout, 9 * cs))
            c0 += cs
        return jnp.concatenate(blocks, axis=1), bias

    def fold_deconv(wt):
        # torch ConvTranspose2d weight (Cin, Cout, 4, 4) -> (4, Cout, 4*Cin):
        # sub-pixel decomposition; phase (ph,pw) = output row/col parity, taps
        # ordered (th,tw) = (0,0),(0,1),(1,0),(1,1), channel-minor.
        #   y[2m]   = W[..,1] x[m] + W[..,3] x[m-1]
        #   y[2m+1] = W[..,2] x[m] + W[..,0] x[m+1]
        kmap = ((3, 1), (2, 0))
        phases = []
        for ph in range(2):
            for pw in range(2):
                taps = [jnp.transpose(wt[:, :, kmap[ph][th], kmap[pw][tw]], (1, 0))
                        for th in range(2) for tw in range(2)]
                phases.append(jnp.concatenate(taps, axis=1))
        return jnp.stack(phases, axis=0)

    def pool_select(w):
        # stride-1 2x2-max column 2j+1 -> padded dest column j+1 (O(W^2) const)
        wp, wo = w + 2, w // 2
        s = np.zeros((wp - 1, wo + 2), np.float32)
        for j in range(wo):
            s[2 * j + 1, j + 1] = 1.0
        return s

    def deconv_select(w):
        # phase column n (pw=0 / pw=1) -> padded dest column 2n+1 / 2n+2
        p = np.zeros((2, w, 2 * w + 2), np.float32)
        for n in range(w):
            p[0, n, 2 * n + 1] = 1.0
            p[1, n, 2 * n + 2] = 1.0
        return p

    mask_idx = {}

    def mask_for(h, w):
        if (h, w) not in mask_idx:
            mask_idx[(h, w)] = add_const(_interior_mask(h, w))
        return mask_idx[(h, w)]

    # ---------------- reused VMEM activation buffers -------------------------
    level_hw = [(H >> l, W >> l) for l in range(nb)]
    buf_chan, buf_shape = {}, {}

    def use_buf(key, c, h, w):
        buf_chan[key] = max(buf_chan.get(key, 0), c)
        assert buf_shape.setdefault(key, (h, w)) == (h, w)
        return key

    def transient_for(level, c, src_key):
        slot = 0
        if isinstance(src_key, tuple) and src_key[0] == "t" and src_key[1] == level:
            slot = 1 - src_key[2]
        h, w = level_hw[level]
        return use_buf(("t", level, slot), c, h, w)

    # ---------------- step list ----------------------------------------------
    steps = []
    stage_K, stage_L = 8, 128

    def add_conv(srcs, wfold, bias, h, w, relu, dst=None, dense_out=False):
        nonlocal stage_K, stage_L
        stage_K = max(stage_K, int(wfold.shape[1]))
        stage_L = max(stage_L, h * (w + 2))
        steps.append(dict(kind="conv", srcs=list(srcs),
                          widx=add_const(wfold, mm_dtype), bidx=add_const(bias),
                          midx=mask_for(h, w), h=h, w=w,
                          cout=int(wfold.shape[0]), relu=relu,
                          dst=dst, dense_out=dense_out))

    sel_pool_idx, sel_dec_idx = {}, {}

    def add_pool(src, c, h, w, dst):
        if w not in sel_pool_idx:
            sel_pool_idx[w] = add_const(pool_select(w))
        steps.append(dict(kind="pool", src=src, c=c, h=h, w=w, dst=dst,
                          sidx=sel_pool_idx[w]))

    def add_deconv(src, cin, cout, h, w, wph, dst):
        nonlocal stage_K, stage_L
        stage_K = max(stage_K, 4 * cin)
        stage_L = max(stage_L, h * (w + 2))
        if w not in sel_dec_idx:
            sel_dec_idx[w] = add_const(deconv_select(w))
        steps.append(dict(kind="deconv", src=src, cin=cin, cout=cout, h=h, w=w,
                          widx=add_const(wph, mm_dtype), pidx=sel_dec_idx[w],
                          dst=dst))

    # ------------------------------ encoder ----------------------------------
    cur = ("x", in_channels)
    h, w = H, W
    for bi, (c_out, nl) in enumerate(zip(enc_sizes, num_layers)):
        if bi > 0:
            dst = transient_for(bi, cur[1], cur[0])
            add_pool(cur[0], cur[1], h, w, dst)
            cur = (dst, cur[1])
            h, w = h // 2, w // 2
        for li in range(nl):
            lp = params["encoder"][bi][li]
            wfold, bias = fold_conv(lp["w"], lp["bn"], [cur[1]])
            if li == nl - 1:
                dst = use_buf(("skip", bi), c_out, h, w)
            else:
                dst = transient_for(bi, c_out, cur[0])
            add_conv([cur], wfold, bias, h, w, relu=True, dst=dst)
            cur = (dst, c_out)

    bot = use_buf(("bot",), cur[1], h // 2, w // 2)
    add_pool(cur[0], cur[1], h, w, bot)
    cur = (bot, cur[1])
    h, w = h // 2, w // 2

    # ------------------------------ decoder ----------------------------------
    dec_sizes = list(reversed(enc_sizes))
    dec_nl = list(reversed(num_layers))
    for bi in range(nb):
        bp = params["decoder"][bi]
        c_in_b = dec_sizes[bi]
        lvl = nb - 1 - bi
        block_last_act = (bi < nb - 1) or last_act

        # ConvTranspose2d(k=4, s=2, p=1) via 4-phase sub-pixel decomposition
        dst = transient_for(lvl, c_in_b, cur[0])
        add_deconv(cur[0], cur[1], c_in_b, h, w, fold_deconv(bp["up_w"]), dst)
        cur = (dst, c_in_b)
        h, w = 2 * h, 2 * w

        skip_key, skip_c = ("skip", lvl), enc_sizes[lvl]
        nl = dec_nl[bi]
        for li in range(nl):
            lp = bp["layers"][li]
            cout = int(lp["w"].shape[0])
            act = (li < nl - 1) or block_last_act
            if li == 0:
                srcs, splits = [cur, (skip_key, skip_c)], [cur[1], skip_c]
            else:
                srcs, splits = [cur], [cur[1]]
            wfold, bias = fold_conv(lp["w"], lp["bn"], splits)
            if bi == nb - 1 and li == nl - 1:
                assert cout == out_channels
                add_conv(srcs, wfold, bias, h, w, relu=act, dense_out=True)
            else:
                dst = transient_for(lvl, cout, cur[0])
                add_conv(srcs, wfold, bias, h, w, relu=act, dst=dst)
                cur = (dst, cout)
    assert (h, w) == (H, W)

    # ------------------------------ scratch ----------------------------------
    buf_keys = list(buf_chan.keys())
    buf_index = {k: i for i, k in enumerate(buf_keys)}
    scratch_dims = [(buf_chan[k], _lpad(*buf_shape[k])) for k in buf_keys]
    scratch_shapes = [pltpu.VMEM(d, jnp.float32) for d in scratch_dims]
    scratch_shapes.append(pltpu.VMEM((stage_K, stage_L), mm_dtype))

    n_consts = len(consts)
    n_bufs = len(buf_keys)
    lpad_in = _lpad(H, W)
    n_out = H * W

    # ------------------------------ kernel -----------------------------------
    def kernel(*refs):
        x_ref = refs[0]
        cref = refs[1:1 + n_consts]
        out_ref = refs[1 + n_consts]
        bufs = refs[2 + n_consts:2 + n_consts + n_bufs]
        stage = refs[2 + n_consts + n_bufs]

        def rd(src, start, size):
            key, c = src
            if key == "x":
                return x_ref[0, 0:c, pl.ds(start, size)]
            return bufs[buf_index[key]][0:c, pl.ds(start, size)]

        # Zero only the constant pad frame of every buffer (rows 0, h+1, h+2
        # and row-1 col-0). Interiors are fully overwritten before being read,
        # and every interior write below leaves its pad columns exactly zero.
        for k in buf_keys:
            c = buf_chan[k]
            hh, ww = buf_shape[k]
            wp = ww + 2
            b = bufs[buf_index[k]]
            b[:, 0:wp + 1] = jnp.zeros((c, wp + 1), jnp.float32)
            b[:, (hh + 1) * wp:(hh + 3) * wp] = jnp.zeros((c, 2 * wp), jnp.float32)

        for st in steps:
            kind = st["kind"]
            if kind == "conv":
                hh, ww, cout = st["h"], st["w"], st["cout"]
                wp = ww + 2
                L = hh * wp
                # Fold all taps of all sources (incl. skip concat) into one
                # deep-K staged tile -> a single MXU matmul per conv.
                r0 = 0
                for src in st["srcs"]:
                    cin = src[1]
                    for k9 in range(9):
                        off = (k9 // 3) * wp + (k9 % 3)
                        stage[r0:r0 + cin, 0:L] = rd(src, off, L).astype(mm_dtype)
                        r0 += cin
                acc = jnp.dot(cref[st["widx"]][...], stage[0:r0, 0:L],
                              preferred_element_type=jnp.float32)
                acc = acc + cref[st["bidx"]][...]
                if st["relu"]:
                    acc = jnp.maximum(acc, 0.0)
                if st["dense_out"]:
                    for i in range(hh):
                        out_ref[0, :, i * ww:(i + 1) * ww] = \
                            acc[:, i * wp:i * wp + ww]
                else:
                    acc = acc * cref[st["midx"]][...]        # zero pad columns
                    bufs[buf_index[st["dst"]]][0:cout, wp + 1:wp + 1 + L] = acc
            elif kind == "pool":
                hh, ww, c = st["h"], st["w"], st["c"]
                wp = ww + 2
                ho, wo = hh // 2, ww // 2
                wpo = wo + 2
                sel = cref[st["sidx"]][...]
                dst = bufs[buf_index[st["dst"]]]
                src = (st["src"], c)
                for i in range(ho):
                    m = None
                    for dr in range(2):
                        base = (2 * i + 1 + dr) * wp
                        for dc in range(2):
                            v = rd(src, base + dc, wp - 1)
                            m = v if m is None else jnp.maximum(m, v)
                    # column 2j+1 of m is the 2x2 max for output col j; the
                    # tiny 0/1 select also writes the row's zero pad columns.
                    row = jnp.dot(m, sel, preferred_element_type=jnp.float32)
                    dst[0:c, (i + 1) * wpo:(i + 2) * wpo] = row
            else:  # transposed conv (4-phase sub-pixel decomposition)
                hh, ww, cin, cout = st["h"], st["w"], st["cin"], st["cout"]
                wp = ww + 2
                Lq = hh * wp
                wpo = 2 * ww + 2
                wref = cref[st["widx"]]
                psel = cref[st["pidx"]][...]
                dst = bufs[buf_index[st["dst"]]]
                src = (st["src"], cin)
                for ph in range(2):
                    pv = []
                    for pw in range(2):
                        r0 = 0
                        for th in range(2):
                            for tw in range(2):
                                off = (ph + th) * wp + (pw + tw)
                                stage[r0:r0 + cin, 0:Lq] = \
                                    rd(src, off, Lq).astype(mm_dtype)
                                r0 += cin
                        pv.append(jnp.dot(wref[2 * ph + pw], stage[0:r0, 0:Lq],
                                          preferred_element_type=jnp.float32))
                    for m in range(hh):
                        v0 = pv[0][:, m * wp:m * wp + ww]
                        v1 = pv[1][:, m * wp:m * wp + ww]
                        # stride-2 interleave of the two column phases into the
                        # padded output row (pad columns written as zeros).
                        row = (jnp.dot(v0, psel[0],
                                       preferred_element_type=jnp.float32)
                               + jnp.dot(v1, psel[1],
                                         preferred_element_type=jnp.float32))
                        ro = (2 * m + ph + 1) * wpo
                        dst[0:cout, ro:ro + wpo] = row

    # ------------------------------ pallas_call ------------------------------
    const_specs = [pl.BlockSpec(memory_space=pltpu.MemorySpace.VMEM)
                   for _ in consts]

    def _padded_bytes(shape, itemsize):
        sub = {4: 8, 2: 16, 1: 32}[int(itemsize)]
        s = tuple(int(d) for d in shape)
        if len(s) == 1:
            s = (1,) + s
        lead = int(np.prod(s[:-2])) if len(s) > 2 else 1
        return (lead * (-(-s[-2] // sub) * sub)
                * (-(-s[-1] // 128) * 128) * int(itemsize))

    stage_item = 2 if mm_dtype == jnp.bfloat16 else 4
    vmem_bytes = _padded_bytes((stage_K, stage_L), stage_item)
    vmem_bytes += sum(_padded_bytes(d, 4) for d in scratch_dims)
    vmem_bytes += sum(_padded_bytes(c.shape, c.dtype.itemsize) for c in consts)
    vmem_bytes += 2 * (_padded_bytes((in_channels, lpad_in), 4)
                       + _padded_bytes((out_channels, n_out), 4))
    vmem_limit = int(min(100 * 1024 * 1024,
                         max(32 * 1024 * 1024, 2 * vmem_bytes + (4 << 20))))

    def forward(x_nchw):
        n = x_nchw.shape[0]
        x_flat = _pad_to_flat(x_nchw.astype(jnp.float32))
        out = pl.pallas_call(
            kernel,
            out_shape=jax.ShapeDtypeStruct((n, out_channels, n_out), jnp.float32),
            grid=(n,),
            in_specs=[pl.BlockSpec((1, in_channels, lpad_in), lambda i: (i, 0, 0))]
                     + const_specs,
            out_specs=pl.BlockSpec((1, out_channels, n_out), lambda i: (i, 0, 0)),
            scratch_shapes=scratch_shapes,
            compiler_params=pltpu.CompilerParams(
                dimension_semantics=("parallel",),
                vmem_limit_bytes=vmem_limit),
        )(x_flat, *consts)
        return out.reshape(n, out_channels, H, W)

    return forward


# ----------------------------------------------------------------------------
# Pure-JAX NCHW reference (lax convs), eval-mode BN, matching PyTorch semantics.
# ----------------------------------------------------------------------------
def vggae_reference(params, x, *, bn_eps, last_act=False):
    def conv3(t, w):
        return lax.conv_general_dilated(
            t, w, (1, 1), [(1, 1), (1, 1)],
            dimension_numbers=("NCHW", "OIHW", "NCHW"),
            precision=lax.Precision.HIGHEST)

    def bn(t, p):
        scale = p["gamma"] / jnp.sqrt(p["var"] + bn_eps)
        shift = p["beta"] - p["mean"] * scale
        return t * scale[None, :, None, None] + shift[None, :, None, None]

    def pool(t):
        return lax.reduce_window(t, -jnp.inf, lax.max,
                                 (1, 1, 2, 2), (1, 1, 2, 2), "VALID")

    skips = []
    h = x
    for bi, layers in enumerate(params["encoder"]):
        if bi > 0:
            h = pool(h)
        for lp in layers:
            h = jnp.maximum(bn(conv3(h, lp["w"]), lp["bn"]), 0.0)
        skips.append(h)
    h = pool(h)

    nblocks = len(params["decoder"])
    for bi, bp in enumerate(params["decoder"]):
        w_rot = jnp.flip(bp["up_w"], (2, 3)).transpose(1, 0, 2, 3)
        h = lax.conv_general_dilated(
            h, w_rot, (1, 1), [(2, 2), (2, 2)], lhs_dilation=(2, 2),
            dimension_numbers=("NCHW", "OIHW", "NCHW"),
            precision=lax.Precision.HIGHEST)
        h = jnp.concatenate([h, skips[nblocks - 1 - bi]], axis=1)
        block_last_act = (bi < nblocks - 1) or last_act
        nl = len(bp["layers"])
        for li, lp in enumerate(bp["layers"]):
            h = bn(conv3(h, lp["w"]), lp["bn"])
            if (li < nl - 1) or block_last_act:
                h = jnp.maximum(h, 0.0)
    return h


if __name__ == "__main__":
    in_channels, out_channels = 3, 1
    enc_sizes = [8, 16]            # small VGG-style widths
    num_layers = [2, 2]
    bn_eps = 1e-4
    N, H, W = 2, 16, 16

    key = jax.random.PRNGKey(0)
    kp, kx = jax.random.split(key)
    params = init_vggae_params(kp, in_channels=in_channels, enc_sizes=enc_sizes,
                               num_layers=num_layers, out_channels=out_channels)
    x = jax.random.normal(kx, (N, in_channels, H, W), jnp.float32)

    # use_bf16=True is the production setting for v6e/v7x (halves matmul
    # operand VMEM, runs the MXU at its bf16 rate); the exact-f32 path is used
    # here so the check against the f32 reference stays tight.
    forward = jax.jit(build_vggae_forward(
        params, in_channels=in_channels, enc_sizes=enc_sizes,
        num_layers=num_layers, out_channels=out_channels,
        H=H, W=W, bn_eps=bn_eps, last_act=False, use_bf16=False))

    out = jax.block_until_ready(forward(x))
    assert out.shape == (N, out_channels, H, W), out.shape

    ref = jax.block_until_ready(
        vggae_reference(params, x, bn_eps=bn_eps, last_act=False))
    np.testing.assert_allclose(np.asarray(out), np.asarray(ref),
                               rtol=2e-3, atol=2e-3)
    print("KERNEL_OK")
</pallas_src>

<mosaic_0001>
module attributes {stable_mosaic.version = 11 : i64} {
  func.func @kernel(%arg0: i32, %arg1: memref<1x3x342xf32, #tpu.memory_space<vmem>>, %arg2: memref<8x27xf32, #tpu.memory_space<vmem>>, %arg3: memref<8x1xf32, #tpu.memory_space<vmem>>, %arg4: memref<1x288xf32, #tpu.memory_space<vmem>>, %arg5: memref<8x72xf32, #tpu.memory_space<vmem>>, %arg6: memref<8x1xf32, #tpu.memory_space<vmem>>, %arg7: memref<17x10xf32, #tpu.memory_space<vmem>>, %arg8: memref<16x72xf32, #tpu.memory_space<vmem>>, %arg9: memref<16x1xf32, #tpu.memory_space<vmem>>, %arg10: memref<1x80xf32, #tpu.memory_space<vmem>>, %arg11: memref<16x144xf32, #tpu.memory_space<vmem>>, %arg12: memref<16x1xf32, #tpu.memory_space<vmem>>, %arg13: memref<9x6xf32, #tpu.memory_space<vmem>>, %arg14: memref<2x4x10xf32, #tpu.memory_space<vmem>>, %arg15: memref<4x16x64xf32, #tpu.memory_space<vmem>>, %arg16: memref<16x288xf32, #tpu.memory_space<vmem>>, %arg17: memref<16x1xf32, #tpu.memory_space<vmem>>, %arg18: memref<8x144xf32, #tpu.memory_space<vmem>>, %arg19: memref<8x1xf32, #tpu.memory_space<vmem>>, %arg20: memref<2x8x18xf32, #tpu.memory_space<vmem>>, %arg21: memref<4x8x32xf32, #tpu.memory_space<vmem>>, %arg22: memref<8x144xf32, #tpu.memory_space<vmem>>, %arg23: memref<8x1xf32, #tpu.memory_space<vmem>>, %arg24: memref<1x72xf32, #tpu.memory_space<vmem>>, %arg25: memref<1x1xf32, #tpu.memory_space<vmem>>, %arg26: memref<1x1x256xf32, #tpu.memory_space<vmem>>, %arg27: memref<8x342xf32, #tpu.memory_space<vmem>>, %arg28: memref<8x342xf32, #tpu.memory_space<vmem>>, %arg29: memref<16x110xf32, #tpu.memory_space<vmem>>, %arg30: memref<16x110xf32, #tpu.memory_space<vmem>>, %arg31: memref<16x110xf32, #tpu.memory_space<vmem>>, %arg32: memref<16x42xf32, #tpu.memory_space<vmem>>, %arg33: memref<8x342xf32, #tpu.memory_space<vmem>>, %arg34: memref<288x288xf32, #tpu.memory_space<vmem>>) attributes {dimension_semantics = [#tpu.dimension_semantics<parallel>], iteration_bounds = array<i64: 2>, scalar_prefetch = 0 : i64, scratch_operands = 8 : i64, tpu.core_type = #tpu.core_type<tc>, window_params = [{transform_indices = @transform_0, window_bounds = array<i64: 1, 3, 342>}, {pipeline_mode = #tpu.pipeline_mode<synchronous>, transform_indices = @transform_1, window_bounds = array<i64: 8, 27>}, {pipeline_mode = #tpu.pipeline_mode<synchronous>, transform_indices = @transform_2, window_bounds = array<i64: 8, 1>}, {pipeline_mode = #tpu.pipeline_mode<synchronous>, transform_indices = @transform_3, window_bounds = array<i64: 1, 288>}, {pipeline_mode = #tpu.pipeline_mode<synchronous>, transform_indices = @transform_4, window_bounds = array<i64: 8, 72>}, {pipeline_mode = #tpu.pipeline_mode<synchronous>, transform_indices = @transform_5, window_bounds = array<i64: 8, 1>}, {pipeline_mode = #tpu.pipeline_mode<synchronous>, transform_indices = @transform_6, window_bounds = array<i64: 17, 10>}, {pipeline_mode = #tpu.pipeline_mode<synchronous>, transform_indices = @transform_7, window_bounds = array<i64: 16, 72>}, {pipeline_mode = #tpu.pipeline_mode<synchronous>, transform_indices = @transform_8, window_bounds = array<i64: 16, 1>}, {pipeline_mode = #tpu.pipeline_mode<synchronous>, transform_indices = @transform_9, window_bounds = array<i64: 1, 80>}, {pipeline_mode = #tpu.pipeline_mode<synchronous>, transform_indices = @transform_10, window_bounds = array<i64: 16, 144>}, {pipeline_mode = #tpu.pipeline_mode<synchronous>, transform_indices = @transform_11, window_bounds = array<i64: 16, 1>}, {pipeline_mode = #tpu.pipeline_mode<synchronous>, transform_indices = @transform_12, window_bounds = array<i64: 9, 6>}, {pipeline_mode = #tpu.pipeline_mode<synchronous>, transform_indices = @transform_13, window_bounds = array<i64: 2, 4, 10>}, {pipeline_mode = #tpu.pipeline_mode<synchronous>, transform_indices = @transform_14, window_bounds = array<i64: 4, 16, 64>}, {pipeline_mode = #tpu.pipeline_mode<synchronous>, transform_indices = @transform_15, window_bounds = array<i64: 16, 288>}, {pipeline_mode = #tpu.pipeline_mode<synchronous>, transform_indices = @transform_16, window_bounds = array<i64: 16, 1>}, {pipeline_mode = #tpu.pipeline_mode<synchronous>, transform_indices = @transform_17, window_bounds = array<i64: 8, 144>}, {pipeline_mode = #tpu.pipeline_mode<synchronous>, transform_indices = @transform_18, window_bounds = array<i64: 8, 1>}, {pipeline_mode = #tpu.pipeline_mode<synchronous>, transform_indices = @transform_19, window_bounds = array<i64: 2, 8, 18>}, {pipeline_mode = #tpu.pipeline_mode<synchronous>, transform_indices = @transform_20, window_bounds = array<i64: 4, 8, 32>}, {pipeline_mode = #tpu.pipeline_mode<synchronous>, transform_indices = @transform_21, window_bounds = array<i64: 8, 144>}, {pipeline_mode = #tpu.pipeline_mode<synchronous>, transform_indices = @transform_22, window_bounds = array<i64: 8, 1>}, {pipeline_mode = #tpu.pipeline_mode<synchronous>, transform_indices = @transform_23, window_bounds = array<i64: 1, 72>}, {pipeline_mode = #tpu.pipeline_mode<synchronous>, transform_indices = @transform_24, window_bounds = array<i64: 1, 1>}, {transform_indices = @transform_25, window_bounds = array<i64: 1, 1, 256>}]} {
    %cst = arith.constant 0.000000e+00 : f32
    %0 = vector.broadcast %cst : f32 to vector<8x19xf32>
    %c0 = arith.constant 0 : index
    %c0_0 = arith.constant 0 : index
    %1 = vector.load %arg27[%c0, %c0_0] : memref<8x342xf32, #tpu.memory_space<vmem>>, vector<8x19xf32>
    tpu.vector_store %arg27[%c0, %c0_0], %0 {strides = array<i32>} : memref<8x342xf32, #tpu.memory_space<vmem>>, vector<8x19xf32>,
    %cst_1 = arith.constant 0.000000e+00 : f32
    %2 = vector.broadcast %cst_1 : f32 to vector<8x36xf32>
    %c0_2 = arith.constant 0 : index
    %c306 = arith.constant 306 : index
    %3 = vector.load %arg27[%c0_2, %c306] : memref<8x342xf32, #tpu.memory_space<vmem>>, vector<8x36xf32>
    tpu.vector_store %arg27[%c0_2, %c306], %2 {strides = array<i32>} : memref<8x342xf32, #tpu.memory_space<vmem>>, vector<8x36xf32>,
    %cst_3 = arith.constant 0.000000e+00 : f32
    %4 = vector.broadcast %cst_3 : f32 to vector<8x19xf32>
    %c0_4 = arith.constant 0 : index
    %c0_5 = arith.constant 0 : index
    %5 = vector.load %arg28[%c0_4, %c0_5] : memref<8x342xf32, #tpu.memory_space<vmem>>, vector<8x19xf32>
    tpu.vector_store %arg28[%c0_4, %c0_5], %4 {strides = array<i32>} : memref<8x342xf32, #tpu.memory_space<vmem>>, vector<8x19xf32>,
    %cst_6 = arith.constant 0.000000e+00 : f32
    %6 = vector.broadcast %cst_6 : f32 to vector<8x36xf32>
    %c0_7 = arith.constant 0 : index
    %c306_8 = arith.constant 306 : index
    %7 = vector.load %arg28[%c0_7, %c306_8] : memref<8x342xf32, #tpu.memory_space<vmem>>, vector<8x36xf32>
    tpu.vector_store %arg28[%c0_7, %c306_8], %6 {strides = array<i32>} : memref<8x342xf32, #tpu.memory_space<vmem>>, vector<8x36xf32>,
    %cst_9 = arith.constant 0.000000e+00 : f32
    %8 = vector.broadcast %cst_9 : f32 to vector<16x11xf32>
    %c0_10 = arith.constant 0 : index
    %c0_11 = arith.constant 0 : index
    %9 = vector.load %arg29[%c0_10, %c0_11] : memref<16x110xf32, #tpu.memory_space<vmem>>, vector<16x11xf32>
    tpu.vector_store %arg29[%c0_10, %c0_11], %8 {strides = array<i32>} : memref<16x110xf32, #tpu.memory_space<vmem>>, vector<16x11xf32>,
    %cst_12 = arith.constant 0.000000e+00 : f32
    %10 = vector.broadcast %cst_12 : f32 to vector<16x20xf32>
    %c0_13 = arith.constant 0 : index
    %c90 = arith.constant 90 : index
    %11 = vector.load %arg29[%c0_13, %c90] : memref<16x110xf32, #tpu.memory_space<vmem>>, vector<16x20xf32>
    tpu.vector_store %arg29[%c0_13, %c90], %10 {strides = array<i32>} : memref<16x110xf32, #tpu.memory_space<vmem>>, vector<16x20xf32>,
    %cst_14 = arith.constant 0.000000e+00 : f32
    %12 = vector.broadcast %cst_14 : f32 to vector<16x11xf32>
    %c0_15 = arith.constant 0 : index
    %c0_16 = arith.constant 0 : index
    %13 = vector.load %arg30[%c0_15, %c0_16] : memref<16x110xf32, #tpu.memory_space<vmem>>, vector<16x11xf32>
    tpu.vector_store %arg30[%c0_15, %c0_16], %12 {strides = array<i32>} : memref<16x110xf32, #tpu.memory_space<vmem>>, vector<16x11xf32>,
    %cst_17 = arith.constant 0.000000e+00 : f32
    %14 = vector.broadcast %cst_17 : f32 to vector<16x20xf32>
    %c0_18 = arith.constant 0 : index
    %c90_19 = arith.constant 90 : index
    %15 = vector.load %arg30[%c0_18, %c90_19] : memref<16x110xf32, #tpu.memory_space<vmem>>, vector<16x20xf32>
    tpu.vector_store %arg30[%c0_18, %c90_19], %14 {strides = array<i32>} : memref<16x110xf32, #tpu.memory_space<vmem>>, vector<16x20xf32>,
    %cst_20 = arith.constant 0.000000e+00 : f32
    %16 = vector.broadcast %cst_20 : f32 to vector<16x11xf32>
    %c0_21 = arith.constant 0 : index
    %c0_22 = arith.constant 0 : index
    %17 = vector.load %arg31[%c0_21, %c0_22] : memref<16x110xf32, #tpu.memory_space<vmem>>, vector<16x11xf32>
    tpu.vector_store %arg31[%c0_21, %c0_22], %16 {strides = array<i32>} : memref<16x110xf32, #tpu.memory_space<vmem>>, vector<16x11xf32>,
    %cst_23 = arith.constant 0.000000e+00 : f32
    %18 = vector.broadcast %cst_23 : f32 to vector<16x20xf32>
    %c0_24 = arith.constant 0 : index
    %c90_25 = arith.constant 90 : index
    %19 = vector.load %arg31[%c0_24, %c90_25] : memref<16x110xf32, #tpu.memory_space<vmem>>, vector<16x20xf32>
    tpu.vector_store %arg31[%c0_24, %c90_25], %18 {strides = array<i32>} : memref<16x110xf32, #tpu.memory_space<vmem>>, vector<16x20xf32>,
    %cst_26 = arith.constant 0.000000e+00 : f32
    %20 = vector.broadcast %cst_26 : f32 to vector<16x7xf32>
    %c0_27 = arith.constant 0 : index
    %c0_28 = arith.constant 0 : index
    %21 = vector.load %arg32[%c0_27, %c0_28] : memref<16x42xf32, #tpu.memory_space<vmem>>, vector<16x7xf32>
    tpu.vector_store %arg32[%c0_27, %c0_28], %20 {strides = array<i32>} : memref<16x42xf32, #tpu.memory_space<vmem>>, vector<16x7xf32>,
    %cst_29 = arith.constant 0.000000e+00 : f32
    %22 = vector.broadcast %cst_29 : f32 to vector<16x12xf32>
    %c0_30 = arith.constant 0 : index
    %c30 = arith.constant 30 : index
    %23 = vector.load %arg32[%c0_30, %c30] : memref<16x42xf32, #tpu.memory_space<vmem>>, vector<16x12xf32>
    tpu.vector_store %arg32[%c0_30, %c30], %22 {strides = array<i32>} : memref<16x42xf32, #tpu.memory_space<vmem>>, vector<16x12xf32>,
    %cst_31 = arith.constant 0.000000e+00 : f32
    %24 = vector.broadcast %cst_31 : f32 to vector<8x19xf32>
    %c0_32 = arith.constant 0 : index
    %c0_33 = arith.constant 0 : index
    %25 = vector.load %arg33[%c0_32, %c0_33] : memref<8x342xf32, #tpu.memory_space<vmem>>, vector<8x19xf32>
    tpu.vector_store %arg33[%c0_32, %c0_33], %24 {strides = array<i32>} : memref<8x342xf32, #tpu.memory_space<vmem>>, vector<8x19xf32>,
    %cst_34 = arith.constant 0.000000e+00 : f32
    %26 = vector.broadcast %cst_34 : f32 to vector<8x36xf32>
    %c0_35 = arith.constant 0 : index
    %c306_36 = arith.constant 306 : index
    %27 = vector.load %arg33[%c0_35, %c306_36] : memref<8x342xf32, #tpu.memory_space<vmem>>, vector<8x36xf32>
    tpu.vector_store %arg33[%c0_35, %c306_36], %26 {strides = array<i32>} : memref<8x342xf32, #tpu.memory_space<vmem>>, vector<8x36xf32>,
    %c0_37 = arith.constant 0 : index
    %c0_38 = arith.constant 0 : index
    %c0_39 = arith.constant 0 : index
    %28 = vector.load %arg1[%c0_37, %c0_38, %c0_39] : memref<1x3x342xf32, #tpu.memory_space<vmem>>, vector<1x3x288xf32>
    %29 = vector.shape_cast %28 : vector<1x3x288xf32> to vector<3x288xf32>
    %c0_40 = arith.constant 0 : index
    %c0_41 = arith.constant 0 : index
    %30 = vector.load %arg34[%c0_40, %c0_41] : memref<288x288xf32, #tpu.memory_space<vmem>>, vector<3x288xf32>
    tpu.vector_store %arg34[%c0_40, %c0_41], %29 {strides = array<i32>} : memref<288x288xf32, #tpu.memory_space<vmem>>, vector<3x288xf32>,
    %c0_42 = arith.constant 0 : index
    %c0_43 = arith.constant 0 : index
    %c1 = arith.constant 1 : index
    %31 = vector.load %arg1[%c0_42, %c0_43, %c1] : memref<1x3x342xf32, #tpu.memory_space<vmem>>, vector<1x3x288xf32>
    %32 = vector.shape_cast %31 : vector<1x3x288xf32> to vector<3x288xf32>
    %c3 = arith.constant 3 : index
    %c0_44 = arith.constant 0 : index
    %33 = vector.load %arg34[%c3, %c0_44] : memref<288x288xf32, #tpu.memory_space<vmem>>, vector<3x288xf32>
    tpu.vector_store %arg34[%c3, %c0_44], %32 {strides = array<i32>} : memref<288x288xf32, #tpu.memory_space<vmem>>, vector<3x288xf32>,
    %c0_45 = arith.constant 0 : index
    %c0_46 = arith.constant 0 : index
    %c2 = arith.constant 2 : index
    %34 = vector.load %arg1[%c0_45, %c0_46, %c2] : memref<1x3x342xf32, #tpu.memory_space<vmem>>, vector<1x3x288xf32>
    %35 = vector.shape_cast %34 : vector<1x3x288xf32> to vector<3x288xf32>
    %c6 = arith.constant 6 : index
    %c0_47 = arith.constant 0 : index
    %36 = vector.load %arg34[%c6, %c0_47] : memref<288x288xf32, #tpu.memory_space<vmem>>, vector<3x288xf32>
    tpu.vector_store %arg34[%c6, %c0_47], %35 {strides = array<i32>} : memref<288x288xf32, #tpu.memory_space<vmem>>, vector<3x288xf32>,
    %c0_48 = arith.constant 0 : index
    %c0_49 = arith.constant 0 : index
    %c18 = arith.constant 18 : index
    %37 = vector.load %arg1[%c0_48, %c0_49, %c18] : memref<1x3x342xf32, #tpu.memory_space<vmem>>, vector<1x3x288xf32>
    %38 = vector.shape_cast %37 : vector<1x3x288xf32> to vector<3x288xf32>
    %c9 = arith.constant 9 : index
    %c0_50 = arith.constant 0 : index
    %39 = vector.load %arg34[%c9, %c0_50] : memref<288x288xf32, #tpu.memory_space<vmem>>, vector<3x288xf32>
    tpu.vector_store %arg34[%c9, %c0_50], %38 {strides = array<i32>} : memref<288x288xf32, #tpu.memory_space<vmem>>, vector<3x288xf32>,
    %c0_51 = arith.constant 0 : index
    %c0_52 = arith.constant 0 : index
    %c19 = arith.constant 19 : index
    %40 = vector.load %arg1[%c0_51, %c0_52, %c19] : memref<1x3x342xf32, #tpu.memory_space<vmem>>, vector<1x3x288xf32>
    %41 = vector.shape_cast %40 : vector<1x3x288xf32> to vector<3x288xf32>
    %c12 = arith.constant 12 : index
    %c0_53 = arith.constant 0 : index
    %42 = vector.load %arg34[%c12, %c0_53] : memref<288x288xf32, #tpu.memory_space<vmem>>, vector<3x288xf32>
    tpu.vector_store %arg34[%c12, %c0_53], %41 {strides = array<i32>} : memref<288x288xf32, #tpu.memory_space<vmem>>, vector<3x288xf32>,
    %c0_54 = arith.constant 0 : index
    %c0_55 = arith.constant 0 : index
    %c20 = arith.constant 20 : index
    %43 = vector.load %arg1[%c0_54, %c0_55, %c20] : memref<1x3x342xf32, #tpu.memory_space<vmem>>, vector<1x3x288xf32>
    %44 = vector.shape_cast %43 : vector<1x3x288xf32> to vector<3x288xf32>
    %c15 = arith.constant 15 : index
    %c0_56 = arith.constant 0 : index
    %45 = vector.load %arg34[%c15, %c0_56] : memref<288x288xf32, #tpu.memory_space<vmem>>, vector<3x288xf32>
    tpu.vector_store %arg34[%c15, %c0_56], %44 {strides = array<i32>} : memref<288x288xf32, #tpu.memory_space<vmem>>, vector<3x288xf32>,
    %c0_57 = arith.constant 0 : index
    %c0_58 = arith.constant 0 : index
    %c36 = arith.constant 36 : index
    %46 = vector.load %arg1[%c0_57, %c0_58, %c36] : memref<1x3x342xf32, #tpu.memory_space<vmem>>, vector<1x3x288xf32>
    %47 = vector.shape_cast %46 : vector<1x3x288xf32> to vector<3x288xf32>
    %c18_59 = arith.constant 18 : index
    %c0_60 = arith.constant 0 : index
    %48 = vector.load %arg34[%c18_59, %c0_60] : memref<288x288xf32, #tpu.memory_space<vmem>>, vector<3x288xf32>
    tpu.vector_store %arg34[%c18_59, %c0_60], %47 {strides = array<i32>} : memref<288x288xf32, #tpu.memory_space<vmem>>, vector<3x288xf32>,
    %c0_61 = arith.constant 0 : index
    %c0_62 = arith.constant 0 : index
    %c37 = arith.constant 37 : index
    %49 = vector.load %arg1[%c0_61, %c0_62, %c37] : memref<1x3x342xf32, #tpu.memory_space<vmem>>, vector<1x3x288xf32>
    %50 = vector.shape_cast %49 : vector<1x3x288xf32> to vector<3x288xf32>
    %c21 = arith.constant 21 : index
    %c0_63 = arith.constant 0 : index
    %51 = vector.load %arg34[%c21, %c0_63] : memref<288x288xf32, #tpu.memory_space<vmem>>, vector<3x288xf32>
    tpu.vector_store %arg34[%c21, %c0_63], %50 {strides = array<i32>} : memref<288x288xf32, #tpu.memory_space<vmem>>, vector<3x288xf32>,
    %c0_64 = arith.constant 0 : index
    %c0_65 = arith.constant 0 : index
    %c38 = arith.constant 38 : index
    %52 = vector.load %arg1[%c0_64, %c0_65, %c38] : memref<1x3x342xf32, #tpu.memory_space<vmem>>, vector<1x3x288xf32>
    %53 = vector.shape_cast %52 : vector<1x3x288xf32> to vector<3x288xf32>
    %c24 = arith.constant 24 : index
    %c0_66 = arith.constant 0 : index
    %54 = vector.load %arg34[%c24, %c0_66] : memref<288x288xf32, #tpu.memory_space<vmem>>, vector<3x288xf32>
    tpu.vector_store %arg34[%c24, %c0_66], %53 {strides = array<i32>} : memref<288x288xf32, #tpu.memory_space<vmem>>, vector<3x288xf32>,
    %c0_67 = arith.constant 0 : index
    %c0_68 = arith.constant 0 : index
    %55 = vector.load %arg2[%c0_67, %c0_68] : memref<8x27xf32, #tpu.memory_space<vmem>>, vector<8x27xf32>
    %c0_69 = arith.constant 0 : index
    %c0_70 = arith.constant 0 : index
    %56 = vector.load %arg34[%c0_69, %c0_70] : memref<288x288xf32, #tpu.memory_space<vmem>>, vector<27x288xf32>
    %cst_71 = arith.constant dense<0.000000e+00> : vector<8x288xf32>
    %57 = tpu.matmul %55, %56, %cst_71 {dimension_numbers = #tpu.dot_dimension_numbers<[1], [0], [0], [1], [0, 0, 1, 1], [], []>} : vector<8x27xf32>, vector<27x288xf32>, vector<8x288xf32> -> vector<8x288xf32>
    %c0_72 = arith.constant 0 : index
    %c0_73 = arith.constant 0 : index
    %58 = vector.load %arg3[%c0_72, %c0_73] : memref<8x1xf32, #tpu.memory_space<vmem>>, vector<8x1xf32>
    %59 = vector.broadcast %58 : vector<8x1xf32> to vector<8x288xf32>
    %60 = arith.addf %57, %59 : vector<8x288xf32>
    %cst_74 = arith.constant 0.000000e+00 : f32
    %61 = vector.broadcast %cst_74 : f32 to vector<8x288xf32>
    %62 = arith.maximumf %60, %61 : vector<8x288xf32>
    %c0_75 = arith.constant 0 : index
    %c0_76 = arith.constant 0 : index
    %63 = vector.load %arg4[%c0_75, %c0_76] : memref<1x288xf32, #tpu.memory_space<vmem>>, vector<1x288xf32>
    %64 = vector.broadcast %63 : vector<1x288xf32> to vector<8x288xf32>
    %65 = arith.mulf %62, %64 : vector<8x288xf32>
    %c0_77 = arith.constant 0 : index
    %c19_78 = arith.constant 19 : index
    %66 = vector.load %arg27[%c0_77, %c19_78] : memref<8x342xf32, #tpu.memory_space<vmem>>, vector<8x288xf32>
    tpu.vector_store %arg27[%c0_77, %c19_78], %65 {strides = array<i32>} : memref<8x342xf32, #tpu.memory_space<vmem>>, vector<8x288xf32>,
    %c0_79 = arith.constant 0 : index
    %c0_80 = arith.constant 0 : index
    %67 = vector.load %arg27[%c0_79, %c0_80] : memref<8x342xf32, #tpu.memory_space<vmem>>, vector<8x288xf32>
    %c0_81 = arith.constant 0 : index
    %c0_82 = arith.constant 0 : index
    %68 = vector.load %arg34[%c0_81, %c0_82] : memref<288x288xf32, #tpu.memory_space<vmem>>, vector<8x288xf32>
    tpu.vector_store %arg34[%c0_81, %c0_82], %67 {strides = array<i32>} : memref<288x288xf32, #tpu.memory_space<vmem>>, vector<8x288xf32>,
    %c0_83 = arith.constant 0 : index
    %c1_84 = arith.constant 1 : index
    %69 = vector.load %arg27[%c0_83, %c1_84] : memref<8x342xf32, #tpu.memory_space<vmem>>, vector<8x288xf32>
    %c8 = arith.constant 8 : index
    %c0_85 = arith.constant 0 : index
    %70 = vector.load %arg34[%c8, %c0_85] : memref<288x288xf32, #tpu.memory_space<vmem>>, vector<8x288xf32>
    tpu.vector_store %arg34[%c8, %c0_85], %69 {strides = array<i32>} : memref<288x288xf32, #tpu.memory_space<vmem>>, vector<8x288xf32>,
    %c0_86 = arith.constant 0 : index
    %c2_87 = arith.constant 2 : index
    %71 = vector.load %arg27[%c0_86, %c2_87] : memref<8x342xf32, #tpu.memory_space<vmem>>, vector<8x288xf32>
    %c16 = arith.constant 16 : index
    %c0_88 = arith.constant 0 : index
    %72 = vector.load %arg34[%c16, %c0_88] : memref<288x288xf32, #tpu.memory_space<vmem>>, vector<8x288xf32>
    tpu.vector_store %arg34[%c16, %c0_88], %71 {strides = array<i32>} : memref<288x288xf32, #tpu.memory_space<vmem>>, vector<8x288xf32>,
    %c0_89 = arith.constant 0 : index
    %c18_90 = arith.constant 18 : index
    %73 = vector.load %arg27[%c0_89, %c18_90] : memref<8x342xf32, #tpu.memory_space<vmem>>, vector<8x288xf32>
    %c24_91 = arith.constant 24 : index
    %c0_92 = arith.constant 0 : index
    %74 = vector.load %arg34[%c24_91, %c0_92] : memref<288x288xf32, #tpu.memory_space<vmem>>, vector<8x288xf32>
    tpu.vector_store %arg34[%c24_91, %c0_92], %73 {strides = array<i32>} : memref<288x288xf32, #tpu.memory_space<vmem>>, vector<8x288xf32>,
    %c0_93 = arith.constant 0 : index
    %c19_94 = arith.constant 19 : index
    %75 = vector.load %arg27[%c0_93, %c19_94] : memref<8x342xf32, #tpu.memory_space<vmem>>, vector<8x288xf32>
    %c32 = arith.constant 32 : index
    %c0_95 = arith.constant 0 : index
    %76 = vector.load %arg34[%c32, %c0_95] : memref<288x288xf32, #tpu.memory_space<vmem>>, vector<8x288xf32>
    tpu.vector_store %arg34[%c32, %c0_95], %75 {strides = array<i32>} : memref<288x288xf32, #tpu.memory_space<vmem>>, vector<8x288xf32>,
    %c0_96 = arith.constant 0 : index
    %c20_97 = arith.constant 20 : index
    %77 = vector.load %arg27[%c0_96, %c20_97] : memref<8x342xf32, #tpu.memory_space<vmem>>, vector<8x288xf32>
    %c40 = arith.constant 40 : index
    %c0_98 = arith.constant 0 : index
    %78 = vector.load %arg34[%c40, %c0_98] : memref<288x288xf32, #tpu.memory_space<vmem>>, vector<8x288xf32>
    tpu.vector_store %arg34[%c40, %c0_98], %77 {strides = array<i32>} : memref<288x288xf32, #tpu.memory_space<vmem>>, vector<8x288xf32>,
    %c0_99 = arith.constant 0 : index
    %c36_100 = arith.constant 36 : index
    %79 = vector.load %arg27[%c0_99, %c36_100] : memref<8x342xf32, #tpu.memory_space<vmem>>, vector<8x288xf32>
    %c48 = arith.constant 48 : index
    %c0_101 = arith.constant 0 : index
    %80 = vector.load %arg34[%c48, %c0_101] : memref<288x288xf32, #tpu.memory_space<vmem>>, vector<8x288xf32>
    tpu.vector_store %arg34[%c48, %c0_101], %79 {strides = array<i32>} : memref<288x288xf32, #tpu.memory_space<vmem>>, vector<8x288xf32>,
    %c0_102 = arith.constant 0 : index
    %c37_103 = arith.constant 37 : index
    %81 = vector.load %arg27[%c0_102, %c37_103] : memref<8x342xf32, #tpu.memory_space<vmem>>, vector<8x288xf32>
    %c56 = arith.constant 56 : index
    %c0_104 = arith.constant 0 : index
    %82 = vector.load %arg34[%c56, %c0_104] : memref<288x288xf32, #tpu.memory_space<vmem>>, vector<8x288xf32>
    tpu.vector_store %arg34[%c56, %c0_104], %81 {strides = array<i32>} : memref<288x288xf32, #tpu.memory_space<vmem>>, vector<8x288xf32>,
    %c0_105 = arith.constant 0 : index
    %c38_106 = arith.constant 38 : index
    %83 = vector.load %arg27[%c0_105, %c38_106] : memref<8x342xf32, #tpu.memory_space<vmem>>, vector<8x288xf32>
    %c64 = arith.constant 64 : index
    %c0_107 = arith.constant 0 : index
    %84 = vector.load %arg34[%c64, %c0_107] : memref<288x288xf32, #tpu.memory_space<vmem>>, vector<8x288xf32>
    tpu.vector_store %arg34[%c64, %c0_107], %83 {strides = array<i32>} : memref<288x288xf32, #tpu.memory_space<vmem>>, vector<8x288xf32>,
    %c0_108 = arith.constant 0 : index
    %c0_109 = arith.constant 0 : index
    %85 = vector.load %arg5[%c0_108, %c0_109] : memref<8x72xf32, #tpu.memory_space<vmem>>, vector<8x72xf32>
    %c0_110 = arith.constant 0 : index
    %c0_111 = arith.constant 0 : index
    %86 = vector.load %arg34[%c0_110, %c0_111] : memref<288x288xf32, #tpu.memory_space<vmem>>, vector<72x288xf32>
    %cst_112 = arith.constant dense<0.000000e+00> : vector<8x288xf32>
    %87 = tpu.matmul %85, %86, %cst_112 {dimension_numbers = #tpu.dot_dimension_numbers<[1], [0], [0], [1], [0, 0, 1, 1], [], []>} : vector<8x72xf32>, vector<72x288xf32>, vector<8x288xf32> -> vector<8x288xf32>
    %c0_113 = arith.constant 0 : index
    %c0_114 = arith.constant 0 : index
    %88 = vector.load %arg6[%c0_113, %c0_114] : memref<8x1xf32, #tpu.memory_space<vmem>>, vector<8x1xf32>
    %89 = vector.broadcast %88 : vector<8x1xf32> to vector<8x288xf32>
    %90 = arith.addf %87, %89 : vector<8x288xf32>
    %cst_115 = arith.constant 0.000000e+00 : f32
    %91 = vector.broadcast %cst_115 : f32 to vector<8x288xf32>
    %92 = arith.maximumf %90, %91 : vector<8x288xf32>
    %c0_116 = arith.constant 0 : index
    %c0_117 = arith.constant 0 : index
    %93 = vector.load %arg4[%c0_116, %c0_117] : memref<1x288xf32, #tpu.memory_space<vmem>>, vector<1x288xf32>
    %94 = vector.broadcast %93 : vector<1x288xf32> to vector<8x288xf32>
    %95 = arith.mulf %92, %94 : vector<8x288xf32>
    %c0_118 = arith.constant 0 : index
    %c19_119 = arith.constant 19 : index
    %96 = vector.load %arg28[%c0_118, %c19_119] : memref<8x342xf32, #tpu.memory_space<vmem>>, vector<8x288xf32>
    tpu.vector_store %arg28[%c0_118, %c19_119], %95 {strides = array<i32>} : memref<8x342xf32, #tpu.memory_space<vmem>>, vector<8x288xf32>,
    %c0_120 = arith.constant 0 : index
    %c0_121 = arith.constant 0 : index
    %97 = vector.load %arg7[%c0_120, %c0_121] : memref<17x10xf32, #tpu.memory_space<vmem>>, vector<17x10xf32>
    %c0_122 = arith.constant 0 : index
    %c18_123 = arith.constant 18 : index
    %98 = vector.load %arg28[%c0_122, %c18_123] : memref<8x342xf32, #tpu.memory_space<vmem>>, vector<8x17xf32>
    %c0_124 = arith.constant 0 : index
    %c19_125 = arith.constant 19 : index
    %99 = vector.load %arg28[%c0_124, %c19_125] : memref<8x342xf32, #tpu.memory_space<vmem>>, vector<8x17xf32>
    %100 = arith.maximumf %98, %99 : vector<8x17xf32>
    %c0_126 = arith.constant 0 : index
    %c36_127 = arith.constant 36 : index
    %101 = vector.load %arg28[%c0_126, %c36_127] : memref<8x342xf32, #tpu.memory_space<vmem>>, vector<8x17xf32>
    %102 = arith.maximumf %100, %101 : vector<8x17xf32>
    %c0_128 = arith.constant 0 : index
    %c37_129 = arith.constant 37 : index
    %103 = vector.load %arg28[%c0_128, %c37_129] : memref<8x342xf32, #tpu.memory_space<vmem>>, vector<8x17xf32>
    %104 = arith.maximumf %102, %103 : vector<8x17xf32>
    %cst_130 = arith.constant dense<0.000000e+00> : vector<8x10xf32>
    %105 = tpu.matmul %104, %97, %cst_130 {dimension_numbers = #tpu.dot_dimension_numbers<[1], [0], [0], [1], [0, 0, 1, 1], [], []>} : vector<8x17xf32>, vector<17x10xf32>, vector<8x10xf32> -> vector<8x10xf32>
    %c0_131 = arith.constant 0 : index
    %c10 = arith.constant 10 : index
    %106 = vector.load %arg29[%c0_131, %c10] : memref<16x110xf32, #tpu.memory_space<vmem>>, vector<8x10xf32>
    tpu.vector_store %arg29[%c0_131, %c10], %105 {strides = array<i32>} : memref<16x110xf32, #tpu.memory_space<vmem>>, vector<8x10xf32>,
    %c0_132 = arith.constant 0 : index
    %c54 = arith.constant 54 : index
    %107 = vector.load %arg28[%c0_132, %c54] : memref<8x342xf32, #tpu.memory_space<vmem>>, vector<8x17xf32>
    %c0_133 = arith.constant 0 : index
    %c55 = arith.constant 55 : index
    %108 = vector.load %arg28[%c0_133, %c55] : memref<8x342xf32, #tpu.memory_space<vmem>>, vector<8x17xf32>
    %109 = arith.maximumf %107, %108 : vector<8x17xf32>
    %c0_134 = arith.constant 0 : index
    %c72 = arith.constant 72 : index
    %110 = vector.load %arg28[%c0_134, %c72] : memref<8x342xf32, #tpu.memory_space<vmem>>, vector<8x17xf32>
    %111 = arith.maximumf %109, %110 : vector<8x17xf32>
    %c0_135 = arith.constant 0 : index
    %c73 = arith.constant 73 : index
    %112 = vector.load %arg28[%c0_135, %c73] : memref<8x342xf32, #tpu.memory_space<vmem>>, vector<8x17xf32>
    %113 = arith.maximumf %111, %112 : vector<8x17xf32>
    %cst_136 = arith.constant dense<0.000000e+00> : vector<8x10xf32>
    %114 = tpu.matmul %113, %97, %cst_136 {dimension_numbers = #tpu.dot_dimension_numbers<[1], [0], [0], [1], [0, 0, 1, 1], [], []>} : vector<8x17xf32>, vector<17x10xf32>, vector<8x10xf32> -> vector<8x10xf32>
    %c0_137 = arith.constant 0 : index
    %c20_138 = arith.constant 20 : index
    %115 = vector.load %arg29[%c0_137, %c20_138] : memref<16x110xf32, #tpu.memory_space<vmem>>, vector<8x10xf32>
    tpu.vector_store %arg29[%c0_137, %c20_138], %114 {strides = array<i32>} : memref<16x110xf32, #tpu.memory_space<vmem>>, vector<8x10xf32>,
    %c0_139 = arith.constant 0 : index
    %c90_140 = arith.constant 90 : index
    %116 = vector.load %arg28[%c0_139, %c90_140] : memref<8x342xf32, #tpu.memory_space<vmem>>, vector<8x17xf32>
    %c0_141 = arith.constant 0 : index
    %c91 = arith.constant 91 : index
    %117 = vector.load %arg28[%c0_141, %c91] : memref<8x342xf32, #tpu.memory_space<vmem>>, vector<8x17xf32>
    %118 = arith.maximumf %116, %117 : vector<8x17xf32>
    %c0_142 = arith.constant 0 : index
    %c108 = arith.constant 108 : index
    %119 = vector.load %arg28[%c0_142, %c108] : memref<8x342xf32, #tpu.memory_space<vmem>>, vector<8x17xf32>
    %120 = arith.maximumf %118, %119 : vector<8x17xf32>
    %c0_143 = arith.constant 0 : index
    %c109 = arith.constant 109 : index
    %121 = vector.load %arg28[%c0_143, %c109] : memref<8x342xf32, #tpu.memory_space<vmem>>, vector<8x17xf32>
    %122 = arith.maximumf %120, %121 : vector<8x17xf32>
    %cst_144 = arith.constant dense<0.000000e+00> : vector<8x10xf32>
    %123 = tpu.matmul %122, %97, %cst_144 {dimension_numbers = #tpu.dot_dimension_numbers<[1], [0], [0], [1], [0, 0, 1, 1], [], []>} : vector<8x17xf32>, vector<17x10xf32>, vector<8x10xf32> -> vector<8x10xf32>
    %c0_145 = arith.constant 0 : index
    %c30_146 = arith.constant 30 : index
    %124 = vector.load %arg29[%c0_145, %c30_146] : memref<16x110xf32, #tpu.memory_space<vmem>>, vector<8x10xf32>
    tpu.vector_store %arg29[%c0_145, %c30_146], %123 {strides = array<i32>} : memref<16x110xf32, #tpu.memory_space<vmem>>, vector<8x10xf32>,
    %c0_147 = arith.constant 0 : index
    %c126 = arith.constant 126 : index
    %125 = vector.load %arg28[%c0_147, %c126] : memref<8x342xf32, #tpu.memory_space<vmem>>, vector<8x17xf32>
    %c0_148 = arith.constant 0 : index
    %c127 = arith.constant 127 : index
    %126 = vector.load %arg28[%c0_148, %c127] : memref<8x342xf32, #tpu.memory_space<vmem>>, vector<8x17xf32>
    %127 = arith.maximumf %125, %126 : vector<8x17xf32>
    %c0_149 = arith.constant 0 : index
    %c144 = arith.constant 144 : index
    %128 = vector.load %arg28[%c0_149, %c144] : memref<8x342xf32, #tpu.memory_space<vmem>>, vector<8x17xf32>
    %129 = arith.maximumf %127, %128 : vector<8x17xf32>
    %c0_150 = arith.constant 0 : index
    %c145 = arith.constant 145 : index
    %130 = vector.load %arg28[%c0_150, %c145] : memref<8x342xf32, #tpu.memory_space<vmem>>, vector<8x17xf32>
    %131 = arith.maximumf %129, %130 : vector<8x17xf32>
    %cst_151 = arith.constant dense<0.000000e+00> : vector<8x10xf32>
    %132 = tpu.matmul %131, %97, %cst_151 {dimension_numbers = #tpu.dot_dimension_numbers<[1], [0], [0], [1], [0, 0, 1, 1], [], []>} : vector<8x17xf32>, vector<17x10xf32>, vector<8x10xf32> -> vector<8x10xf32>
    %c0_152 = arith.constant 0 : index
    %c40_153 = arith.constant 40 : index
    %133 = vector.load %arg29[%c0_152, %c40_153] : memref<16x110xf32, #tpu.memory_space<vmem>>, vector<8x10xf32>
    tpu.vector_store %arg29[%c0_152, %c40_153], %132 {strides = array<i32>} : memref<16x110xf32, #tpu.memory_space<vmem>>, vector<8x10xf32>,
    %c0_154 = arith.constant 0 : index
    %c162 = arith.constant 162 : index
    %134 = vector.load %arg28[%c0_154, %c162] : memref<8x342xf32, #tpu.memory_space<vmem>>, vector<8x17xf32>
    %c0_155 = arith.constant 0 : index
    %c163 = arith.constant 163 : index
    %135 = vector.load %arg28[%c0_155, %c163] : memref<8x342xf32, #tpu.memory_space<vmem>>, vector<8x17xf32>
    %136 = arith.maximumf %134, %135 : vector<8x17xf32>
    %c0_156 = arith.constant 0 : index
    %c180 = arith.constant 180 : index
    %137 = vector.load %arg28[%c0_156, %c180] : memref<8x342xf32, #tpu.memory_space<vmem>>, vector<8x17xf32>
    %138 = arith.maximumf %136, %137 : vector<8x17xf32>
    %c0_157 = arith.constant 0 : index
    %c181 = arith.constant 181 : index
    %139 = vector.load %arg28[%c0_157, %c181] : memref<8x342xf32, #tpu.memory_space<vmem>>, vector<8x17xf32>
    %140 = arith.maximumf %138, %139 : vector<8x17xf32>
    %cst_158 = arith.constant dense<0.000000e+00> : vector<8x10xf32>
    %141 = tpu.matmul %140, %97, %cst_158 {dimension_numbers = #tpu.dot_dimension_numbers<[1], [0], [0], [1], [0, 0, 1, 1], [], []>} : vector<8x17xf32>, vector<17x10xf32>, vector<8x10xf32> -> vector<8x10xf32>
    %c0_159 = arith.constant 0 : index
    %c50 = arith.constant 50 : index
    %142 = vector.load %arg29[%c0_159, %c50] : memref<16x110xf32, #tpu.memory_space<vmem>>, vector<8x10xf32>
    tpu.vector_store %arg29[%c0_159, %c50], %141 {strides = array<i32>} : memref<16x110xf32, #tpu.memory_space<vmem>>, vector<8x10xf32>,
    %c0_160 = arith.constant 0 : index
    %c198 = arith.constant 198 : index
    %143 = vector.load %arg28[%c0_160, %c198] : memref<8x342xf32, #tpu.memory_space<vmem>>, vector<8x17xf32>
    %c0_161 = arith.constant 0 : index
    %c199 = arith.constant 199 : index
    %144 = vector.load %arg28[%c0_161, %c199] : memref<8x342xf32, #tpu.memory_space<vmem>>, vector<8x17xf32>
    %145 = arith.maximumf %143, %144 : vector<8x17xf32>
    %c0_162 = arith.constant 0 : index
    %c216 = arith.constant 216 : index
    %146 = vector.load %arg28[%c0_162, %c216] : memref<8x342xf32, #tpu.memory_space<vmem>>, vector<8x17xf32>
    %147 = arith.maximumf %145, %146 : vector<8x17xf32>
    %c0_163 = arith.constant 0 : index
    %c217 = arith.constant 217 : index
    %148 = vector.load %arg28[%c0_163, %c217] : memref<8x342xf32, #tpu.memory_space<vmem>>, vector<8x17xf32>
    %149 = arith.maximumf %147, %148 : vector<8x17xf32>
    %cst_164 = arith.constant dense<0.000000e+00> : vector<8x10xf32>
    %150 = tpu.matmul %149, %97, %cst_164 {dimension_numbers = #tpu.dot_dimension_numbers<[1], [0], [0], [1], [0, 0, 1, 1], [], []>} : vector<8x17xf32>, vector<17x10xf32>, vector<8x10xf32> -> vector<8x10xf32>
    %c0_165 = arith.constant 0 : index
    %c60 = arith.constant 60 : index
    %151 = vector.load %arg29[%c0_165, %c60] : memref<16x110xf32, #tpu.memory_space<vmem>>, vector<8x10xf32>
    tpu.vector_store %arg29[%c0_165, %c60], %150 {strides = array<i32>} : memref<16x110xf32, #tpu.memory_space<vmem>>, vector<8x10xf32>,
    %c0_166 = arith.constant 0 : index
    %c234 = arith.constant 234 : index
    %152 = vector.load %arg28[%c0_166, %c234] : memref<8x342xf32, #tpu.memory_space<vmem>>, vector<8x17xf32>
    %c0_167 = arith.constant 0 : index
    %c235 = arith.constant 235 : index
    %153 = vector.load %arg28[%c0_167, %c235] : memref<8x342xf32, #tpu.memory_space<vmem>>, vector<8x17xf32>
    %154 = arith.maximumf %152, %153 : vector<8x17xf32>
    %c0_168 = arith.constant 0 : index
    %c252 = arith.constant 252 : index
    %155 = vector.load %arg28[%c0_168, %c252] : memref<8x342xf32, #tpu.memory_space<vmem>>, vector<8x17xf32>
    %156 = arith.maximumf %154, %155 : vector<8x17xf32>
    %c0_169 = arith.constant 0 : index
    %c253 = arith.constant 253 : index
    %157 = vector.load %arg28[%c0_169, %c253] : memref<8x342xf32, #tpu.memory_space<vmem>>, vector<8x17xf32>
    %158 = arith.maximumf %156, %157 : vector<8x17xf32>
    %cst_170 = arith.constant dense<0.000000e+00> : vector<8x10xf32>
    %159 = tpu.matmul %158, %97, %cst_170 {dimension_numbers = #tpu.dot_dimension_numbers<[1], [0], [0], [1], [0, 0, 1, 1], [], []>} : vector<8x17xf32>, vector<17x10xf32>, vector<8x10xf32> -> vector<8x10xf32>
    %c0_171 = arith.constant 0 : index
    %c70 = arith.constant 70 : index
    %160 = vector.load %arg29[%c0_171, %c70] : memref<16x110xf32, #tpu.memory_space<vmem>>, vector<8x10xf32>
    tpu.vector_store %arg29[%c0_171, %c70], %159 {strides = array<i32>} : memref<16x110xf32, #tpu.memory_space<vmem>>, vector<8x10xf32>,
    %c0_172 = arith.constant 0 : index
    %c270 = arith.constant 270 : index
    %161 = vector.load %arg28[%c0_172, %c270] : memref<8x342xf32, #tpu.memory_space<vmem>>, vector<8x17xf32>
    %c0_173 = arith.constant 0 : index
    %c271 = arith.constant 271 : index
    %162 = vector.load %arg28[%c0_173, %c271] : memref<8x342xf32, #tpu.memory_space<vmem>>, vector<8x17xf32>
    %163 = arith.maximumf %161, %162 : vector<8x17xf32>
    %c0_174 = arith.constant 0 : index
    %c288 = arith.constant 288 : index
    %164 = vector.load %arg28[%c0_174, %c288] : memref<8x342xf32, #tpu.memory_space<vmem>>, vector<8x17xf32>
    %165 = arith.maximumf %163, %164 : vector<8x17xf32>
    %c0_175 = arith.constant 0 : index
    %c289 = arith.constant 289 : index
    %166 = vector.load %arg28[%c0_175, %c289] : memref<8x342xf32, #tpu.memory_space<vmem>>, vector<8x17xf32>
    %167 = arith.maximumf %165, %166 : vector<8x17xf32>
    %cst_176 = arith.constant dense<0.000000e+00> : vector<8x10xf32>
    %168 = tpu.matmul %167, %97, %cst_176 {dimension_numbers = #tpu.dot_dimension_numbers<[1], [0], [0], [1], [0, 0, 1, 1], [], []>} : vector<8x17xf32>, vector<17x10xf32>, vector<8x10xf32> -> vector<8x10xf32>
    %c0_177 = arith.constant 0 : index
    %c80 = arith.constant 80 : index
    %169 = vector.load %arg29[%c0_177, %c80] : memref<16x110xf32, #tpu.memory_space<vmem>>, vector<8x10xf32>
    tpu.vector_store %arg29[%c0_177, %c80], %168 {strides = array<i32>} : memref<16x110xf32, #tpu.memory_space<vmem>>, vector<8x10xf32>,
    %c0_178 = arith.constant 0 : index
    %c0_179 = arith.constant 0 : index
    %170 = vector.load %arg29[%c0_178, %c0_179] : memref<16x110xf32, #tpu.memory_space<vmem>>, vector<8x80xf32>
    %c0_180 = arith.constant 0 : index
    %c0_181 = arith.constant 0 : index
    %171 = vector.load %arg34[%c0_180, %c0_181] : memref<288x288xf32, #tpu.memory_space<vmem>>, vector<8x80xf32>
    tpu.vector_store %arg34[%c0_180, %c0_181], %170 {strides = array<i32>} : memref<288x288xf32, #tpu.memory_space<vmem>>, vector<8x80xf32>,
    %c0_182 = arith.constant 0 : index
    %c1_183 = arith.constant 1 : index
    %172 = vector.load %arg29[%c0_182, %c1_183] : memref<16x110xf32, #tpu.memory_space<vmem>>, vector<8x80xf32>
    %c8_184 = arith.constant 8 : index
    %c0_185 = arith.constant 0 : index
    %173 = vector.load %arg34[%c8_184, %c0_185] : memref<288x288xf32, #tpu.memory_space<vmem>>, vector<8x80xf32>
    tpu.vector_store %arg34[%c8_184, %c0_185], %172 {strides = array<i32>} : memref<288x288xf32, #tpu.memory_space<vmem>>, vector<8x80xf32>,
    %c0_186 = arith.constant 0 : index
    %c2_187 = arith.constant 2 : index
    %174 = vector.load %arg29[%c0_186, %c2_187] : memref<16x110xf32, #tpu.memory_space<vmem>>, vector<8x80xf32>
    %c16_188 = arith.constant 16 : index
    %c0_189 = arith.constant 0 : index
    %175 = vector.load %arg34[%c16_188, %c0_189] : memref<288x288xf32, #tpu.memory_space<vmem>>, vector<8x80xf32>
    tpu.vector_store %arg34[%c16_188, %c0_189], %174 {strides = array<i32>} : memref<288x288xf32, #tpu.memory_space<vmem>>, vector<8x80xf32>,
    %c0_190 = arith.constant 0 : index
    %c10_191 = arith.constant 10 : index
    %176 = vector.load %arg29[%c0_190, %c10_191] : memref<16x110xf32, #tpu.memory_space<vmem>>, vector<8x80xf32>
    %c24_192 = arith.constant 24 : index
    %c0_193 = arith.constant 0 : index
    %177 = vector.load %arg34[%c24_192, %c0_193] : memref<288x288xf32, #tpu.memory_space<vmem>>, vector<8x80xf32>
    tpu.vector_store %arg34[%c24_192, %c0_193], %176 {strides = array<i32>} : memref<288x288xf32, #tpu.memory_space<vmem>>, vector<8x80xf32>,
    %c0_194 = arith.constant 0 : index
    %c11 = arith.constant 11 : index
    %178 = vector.load %arg29[%c0_194, %c11] : memref<16x110xf32, #tpu.memory_space<vmem>>, vector<8x80xf32>
    %c32_195 = arith.constant 32 : index
    %c0_196 = arith.constant 0 : index
    %179 = vector.load %arg34[%c32_195, %c0_196] : memref<288x288xf32, #tpu.memory_space<vmem>>, vector<8x80xf32>
    tpu.vector_store %arg34[%c32_195, %c0_196], %178 {strides = array<i32>} : memref<288x288xf32, #tpu.memory_space<vmem>>, vector<8x80xf32>,
    %c0_197 = arith.constant 0 : index
    %c12_198 = arith.constant 12 : index
    %180 = vector.load %arg29[%c0_197, %c12_198] : memref<16x110xf32, #tpu.memory_space<vmem>>, vector<8x80xf32>
    %c40_199 = arith.constant 40 : index
    %c0_200 = arith.constant 0 : index
    %181 = vector.load %arg34[%c40_199, %c0_200] : memref<288x288xf32, #tpu.memory_space<vmem>>, vector<8x80xf32>
    tpu.vector_store %arg34[%c40_199, %c0_200], %180 {strides = array<i32>} : memref<288x288xf32, #tpu.memory_space<vmem>>, vector<8x80xf32>,
    %c0_201 = arith.constant 0 : index
    %c20_202 = arith.constant 20 : index
    %182 = vector.load %arg29[%c0_201, %c20_202] : memref<16x110xf32, #tpu.memory_space<vmem>>, vector<8x80xf32>
    %c48_203 = arith.constant 48 : index
    %c0_204 = arith.constant 0 : index
    %183 = vector.load %arg34[%c48_203, %c0_204] : memref<288x288xf32, #tpu.memory_space<vmem>>, vector<8x80xf32>
    tpu.vector_store %arg34[%c48_203, %c0_204], %182 {strides = array<i32>} : memref<288x288xf32, #tpu.memory_space<vmem>>, vector<8x80xf32>,
    %c0_205 = arith.constant 0 : index
    %c21_206 = arith.constant 21 : index
    %184 = vector.load %arg29[%c0_205, %c21_206] : memref<16x110xf32, #tpu.memory_space<vmem>>, vector<8x80xf32>
    %c56_207 = arith.constant 56 : index
    %c0_208 = arith.constant 0 : index
    %185 = vector.load %arg34[%c56_207, %c0_208] : memref<288x288xf32, #tpu.memory_space<vmem>>, vector<8x80xf32>
    tpu.vector_store %arg34[%c56_207, %c0_208], %184 {strides = array<i32>} : memref<288x288xf32, #tpu.memory_space<vmem>>, vector<8x80xf32>,
    %c0_209 = arith.constant 0 : index
    %c22 = arith.constant 22 : index
    %186 = vector.load %arg29[%c0_209, %c22] : memref<16x110xf32, #tpu.memory_space<vmem>>, vector<8x80xf32>
    %c64_210 = arith.constant 64 : index
    %c0_211 = arith.constant 0 : index
    %187 = vector.load %arg34[%c64_210, %c0_211] : memref<288x288xf32, #tpu.memory_space<vmem>>, vector<8x80xf32>
    tpu.vector_store %arg34[%c64_210, %c0_211], %186 {strides = array<i32>} : memref<288x288xf32, #tpu.memory_space<vmem>>, vector<8x80xf32>,
    %c0_212 = arith.constant 0 : index
    %c0_213 = arith.constant 0 : index
    %188 = vector.load %arg8[%c0_212, %c0_213] : memref<16x72xf32, #tpu.memory_space<vmem>>, vector<16x72xf32>
    %c0_214 = arith.constant 0 : index
    %c0_215 = arith.constant 0 : index
    %189 = vector.load %arg34[%c0_214, %c0_215] : memref<288x288xf32, #tpu.memory_space<vmem>>, vector<72x80xf32>
    %cst_216 = arith.constant dense<0.000000e+00> : vector<16x80xf32>
    %190 = tpu.matmul %188, %189, %cst_216 {dimension_numbers = #tpu.dot_dimension_numbers<[1], [0], [0], [1], [0, 0, 1, 1], [], []>} : vector<16x72xf32>, vector<72x80xf32>, vector<16x80xf32> -> vector<16x80xf32>
    %c0_217 = arith.constant 0 : index
    %c0_218 = arith.constant 0 : index
    %191 = vector.load %arg9[%c0_217, %c0_218] : memref<16x1xf32, #tpu.memory_space<vmem>>, vector<16x1xf32>
    %192 = vector.broadcast %191 : vector<16x1xf32> to vector<16x80xf32>
    %193 = arith.addf %190, %192 : vector<16x80xf32>
    %cst_219 = arith.constant 0.000000e+00 : f32
    %194 = vector.broadcast %cst_219 : f32 to vector<16x80xf32>
    %195 = arith.maximumf %193, %194 : vector<16x80xf32>
    %c0_220 = arith.constant 0 : index
    %c0_221 = arith.constant 0 : index
    %196 = vector.load %arg10[%c0_220, %c0_221] : memref<1x80xf32, #tpu.memory_space<vmem>>, vector<1x80xf32>
    %197 = vector.broadcast %196 : vector<1x80xf32> to vector<16x80xf32>
    %198 = arith.mulf %195, %197 : vector<16x80xf32>
    %c0_222 = arith.constant 0 : index
    %c11_223 = arith.constant 11 : index
    %199 = vector.load %arg30[%c0_222, %c11_223] : memref<16x110xf32, #tpu.memory_space<vmem>>, vector<16x80xf32>
    tpu.vector_store %arg30[%c0_222, %c11_223], %198 {strides = array<i32>} : memref<16x110xf32, #tpu.memory_space<vmem>>, vector<16x80xf32>,
    %c0_224 = arith.constant 0 : index
    %c0_225 = arith.constant 0 : index
    %200 = vector.load %arg30[%c0_224, %c0_225] : memref<16x110xf32, #tpu.memory_space<vmem>>, vector<16x80xf32>
    %c0_226 = arith.constant 0 : index
    %c0_227 = arith.constant 0 : index
    %201 = vector.load %arg34[%c0_226, %c0_227] : memref<288x288xf32, #tpu.memory_space<vmem>>, vector<16x80xf32>
    tpu.vector_store %arg34[%c0_226, %c0_227], %200 {strides = array<i32>} : memref<288x288xf32, #tpu.memory_space<vmem>>, vector<16x80xf32>,
    %c0_228 = arith.constant 0 : index
    %c1_229 = arith.constant 1 : index
    %202 = vector.load %arg30[%c0_228, %c1_229] : memref<16x110xf32, #tpu.memory_space<vmem>>, vector<16x80xf32>
    %c16_230 = arith.constant 16 : index
    %c0_231 = arith.constant 0 : index
    %203 = vector.load %arg34[%c16_230, %c0_231] : memref<288x288xf32, #tpu.memory_space<vmem>>, vector<16x80xf32>
    tpu.vector_store %arg34[%c16_230, %c0_231], %202 {strides = array<i32>} : memref<288x288xf32, #tpu.memory_space<vmem>>, vector<16x80xf32>,
    %c0_232 = arith.constant 0 : index
    %c2_233 = arith.constant 2 : index
    %204 = vector.load %arg30[%c0_232, %c2_233] : memref<16x110xf32, #tpu.memory_space<vmem>>, vector<16x80xf32>
    %c32_234 = arith.constant 32 : index
    %c0_235 = arith.constant 0 : index
    %205 = vector.load %arg34[%c32_234, %c0_235] : memref<288x288xf32, #tpu.memory_space<vmem>>, vector<16x80xf32>
    tpu.vector_store %arg34[%c32_234, %c0_235], %204 {strides = array<i32>} : memref<288x288xf32, #tpu.memory_space<vmem>>, vector<16x80xf32>,
    %c0_236 = arith.constant 0 : index
    %c10_237 = arith.constant 10 : index
    %206 = vector.load %arg30[%c0_236, %c10_237] : memref<16x110xf32, #tpu.memory_space<vmem>>, vector<16x80xf32>
    %c48_238 = arith.constant 48 : index
    %c0_239 = arith.constant 0 : index
    %207 = vector.load %arg34[%c48_238, %c0_239] : memref<288x288xf32, #tpu.memory_space<vmem>>, vector<16x80xf32>
    tpu.vector_store %arg34[%c48_238, %c0_239], %206 {strides = array<i32>} : memref<288x288xf32, #tpu.memory_space<vmem>>, vector<16x80xf32>,
    %c0_240 = arith.constant 0 : index
    %c11_241 = arith.constant 11 : index
    %208 = vector.load %arg30[%c0_240, %c11_241] : memref<16x110xf32, #tpu.memory_space<vmem>>, vector<16x80xf32>
    %c64_242 = arith.constant 64 : index
    %c0_243 = arith.constant 0 : index
    %209 = vector.load %arg34[%c64_242, %c0_243] : memref<288x288xf32, #tpu.memory_space<vmem>>, vector<16x80xf32>
    tpu.vector_store %arg34[%c64_242, %c0_243], %208 {strides = array<i32>} : memref<288x288xf32, #tpu.memory_space<vmem>>, vector<16x80xf32>,
    %c0_244 = arith.constant 0 : index
    %c12_245 = arith.constant 12 : index
    %210 = vector.load %arg30[%c0_244, %c12_245] : memref<16x110xf32, #tpu.memory_space<vmem>>, vector<16x80xf32>
    %c80_246 = arith.constant 80 : index
    %c0_247 = arith.constant 0 : index
    %211 = vector.load %arg34[%c80_246, %c0_247] : memref<288x288xf32, #tpu.memory_space<vmem>>, vector<16x80xf32>
    tpu.vector_store %arg34[%c80_246, %c0_247], %210 {strides = array<i32>} : memref<288x288xf32, #tpu.memory_space<vmem>>, vector<16x80xf32>,
    %c0_248 = arith.constant 0 : index
    %c20_249 = arith.constant 20 : index
    %212 = vector.load %arg30[%c0_248, %c20_249] : memref<16x110xf32, #tpu.memory_space<vmem>>, vector<16x80xf32>
    %c96 = arith.constant 96 : index
    %c0_250 = arith.constant 0 : index
    %213 = vector.load %arg34[%c96, %c0_250] : memref<288x288xf32, #tpu.memory_space<vmem>>, vector<16x80xf32>
    tpu.vector_store %arg34[%c96, %c0_250], %212 {strides = array<i32>} : memref<288x288xf32, #tpu.memory_space<vmem>>, vector<16x80xf32>,
    %c0_251 = arith.constant 0 : index
    %c21_252 = arith.constant 21 : index
    %214 = vector.load %arg30[%c0_251, %c21_252] : memref<16x110xf32, #tpu.memory_space<vmem>>, vector<16x80xf32>
    %c112 = arith.constant 112 : index
    %c0_253 = arith.constant 0 : index
    %215 = vector.load %arg34[%c112, %c0_253] : memref<288x288xf32, #tpu.memory_space<vmem>>, vector<16x80xf32>
    tpu.vector_store %arg34[%c112, %c0_253], %214 {strides = array<i32>} : memref<288x288xf32, #tpu.memory_space<vmem>>, vector<16x80xf32>,
    %c0_254 = arith.constant 0 : index
    %c22_255 = arith.constant 22 : index
    %216 = vector.load %arg30[%c0_254, %c22_255] : memref<16x110xf32, #tpu.memory_space<vmem>>, vector<16x80xf32>
    %c128 = arith.constant 128 : index
    %c0_256 = arith.constant 0 : index
    %217 = vector.load %arg34[%c128, %c0_256] : memref<288x288xf32, #tpu.memory_space<vmem>>, vector<16x80xf32>
    tpu.vector_store %arg34[%c128, %c0_256], %216 {strides = array<i32>} : memref<288x288xf32, #tpu.memory_space<vmem>>, vector<16x80xf32>,
    %c0_257 = arith.constant 0 : index
    %c0_258 = arith.constant 0 : index
    %218 = vector.load %arg11[%c0_257, %c0_258] : memref<16x144xf32, #tpu.memory_space<vmem>>, vector<16x144xf32>
    %c0_259 = arith.constant 0 : index
    %c0_260 = arith.constant 0 : index
    %219 = vector.load %arg34[%c0_259, %c0_260] : memref<288x288xf32, #tpu.memory_space<vmem>>, vector<144x80xf32>
    %cst_261 = arith.constant dense<0.000000e+00> : vector<16x80xf32>
    %220 = tpu.matmul %218, %219, %cst_261 {dimension_numbers = #tpu.dot_dimension_numbers<[1], [0], [0], [1], [0, 0, 1, 1], [], []>} : vector<16x144xf32>, vector<144x80xf32>, vector<16x80xf32> -> vector<16x80xf32>
    %c0_262 = arith.constant 0 : index
    %c0_263 = arith.constant 0 : index
    %221 = vector.load %arg12[%c0_262, %c0_263] : memref<16x1xf32, #tpu.memory_space<vmem>>, vector<16x1xf32>
    %222 = vector.broadcast %221 : vector<16x1xf32> to vector<16x80xf32>
    %223 = arith.addf %220, %222 : vector<16x80xf32>
    %cst_264 = arith.constant 0.000000e+00 : f32
    %224 = vector.broadcast %cst_264 : f32 to vector<16x80xf32>
    %225 = arith.maximumf %223, %224 : vector<16x80xf32>
    %c0_265 = arith.constant 0 : index
    %c0_266 = arith.constant 0 : index
    %226 = vector.load %arg10[%c0_265, %c0_266] : memref<1x80xf32, #tpu.memory_space<vmem>>, vector<1x80xf32>
    %227 = vector.broadcast %226 : vector<1x80xf32> to vector<16x80xf32>
    %228 = arith.mulf %225, %227 : vector<16x80xf32>
    %c0_267 = arith.constant 0 : index
    %c11_268 = arith.constant 11 : index
    %229 = vector.load %arg31[%c0_267, %c11_268] : memref<16x110xf32, #tpu.memory_space<vmem>>, vector<16x80xf32>
    tpu.vector_store %arg31[%c0_267, %c11_268], %228 {strides = array<i32>} : memref<16x110xf32, #tpu.memory_space<vmem>>, vector<16x80xf32>,
    %c0_269 = arith.constant 0 : index
    %c0_270 = arith.constant 0 : index
    %230 = vector.load %arg13[%c0_269, %c0_270] : memref<9x6xf32, #tpu.memory_space<vmem>>, vector<9x6xf32>
    %c0_271 = arith.constant 0 : index
    %c10_272 = arith.constant 10 : index
    %231 = vector.load %arg31[%c0_271, %c10_272] : memref<16x110xf32, #tpu.memory_space<vmem>>, vector<16x9xf32>
    %c0_273 = arith.constant 0 : index
    %c11_274 = arith.constant 11 : index
    %232 = vector.load %arg31[%c0_273, %c11_274] : memref<16x110xf32, #tpu.memory_space<vmem>>, vector<16x9xf32>
    %233 = arith.maximumf %231, %232 : vector<16x9xf32>
    %c0_275 = arith.constant 0 : index
    %c20_276 = arith.constant 20 : index
    %234 = vector.load %arg31[%c0_275, %c20_276] : memref<16x110xf32, #tpu.memory_space<vmem>>, vector<16x9xf32>
    %235 = arith.maximumf %233, %234 : vector<16x9xf32>
    %c0_277 = arith.constant 0 : index
    %c21_278 = arith.constant 21 : index
    %236 = vector.load %arg31[%c0_277, %c21_278] : memref<16x110xf32, #tpu.memory_space<vmem>>, vector<16x9xf32>
    %237 = arith.maximumf %235, %236 : vector<16x9xf32>
    %cst_279 = arith.constant dense<0.000000e+00> : vector<16x6xf32>
    %238 = tpu.matmul %237, %230, %cst_279 {dimension_numbers = #tpu.dot_dimension_numbers<[1], [0], [0], [1], [0, 0, 1, 1], [], []>} : vector<16x9xf32>, vector<9x6xf32>, vector<16x6xf32> -> vector<16x6xf32>
    %c0_280 = arith.constant 0 : index
    %c6_281 = arith.constant 6 : index
    %239 = vector.load %arg32[%c0_280, %c6_281] : memref<16x42xf32, #tpu.memory_space<vmem>>, vector<16x6xf32>
    tpu.vector_store %arg32[%c0_280, %c6_281], %238 {strides = array<i32>} : memref<16x42xf32, #tpu.memory_space<vmem>>, vector<16x6xf32>,
    %c0_282 = arith.constant 0 : index
    %c30_283 = arith.constant 30 : index
    %240 = vector.load %arg31[%c0_282, %c30_283] : memref<16x110xf32, #tpu.memory_space<vmem>>, vector<16x9xf32>
    %c0_284 = arith.constant 0 : index
    %c31 = arith.constant 31 : index
    %241 = vector.load %arg31[%c0_284, %c31] : memref<16x110xf32, #tpu.memory_space<vmem>>, vector<16x9xf32>
    %242 = arith.maximumf %240, %241 : vector<16x9xf32>
    %c0_285 = arith.constant 0 : index
    %c40_286 = arith.constant 40 : index
    %243 = vector.load %arg31[%c0_285, %c40_286] : memref<16x110xf32, #tpu.memory_space<vmem>>, vector<16x9xf32>
    %244 = arith.maximumf %242, %243 : vector<16x9xf32>
    %c0_287 = arith.constant 0 : index
    %c41 = arith.constant 41 : index
    %245 = vector.load %arg31[%c0_287, %c41] : memref<16x110xf32, #tpu.memory_space<vmem>>, vector<16x9xf32>
    %246 = arith.maximumf %244, %245 : vector<16x9xf32>
    %cst_288 = arith.constant dense<0.000000e+00> : vector<16x6xf32>
    %247 = tpu.matmul %246, %230, %cst_288 {dimension_numbers = #tpu.dot_dimension_numbers<[1], [0], [0], [1], [0, 0, 1, 1], [], []>} : vector<16x9xf32>, vector<9x6xf32>, vector<16x6xf32> -> vector<16x6xf32>
    %c0_289 = arith.constant 0 : index
    %c12_290 = arith.constant 12 : index
    %248 = vector.load %arg32[%c0_289, %c12_290] : memref<16x42xf32, #tpu.memory_space<vmem>>, vector<16x6xf32>
    tpu.vector_store %arg32[%c0_289, %c12_290], %247 {strides = array<i32>} : memref<16x42xf32, #tpu.memory_space<vmem>>, vector<16x6xf32>,
    %c0_291 = arith.constant 0 : index
    %c50_292 = arith.constant 50 : index
    %249 = vector.load %arg31[%c0_291, %c50_292] : memref<16x110xf32, #tpu.memory_space<vmem>>, vector<16x9xf32>
    %c0_293 = arith.constant 0 : index
    %c51 = arith.constant 51 : index
    %250 = vector.load %arg31[%c0_293, %c51] : memref<16x110xf32, #tpu.memory_space<vmem>>, vector<16x9xf32>
    %251 = arith.maximumf %249, %250 : vector<16x9xf32>
    %c0_294 = arith.constant 0 : index
    %c60_295 = arith.constant 60 : index
    %252 = vector.load %arg31[%c0_294, %c60_295] : memref<16x110xf32, #tpu.memory_space<vmem>>, vector<16x9xf32>
    %253 = arith.maximumf %251, %252 : vector<16x9xf32>
    %c0_296 = arith.constant 0 : index
    %c61 = arith.constant 61 : index
    %254 = vector.load %arg31[%c0_296, %c61] : memref<16x110xf32, #tpu.memory_space<vmem>>, vector<16x9xf32>
    %255 = arith.maximumf %253, %254 : vector<16x9xf32>
    %cst_297 = arith.constant dense<0.000000e+00> : vector<16x6xf32>
    %256 = tpu.matmul %255, %230, %cst_297 {dimension_numbers = #tpu.dot_dimension_numbers<[1], [0], [0], [1], [0, 0, 1, 1], [], []>} : vector<16x9xf32>, vector<9x6xf32>, vector<16x6xf32> -> vector<16x6xf32>
    %c0_298 = arith.constant 0 : index
    %c18_299 = arith.constant 18 : index
    %257 = vector.load %arg32[%c0_298, %c18_299] : memref<16x42xf32, #tpu.memory_space<vmem>>, vector<16x6xf32>
    tpu.vector_store %arg32[%c0_298, %c18_299], %256 {strides = array<i32>} : memref<16x42xf32, #tpu.memory_space<vmem>>, vector<16x6xf32>,
    %c0_300 = arith.constant 0 : index
    %c70_301 = arith.constant 70 : index
    %258 = vector.load %arg31[%c0_300, %c70_301] : memref<16x110xf32, #tpu.memory_space<vmem>>, vector<16x9xf32>
    %c0_302 = arith.constant 0 : index
    %c71 = arith.constant 71 : index
    %259 = vector.load %arg31[%c0_302, %c71] : memref<16x110xf32, #tpu.memory_space<vmem>>, vector<16x9xf32>
    %260 = arith.maximumf %258, %259 : vector<16x9xf32>
    %c0_303 = arith.constant 0 : index
    %c80_304 = arith.constant 80 : index
    %261 = vector.load %arg31[%c0_303, %c80_304] : memref<16x110xf32, #tpu.memory_space<vmem>>, vector<16x9xf32>
    %262 = arith.maximumf %260, %261 : vector<16x9xf32>
    %c0_305 = arith.constant 0 : index
    %c81 = arith.constant 81 : index
    %263 = vector.load %arg31[%c0_305, %c81] : memref<16x110xf32, #tpu.memory_space<vmem>>, vector<16x9xf32>
    %264 = arith.maximumf %262, %263 : vector<16x9xf32>
    %cst_306 = arith.constant dense<0.000000e+00> : vector<16x6xf32>
    %265 = tpu.matmul %264, %230, %cst_306 {dimension_numbers = #tpu.dot_dimension_numbers<[1], [0], [0], [1], [0, 0, 1, 1], [], []>} : vector<16x9xf32>, vector<9x6xf32>, vector<16x6xf32> -> vector<16x6xf32>
    %c0_307 = arith.constant 0 : index
    %c24_308 = arith.constant 24 : index
    %266 = vector.load %arg32[%c0_307, %c24_308] : memref<16x42xf32, #tpu.memory_space<vmem>>, vector<16x6xf32>
    tpu.vector_store %arg32[%c0_307, %c24_308], %265 {strides = array<i32>} : memref<16x42xf32, #tpu.memory_space<vmem>>, vector<16x6xf32>,
    %c0_309 = arith.constant 0 : index
    %c0_310 = arith.constant 0 : index
    %c0_311 = arith.constant 0 : index
    %267 = vector.load %arg14[%c0_309, %c0_310, %c0_311] : memref<2x4x10xf32, #tpu.memory_space<vmem>>, vector<2x4x10xf32>
    %c0_312 = arith.constant 0 : index
    %c0_313 = arith.constant 0 : index
    %268 = vector.load %arg32[%c0_312, %c0_313] : memref<16x42xf32, #tpu.memory_space<vmem>>, vector<16x24xf32>
    %c0_314 = arith.constant 0 : index
    %c0_315 = arith.constant 0 : index
    %269 = vector.load %arg34[%c0_314, %c0_315] : memref<288x288xf32, #tpu.memory_space<vmem>>, vector<16x24xf32>
    tpu.vector_store %arg34[%c0_314, %c0_315], %268 {strides = array<i32>} : memref<288x288xf32, #tpu.memory_space<vmem>>, vector<16x24xf32>,
    %c0_316 = arith.constant 0 : index
    %c1_317 = arith.constant 1 : index
    %270 = vector.load %arg32[%c0_316, %c1_317] : memref<16x42xf32, #tpu.memory_space<vmem>>, vector<16x24xf32>
    %c16_318 = arith.constant 16 : index
    %c0_319 = arith.constant 0 : index
    %271 = vector.load %arg34[%c16_318, %c0_319] : memref<288x288xf32, #tpu.memory_space<vmem>>, vector<16x24xf32>
    tpu.vector_store %arg34[%c16_318, %c0_319], %270 {strides = array<i32>} : memref<288x288xf32, #tpu.memory_space<vmem>>, vector<16x24xf32>,
    %c0_320 = arith.constant 0 : index
    %c6_321 = arith.constant 6 : index
    %272 = vector.load %arg32[%c0_320, %c6_321] : memref<16x42xf32, #tpu.memory_space<vmem>>, vector<16x24xf32>
    %c32_322 = arith.constant 32 : index
    %c0_323 = arith.constant 0 : index
    %273 = vector.load %arg34[%c32_322, %c0_323] : memref<288x288xf32, #tpu.memory_space<vmem>>, vector<16x24xf32>
    tpu.vector_store %arg34[%c32_322, %c0_323], %272 {strides = array<i32>} : memref<288x288xf32, #tpu.memory_space<vmem>>, vector<16x24xf32>,
    %c0_324 = arith.constant 0 : index
    %c7 = arith.constant 7 : index
    %274 = vector.load %arg32[%c0_324, %c7] : memref<16x42xf32, #tpu.memory_space<vmem>>, vector<16x24xf32>
    %c48_325 = arith.constant 48 : index
    %c0_326 = arith.constant 0 : index
    %275 = vector.load %arg34[%c48_325, %c0_326] : memref<288x288xf32, #tpu.memory_space<vmem>>, vector<16x24xf32>
    tpu.vector_store %arg34[%c48_325, %c0_326], %274 {strides = array<i32>} : memref<288x288xf32, #tpu.memory_space<vmem>>, vector<16x24xf32>,
    %c0_327 = arith.constant 0 : index
    %c0_328 = arith.constant 0 : index
    %c0_329 = arith.constant 0 : index
    %276 = vector.load %arg15[%c0_327, %c0_328, %c0_329] : memref<4x16x64xf32, #tpu.memory_space<vmem>>, vector<1x16x64xf32>
    %277 = vector.shape_cast %276 : vector<1x16x64xf32> to vector<16x64xf32>
    %c0_330 = arith.constant 0 : index
    %c0_331 = arith.constant 0 : index
    %278 = vector.load %arg34[%c0_330, %c0_331] : memref<288x288xf32, #tpu.memory_space<vmem>>, vector<64x24xf32>
    %cst_332 = arith.constant dense<0.000000e+00> : vector<16x24xf32>
    %279 = tpu.matmul %277, %278, %cst_332 {dimension_numbers = #tpu.dot_dimension_numbers<[1], [0], [0], [1], [0, 0, 1, 1], [], []>} : vector<16x64xf32>, vector<64x24xf32>, vector<16x24xf32> -> vector<16x24xf32>
    %c0_333 = arith.constant 0 : index
    %c1_334 = arith.constant 1 : index
    %280 = vector.load %arg32[%c0_333, %c1_334] : memref<16x42xf32, #tpu.memory_space<vmem>>, vector<16x24xf32>
    %c0_335 = arith.constant 0 : index
    %c0_336 = arith.constant 0 : index
    %281 = vector.load %arg34[%c0_335, %c0_336] : memref<288x288xf32, #tpu.memory_space<vmem>>, vector<16x24xf32>
    tpu.vector_store %arg34[%c0_335, %c0_336], %280 {strides = array<i32>} : memref<288x288xf32, #tpu.memory_space<vmem>>, vector<16x24xf32>,
    %c0_337 = arith.constant 0 : index
    %c2_338 = arith.constant 2 : index
    %282 = vector.load %arg32[%c0_337, %c2_338] : memref<16x42xf32, #tpu.memory_space<vmem>>, vector<16x24xf32>
    %c16_339 = arith.constant 16 : index
    %c0_340 = arith.constant 0 : index
    %283 = vector.load %arg34[%c16_339, %c0_340] : memref<288x288xf32, #tpu.memory_space<vmem>>, vector<16x24xf32>
    tpu.vector_store %arg34[%c16_339, %c0_340], %282 {strides = array<i32>} : memref<288x288xf32, #tpu.memory_space<vmem>>, vector<16x24xf32>,
    %c0_341 = arith.constant 0 : index
    %c7_342 = arith.constant 7 : index
    %284 = vector.load %arg32[%c0_341, %c7_342] : memref<16x42xf32, #tpu.memory_space<vmem>>, vector<16x24xf32>
    %c32_343 = arith.constant 32 : index
    %c0_344 = arith.constant 0 : index
    %285 = vector.load %arg34[%c32_343, %c0_344] : memref<288x288xf32, #tpu.memory_space<vmem>>, vector<16x24xf32>
    tpu.vector_store %arg34[%c32_343, %c0_344], %284 {strides = array<i32>} : memref<288x288xf32, #tpu.memory_space<vmem>>, vector<16x24xf32>,
    %c0_345 = arith.constant 0 : index
    %c8_346 = arith.constant 8 : index
    %286 = vector.load %arg32[%c0_345, %c8_346] : memref<16x42xf32, #tpu.memory_space<vmem>>, vector<16x24xf32>
    %c48_347 = arith.constant 48 : index
    %c0_348 = arith.constant 0 : index
    %287 = vector.load %arg34[%c48_347, %c0_348] : memref<288x288xf32, #tpu.memory_space<vmem>>, vector<16x24xf32>
    tpu.vector_store %arg34[%c48_347, %c0_348], %286 {strides = array<i32>} : memref<288x288xf32, #tpu.memory_space<vmem>>, vector<16x24xf32>,
    %c1_349 = arith.constant 1 : index
    %c0_350 = arith.constant 0 : index
    %c0_351 = arith.constant 0 : index
    %288 = vector.load %arg15[%c1_349, %c0_350, %c0_351] : memref<4x16x64xf32, #tpu.memory_space<vmem>>, vector<1x16x64xf32>
    %289 = vector.shape_cast %288 : vector<1x16x64xf32> to vector<16x64xf32>
    %c0_352 = arith.constant 0 : index
    %c0_353 = arith.constant 0 : index
    %290 = vector.load %arg34[%c0_352, %c0_353] : memref<288x288xf32, #tpu.memory_space<vmem>>, vector<64x24xf32>
    %cst_354 = arith.constant dense<0.000000e+00> : vector<16x24xf32>
    %291 = tpu.matmul %289, %290, %cst_354 {dimension_numbers = #tpu.dot_dimension_numbers<[1], [0], [0], [1], [0, 0, 1, 1], [], []>} : vector<16x64xf32>, vector<64x24xf32>, vector<16x24xf32> -> vector<16x24xf32>
    %292 = vector.extract_strided_slice %279 {offsets = [0, 0], sizes = [16, 4], strides = [1, 1]} : vector<16x24xf32> to vector<16x4xf32>
    %293 = vector.extract_strided_slice %291 {offsets = [0, 0], sizes = [16, 4], strides = [1, 1]} : vector<16x24xf32> to vector<16x4xf32>
    %294 = vector.extract_strided_slice %267 {offsets = [0, 0, 0], sizes = [1, 4, 10], strides = [1, 1, 1]} : vector<2x4x10xf32> to vector<1x4x10xf32>
    %295 = vector.shape_cast %294 : vector<1x4x10xf32> to vector<4x10xf32>
    %cst_355 = arith.constant dense<0.000000e+00> : vector<16x10xf32>
    %296 = tpu.matmul %292, %295, %cst_355 {dimension_numbers = #tpu.dot_dimension_numbers<[1], [0], [0], [1], [0, 0, 1, 1], [], []>} : vector<16x4xf32>, vector<4x10xf32>, vector<16x10xf32> -> vector<16x10xf32>
    %297 = vector.extract_strided_slice %267 {offsets = [1, 0, 0], sizes = [1, 4, 10], strides = [1, 1, 1]} : vector<2x4x10xf32> to vector<1x4x10xf32>
    %298 = vector.shape_cast %297 : vector<1x4x10xf32> to vector<4x10xf32>
    %cst_356 = arith.constant dense<0.000000e+00> : vector<16x10xf32>
    %299 = tpu.matmul %293, %298, %cst_356 {dimension_numbers = #tpu.dot_dimension_numbers<[1], [0], [0], [1], [0, 0, 1, 1], [], []>} : vector<16x4xf32>, vector<4x10xf32>, vector<16x10xf32> -> vector<16x10xf32>
    %300 = arith.addf %296, %299 : vector<16x10xf32>
    %c0_357 = arith.constant 0 : index
    %c10_358 = arith.constant 10 : index
    %301 = vector.load %arg29[%c0_357, %c10_358] : memref<16x110xf32, #tpu.memory_space<vmem>>, vector<16x10xf32>
    tpu.vector_store %arg29[%c0_357, %c10_358], %300 {strides = array<i32>} : memref<16x110xf32, #tpu.memory_space<vmem>>, vector<16x10xf32>,
    %302 = vector.extract_strided_slice %279 {offsets = [0, 6], sizes = [16, 4], strides = [1, 1]} : vector<16x24xf32> to vector<16x4xf32>
    %303 = vector.extract_strided_slice %291 {offsets = [0, 6], sizes = [16, 4], strides = [1, 1]} : vector<16x24xf32> to vector<16x4xf32>
    %304 = vector.extract_strided_slice %267 {offsets = [0, 0, 0], sizes = [1, 4, 10], strides = [1, 1, 1]} : vector<2x4x10xf32> to vector<1x4x10xf32>
    %305 = vector.shape_cast %304 : vector<1x4x10xf32> to vector<4x10xf32>
    %cst_359 = arith.constant dense<0.000000e+00> : vector<16x10xf32>
    %306 = tpu.matmul %302, %305, %cst_359 {dimension_numbers = #tpu.dot_dimension_numbers<[1], [0], [0], [1], [0, 0, 1, 1], [], []>} : vector<16x4xf32>, vector<4x10xf32>, vector<16x10xf32> -> vector<16x10xf32>
    %307 = vector.extract_strided_slice %267 {offsets = [1, 0, 0], sizes = [1, 4, 10], strides = [1, 1, 1]} : vector<2x4x10xf32> to vector<1x4x10xf32>
    %308 = vector.shape_cast %307 : vector<1x4x10xf32> to vector<4x10xf32>
    %cst_360 = arith.constant dense<0.000000e+00> : vector<16x10xf32>
    %309 = tpu.matmul %303, %308, %cst_360 {dimension_numbers = #tpu.dot_dimension_numbers<[1], [0], [0], [1], [0, 0, 1, 1], [], []>} : vector<16x4xf32>, vector<4x10xf32>, vector<16x10xf32> -> vector<16x10xf32>
    %310 = arith.addf %306, %309 : vector<16x10xf32>
    %c0_361 = arith.constant 0 : index
    %c30_362 = arith.constant 30 : index
    %311 = vector.load %arg29[%c0_361, %c30_362] : memref<16x110xf32, #tpu.memory_space<vmem>>, vector<16x10xf32>
    tpu.vector_store %arg29[%c0_361, %c30_362], %310 {strides = array<i32>} : memref<16x110xf32, #tpu.memory_space<vmem>>, vector<16x10xf32>,
    %312 = vector.extract_strided_slice %279 {offsets = [0, 12], sizes = [16, 4], strides = [1, 1]} : vector<16x24xf32> to vector<16x4xf32>
    %313 = vector.extract_strided_slice %291 {offsets = [0, 12], sizes = [16, 4], strides = [1, 1]} : vector<16x24xf32> to vector<16x4xf32>
    %314 = vector.extract_strided_slice %267 {offsets = [0, 0, 0], sizes = [1, 4, 10], strides = [1, 1, 1]} : vector<2x4x10xf32> to vector<1x4x10xf32>
    %315 = vector.shape_cast %314 : vector<1x4x10xf32> to vector<4x10xf32>
    %cst_363 = arith.constant dense<0.000000e+00> : vector<16x10xf32>
    %316 = tpu.matmul %312, %315, %cst_363 {dimension_numbers = #tpu.dot_dimension_numbers<[1], [0], [0], [1], [0, 0, 1, 1], [], []>} : vector<16x4xf32>, vector<4x10xf32>, vector<16x10xf32> -> vector<16x10xf32>
    %317 = vector.extract_strided_slice %267 {offsets = [1, 0, 0], sizes = [1, 4, 10], strides = [1, 1, 1]} : vector<2x4x10xf32> to vector<1x4x10xf32>
    %318 = vector.shape_cast %317 : vector<1x4x10xf32> to vector<4x10xf32>
    %cst_364 = arith.constant dense<0.000000e+00> : vector<16x10xf32>
    %319 = tpu.matmul %313, %318, %cst_364 {dimension_numbers = #tpu.dot_dimension_numbers<[1], [0], [0], [1], [0, 0, 1, 1], [], []>} : vector<16x4xf32>, vector<4x10xf32>, vector<16x10xf32> -> vector<16x10xf32>
    %320 = arith.addf %316, %319 : vector<16x10xf32>
    %c0_365 = arith.constant 0 : index
    %c50_366 = arith.constant 50 : index
    %321 = vector.load %arg29[%c0_365, %c50_366] : memref<16x110xf32, #tpu.memory_space<vmem>>, vector<16x10xf32>
    tpu.vector_store %arg29[%c0_365, %c50_366], %320 {strides = array<i32>} : memref<16x110xf32, #tpu.memory_space<vmem>>, vector<16x10xf32>,
    %322 = vector.extract_strided_slice %279 {offsets = [0, 18], sizes = [16, 4], strides = [1, 1]} : vector<16x24xf32> to vector<16x4xf32>
    %323 = vector.extract_strided_slice %291 {offsets = [0, 18], sizes = [16, 4], strides = [1, 1]} : vector<16x24xf32> to vector<16x4xf32>
    %324 = vector.extract_strided_slice %267 {offsets = [0, 0, 0], sizes = [1, 4, 10], strides = [1, 1, 1]} : vector<2x4x10xf32> to vector<1x4x10xf32>
    %325 = vector.shape_cast %324 : vector<1x4x10xf32> to vector<4x10xf32>
    %cst_367 = arith.constant dense<0.000000e+00> : vector<16x10xf32>
    %326 = tpu.matmul %322, %325, %cst_367 {dimension_numbers = #tpu.dot_dimension_numbers<[1], [0], [0], [1], [0, 0, 1, 1], [], []>} : vector<16x4xf32>, vector<4x10xf32>, vector<16x10xf32> -> vector<16x10xf32>
    %327 = vector.extract_strided_slice %267 {offsets = [1, 0, 0], sizes = [1, 4, 10], strides = [1, 1, 1]} : vector<2x4x10xf32> to vector<1x4x10xf32>
    %328 = vector.shape_cast %327 : vector<1x4x10xf32> to vector<4x10xf32>
    %cst_368 = arith.constant dense<0.000000e+00> : vector<16x10xf32>
    %329 = tpu.matmul %323, %328, %cst_368 {dimension_numbers = #tpu.dot_dimension_numbers<[1], [0], [0], [1], [0, 0, 1, 1], [], []>} : vector<16x4xf32>, vector<4x10xf32>, vector<16x10xf32> -> vector<16x10xf32>
    %330 = arith.addf %326, %329 : vector<16x10xf32>
    %c0_369 = arith.constant 0 : index
    %c70_370 = arith.constant 70 : index
    %331 = vector.load %arg29[%c0_369, %c70_370] : memref<16x110xf32, #tpu.memory_space<vmem>>, vector<16x10xf32>
    tpu.vector_store %arg29[%c0_369, %c70_370], %330 {strides = array<i32>} : memref<16x110xf32, #tpu.memory_space<vmem>>, vector<16x10xf32>,
    %c0_371 = arith.constant 0 : index
    %c6_372 = arith.constant 6 : index
    %332 = vector.load %arg32[%c0_371, %c6_372] : memref<16x42xf32, #tpu.memory_space<vmem>>, vector<16x24xf32>
    %c0_373 = arith.constant 0 : index
    %c0_374 = arith.constant 0 : index
    %333 = vector.load %arg34[%c0_373, %c0_374] : memref<288x288xf32, #tpu.memory_space<vmem>>, vector<16x24xf32>
    tpu.vector_store %arg34[%c0_373, %c0_374], %332 {strides = array<i32>} : memref<288x288xf32, #tpu.memory_space<vmem>>, vector<16x24xf32>,
    %c0_375 = arith.constant 0 : index
    %c7_376 = arith.constant 7 : index
    %334 = vector.load %arg32[%c0_375, %c7_376] : memref<16x42xf32, #tpu.memory_space<vmem>>, vector<16x24xf32>
    %c16_377 = arith.constant 16 : index
    %c0_378 = arith.constant 0 : index
    %335 = vector.load %arg34[%c16_377, %c0_378] : memref<288x288xf32, #tpu.memory_space<vmem>>, vector<16x24xf32>
    tpu.vector_store %arg34[%c16_377, %c0_378], %334 {strides = array<i32>} : memref<288x288xf32, #tpu.memory_space<vmem>>, vector<16x24xf32>,
    %c0_379 = arith.constant 0 : index
    %c12_380 = arith.constant 12 : index
    %336 = vector.load %arg32[%c0_379, %c12_380] : memref<16x42xf32, #tpu.memory_space<vmem>>, vector<16x24xf32>
    %c32_381 = arith.constant 32 : index
    %c0_382 = arith.constant 0 : index
    %337 = vector.load %arg34[%c32_381, %c0_382] : memref<288x288xf32, #tpu.memory_space<vmem>>, vector<16x24xf32>
    tpu.vector_store %arg34[%c32_381, %c0_382], %336 {strides = array<i32>} : memref<288x288xf32, #tpu.memory_space<vmem>>, vector<16x24xf32>,
    %c0_383 = arith.constant 0 : index
    %c13 = arith.constant 13 : index
    %338 = vector.load %arg32[%c0_383, %c13] : memref<16x42xf32, #tpu.memory_space<vmem>>, vector<16x24xf32>
    %c48_384 = arith.constant 48 : index
    %c0_385 = arith.constant 0 : index
    %339 = vector.load %arg34[%c48_384, %c0_385] : memref<288x288xf32, #tpu.memory_space<vmem>>, vector<16x24xf32>
    tpu.vector_store %arg34[%c48_384, %c0_385], %338 {strides = array<i32>} : memref<288x288xf32, #tpu.memory_space<vmem>>, vector<16x24xf32>,
    %c2_386 = arith.constant 2 : index
    %c0_387 = arith.constant 0 : index
    %c0_388 = arith.constant 0 : index
    %340 = vector.load %arg15[%c2_386, %c0_387, %c0_388] : memref<4x16x64xf32, #tpu.memory_space<vmem>>, vector<1x16x64xf32>
    %341 = vector.shape_cast %340 : vector<1x16x64xf32> to vector<16x64xf32>
    %c0_389 = arith.constant 0 : index
    %c0_390 = arith.constant 0 : index
    %342 = vector.load %arg34[%c0_389, %c0_390] : memref<288x288xf32, #tpu.memory_space<vmem>>, vector<64x24xf32>
    %cst_391 = arith.constant dense<0.000000e+00> : vector<16x24xf32>
    %343 = tpu.matmul %341, %342, %cst_391 {dimension_numbers = #tpu.dot_dimension_numbers<[1], [0], [0], [1], [0, 0, 1, 1], [], []>} : vector<16x64xf32>, vector<64x24xf32>, vector<16x24xf32> -> vector<16x24xf32>
    %c0_392 = arith.constant 0 : index
    %c7_393 = arith.constant 7 : index
    %344 = vector.load %arg32[%c0_392, %c7_393] : memref<16x42xf32, #tpu.memory_space<vmem>>, vector<16x24xf32>
    %c0_394 = arith.constant 0 : index
    %c0_395 = arith.constant 0 : index
    %345 = vector.load %arg34[%c0_394, %c0_395] : memref<288x288xf32, #tpu.memory_space<vmem>>, vector<16x24xf32>
    tpu.vector_store %arg34[%c0_394, %c0_395], %344 {strides = array<i32>} : memref<288x288xf32, #tpu.memory_space<vmem>>, vector<16x24xf32>,
    %c0_396 = arith.constant 0 : index
    %c8_397 = arith.constant 8 : index
    %346 = vector.load %arg32[%c0_396, %c8_397] : memref<16x42xf32, #tpu.memory_space<vmem>>, vector<16x24xf32>
    %c16_398 = arith.constant 16 : index
    %c0_399 = arith.constant 0 : index
    %347 = vector.load %arg34[%c16_398, %c0_399] : memref<288x288xf32, #tpu.memory_space<vmem>>, vector<16x24xf32>
    tpu.vector_store %arg34[%c16_398, %c0_399], %346 {strides = array<i32>} : memref<288x288xf32, #tpu.memory_space<vmem>>, vector<16x24xf32>,
    %c0_400 = arith.constant 0 : index
    %c13_401 = arith.constant 13 : index
    %348 = vector.load %arg32[%c0_400, %c13_401] : memref<16x42xf32, #tpu.memory_space<vmem>>, vector<16x24xf32>
    %c32_402 = arith.constant 32 : index
    %c0_403 = arith.constant 0 : index
    %349 = vector.load %arg34[%c32_402, %c0_403] : memref<288x288xf32, #tpu.memory_space<vmem>>, vector<16x24xf32>
    tpu.vector_store %arg34[%c32_402, %c0_403], %348 {strides = array<i32>} : memref<288x288xf32, #tpu.memory_space<vmem>>, vector<16x24xf32>,
    %c0_404 = arith.constant 0 : index
    %c14 = arith.constant 14 : index
    %350 = vector.load %arg32[%c0_404, %c14] : memref<16x42xf32, #tpu.memory_space<vmem>>, vector<16x24xf32>
    %c48_405 = arith.constant 48 : index
    %c0_406 = arith.constant 0 : index
    %351 = vector.load %arg34[%c48_405, %c0_406] : memref<288x288xf32, #tpu.memory_space<vmem>>, vector<16x24xf32>
    tpu.vector_store %arg34[%c48_405, %c0_406], %350 {strides = array<i32>} : memref<288x288xf32, #tpu.memory_space<vmem>>, vector<16x24xf32>,
    %c3_407 = arith.constant 3 : index
    %c0_408 = arith.constant 0 : index
    %c0_409 = arith.constant 0 : index
    %352 = vector.load %arg15[%c3_407, %c0_408, %c0_409] : memref<4x16x64xf32, #tpu.memory_space<vmem>>, vector<1x16x64xf32>
    %353 = vector.shape_cast %352 : vector<1x16x64xf32> to vector<16x64xf32>
    %c0_410 = arith.constant 0 : index
    %c0_411 = arith.constant 0 : index
    %354 = vector.load %arg34[%c0_410, %c0_411] : memref<288x288xf32, #tpu.memory_space<vmem>>, vector<64x24xf32>
    %cst_412 = arith.constant dense<0.000000e+00> : vector<16x24xf32>
    %355 = tpu.matmul %353, %354, %cst_412 {dimension_numbers = #tpu.dot_dimension_numbers<[1], [0], [0], [1], [0, 0, 1, 1], [], []>} : vector<16x64xf32>, vector<64x24xf32>, vector<16x24xf32> -> vector<16x24xf32>
    %356 = vector.extract_strided_slice %343 {offsets = [0, 0], sizes = [16, 4], strides = [1, 1]} : vector<16x24xf32> to vector<16x4xf32>
    %357 = vector.extract_strided_slice %355 {offsets = [0, 0], sizes = [16, 4], strides = [1, 1]} : vector<16x24xf32> to vector<16x4xf32>
    %358 = vector.extract_strided_slice %267 {offsets = [0, 0, 0], sizes = [1, 4, 10], strides = [1, 1, 1]} : vector<2x4x10xf32> to vector<1x4x10xf32>
    %359 = vector.shape_cast %358 : vector<1x4x10xf32> to vector<4x10xf32>
    %cst_413 = arith.constant dense<0.000000e+00> : vector<16x10xf32>
    %360 = tpu.matmul %356, %359, %cst_413 {dimension_numbers = #tpu.dot_dimension_numbers<[1], [0], [0], [1], [0, 0, 1, 1], [], []>} : vector<16x4xf32>, vector<4x10xf32>, vector<16x10xf32> -> vector<16x10xf32>
    %361 = vector.extract_strided_slice %267 {offsets = [1, 0, 0], sizes = [1, 4, 10], strides = [1, 1, 1]} : vector<2x4x10xf32> to vector<1x4x10xf32>
    %362 = vector.shape_cast %361 : vector<1x4x10xf32> to vector<4x10xf32>
    %cst_414 = arith.constant dense<0.000000e+00> : vector<16x10xf32>
    %363 = tpu.matmul %357, %362, %cst_414 {dimension_numbers = #tpu.dot_dimension_numbers<[1], [0], [0], [1], [0, 0, 1, 1], [], []>} : vector<16x4xf32>, vector<4x10xf32>, vector<16x10xf32> -> vector<16x10xf32>
    %364 = arith.addf %360, %363 : vector<16x10xf32>
    %c0_415 = arith.constant 0 : index
    %c20_416 = arith.constant 20 : index
    %365 = vector.load %arg29[%c0_415, %c20_416] : memref<16x110xf32, #tpu.memory_space<vmem>>, vector<16x10xf32>
    tpu.vector_store %arg29[%c0_415, %c20_416], %364 {strides = array<i32>} : memref<16x110xf32, #tpu.memory_space<vmem>>, vector<16x10xf32>,
    %366 = vector.extract_strided_slice %343 {offsets = [0, 6], sizes = [16, 4], strides = [1, 1]} : vector<16x24xf32> to vector<16x4xf32>
    %367 = vector.extract_strided_slice %355 {offsets = [0, 6], sizes = [16, 4], strides = [1, 1]} : vector<16x24xf32> to vector<16x4xf32>
    %368 = vector.extract_strided_slice %267 {offsets = [0, 0, 0], sizes = [1, 4, 10], strides = [1, 1, 1]} : vector<2x4x10xf32> to vector<1x4x10xf32>
    %369 = vector.shape_cast %368 : vector<1x4x10xf32> to vector<4x10xf32>
    %cst_417 = arith.constant dense<0.000000e+00> : vector<16x10xf32>
    %370 = tpu.matmul %366, %369, %cst_417 {dimension_numbers = #tpu.dot_dimension_numbers<[1], [0], [0], [1], [0, 0, 1, 1], [], []>} : vector<16x4xf32>, vector<4x10xf32>, vector<16x10xf32> -> vector<16x10xf32>
    %371 = vector.extract_strided_slice %267 {offsets = [1, 0, 0], sizes = [1, 4, 10], strides = [1, 1, 1]} : vector<2x4x10xf32> to vector<1x4x10xf32>
    %372 = vector.shape_cast %371 : vector<1x4x10xf32> to vector<4x10xf32>
    %cst_418 = arith.constant dense<0.000000e+00> : vector<16x10xf32>
    %373 = tpu.matmul %367, %372, %cst_418 {dimension_numbers = #tpu.dot_dimension_numbers<[1], [0], [0], [1], [0, 0, 1, 1], [], []>} : vector<16x4xf32>, vector<4x10xf32>, vector<16x10xf32> -> vector<16x10xf32>
    %374 = arith.addf %370, %373 : vector<16x10xf32>
    %c0_419 = arith.constant 0 : index
    %c40_420 = arith.constant 40 : index
    %375 = vector.load %arg29[%c0_419, %c40_420] : memref<16x110xf32, #tpu.memory_space<vmem>>, vector<16x10xf32>
    tpu.vector_store %arg29[%c0_419, %c40_420], %374 {strides = array<i32>} : memref<16x110xf32, #tpu.memory_space<vmem>>, vector<16x10xf32>,
    %376 = vector.extract_strided_slice %343 {offsets = [0, 12], sizes = [16, 4], strides = [1, 1]} : vector<16x24xf32> to vector<16x4xf32>
    %377 = vector.extract_strided_slice %355 {offsets = [0, 12], sizes = [16, 4], strides = [1, 1]} : vector<16x24xf32> to vector<16x4xf32>
    %378 = vector.extract_strided_slice %267 {offsets = [0, 0, 0], sizes = [1, 4, 10], strides = [1, 1, 1]} : vector<2x4x10xf32> to vector<1x4x10xf32>
    %379 = vector.shape_cast %378 : vector<1x4x10xf32> to vector<4x10xf32>
    %cst_421 = arith.constant dense<0.000000e+00> : vector<16x10xf32>
    %380 = tpu.matmul %376, %379, %cst_421 {dimension_numbers = #tpu.dot_dimension_numbers<[1], [0], [0], [1], [0, 0, 1, 1], [], []>} : vector<16x4xf32>, vector<4x10xf32>, vector<16x10xf32> -> vector<16x10xf32>
    %381 = vector.extract_strided_slice %267 {offsets = [1, 0, 0], sizes = [1, 4, 10], strides = [1, 1, 1]} : vector<2x4x10xf32> to vector<1x4x10xf32>
    %382 = vector.shape_cast %381 : vector<1x4x10xf32> to vector<4x10xf32>
    %cst_422 = arith.constant dense<0.000000e+00> : vector<16x10xf32>
    %383 = tpu.matmul %377, %382, %cst_422 {dimension_numbers = #tpu.dot_dimension_numbers<[1], [0], [0], [1], [0, 0, 1, 1], [], []>} : vector<16x4xf32>, vector<4x10xf32>, vector<16x10xf32> -> vector<16x10xf32>
    %384 = arith.addf %380, %383 : vector<16x10xf32>
    %c0_423 = arith.constant 0 : index
    %c60_424 = arith.constant 60 : index
    %385 = vector.load %arg29[%c0_423, %c60_424] : memref<16x110xf32, #tpu.memory_space<vmem>>, vector<16x10xf32>
    tpu.vector_store %arg29[%c0_423, %c60_424], %384 {strides = array<i32>} : memref<16x110xf32, #tpu.memory_space<vmem>>, vector<16x10xf32>,
    %386 = vector.extract_strided_slice %343 {offsets = [0, 18], sizes = [16, 4], strides = [1, 1]} : vector<16x24xf32> to vector<16x4xf32>
    %387 = vector.extract_strided_slice %355 {offsets = [0, 18], sizes = [16, 4], strides = [1, 1]} : vector<16x24xf32> to vector<16x4xf32>
    %388 = vector.extract_strided_slice %267 {offsets = [0, 0, 0], sizes = [1, 4, 10], strides = [1, 1, 1]} : vector<2x4x10xf32> to vector<1x4x10xf32>
    %389 = vector.shape_cast %388 : vector<1x4x10xf32> to vector<4x10xf32>
    %cst_425 = arith.constant dense<0.000000e+00> : vector<16x10xf32>
    %390 = tpu.matmul %386, %389, %cst_425 {dimension_numbers = #tpu.dot_dimension_numbers<[1], [0], [0], [1], [0, 0, 1, 1], [], []>} : vector<16x4xf32>, vector<4x10xf32>, vector<16x10xf32> -> vector<16x10xf32>
    %391 = vector.extract_strided_slice %267 {offsets = [1, 0, 0], sizes = [1, 4, 10], strides = [1, 1, 1]} : vector<2x4x10xf32> to vector<1x4x10xf32>
    %392 = vector.shape_cast %391 : vector<1x4x10xf32> to vector<4x10xf32>
    %cst_426 = arith.constant dense<0.000000e+00> : vector<16x10xf32>
    %393 = tpu.matmul %387, %392, %cst_426 {dimension_numbers = #tpu.dot_dimension_numbers<[1], [0], [0], [1], [0, 0, 1, 1], [], []>} : vector<16x4xf32>, vector<4x10xf32>, vector<16x10xf32> -> vector<16x10xf32>
    %394 = arith.addf %390, %393 : vector<16x10xf32>
    %c0_427 = arith.constant 0 : index
    %c80_428 = arith.constant 80 : index
    %395 = vector.load %arg29[%c0_427, %c80_428] : memref<16x110xf32, #tpu.memory_space<vmem>>, vector<16x10xf32>
    tpu.vector_store %arg29[%c0_427, %c80_428], %394 {strides = array<i32>} : memref<16x110xf32, #tpu.memory_space<vmem>>, vector<16x10xf32>,
    %c0_429 = arith.constant 0 : index
    %c0_430 = arith.constant 0 : index
    %396 = vector.load %arg29[%c0_429, %c0_430] : memref<16x110xf32, #tpu.memory_space<vmem>>, vector<16x80xf32>
    %c0_431 = arith.constant 0 : index
    %c0_432 = arith.constant 0 : index
    %397 = vector.load %arg34[%c0_431, %c0_432] : memref<288x288xf32, #tpu.memory_space<vmem>>, vector<16x80xf32>
    tpu.vector_store %arg34[%c0_431, %c0_432], %396 {strides = array<i32>} : memref<288x288xf32, #tpu.memory_space<vmem>>, vector<16x80xf32>,
    %c0_433 = arith.constant 0 : index
    %c1_434 = arith.constant 1 : index
    %398 = vector.load %arg29[%c0_433, %c1_434] : memref<16x110xf32, #tpu.memory_space<vmem>>, vector<16x80xf32>
    %c16_435 = arith.constant 16 : index
    %c0_436 = arith.constant 0 : index
    %399 = vector.load %arg34[%c16_435, %c0_436] : memref<288x288xf32, #tpu.memory_space<vmem>>, vector<16x80xf32>
    tpu.vector_store %arg34[%c16_435, %c0_436], %398 {strides = array<i32>} : memref<288x288xf32, #tpu.memory_space<vmem>>, vector<16x80xf32>,
    %c0_437 = arith.constant 0 : index
    %c2_438 = arith.constant 2 : index
    %400 = vector.load %arg29[%c0_437, %c2_438] : memref<16x110xf32, #tpu.memory_space<vmem>>, vector<16x80xf32>
    %c32_439 = arith.constant 32 : index
    %c0_440 = arith.constant 0 : index
    %401 = vector.load %arg34[%c32_439, %c0_440] : memref<288x288xf32, #tpu.memory_space<vmem>>, vector<16x80xf32>
    tpu.vector_store %arg34[%c32_439, %c0_440], %400 {strides = array<i32>} : memref<288x288xf32, #tpu.memory_space<vmem>>, vector<16x80xf32>,
    %c0_441 = arith.constant 0 : index
    %c10_442 = arith.constant 10 : index
    %402 = vector.load %arg29[%c0_441, %c10_442] : memref<16x110xf32, #tpu.memory_space<vmem>>, vector<16x80xf32>
    %c48_443 = arith.constant 48 : index
    %c0_444 = arith.constant 0 : index
    %403 = vector.load %arg34[%c48_443, %c0_444] : memref<288x288xf32, #tpu.memory_space<vmem>>, vector<16x80xf32>
    tpu.vector_store %arg34[%c48_443, %c0_444], %402 {strides = array<i32>} : memref<288x288xf32, #tpu.memory_space<vmem>>, vector<16x80xf32>,
    %c0_445 = arith.constant 0 : index
    %c11_446 = arith.constant 11 : index
    %404 = vector.load %arg29[%c0_445, %c11_446] : memref<16x110xf32, #tpu.memory_space<vmem>>, vector<16x80xf32>
    %c64_447 = arith.constant 64 : index
    %c0_448 = arith.constant 0 : index
    %405 = vector.load %arg34[%c64_447, %c0_448] : memref<288x288xf32, #tpu.memory_space<vmem>>, vector<16x80xf32>
    tpu.vector_store %arg34[%c64_447, %c0_448], %404 {strides = array<i32>} : memref<288x288xf32, #tpu.memory_space<vmem>>, vector<16x80xf32>,
    %c0_449 = arith.constant 0 : index
    %c12_450 = arith.constant 12 : index
    %406 = vector.load %arg29[%c0_449, %c12_450] : memref<16x110xf32, #tpu.memory_space<vmem>>, vector<16x80xf32>
    %c80_451 = arith.constant 80 : index
    %c0_452 = arith.constant 0 : index
    %407 = vector.load %arg34[%c80_451, %c0_452] : memref<288x288xf32, #tpu.memory_space<vmem>>, vector<16x80xf32>
    tpu.vector_store %arg34[%c80_451, %c0_452], %406 {strides = array<i32>} : memref<288x288xf32, #tpu.memory_space<vmem>>, vector<16x80xf32>,
    %c0_453 = arith.constant 0 : index
    %c20_454 = arith.constant 20 : index
    %408 = vector.load %arg29[%c0_453, %c20_454] : memref<16x110xf32, #tpu.memory_space<vmem>>, vector<16x80xf32>
    %c96_455 = arith.constant 96 : index
    %c0_456 = arith.constant 0 : index
    %409 = vector.load %arg34[%c96_455, %c0_456] : memref<288x288xf32, #tpu.memory_space<vmem>>, vector<16x80xf32>
    tpu.vector_store %arg34[%c96_455, %c0_456], %408 {strides = array<i32>} : memref<288x288xf32, #tpu.memory_space<vmem>>, vector<16x80xf32>,
    %c0_457 = arith.constant 0 : index
    %c21_458 = arith.constant 21 : index
    %410 = vector.load %arg29[%c0_457, %c21_458] : memref<16x110xf32, #tpu.memory_space<vmem>>, vector<16x80xf32>
    %c112_459 = arith.constant 112 : index
    %c0_460 = arith.constant 0 : index
    %411 = vector.load %arg34[%c112_459, %c0_460] : memref<288x288xf32, #tpu.memory_space<vmem>>, vector<16x80xf32>
    tpu.vector_store %arg34[%c112_459, %c0_460], %410 {strides = array<i32>} : memref<288x288xf32, #tpu.memory_space<vmem>>, vector<16x80xf32>,
    %c0_461 = arith.constant 0 : index
    %c22_462 = arith.constant 22 : index
    %412 = vector.load %arg29[%c0_461, %c22_462] : memref<16x110xf32, #tpu.memory_space<vmem>>, vector<16x80xf32>
    %c128_463 = arith.constant 128 : index
    %c0_464 = arith.constant 0 : index
    %413 = vector.load %arg34[%c128_463, %c0_464] : memref<288x288xf32, #tpu.memory_space<vmem>>, vector<16x80xf32>
    tpu.vector_store %arg34[%c128_463, %c0_464], %412 {strides = array<i32>} : memref<288x288xf32, #tpu.memory_space<vmem>>, vector<16x80xf32>,
    %c0_465 = arith.constant 0 : index
    %c0_466 = arith.constant 0 : index
    %414 = vector.load %arg31[%c0_465, %c0_466] : memref<16x110xf32, #tpu.memory_space<vmem>>, vector<16x80xf32>
    %c144_467 = arith.constant 144 : index
    %c0_468 = arith.constant 0 : index
    %415 = vector.load %arg34[%c144_467, %c0_468] : memref<288x288xf32, #tpu.memory_space<vmem>>, vector<16x80xf32>
    tpu.vector_store %arg34[%c144_467, %c0_468], %414 {strides = array<i32>} : memref<288x288xf32, #tpu.memory_space<vmem>>, vector<16x80xf32>,
    %c0_469 = arith.constant 0 : index
    %c1_470 = arith.constant 1 : index
    %416 = vector.load %arg31[%c0_469, %c1_470] : memref<16x110xf32, #tpu.memory_space<vmem>>, vector<16x80xf32>
    %c160 = arith.constant 160 : index
    %c0_471 = arith.constant 0 : index
    %417 = vector.load %arg34[%c160, %c0_471] : memref<288x288xf32, #tpu.memory_space<vmem>>, vector<16x80xf32>
    tpu.vector_store %arg34[%c160, %c0_471], %416 {strides = array<i32>} : memref<288x288xf32, #tpu.memory_space<vmem>>, vector<16x80xf32>,
    %c0_472 = arith.constant 0 : index
    %c2_473 = arith.constant 2 : index
    %418 = vector.load %arg31[%c0_472, %c2_473] : memref<16x110xf32, #tpu.memory_space<vmem>>, vector<16x80xf32>
    %c176 = arith.constant 176 : index
    %c0_474 = arith.constant 0 : index
    %419 = vector.load %arg34[%c176, %c0_474] : memref<288x288xf32, #tpu.memory_space<vmem>>, vector<16x80xf32>
    tpu.vector_store %arg34[%c176, %c0_474], %418 {strides = array<i32>} : memref<288x288xf32, #tpu.memory_space<vmem>>, vector<16x80xf32>,
    %c0_475 = arith.constant 0 : index
    %c10_476 = arith.constant 10 : index
    %420 = vector.load %arg31[%c0_475, %c10_476] : memref<16x110xf32, #tpu.memory_space<vmem>>, vector<16x80xf32>
    %c192 = arith.constant 192 : index
    %c0_477 = arith.constant 0 : index
    %421 = vector.load %arg34[%c192, %c0_477] : memref<288x288xf32, #tpu.memory_space<vmem>>, vector<16x80xf32>
    tpu.vector_store %arg34[%c192, %c0_477], %420 {strides = array<i32>} : memref<288x288xf32, #tpu.memory_space<vmem>>, vector<16x80xf32>,
    %c0_478 = arith.constant 0 : index
    %c11_479 = arith.constant 11 : index
    %422 = vector.load %arg31[%c0_478, %c11_479] : memref<16x110xf32, #tpu.memory_space<vmem>>, vector<16x80xf32>
    %c208 = arith.constant 208 : index
    %c0_480 = arith.constant 0 : index
    %423 = vector.load %arg34[%c208, %c0_480] : memref<288x288xf32, #tpu.memory_space<vmem>>, vector<16x80xf32>
    tpu.vector_store %arg34[%c208, %c0_480], %422 {strides = array<i32>} : memref<288x288xf32, #tpu.memory_space<vmem>>, vector<16x80xf32>,
    %c0_481 = arith.constant 0 : index
    %c12_482 = arith.constant 12 : index
    %424 = vector.load %arg31[%c0_481, %c12_482] : memref<16x110xf32, #tpu.memory_space<vmem>>, vector<16x80xf32>
    %c224 = arith.constant 224 : index
    %c0_483 = arith.constant 0 : index
    %425 = vector.load %arg34[%c224, %c0_483] : memref<288x288xf32, #tpu.memory_space<vmem>>, vector<16x80xf32>
    tpu.vector_store %arg34[%c224, %c0_483], %424 {strides = array<i32>} : memref<288x288xf32, #tpu.memory_space<vmem>>, vector<16x80xf32>,
    %c0_484 = arith.constant 0 : index
    %c20_485 = arith.constant 20 : index
    %426 = vector.load %arg31[%c0_484, %c20_485] : memref<16x110xf32, #tpu.memory_space<vmem>>, vector<16x80xf32>
    %c240 = arith.constant 240 : index
    %c0_486 = arith.constant 0 : index
    %427 = vector.load %arg34[%c240, %c0_486] : memref<288x288xf32, #tpu.memory_space<vmem>>, vector<16x80xf32>
    tpu.vector_store %arg34[%c240, %c0_486], %426 {strides = array<i32>} : memref<288x288xf32, #tpu.memory_space<vmem>>, vector<16x80xf32>,
    %c0_487 = arith.constant 0 : index
    %c21_488 = arith.constant 21 : index
    %428 = vector.load %arg31[%c0_487, %c21_488] : memref<16x110xf32, #tpu.memory_space<vmem>>, vector<16x80xf32>
    %c256 = arith.constant 256 : index
    %c0_489 = arith.constant 0 : index
    %429 = vector.load %arg34[%c256, %c0_489] : memref<288x288xf32, #tpu.memory_space<vmem>>, vector<16x80xf32>
    tpu.vector_store %arg34[%c256, %c0_489], %428 {strides = array<i32>} : memref<288x288xf32, #tpu.memory_space<vmem>>, vector<16x80xf32>,
    %c0_490 = arith.constant 0 : index
    %c22_491 = arith.constant 22 : index
    %430 = vector.load %arg31[%c0_490, %c22_491] : memref<16x110xf32, #tpu.memory_space<vmem>>, vector<16x80xf32>
    %c272 = arith.constant 272 : index
    %c0_492 = arith.constant 0 : index
    %431 = vector.load %arg34[%c272, %c0_492] : memref<288x288xf32, #tpu.memory_space<vmem>>, vector<16x80xf32>
    tpu.vector_store %arg34[%c272, %c0_492], %430 {strides = array<i32>} : memref<288x288xf32, #tpu.memory_space<vmem>>, vector<16x80xf32>,
    %c0_493 = arith.constant 0 : index
    %c0_494 = arith.constant 0 : index
    %432 = vector.load %arg16[%c0_493, %c0_494] : memref<16x288xf32, #tpu.memory_space<vmem>>, vector<16x288xf32>
    %c0_495 = arith.constant 0 : index
    %c0_496 = arith.constant 0 : index
    %433 = vector.load %arg34[%c0_495, %c0_496] : memref<288x288xf32, #tpu.memory_space<vmem>>, vector<288x80xf32>
    %cst_497 = arith.constant dense<0.000000e+00> : vector<16x80xf32>
    %434 = tpu.matmul %432, %433, %cst_497 {dimension_numbers = #tpu.dot_dimension_numbers<[1], [0], [0], [1], [0, 0, 1, 1], [], []>} : vector<16x288xf32>, vector<288x80xf32>, vector<16x80xf32> -> vector<16x80xf32>
    %c0_498 = arith.constant 0 : index
    %c0_499 = arith.constant 0 : index
    %435 = vector.load %arg17[%c0_498, %c0_499] : memref<16x1xf32, #tpu.memory_space<vmem>>, vector<16x1xf32>
    %436 = vector.broadcast %435 : vector<16x1xf32> to vector<16x80xf32>
    %437 = arith.addf %434, %436 : vector<16x80xf32>
    %cst_500 = arith.constant 0.000000e+00 : f32
    %438 = vector.broadcast %cst_500 : f32 to vector<16x80xf32>
    %439 = arith.maximumf %437, %438 : vector<16x80xf32>
    %c0_501 = arith.constant 0 : index
    %c0_502 = arith.constant 0 : index
    %440 = vector.load %arg10[%c0_501, %c0_502] : memref<1x80xf32, #tpu.memory_space<vmem>>, vector<1x80xf32>
    %441 = vector.broadcast %440 : vector<1x80xf32> to vector<16x80xf32>
    %442 = arith.mulf %439, %441 : vector<16x80xf32>
    %c0_503 = arith.constant 0 : index
    %c11_504 = arith.constant 11 : index
    %443 = vector.load %arg30[%c0_503, %c11_504] : memref<16x110xf32, #tpu.memory_space<vmem>>, vector<16x80xf32>
    tpu.vector_store %arg30[%c0_503, %c11_504], %442 {strides = array<i32>} : memref<16x110xf32, #tpu.memory_space<vmem>>, vector<16x80xf32>,
    %c0_505 = arith.constant 0 : index
    %c0_506 = arith.constant 0 : index
    %444 = vector.load %arg30[%c0_505, %c0_506] : memref<16x110xf32, #tpu.memory_space<vmem>>, vector<16x80xf32>
    %c0_507 = arith.constant 0 : index
    %c0_508 = arith.constant 0 : index
    %445 = vector.load %arg34[%c0_507, %c0_508] : memref<288x288xf32, #tpu.memory_space<vmem>>, vector<16x80xf32>
    tpu.vector_store %arg34[%c0_507, %c0_508], %444 {strides = array<i32>} : memref<288x288xf32, #tpu.memory_space<vmem>>, vector<16x80xf32>,
    %c0_509 = arith.constant 0 : index
    %c1_510 = arith.constant 1 : index
    %446 = vector.load %arg30[%c0_509, %c1_510] : memref<16x110xf32, #tpu.memory_space<vmem>>, vector<16x80xf32>
    %c16_511 = arith.constant 16 : index
    %c0_512 = arith.constant 0 : index
    %447 = vector.load %arg34[%c16_511, %c0_512] : memref<288x288xf32, #tpu.memory_space<vmem>>, vector<16x80xf32>
    tpu.vector_store %arg34[%c16_511, %c0_512], %446 {strides = array<i32>} : memref<288x288xf32, #tpu.memory_space<vmem>>, vector<16x80xf32>,
    %c0_513 = arith.constant 0 : index
    %c2_514 = arith.constant 2 : index
    %448 = vector.load %arg30[%c0_513, %c2_514] : memref<16x110xf32, #tpu.memory_space<vmem>>, vector<16x80xf32>
    %c32_515 = arith.constant 32 : index
    %c0_516 = arith.constant 0 : index
    %449 = vector.load %arg34[%c32_515, %c0_516] : memref<288x288xf32, #tpu.memory_space<vmem>>, vector<16x80xf32>
    tpu.vector_store %arg34[%c32_515, %c0_516], %448 {strides = array<i32>} : memref<288x288xf32, #tpu.memory_space<vmem>>, vector<16x80xf32>,
    %c0_517 = arith.constant 0 : index
    %c10_518 = arith.constant 10 : index
    %450 = vector.load %arg30[%c0_517, %c10_518] : memref<16x110xf32, #tpu.memory_space<vmem>>, vector<16x80xf32>
    %c48_519 = arith.constant 48 : index
    %c0_520 = arith.constant 0 : index
    %451 = vector.load %arg34[%c48_519, %c0_520] : memref<288x288xf32, #tpu.memory_space<vmem>>, vector<16x80xf32>
    tpu.vector_store %arg34[%c48_519, %c0_520], %450 {strides = array<i32>} : memref<288x288xf32, #tpu.memory_space<vmem>>, vector<16x80xf32>,
    %c0_521 = arith.constant 0 : index
    %c11_522 = arith.constant 11 : index
    %452 = vector.load %arg30[%c0_521, %c11_522] : memref<16x110xf32, #tpu.memory_space<vmem>>, vector<16x80xf32>
    %c64_523 = arith.constant 64 : index
    %c0_524 = arith.constant 0 : index
    %453 = vector.load %arg34[%c64_523, %c0_524] : memref<288x288xf32, #tpu.memory_space<vmem>>, vector<16x80xf32>
    tpu.vector_store %arg34[%c64_523, %c0_524], %452 {strides = array<i32>} : memref<288x288xf32, #tpu.memory_space<vmem>>, vector<16x80xf32>,
    %c0_525 = arith.constant 0 : index
    %c12_526 = arith.constant 12 : index
    %454 = vector.load %arg30[%c0_525, %c12_526] : memref<16x110xf32, #tpu.memory_space<vmem>>, vector<16x80xf32>
    %c80_527 = arith.constant 80 : index
    %c0_528 = arith.constant 0 : index
    %455 = vector.load %arg34[%c80_527, %c0_528] : memref<288x288xf32, #tpu.memory_space<vmem>>, vector<16x80xf32>
    tpu.vector_store %arg34[%c80_527, %c0_528], %454 {strides = array<i32>} : memref<288x288xf32, #tpu.memory_space<vmem>>, vector<16x80xf32>,
    %c0_529 = arith.constant 0 : index
    %c20_530 = arith.constant 20 : index
    %456 = vector.load %arg30[%c0_529, %c20_530] : memref<16x110xf32, #tpu.memory_space<vmem>>, vector<16x80xf32>
    %c96_531 = arith.constant 96 : index
    %c0_532 = arith.constant 0 : index
    %457 = vector.load %arg34[%c96_531, %c0_532] : memref<288x288xf32, #tpu.memory_space<vmem>>, vector<16x80xf32>
    tpu.vector_store %arg34[%c96_531, %c0_532], %456 {strides = array<i32>} : memref<288x288xf32, #tpu.memory_space<vmem>>, vector<16x80xf32>,
    %c0_533 = arith.constant 0 : index
    %c21_534 = arith.constant 21 : index
    %458 = vector.load %arg30[%c0_533, %c21_534] : memref<16x110xf32, #tpu.memory_space<vmem>>, vector<16x80xf32>
    %c112_535 = arith.constant 112 : index
    %c0_536 = arith.constant 0 : index
    %459 = vector.load %arg34[%c112_535, %c0_536] : memref<288x288xf32, #tpu.memory_space<vmem>>, vector<16x80xf32>
    tpu.vector_store %arg34[%c112_535, %c0_536], %458 {strides = array<i32>} : memref<288x288xf32, #tpu.memory_space<vmem>>, vector<16x80xf32>,
    %c0_537 = arith.constant 0 : index
    %c22_538 = arith.constant 22 : index
    %460 = vector.load %arg30[%c0_537, %c22_538] : memref<16x110xf32, #tpu.memory_space<vmem>>, vector<16x80xf32>
    %c128_539 = arith.constant 128 : index
    %c0_540 = arith.constant 0 : index
    %461 = vector.load %arg34[%c128_539, %c0_540] : memref<288x288xf32, #tpu.memory_space<vmem>>, vector<16x80xf32>
    tpu.vector_store %arg34[%c128_539, %c0_540], %460 {strides = array<i32>} : memref<288x288xf32, #tpu.memory_space<vmem>>, vector<16x80xf32>,
    %c0_541 = arith.constant 0 : index
    %c0_542 = arith.constant 0 : index
    %462 = vector.load %arg18[%c0_541, %c0_542] : memref<8x144xf32, #tpu.memory_space<vmem>>, vector<8x144xf32>
    %c0_543 = arith.constant 0 : index
    %c0_544 = arith.constant 0 : index
    %463 = vector.load %arg34[%c0_543, %c0_544] : memref<288x288xf32, #tpu.memory_space<vmem>>, vector<144x80xf32>
    %cst_545 = arith.constant dense<0.000000e+00> : vector<8x80xf32>
    %464 = tpu.matmul %462, %463, %cst_545 {dimension_numbers = #tpu.dot_dimension_numbers<[1], [0], [0], [1], [0, 0, 1, 1], [], []>} : vector<8x144xf32>, vector<144x80xf32>, vector<8x80xf32> -> vector<8x80xf32>
    %c0_546 = arith.constant 0 : index
    %c0_547 = arith.constant 0 : index
    %465 = vector.load %arg19[%c0_546, %c0_547] : memref<8x1xf32, #tpu.memory_space<vmem>>, vector<8x1xf32>
    %466 = vector.broadcast %465 : vector<8x1xf32> to vector<8x80xf32>
    %467 = arith.addf %464, %466 : vector<8x80xf32>
    %cst_548 = arith.constant 0.000000e+00 : f32
    %468 = vector.broadcast %cst_548 : f32 to vector<8x80xf32>
    %469 = arith.maximumf %467, %468 : vector<8x80xf32>
    %c0_549 = arith.constant 0 : index
    %c0_550 = arith.constant 0 : index
    %470 = vector.load %arg10[%c0_549, %c0_550] : memref<1x80xf32, #tpu.memory_space<vmem>>, vector<1x80xf32>
    %471 = vector.broadcast %470 : vector<1x80xf32> to vector<8x80xf32>
    %472 = arith.mulf %469, %471 : vector<8x80xf32>
    %c0_551 = arith.constant 0 : index
    %c11_552 = arith.constant 11 : index
    %473 = vector.load %arg29[%c0_551, %c11_552] : memref<16x110xf32, #tpu.memory_space<vmem>>, vector<8x80xf32>
    tpu.vector_store %arg29[%c0_551, %c11_552], %472 {strides = array<i32>} : memref<16x110xf32, #tpu.memory_space<vmem>>, vector<8x80xf32>,
    %c0_553 = arith.constant 0 : index
    %c0_554 = arith.constant 0 : index
    %c0_555 = arith.constant 0 : index
    %474 = vector.load %arg20[%c0_553, %c0_554, %c0_555] : memref<2x8x18xf32, #tpu.memory_space<vmem>>, vector<2x8x18xf32>
    %c0_556 = arith.constant 0 : index
    %c0_557 = arith.constant 0 : index
    %475 = vector.load %arg29[%c0_556, %c0_557] : memref<16x110xf32, #tpu.memory_space<vmem>>, vector<8x80xf32>
    %c0_558 = arith.constant 0 : index
    %c0_559 = arith.constant 0 : index
    %476 = vector.load %arg34[%c0_558, %c0_559] : memref<288x288xf32, #tpu.memory_space<vmem>>, vector<8x80xf32>
    tpu.vector_store %arg34[%c0_558, %c0_559], %475 {strides = array<i32>} : memref<288x288xf32, #tpu.memory_space<vmem>>, vector<8x80xf32>,
    %c0_560 = arith.constant 0 : index
    %c1_561 = arith.constant 1 : index
    %477 = vector.load %arg29[%c0_560, %c1_561] : memref<16x110xf32, #tpu.memory_space<vmem>>, vector<8x80xf32>
    %c8_562 = arith.constant 8 : index
    %c0_563 = arith.constant 0 : index
    %478 = vector.load %arg34[%c8_562, %c0_563] : memref<288x288xf32, #tpu.memory_space<vmem>>, vector<8x80xf32>
    tpu.vector_store %arg34[%c8_562, %c0_563], %477 {strides = array<i32>} : memref<288x288xf32, #tpu.memory_space<vmem>>, vector<8x80xf32>,
    %c0_564 = arith.constant 0 : index
    %c10_565 = arith.constant 10 : index
    %479 = vector.load %arg29[%c0_564, %c10_565] : memref<16x110xf32, #tpu.memory_space<vmem>>, vector<8x80xf32>
    %c16_566 = arith.constant 16 : index
    %c0_567 = arith.constant 0 : index
    %480 = vector.load %arg34[%c16_566, %c0_567] : memref<288x288xf32, #tpu.memory_space<vmem>>, vector<8x80xf32>
    tpu.vector_store %arg34[%c16_566, %c0_567], %479 {strides = array<i32>} : memref<288x288xf32, #tpu.memory_space<vmem>>, vector<8x80xf32>,
    %c0_568 = arith.constant 0 : index
    %c11_569 = arith.constant 11 : index
    %481 = vector.load %arg29[%c0_568, %c11_569] : memref<16x110xf32, #tpu.memory_space<vmem>>, vector<8x80xf32>
    %c24_570 = arith.constant 24 : index
    %c0_571 = arith.constant 0 : index
    %482 = vector.load %arg34[%c24_570, %c0_571] : memref<288x288xf32, #tpu.memory_space<vmem>>, vector<8x80xf32>
    tpu.vector_store %arg34[%c24_570, %c0_571], %481 {strides = array<i32>} : memref<288x288xf32, #tpu.memory_space<vmem>>, vector<8x80xf32>,
    %c0_572 = arith.constant 0 : index
    %c0_573 = arith.constant 0 : index
    %c0_574 = arith.constant 0 : index
    %483 = vector.load %arg21[%c0_572, %c0_573, %c0_574] : memref<4x8x32xf32, #tpu.memory_space<vmem>>, vector<1x8x32xf32>
    %484 = vector.shape_cast %483 : vector<1x8x32xf32> to vector<8x32xf32>
    %c0_575 = arith.constant 0 : index
    %c0_576 = arith.constant 0 : index
    %485 = vector.load %arg34[%c0_575, %c0_576] : memref<288x288xf32, #tpu.memory_space<vmem>>, vector<32x80xf32>
    %cst_577 = arith.constant dense<0.000000e+00> : vector<8x80xf32>
    %486 = tpu.matmul %484, %485, %cst_577 {dimension_numbers = #tpu.dot_dimension_numbers<[1], [0], [0], [1], [0, 0, 1, 1], [], []>} : vector<8x32xf32>, vector<32x80xf32>, vector<8x80xf32> -> vector<8x80xf32>
    %c0_578 = arith.constant 0 : index
    %c1_579 = arith.constant 1 : index
    %487 = vector.load %arg29[%c0_578, %c1_579] : memref<16x110xf32, #tpu.memory_space<vmem>>, vector<8x80xf32>
    %c0_580 = arith.constant 0 : index
    %c0_581 = arith.constant 0 : index
    %488 = vector.load %arg34[%c0_580, %c0_581] : memref<288x288xf32, #tpu.memory_space<vmem>>, vector<8x80xf32>
    tpu.vector_store %arg34[%c0_580, %c0_581], %487 {strides = array<i32>} : memref<288x288xf32, #tpu.memory_space<vmem>>, vector<8x80xf32>,
    %c0_582 = arith.constant 0 : index
    %c2_583 = arith.constant 2 : index
    %489 = vector.load %arg29[%c0_582, %c2_583] : memref<16x110xf32, #tpu.memory_space<vmem>>, vector<8x80xf32>
    %c8_584 = arith.constant 8 : index
    %c0_585 = arith.constant 0 : index
    %490 = vector.load %arg34[%c8_584, %c0_585] : memref<288x288xf32, #tpu.memory_space<vmem>>, vector<8x80xf32>
    tpu.vector_store %arg34[%c8_584, %c0_585], %489 {strides = array<i32>} : memref<288x288xf32, #tpu.memory_space<vmem>>, vector<8x80xf32>,
    %c0_586 = arith.constant 0 : index
    %c11_587 = arith.constant 11 : index
    %491 = vector.load %arg29[%c0_586, %c11_587] : memref<16x110xf32, #tpu.memory_space<vmem>>, vector<8x80xf32>
    %c16_588 = arith.constant 16 : index
    %c0_589 = arith.constant 0 : index
    %492 = vector.load %arg34[%c16_588, %c0_589] : memref<288x288xf32, #tpu.memory_space<vmem>>, vector<8x80xf32>
    tpu.vector_store %arg34[%c16_588, %c0_589], %491 {strides = array<i32>} : memref<288x288xf32, #tpu.memory_space<vmem>>, vector<8x80xf32>,
    %c0_590 = arith.constant 0 : index
    %c12_591 = arith.constant 12 : index
    %493 = vector.load %arg29[%c0_590, %c12_591] : memref<16x110xf32, #tpu.memory_space<vmem>>, vector<8x80xf32>
    %c24_592 = arith.constant 24 : index
    %c0_593 = arith.constant 0 : index
    %494 = vector.load %arg34[%c24_592, %c0_593] : memref<288x288xf32, #tpu.memory_space<vmem>>, vector<8x80xf32>
    tpu.vector_store %arg34[%c24_592, %c0_593], %493 {strides = array<i32>} : memref<288x288xf32, #tpu.memory_space<vmem>>, vector<8x80xf32>,
    %c1_594 = arith.constant 1 : index
    %c0_595 = arith.constant 0 : index
    %c0_596 = arith.constant 0 : index
    %495 = vector.load %arg21[%c1_594, %c0_595, %c0_596] : memref<4x8x32xf32, #tpu.memory_space<vmem>>, vector<1x8x32xf32>
    %496 = vector.shape_cast %495 : vector<1x8x32xf32> to vector<8x32xf32>
    %c0_597 = arith.constant 0 : index
    %c0_598 = arith.constant 0 : index
    %497 = vector.load %arg34[%c0_597, %c0_598] : memref<288x288xf32, #tpu.memory_space<vmem>>, vector<32x80xf32>
    %cst_599 = arith.constant dense<0.000000e+00> : vector<8x80xf32>
    %498 = tpu.matmul %496, %497, %cst_599 {dimension_numbers = #tpu.dot_dimension_numbers<[1], [0], [0], [1], [0, 0, 1, 1], [], []>} : vector<8x32xf32>, vector<32x80xf32>, vector<8x80xf32> -> vector<8x80xf32>
    %499 = vector.extract_strided_slice %486 {offsets = [0, 0], sizes = [8, 8], strides = [1, 1]} : vector<8x80xf32> to vector<8x8xf32>
    %500 = vector.extract_strided_slice %498 {offsets = [0, 0], sizes = [8, 8], strides = [1, 1]} : vector<8x80xf32> to vector<8x8xf32>
    %501 = vector.extract_strided_slice %474 {offsets = [0, 0, 0], sizes = [1, 8, 18], strides = [1, 1, 1]} : vector<2x8x18xf32> to vector<1x8x18xf32>
    %502 = vector.shape_cast %501 : vector<1x8x18xf32> to vector<8x18xf32>
    %cst_600 = arith.constant dense<0.000000e+00> : vector<8x18xf32>
    %503 = tpu.matmul %499, %502, %cst_600 {dimension_numbers = #tpu.dot_dimension_numbers<[1], [0], [0], [1], [0, 0, 1, 1], [], []>} : vector<8x8xf32>, vector<8x18xf32>, vector<8x18xf32> -> vector<8x18xf32>
    %504 = vector.extract_strided_slice %474 {offsets = [1, 0, 0], sizes = [1, 8, 18], strides = [1, 1, 1]} : vector<2x8x18xf32> to vector<1x8x18xf32>
    %505 = vector.shape_cast %504 : vector<1x8x18xf32> to vector<8x18xf32>
    %cst_601 = arith.constant dense<0.000000e+00> : vector<8x18xf32>
    %506 = tpu.matmul %500, %505, %cst_601 {dimension_numbers = #tpu.dot_dimension_numbers<[1], [0], [0], [1], [0, 0, 1, 1], [], []>} : vector<8x8xf32>, vector<8x18xf32>, vector<8x18xf32> -> vector<8x18xf32>
    %507 = arith.addf %503, %506 : vector<8x18xf32>
    %c0_602 = arith.constant 0 : index
    %c18_603 = arith.constant 18 : index
    %508 = vector.load %arg27[%c0_602, %c18_603] : memref<8x342xf32, #tpu.memory_space<vmem>>, vector<8x18xf32>
    tpu.vector_store %arg27[%c0_602, %c18_603], %507 {strides = array<i32>} : memref<8x342xf32, #tpu.memory_space<vmem>>, vector<8x18xf32>,
    %509 = vector.extract_strided_slice %486 {offsets = [0, 10], sizes = [8, 8], strides = [1, 1]} : vector<8x80xf32> to vector<8x8xf32>
    %510 = vector.extract_strided_slice %498 {offsets = [0, 10], sizes = [8, 8], strides = [1, 1]} : vector<8x80xf32> to vector<8x8xf32>
    %511 = vector.extract_strided_slice %474 {offsets = [0, 0, 0], sizes = [1, 8, 18], strides = [1, 1, 1]} : vector<2x8x18xf32> to vector<1x8x18xf32>
    %512 = vector.shape_cast %511 : vector<1x8x18xf32> to vector<8x18xf32>
    %cst_604 = arith.constant dense<0.000000e+00> : vector<8x18xf32>
    %513 = tpu.matmul %509, %512, %cst_604 {dimension_numbers = #tpu.dot_dimension_numbers<[1], [0], [0], [1], [0, 0, 1, 1], [], []>} : vector<8x8xf32>, vector<8x18xf32>, vector<8x18xf32> -> vector<8x18xf32>
    %514 = vector.extract_strided_slice %474 {offsets = [1, 0, 0], sizes = [1, 8, 18], strides = [1, 1, 1]} : vector<2x8x18xf32> to vector<1x8x18xf32>
    %515 = vector.shape_cast %514 : vector<1x8x18xf32> to vector<8x18xf32>
    %cst_605 = arith.constant dense<0.000000e+00> : vector<8x18xf32>
    %516 = tpu.matmul %510, %515, %cst_605 {dimension_numbers = #tpu.dot_dimension_numbers<[1], [0], [0], [1], [0, 0, 1, 1], [], []>} : vector<8x8xf32>, vector<8x18xf32>, vector<8x18xf32> -> vector<8x18xf32>
    %517 = arith.addf %513, %516 : vector<8x18xf32>
    %c0_606 = arith.constant 0 : index
    %c54_607 = arith.constant 54 : index
    %518 = vector.load %arg27[%c0_606, %c54_607] : memref<8x342xf32, #tpu.memory_space<vmem>>, vector<8x18xf32>
    tpu.vector_store %arg27[%c0_606, %c54_607], %517 {strides = array<i32>} : memref<8x342xf32, #tpu.memory_space<vmem>>, vector<8x18xf32>,
    %519 = vector.extract_strided_slice %486 {offsets = [0, 20], sizes = [8, 8], strides = [1, 1]} : vector<8x80xf32> to vector<8x8xf32>
    %520 = vector.extract_strided_slice %498 {offsets = [0, 20], sizes = [8, 8], strides = [1, 1]} : vector<8x80xf32> to vector<8x8xf32>
    %521 = vector.extract_strided_slice %474 {offsets = [0, 0, 0], sizes = [1, 8, 18], strides = [1, 1, 1]} : vector<2x8x18xf32> to vector<1x8x18xf32>
    %522 = vector.shape_cast %521 : vector<1x8x18xf32> to vector<8x18xf32>
    %cst_608 = arith.constant dense<0.000000e+00> : vector<8x18xf32>
    %523 = tpu.matmul %519, %522, %cst_608 {dimension_numbers = #tpu.dot_dimension_numbers<[1], [0], [0], [1], [0, 0, 1, 1], [], []>} : vector<8x8xf32>, vector<8x18xf32>, vector<8x18xf32> -> vector<8x18xf32>
    %524 = vector.extract_strided_slice %474 {offsets = [1, 0, 0], sizes = [1, 8, 18], strides = [1, 1, 1]} : vector<2x8x18xf32> to vector<1x8x18xf32>
    %525 = vector.shape_cast %524 : vector<1x8x18xf32> to vector<8x18xf32>
    %cst_609 = arith.constant dense<0.000000e+00> : vector<8x18xf32>
    %526 = tpu.matmul %520, %525, %cst_609 {dimension_numbers = #tpu.dot_dimension_numbers<[1], [0], [0], [1], [0, 0, 1, 1], [], []>} : vector<8x8xf32>, vector<8x18xf32>, vector<8x18xf32> -> vector<8x18xf32>
    %527 = arith.addf %523, %526 : vector<8x18xf32>
    %c0_610 = arith.constant 0 : index
    %c90_611 = arith.constant 90 : index
    %528 = vector.load %arg27[%c0_610, %c90_611] : memref<8x342xf32, #tpu.memory_space<vmem>>, vector<8x18xf32>
    tpu.vector_store %arg27[%c0_610, %c90_611], %527 {strides = array<i32>} : memref<8x342xf32, #tpu.memory_space<vmem>>, vector<8x18xf32>,
    %529 = vector.extract_strided_slice %486 {offsets = [0, 30], sizes = [8, 8], strides = [1, 1]} : vector<8x80xf32> to vector<8x8xf32>
    %530 = vector.extract_strided_slice %498 {offsets = [0, 30], sizes = [8, 8], strides = [1, 1]} : vector<8x80xf32> to vector<8x8xf32>
    %531 = vector.extract_strided_slice %474 {offsets = [0, 0, 0], sizes = [1, 8, 18], strides = [1, 1, 1]} : vector<2x8x18xf32> to vector<1x8x18xf32>
    %532 = vector.shape_cast %531 : vector<1x8x18xf32> to vector<8x18xf32>
    %cst_612 = arith.constant dense<0.000000e+00> : vector<8x18xf32>
    %533 = tpu.matmul %529, %532, %cst_612 {dimension_numbers = #tpu.dot_dimension_numbers<[1], [0], [0], [1], [0, 0, 1, 1], [], []>} : vector<8x8xf32>, vector<8x18xf32>, vector<8x18xf32> -> vector<8x18xf32>
    %534 = vector.extract_strided_slice %474 {offsets = [1, 0, 0], sizes = [1, 8, 18], strides = [1, 1, 1]} : vector<2x8x18xf32> to vector<1x8x18xf32>
    %535 = vector.shape_cast %534 : vector<1x8x18xf32> to vector<8x18xf32>
    %cst_613 = arith.constant dense<0.000000e+00> : vector<8x18xf32>
    %536 = tpu.matmul %530, %535, %cst_613 {dimension_numbers = #tpu.dot_dimension_numbers<[1], [0], [0], [1], [0, 0, 1, 1], [], []>} : vector<8x8xf32>, vector<8x18xf32>, vector<8x18xf32> -> vector<8x18xf32>
    %537 = arith.addf %533, %536 : vector<8x18xf32>
    %c0_614 = arith.constant 0 : index
    %c126_615 = arith.constant 126 : index
    %538 = vector.load %arg27[%c0_614, %c126_615] : memref<8x342xf32, #tpu.memory_space<vmem>>, vector<8x18xf32>
    tpu.vector_store %arg27[%c0_614, %c126_615], %537 {strides = array<i32>} : memref<8x342xf32, #tpu.memory_space<vmem>>, vector<8x18xf32>,
    %539 = vector.extract_strided_slice %486 {offsets = [0, 40], sizes = [8, 8], strides = [1, 1]} : vector<8x80xf32> to vector<8x8xf32>
    %540 = vector.extract_strided_slice %498 {offsets = [0, 40], sizes = [8, 8], strides = [1, 1]} : vector<8x80xf32> to vector<8x8xf32>
    %541 = vector.extract_strided_slice %474 {offsets = [0, 0, 0], sizes = [1, 8, 18], strides = [1, 1, 1]} : vector<2x8x18xf32> to vector<1x8x18xf32>
    %542 = vector.shape_cast %541 : vector<1x8x18xf32> to vector<8x18xf32>
    %cst_616 = arith.constant dense<0.000000e+00> : vector<8x18xf32>
    %543 = tpu.matmul %539, %542, %cst_616 {dimension_numbers = #tpu.dot_dimension_numbers<[1], [0], [0], [1], [0, 0, 1, 1], [], []>} : vector<8x8xf32>, vector<8x18xf32>, vector<8x18xf32> -> vector<8x18xf32>
    %544 = vector.extract_strided_slice %474 {offsets = [1, 0, 0], sizes = [1, 8, 18], strides = [1, 1, 1]} : vector<2x8x18xf32> to vector<1x8x18xf32>
    %545 = vector.shape_cast %544 : vector<1x8x18xf32> to vector<8x18xf32>
    %cst_617 = arith.constant dense<0.000000e+00> : vector<8x18xf32>
    %546 = tpu.matmul %540, %545, %cst_617 {dimension_numbers = #tpu.dot_dimension_numbers<[1], [0], [0], [1], [0, 0, 1, 1], [], []>} : vector<8x8xf32>, vector<8x18xf32>, vector<8x18xf32> -> vector<8x18xf32>
    %547 = arith.addf %543, %546 : vector<8x18xf32>
    %c0_618 = arith.constant 0 : index
    %c162_619 = arith.constant 162 : index
    %548 = vector.load %arg27[%c0_618, %c162_619] : memref<8x342xf32, #tpu.memory_space<vmem>>, vector<8x18xf32>
    tpu.vector_store %arg27[%c0_618, %c162_619], %547 {strides = array<i32>} : memref<8x342xf32, #tpu.memory_space<vmem>>, vector<8x18xf32>,
    %549 = vector.extract_strided_slice %486 {offsets = [0, 50], sizes = [8, 8], strides = [1, 1]} : vector<8x80xf32> to vector<8x8xf32>
    %550 = vector.extract_strided_slice %498 {offsets = [0, 50], sizes = [8, 8], strides = [1, 1]} : vector<8x80xf32> to vector<8x8xf32>
    %551 = vector.extract_strided_slice %474 {offsets = [0, 0, 0], sizes = [1, 8, 18], strides = [1, 1, 1]} : vector<2x8x18xf32> to vector<1x8x18xf32>
    %552 = vector.shape_cast %551 : vector<1x8x18xf32> to vector<8x18xf32>
    %cst_620 = arith.constant dense<0.000000e+00> : vector<8x18xf32>
    %553 = tpu.matmul %549, %552, %cst_620 {dimension_numbers = #tpu.dot_dimension_numbers<[1], [0], [0], [1], [0, 0, 1, 1], [], []>} : vector<8x8xf32>, vector<8x18xf32>, vector<8x18xf32> -> vector<8x18xf32>
    %554 = vector.extract_strided_slice %474 {offsets = [1, 0, 0], sizes = [1, 8, 18], strides = [1, 1, 1]} : vector<2x8x18xf32> to vector<1x8x18xf32>
    %555 = vector.shape_cast %554 : vector<1x8x18xf32> to vector<8x18xf32>
    %cst_621 = arith.constant dense<0.000000e+00> : vector<8x18xf32>
    %556 = tpu.matmul %550, %555, %cst_621 {dimension_numbers = #tpu.dot_dimension_numbers<[1], [0], [0], [1], [0, 0, 1, 1], [], []>} : vector<8x8xf32>, vector<8x18xf32>, vector<8x18xf32> -> vector<8x18xf32>
    %557 = arith.addf %553, %556 : vector<8x18xf32>
    %c0_622 = arith.constant 0 : index
    %c198_623 = arith.constant 198 : index
    %558 = vector.load %arg27[%c0_622, %c198_623] : memref<8x342xf32, #tpu.memory_space<vmem>>, vector<8x18xf32>
    tpu.vector_store %arg27[%c0_622, %c198_623], %557 {strides = array<i32>} : memref<8x342xf32, #tpu.memory_space<vmem>>, vector<8x18xf32>,
    %559 = vector.extract_strided_slice %486 {offsets = [0, 60], sizes = [8, 8], strides = [1, 1]} : vector<8x80xf32> to vector<8x8xf32>
    %560 = vector.extract_strided_slice %498 {offsets = [0, 60], sizes = [8, 8], strides = [1, 1]} : vector<8x80xf32> to vector<8x8xf32>
    %561 = vector.extract_strided_slice %474 {offsets = [0, 0, 0], sizes = [1, 8, 18], strides = [1, 1, 1]} : vector<2x8x18xf32> to vector<1x8x18xf32>
    %562 = vector.shape_cast %561 : vector<1x8x18xf32> to vector<8x18xf32>
    %cst_624 = arith.constant dense<0.000000e+00> : vector<8x18xf32>
    %563 = tpu.matmul %559, %562, %cst_624 {dimension_numbers = #tpu.dot_dimension_numbers<[1], [0], [0], [1], [0, 0, 1, 1], [], []>} : vector<8x8xf32>, vector<8x18xf32>, vector<8x18xf32> -> vector<8x18xf32>
    %564 = vector.extract_strided_slice %474 {offsets = [1, 0, 0], sizes = [1, 8, 18], strides = [1, 1, 1]} : vector<2x8x18xf32> to vector<1x8x18xf32>
    %565 = vector.shape_cast %564 : vector<1x8x18xf32> to vector<8x18xf32>
    %cst_625 = arith.constant dense<0.000000e+00> : vector<8x18xf32>
    %566 = tpu.matmul %560, %565, %cst_625 {dimension_numbers = #tpu.dot_dimension_numbers<[1], [0], [0], [1], [0, 0, 1, 1], [], []>} : vector<8x8xf32>, vector<8x18xf32>, vector<8x18xf32> -> vector<8x18xf32>
    %567 = arith.addf %563, %566 : vector<8x18xf32>
    %c0_626 = arith.constant 0 : index
    %c234_627 = arith.constant 234 : index
    %568 = vector.load %arg27[%c0_626, %c234_627] : memref<8x342xf32, #tpu.memory_space<vmem>>, vector<8x18xf32>
    tpu.vector_store %arg27[%c0_626, %c234_627], %567 {strides = array<i32>} : memref<8x342xf32, #tpu.memory_space<vmem>>, vector<8x18xf32>,
    %569 = vector.extract_strided_slice %486 {offsets = [0, 70], sizes = [8, 8], strides = [1, 1]} : vector<8x80xf32> to vector<8x8xf32>
    %570 = vector.extract_strided_slice %498 {offsets = [0, 70], sizes = [8, 8], strides = [1, 1]} : vector<8x80xf32> to vector<8x8xf32>
    %571 = vector.extract_strided_slice %474 {offsets = [0, 0, 0], sizes = [1, 8, 18], strides = [1, 1, 1]} : vector<2x8x18xf32> to vector<1x8x18xf32>
    %572 = vector.shape_cast %571 : vector<1x8x18xf32> to vector<8x18xf32>
    %cst_628 = arith.constant dense<0.000000e+00> : vector<8x18xf32>
    %573 = tpu.matmul %569, %572, %cst_628 {dimension_numbers = #tpu.dot_dimension_numbers<[1], [0], [0], [1], [0, 0, 1, 1], [], []>} : vector<8x8xf32>, vector<8x18xf32>, vector<8x18xf32> -> vector<8x18xf32>
    %574 = vector.extract_strided_slice %474 {offsets = [1, 0, 0], sizes = [1, 8, 18], strides = [1, 1, 1]} : vector<2x8x18xf32> to vector<1x8x18xf32>
    %575 = vector.shape_cast %574 : vector<1x8x18xf32> to vector<8x18xf32>
    %cst_629 = arith.constant dense<0.000000e+00> : vector<8x18xf32>
    %576 = tpu.matmul %570, %575, %cst_629 {dimension_numbers = #tpu.dot_dimension_numbers<[1], [0], [0], [1], [0, 0, 1, 1], [], []>} : vector<8x8xf32>, vector<8x18xf32>, vector<8x18xf32> -> vector<8x18xf32>
    %577 = arith.addf %573, %576 : vector<8x18xf32>
    %c0_630 = arith.constant 0 : index
    %c270_631 = arith.constant 270 : index
    %578 = vector.load %arg27[%c0_630, %c270_631] : memref<8x342xf32, #tpu.memory_space<vmem>>, vector<8x18xf32>
    tpu.vector_store %arg27[%c0_630, %c270_631], %577 {strides = array<i32>} : memref<8x342xf32, #tpu.memory_space<vmem>>, vector<8x18xf32>,
    %c0_632 = arith.constant 0 : index
    %c10_633 = arith.constant 10 : index
    %579 = vector.load %arg29[%c0_632, %c10_633] : memref<16x110xf32, #tpu.memory_space<vmem>>, vector<8x80xf32>
    %c0_634 = arith.constant 0 : index
    %c0_635 = arith.constant 0 : index
    %580 = vector.load %arg34[%c0_634, %c0_635] : memref<288x288xf32, #tpu.memory_space<vmem>>, vector<8x80xf32>
    tpu.vector_store %arg34[%c0_634, %c0_635], %579 {strides = array<i32>} : memref<288x288xf32, #tpu.memory_space<vmem>>, vector<8x80xf32>,
    %c0_636 = arith.constant 0 : index
    %c11_637 = arith.constant 11 : index
    %581 = vector.load %arg29[%c0_636, %c11_637] : memref<16x110xf32, #tpu.memory_space<vmem>>, vector<8x80xf32>
    %c8_638 = arith.constant 8 : index
    %c0_639 = arith.constant 0 : index
    %582 = vector.load %arg34[%c8_638, %c0_639] : memref<288x288xf32, #tpu.memory_space<vmem>>, vector<8x80xf32>
    tpu.vector_store %arg34[%c8_638, %c0_639], %581 {strides = array<i32>} : memref<288x288xf32, #tpu.memory_space<vmem>>, vector<8x80xf32>,
    %c0_640 = arith.constant 0 : index
    %c20_641 = arith.constant 20 : index
    %583 = vector.load %arg29[%c0_640, %c20_641] : memref<16x110xf32, #tpu.memory_space<vmem>>, vector<8x80xf32>
    %c16_642 = arith.constant 16 : index
    %c0_643 = arith.constant 0 : index
    %584 = vector.load %arg34[%c16_642, %c0_643] : memref<288x288xf32, #tpu.memory_space<vmem>>, vector<8x80xf32>
    tpu.vector_store %arg34[%c16_642, %c0_643], %583 {strides = array<i32>} : memref<288x288xf32, #tpu.memory_space<vmem>>, vector<8x80xf32>,
    %c0_644 = arith.constant 0 : index
    %c21_645 = arith.constant 21 : index
    %585 = vector.load %arg29[%c0_644, %c21_645] : memref<16x110xf32, #tpu.memory_space<vmem>>, vector<8x80xf32>
    %c24_646 = arith.constant 24 : index
    %c0_647 = arith.constant 0 : index
    %586 = vector.load %arg34[%c24_646, %c0_647] : memref<288x288xf32, #tpu.memory_space<vmem>>, vector<8x80xf32>
    tpu.vector_store %arg34[%c24_646, %c0_647], %585 {strides = array<i32>} : memref<288x288xf32, #tpu.memory_space<vmem>>, vector<8x80xf32>,
    %c2_648 = arith.constant 2 : index
    %c0_649 = arith.constant 0 : index
    %c0_650 = arith.constant 0 : index
    %587 = vector.load %arg21[%c2_648, %c0_649, %c0_650] : memref<4x8x32xf32, #tpu.memory_space<vmem>>, vector<1x8x32xf32>
    %588 = vector.shape_cast %587 : vector<1x8x32xf32> to vector<8x32xf32>
    %c0_651 = arith.constant 0 : index
    %c0_652 = arith.constant 0 : index
    %589 = vector.load %arg34[%c0_651, %c0_652] : memref<288x288xf32, #tpu.memory_space<vmem>>, vector<32x80xf32>
    %cst_653 = arith.constant dense<0.000000e+00> : vector<8x80xf32>
    %590 = tpu.matmul %588, %589, %cst_653 {dimension_numbers = #tpu.dot_dimension_numbers<[1], [0], [0], [1], [0, 0, 1, 1], [], []>} : vector<8x32xf32>, vector<32x80xf32>, vector<8x80xf32> -> vector<8x80xf32>
    %c0_654 = arith.constant 0 : index
    %c11_655 = arith.constant 11 : index
    %591 = vector.load %arg29[%c0_654, %c11_655] : memref<16x110xf32, #tpu.memory_space<vmem>>, vector<8x80xf32>
    %c0_656 = arith.constant 0 : index
    %c0_657 = arith.constant 0 : index
    %592 = vector.load %arg34[%c0_656, %c0_657] : memref<288x288xf32, #tpu.memory_space<vmem>>, vector<8x80xf32>
    tpu.vector_store %arg34[%c0_656, %c0_657], %591 {strides = array<i32>} : memref<288x288xf32, #tpu.memory_space<vmem>>, vector<8x80xf32>,
    %c0_658 = arith.constant 0 : index
    %c12_659 = arith.constant 12 : index
    %593 = vector.load %arg29[%c0_658, %c12_659] : memref<16x110xf32, #tpu.memory_space<vmem>>, vector<8x80xf32>
    %c8_660 = arith.constant 8 : index
    %c0_661 = arith.constant 0 : index
    %594 = vector.load %arg34[%c8_660, %c0_661] : memref<288x288xf32, #tpu.memory_space<vmem>>, vector<8x80xf32>
    tpu.vector_store %arg34[%c8_660, %c0_661], %593 {strides = array<i32>} : memref<288x288xf32, #tpu.memory_space<vmem>>, vector<8x80xf32>,
    %c0_662 = arith.constant 0 : index
    %c21_663 = arith.constant 21 : index
    %595 = vector.load %arg29[%c0_662, %c21_663] : memref<16x110xf32, #tpu.memory_space<vmem>>, vector<8x80xf32>
    %c16_664 = arith.constant 16 : index
    %c0_665 = arith.constant 0 : index
    %596 = vector.load %arg34[%c16_664, %c0_665] : memref<288x288xf32, #tpu.memory_space<vmem>>, vector<8x80xf32>
    tpu.vector_store %arg34[%c16_664, %c0_665], %595 {strides = array<i32>} : memref<288x288xf32, #tpu.memory_space<vmem>>, vector<8x80xf32>,
    %c0_666 = arith.constant 0 : index
    %c22_667 = arith.constant 22 : index
    %597 = vector.load %arg29[%c0_666, %c22_667] : memref<16x110xf32, #tpu.memory_space<vmem>>, vector<8x80xf32>
    %c24_668 = arith.constant 24 : index
    %c0_669 = arith.constant 0 : index
    %598 = vector.load %arg34[%c24_668, %c0_669] : memref<288x288xf32, #tpu.memory_space<vmem>>, vector<8x80xf32>
    tpu.vector_store %arg34[%c24_668, %c0_669], %597 {strides = array<i32>} : memref<288x288xf32, #tpu.memory_space<vmem>>, vector<8x80xf32>,
    %c3_670 = arith.constant 3 : index
    %c0_671 = arith.constant 0 : index
    %c0_672 = arith.constant 0 : index
    %599 = vector.load %arg21[%c3_670, %c0_671, %c0_672] : memref<4x8x32xf32, #tpu.memory_space<vmem>>, vector<1x8x32xf32>
    %600 = vector.shape_cast %599 : vector<1x8x32xf32> to vector<8x32xf32>
    %c0_673 = arith.constant 0 : index
    %c0_674 = arith.constant 0 : index
    %601 = vector.load %arg34[%c0_673, %c0_674] : memref<288x288xf32, #tpu.memory_space<vmem>>, vector<32x80xf32>
    %cst_675 = arith.constant dense<0.000000e+00> : vector<8x80xf32>
    %602 = tpu.matmul %600, %601, %cst_675 {dimension_numbers = #tpu.dot_dimension_numbers<[1], [0], [0], [1], [0, 0, 1, 1], [], []>} : vector<8x32xf32>, vector<32x80xf32>, vector<8x80xf32> -> vector<8x80xf32>
    %603 = vector.extract_strided_slice %590 {offsets = [0, 0], sizes = [8, 8], strides = [1, 1]} : vector<8x80xf32> to vector<8x8xf32>
    %604 = vector.extract_strided_slice %602 {offsets = [0, 0], sizes = [8, 8], strides = [1, 1]} : vector<8x80xf32> to vector<8x8xf32>
    %605 = vector.extract_strided_slice %474 {offsets = [0, 0, 0], sizes = [1, 8, 18], strides = [1, 1, 1]} : vector<2x8x18xf32> to vector<1x8x18xf32>
    %606 = vector.shape_cast %605 : vector<1x8x18xf32> to vector<8x18xf32>
    %cst_676 = arith.constant dense<0.000000e+00> : vector<8x18xf32>
    %607 = tpu.matmul %603, %606, %cst_676 {dimension_numbers = #tpu.dot_dimension_numbers<[1], [0], [0], [1], [0, 0, 1, 1], [], []>} : vector<8x8xf32>, vector<8x18xf32>, vector<8x18xf32> -> vector<8x18xf32>
    %608 = vector.extract_strided_slice %474 {offsets = [1, 0, 0], sizes = [1, 8, 18], strides = [1, 1, 1]} : vector<2x8x18xf32> to vector<1x8x18xf32>
    %609 = vector.shape_cast %608 : vector<1x8x18xf32> to vector<8x18xf32>
    %cst_677 = arith.constant dense<0.000000e+00> : vector<8x18xf32>
    %610 = tpu.matmul %604, %609, %cst_677 {dimension_numbers = #tpu.dot_dimension_numbers<[1], [0], [0], [1], [0, 0, 1, 1], [], []>} : vector<8x8xf32>, vector<8x18xf32>, vector<8x18xf32> -> vector<8x18xf32>
    %611 = arith.addf %607, %610 : vector<8x18xf32>
    %c0_678 = arith.constant 0 : index
    %c36_679 = arith.constant 36 : index
    %612 = vector.load %arg27[%c0_678, %c36_679] : memref<8x342xf32, #tpu.memory_space<vmem>>, vector<8x18xf32>
    tpu.vector_store %arg27[%c0_678, %c36_679], %611 {strides = array<i32>} : memref<8x342xf32, #tpu.memory_space<vmem>>, vector<8x18xf32>,
    %613 = vector.extract_strided_slice %590 {offsets = [0, 10], sizes = [8, 8], strides = [1, 1]} : vector<8x80xf32> to vector<8x8xf32>
    %614 = vector.extract_strided_slice %602 {offsets = [0, 10], sizes = [8, 8], strides = [1, 1]} : vector<8x80xf32> to vector<8x8xf32>
    %615 = vector.extract_strided_slice %474 {offsets = [0, 0, 0], sizes = [1, 8, 18], strides = [1, 1, 1]} : vector<2x8x18xf32> to vector<1x8x18xf32>
    %616 = vector.shape_cast %615 : vector<1x8x18xf32> to vector<8x18xf32>
    %cst_680 = arith.constant dense<0.000000e+00> : vector<8x18xf32>
    %617 = tpu.matmul %613, %616, %cst_680 {dimension_numbers = #tpu.dot_dimension_numbers<[1], [0], [0], [1], [0, 0, 1, 1], [], []>} : vector<8x8xf32>, vector<8x18xf32>, vector<8x18xf32> -> vector<8x18xf32>
    %618 = vector.extract_strided_slice %474 {offsets = [1, 0, 0], sizes = [1, 8, 18], strides = [1, 1, 1]} : vector<2x8x18xf32> to vector<1x8x18xf32>
    %619 = vector.shape_cast %618 : vector<1x8x18xf32> to vector<8x18xf32>
    %cst_681 = arith.constant dense<0.000000e+00> : vector<8x18xf32>
    %620 = tpu.matmul %614, %619, %cst_681 {dimension_numbers = #tpu.dot_dimension_numbers<[1], [0], [0], [1], [0, 0, 1, 1], [], []>} : vector<8x8xf32>, vector<8x18xf32>, vector<8x18xf32> -> vector<8x18xf32>
    %621 = arith.addf %617, %620 : vector<8x18xf32>
    %c0_682 = arith.constant 0 : index
    %c72_683 = arith.constant 72 : index
    %622 = vector.load %arg27[%c0_682, %c72_683] : memref<8x342xf32, #tpu.memory_space<vmem>>, vector<8x18xf32>
    tpu.vector_store %arg27[%c0_682, %c72_683], %621 {strides = array<i32>} : memref<8x342xf32, #tpu.memory_space<vmem>>, vector<8x18xf32>,
    %623 = vector.extract_strided_slice %590 {offsets = [0, 20], sizes = [8, 8], strides = [1, 1]} : vector<8x80xf32> to vector<8x8xf32>
    %624 = vector.extract_strided_slice %602 {offsets = [0, 20], sizes = [8, 8], strides = [1, 1]} : vector<8x80xf32> to vector<8x8xf32>
    %625 = vector.extract_strided_slice %474 {offsets = [0, 0, 0], sizes = [1, 8, 18], strides = [1, 1, 1]} : vector<2x8x18xf32> to vector<1x8x18xf32>
    %626 = vector.shape_cast %625 : vector<1x8x18xf32> to vector<8x18xf32>
    %cst_684 = arith.constant dense<0.000000e+00> : vector<8x18xf32>
    %627 = tpu.matmul %623, %626, %cst_684 {dimension_numbers = #tpu.dot_dimension_numbers<[1], [0], [0], [1], [0, 0, 1, 1], [], []>} : vector<8x8xf32>, vector<8x18xf32>, vector<8x18xf32> -> vector<8x18xf32>
    %628 = vector.extract_strided_slice %474 {offsets = [1, 0, 0], sizes = [1, 8, 18], strides = [1, 1, 1]} : vector<2x8x18xf32> to vector<1x8x18xf32>
    %629 = vector.shape_cast %628 : vector<1x8x18xf32> to vector<8x18xf32>
    %cst_685 = arith.constant dense<0.000000e+00> : vector<8x18xf32>
    %630 = tpu.matmul %624, %629, %cst_685 {dimension_numbers = #tpu.dot_dimension_numbers<[1], [0], [0], [1], [0, 0, 1, 1], [], []>} : vector<8x8xf32>, vector<8x18xf32>, vector<8x18xf32> -> vector<8x18xf32>
    %631 = arith.addf %627, %630 : vector<8x18xf32>
    %c0_686 = arith.constant 0 : index
    %c108_687 = arith.constant 108 : index
    %632 = vector.load %arg27[%c0_686, %c108_687] : memref<8x342xf32, #tpu.memory_space<vmem>>, vector<8x18xf32>
    tpu.vector_store %arg27[%c0_686, %c108_687], %631 {strides = array<i32>} : memref<8x342xf32, #tpu.memory_space<vmem>>, vector<8x18xf32>,
    %633 = vector.extract_strided_slice %590 {offsets = [0, 30], sizes = [8, 8], strides = [1, 1]} : vector<8x80xf32> to vector<8x8xf32>
    %634 = vector.extract_strided_slice %602 {offsets = [0, 30], sizes = [8, 8], strides = [1, 1]} : vector<8x80xf32> to vector<8x8xf32>
    %635 = vector.extract_strided_slice %474 {offsets = [0, 0, 0], sizes = [1, 8, 18], strides = [1, 1, 1]} : vector<2x8x18xf32> to vector<1x8x18xf32>
    %636 = vector.shape_cast %635 : vector<1x8x18xf32> to vector<8x18xf32>
    %cst_688 = arith.constant dense<0.000000e+00> : vector<8x18xf32>
    %637 = tpu.matmul %633, %636, %cst_688 {dimension_numbers = #tpu.dot_dimension_numbers<[1], [0], [0], [1], [0, 0, 1, 1], [], []>} : vector<8x8xf32>, vector<8x18xf32>, vector<8x18xf32> -> vector<8x18xf32>
    %638 = vector.extract_strided_slice %474 {offsets = [1, 0, 0], sizes = [1, 8, 18], strides = [1, 1, 1]} : vector<2x8x18xf32> to vector<1x8x18xf32>
    %639 = vector.shape_cast %638 : vector<1x8x18xf32> to vector<8x18xf32>
    %cst_689 = arith.constant dense<0.000000e+00> : vector<8x18xf32>
    %640 = tpu.matmul %634, %639, %cst_689 {dimension_numbers = #tpu.dot_dimension_numbers<[1], [0], [0], [1], [0, 0, 1, 1], [], []>} : vector<8x8xf32>, vector<8x18xf32>, vector<8x18xf32> -> vector<8x18xf32>
    %641 = arith.addf %637, %640 : vector<8x18xf32>
    %c0_690 = arith.constant 0 : index
    %c144_691 = arith.constant 144 : index
    %642 = vector.load %arg27[%c0_690, %c144_691] : memref<8x342xf32, #tpu.memory_space<vmem>>, vector<8x18xf32>
    tpu.vector_store %arg27[%c0_690, %c144_691], %641 {strides = array<i32>} : memref<8x342xf32, #tpu.memory_space<vmem>>, vector<8x18xf32>,
    %643 = vector.extract_strided_slice %590 {offsets = [0, 40], sizes = [8, 8], strides = [1, 1]} : vector<8x80xf32> to vector<8x8xf32>
    %644 = vector.extract_strided_slice %602 {offsets = [0, 40], sizes = [8, 8], strides = [1, 1]} : vector<8x80xf32> to vector<8x8xf32>
    %645 = vector.extract_strided_slice %474 {offsets = [0, 0, 0], sizes = [1, 8, 18], strides = [1, 1, 1]} : vector<2x8x18xf32> to vector<1x8x18xf32>
    %646 = vector.shape_cast %645 : vector<1x8x18xf32> to vector<8x18xf32>
    %cst_692 = arith.constant dense<0.000000e+00> : vector<8x18xf32>
    %647 = tpu.matmul %643, %646, %cst_692 {dimension_numbers = #tpu.dot_dimension_numbers<[1], [0], [0], [1], [0, 0, 1, 1], [], []>} : vector<8x8xf32>, vector<8x18xf32>, vector<8x18xf32> -> vector<8x18xf32>
    %648 = vector.extract_strided_slice %474 {offsets = [1, 0, 0], sizes = [1, 8, 18], strides = [1, 1, 1]} : vector<2x8x18xf32> to vector<1x8x18xf32>
    %649 = vector.shape_cast %648 : vector<1x8x18xf32> to vector<8x18xf32>
    %cst_693 = arith.constant dense<0.000000e+00> : vector<8x18xf32>
    %650 = tpu.matmul %644, %649, %cst_693 {dimension_numbers = #tpu.dot_dimension_numbers<[1], [0], [0], [1], [0, 0, 1, 1], [], []>} : vector<8x8xf32>, vector<8x18xf32>, vector<8x18xf32> -> vector<8x18xf32>
    %651 = arith.addf %647, %650 : vector<8x18xf32>
    %c0_694 = arith.constant 0 : index
    %c180_695 = arith.constant 180 : index
    %652 = vector.load %arg27[%c0_694, %c180_695] : memref<8x342xf32, #tpu.memory_space<vmem>>, vector<8x18xf32>
    tpu.vector_store %arg27[%c0_694, %c180_695], %651 {strides = array<i32>} : memref<8x342xf32, #tpu.memory_space<vmem>>, vector<8x18xf32>,
    %653 = vector.extract_strided_slice %590 {offsets = [0, 50], sizes = [8, 8], strides = [1, 1]} : vector<8x80xf32> to vector<8x8xf32>
    %654 = vector.extract_strided_slice %602 {offsets = [0, 50], sizes = [8, 8], strides = [1, 1]} : vector<8x80xf32> to vector<8x8xf32>
    %655 = vector.extract_strided_slice %474 {offsets = [0, 0, 0], sizes = [1, 8, 18], strides = [1, 1, 1]} : vector<2x8x18xf32> to vector<1x8x18xf32>
    %656 = vector.shape_cast %655 : vector<1x8x18xf32> to vector<8x18xf32>
    %cst_696 = arith.constant dense<0.000000e+00> : vector<8x18xf32>
    %657 = tpu.matmul %653, %656, %cst_696 {dimension_numbers = #tpu.dot_dimension_numbers<[1], [0], [0], [1], [0, 0, 1, 1], [], []>} : vector<8x8xf32>, vector<8x18xf32>, vector<8x18xf32> -> vector<8x18xf32>
    %658 = vector.extract_strided_slice %474 {offsets = [1, 0, 0], sizes = [1, 8, 18], strides = [1, 1, 1]} : vector<2x8x18xf32> to vector<1x8x18xf32>
    %659 = vector.shape_cast %658 : vector<1x8x18xf32> to vector<8x18xf32>
    %cst_697 = arith.constant dense<0.000000e+00> : vector<8x18xf32>
    %660 = tpu.matmul %654, %659, %cst_697 {dimension_numbers = #tpu.dot_dimension_numbers<[1], [0], [0], [1], [0, 0, 1, 1], [], []>} : vector<8x8xf32>, vector<8x18xf32>, vector<8x18xf32> -> vector<8x18xf32>
    %661 = arith.addf %657, %660 : vector<8x18xf32>
    %c0_698 = arith.constant 0 : index
    %c216_699 = arith.constant 216 : index
    %662 = vector.load %arg27[%c0_698, %c216_699] : memref<8x342xf32, #tpu.memory_space<vmem>>, vector<8x18xf32>
    tpu.vector_store %arg27[%c0_698, %c216_699], %661 {strides = array<i32>} : memref<8x342xf32, #tpu.memory_space<vmem>>, vector<8x18xf32>,
    %663 = vector.extract_strided_slice %590 {offsets = [0, 60], sizes = [8, 8], strides = [1, 1]} : vector<8x80xf32> to vector<8x8xf32>
    %664 = vector.extract_strided_slice %602 {offsets = [0, 60], sizes = [8, 8], strides = [1, 1]} : vector<8x80xf32> to vector<8x8xf32>
    %665 = vector.extract_strided_slice %474 {offsets = [0, 0, 0], sizes = [1, 8, 18], strides = [1, 1, 1]} : vector<2x8x18xf32> to vector<1x8x18xf32>
    %666 = vector.shape_cast %665 : vector<1x8x18xf32> to vector<8x18xf32>
    %cst_700 = arith.constant dense<0.000000e+00> : vector<8x18xf32>
    %667 = tpu.matmul %663, %666, %cst_700 {dimension_numbers = #tpu.dot_dimension_numbers<[1], [0], [0], [1], [0, 0, 1, 1], [], []>} : vector<8x8xf32>, vector<8x18xf32>, vector<8x18xf32> -> vector<8x18xf32>
    %668 = vector.extract_strided_slice %474 {offsets = [1, 0, 0], sizes = [1, 8, 18], strides = [1, 1, 1]} : vector<2x8x18xf32> to vector<1x8x18xf32>
    %669 = vector.shape_cast %668 : vector<1x8x18xf32> to vector<8x18xf32>
    %cst_701 = arith.constant dense<0.000000e+00> : vector<8x18xf32>
    %670 = tpu.matmul %664, %669, %cst_701 {dimension_numbers = #tpu.dot_dimension_numbers<[1], [0], [0], [1], [0, 0, 1, 1], [], []>} : vector<8x8xf32>, vector<8x18xf32>, vector<8x18xf32> -> vector<8x18xf32>
    %671 = arith.addf %667, %670 : vector<8x18xf32>
    %c0_702 = arith.constant 0 : index
    %c252_703 = arith.constant 252 : index
    %672 = vector.load %arg27[%c0_702, %c252_703] : memref<8x342xf32, #tpu.memory_space<vmem>>, vector<8x18xf32>
    tpu.vector_store %arg27[%c0_702, %c252_703], %671 {strides = array<i32>} : memref<8x342xf32, #tpu.memory_space<vmem>>, vector<8x18xf32>,
    %673 = vector.extract_strided_slice %590 {offsets = [0, 70], sizes = [8, 8], strides = [1, 1]} : vector<8x80xf32> to vector<8x8xf32>
    %674 = vector.extract_strided_slice %602 {offsets = [0, 70], sizes = [8, 8], strides = [1, 1]} : vector<8x80xf32> to vector<8x8xf32>
    %675 = vector.extract_strided_slice %474 {offsets = [0, 0, 0], sizes = [1, 8, 18], strides = [1, 1, 1]} : vector<2x8x18xf32> to vector<1x8x18xf32>
    %676 = vector.shape_cast %675 : vector<1x8x18xf32> to vector<8x18xf32>
    %cst_704 = arith.constant dense<0.000000e+00> : vector<8x18xf32>
    %677 = tpu.matmul %673, %676, %cst_704 {dimension_numbers = #tpu.dot_dimension_numbers<[1], [0], [0], [1], [0, 0, 1, 1], [], []>} : vector<8x8xf32>, vector<8x18xf32>, vector<8x18xf32> -> vector<8x18xf32>
    %678 = vector.extract_strided_slice %474 {offsets = [1, 0, 0], sizes = [1, 8, 18], strides = [1, 1, 1]} : vector<2x8x18xf32> to vector<1x8x18xf32>
    %679 = vector.shape_cast %678 : vector<1x8x18xf32> to vector<8x18xf32>
    %cst_705 = arith.constant dense<0.000000e+00> : vector<8x18xf32>
    %680 = tpu.matmul %674, %679, %cst_705 {dimension_numbers = #tpu.dot_dimension_numbers<[1], [0], [0], [1], [0, 0, 1, 1], [], []>} : vector<8x8xf32>, vector<8x18xf32>, vector<8x18xf32> -> vector<8x18xf32>
    %681 = arith.addf %677, %680 : vector<8x18xf32>
    %c0_706 = arith.constant 0 : index
    %c288_707 = arith.constant 288 : index
    %682 = vector.load %arg27[%c0_706, %c288_707] : memref<8x342xf32, #tpu.memory_space<vmem>>, vector<8x18xf32>
    tpu.vector_store %arg27[%c0_706, %c288_707], %681 {strides = array<i32>} : memref<8x342xf32, #tpu.memory_space<vmem>>, vector<8x18xf32>,
    %c0_708 = arith.constant 0 : index
    %c0_709 = arith.constant 0 : index
    %683 = vector.load %arg27[%c0_708, %c0_709] : memref<8x342xf32, #tpu.memory_space<vmem>>, vector<8x288xf32>
    %c0_710 = arith.constant 0 : index
    %c0_711 = arith.constant 0 : index
    %684 = vector.load %arg34[%c0_710, %c0_711] : memref<288x288xf32, #tpu.memory_space<vmem>>, vector<8x288xf32>
    tpu.vector_store %arg34[%c0_710, %c0_711], %683 {strides = array<i32>} : memref<288x288xf32, #tpu.memory_space<vmem>>, vector<8x288xf32>,
    %c0_712 = arith.constant 0 : index
    %c1_713 = arith.constant 1 : index
    %685 = vector.load %arg27[%c0_712, %c1_713] : memref<8x342xf32, #tpu.memory_space<vmem>>, vector<8x288xf32>
    %c8_714 = arith.constant 8 : index
    %c0_715 = arith.constant 0 : index
    %686 = vector.load %arg34[%c8_714, %c0_715] : memref<288x288xf32, #tpu.memory_space<vmem>>, vector<8x288xf32>
    tpu.vector_store %arg34[%c8_714, %c0_715], %685 {strides = array<i32>} : memref<288x288xf32, #tpu.memory_space<vmem>>, vector<8x288xf32>,
    %c0_716 = arith.constant 0 : index
    %c2_717 = arith.constant 2 : index
    %687 = vector.load %arg27[%c0_716, %c2_717] : memref<8x342xf32, #tpu.memory_space<vmem>>, vector<8x288xf32>
    %c16_718 = arith.constant 16 : index
    %c0_719 = arith.constant 0 : index
    %688 = vector.load %arg34[%c16_718, %c0_719] : memref<288x288xf32, #tpu.memory_space<vmem>>, vector<8x288xf32>
    tpu.vector_store %arg34[%c16_718, %c0_719], %687 {strides = array<i32>} : memref<288x288xf32, #tpu.memory_space<vmem>>, vector<8x288xf32>,
    %c0_720 = arith.constant 0 : index
    %c18_721 = arith.constant 18 : index
    %689 = vector.load %arg27[%c0_720, %c18_721] : memref<8x342xf32, #tpu.memory_space<vmem>>, vector<8x288xf32>
    %c24_722 = arith.constant 24 : index
    %c0_723 = arith.constant 0 : index
    %690 = vector.load %arg34[%c24_722, %c0_723] : memref<288x288xf32, #tpu.memory_space<vmem>>, vector<8x288xf32>
    tpu.vector_store %arg34[%c24_722, %c0_723], %689 {strides = array<i32>} : memref<288x288xf32, #tpu.memory_space<vmem>>, vector<8x288xf32>,
    %c0_724 = arith.constant 0 : index
    %c19_725 = arith.constant 19 : index
    %691 = vector.load %arg27[%c0_724, %c19_725] : memref<8x342xf32, #tpu.memory_space<vmem>>, vector<8x288xf32>
    %c32_726 = arith.constant 32 : index
    %c0_727 = arith.constant 0 : index
    %692 = vector.load %arg34[%c32_726, %c0_727] : memref<288x288xf32, #tpu.memory_space<vmem>>, vector<8x288xf32>
    tpu.vector_store %arg34[%c32_726, %c0_727], %691 {strides = array<i32>} : memref<288x288xf32, #tpu.memory_space<vmem>>, vector<8x288xf32>,
    %c0_728 = arith.constant 0 : index
    %c20_729 = arith.constant 20 : index
    %693 = vector.load %arg27[%c0_728, %c20_729] : memref<8x342xf32, #tpu.memory_space<vmem>>, vector<8x288xf32>
    %c40_730 = arith.constant 40 : index
    %c0_731 = arith.constant 0 : index
    %694 = vector.load %arg34[%c40_730, %c0_731] : memref<288x288xf32, #tpu.memory_space<vmem>>, vector<8x288xf32>
    tpu.vector_store %arg34[%c40_730, %c0_731], %693 {strides = array<i32>} : memref<288x288xf32, #tpu.memory_space<vmem>>, vector<8x288xf32>,
    %c0_732 = arith.constant 0 : index
    %c36_733 = arith.constant 36 : index
    %695 = vector.load %arg27[%c0_732, %c36_733] : memref<8x342xf32, #tpu.memory_space<vmem>>, vector<8x288xf32>
    %c48_734 = arith.constant 48 : index
    %c0_735 = arith.constant 0 : index
    %696 = vector.load %arg34[%c48_734, %c0_735] : memref<288x288xf32, #tpu.memory_space<vmem>>, vector<8x288xf32>
    tpu.vector_store %arg34[%c48_734, %c0_735], %695 {strides = array<i32>} : memref<288x288xf32, #tpu.memory_space<vmem>>, vector<8x288xf32>,
    %c0_736 = arith.constant 0 : index
    %c37_737 = arith.constant 37 : index
    %697 = vector.load %arg27[%c0_736, %c37_737] : memref<8x342xf32, #tpu.memory_space<vmem>>, vector<8x288xf32>
    %c56_738 = arith.constant 56 : index
    %c0_739 = arith.constant 0 : index
    %698 = vector.load %arg34[%c56_738, %c0_739] : memref<288x288xf32, #tpu.memory_space<vmem>>, vector<8x288xf32>
    tpu.vector_store %arg34[%c56_738, %c0_739], %697 {strides = array<i32>} : memref<288x288xf32, #tpu.memory_space<vmem>>, vector<8x288xf32>,
    %c0_740 = arith.constant 0 : index
    %c38_741 = arith.constant 38 : index
    %699 = vector.load %arg27[%c0_740, %c38_741] : memref<8x342xf32, #tpu.memory_space<vmem>>, vector<8x288xf32>
    %c64_742 = arith.constant 64 : index
    %c0_743 = arith.constant 0 : index
    %700 = vector.load %arg34[%c64_742, %c0_743] : memref<288x288xf32, #tpu.memory_space<vmem>>, vector<8x288xf32>
    tpu.vector_store %arg34[%c64_742, %c0_743], %699 {strides = array<i32>} : memref<288x288xf32, #tpu.memory_space<vmem>>, vector<8x288xf32>,
    %c0_744 = arith.constant 0 : index
    %c0_745 = arith.constant 0 : index
    %701 = vector.load %arg28[%c0_744, %c0_745] : memref<8x342xf32, #tpu.memory_space<vmem>>, vector<8x288xf32>
    %c72_746 = arith.constant 72 : index
    %c0_747 = arith.constant 0 : index
    %702 = vector.load %arg34[%c72_746, %c0_747] : memref<288x288xf32, #tpu.memory_space<vmem>>, vector<8x288xf32>
    tpu.vector_store %arg34[%c72_746, %c0_747], %701 {strides = array<i32>} : memref<288x288xf32, #tpu.memory_space<vmem>>, vector<8x288xf32>,
    %c0_748 = arith.constant 0 : index
    %c1_749 = arith.constant 1 : index
    %703 = vector.load %arg28[%c0_748, %c1_749] : memref<8x342xf32, #tpu.memory_space<vmem>>, vector<8x288xf32>
    %c80_750 = arith.constant 80 : index
    %c0_751 = arith.constant 0 : index
    %704 = vector.load %arg34[%c80_750, %c0_751] : memref<288x288xf32, #tpu.memory_space<vmem>>, vector<8x288xf32>
    tpu.vector_store %arg34[%c80_750, %c0_751], %703 {strides = array<i32>} : memref<288x288xf32, #tpu.memory_space<vmem>>, vector<8x288xf32>,
    %c0_752 = arith.constant 0 : index
    %c2_753 = arith.constant 2 : index
    %705 = vector.load %arg28[%c0_752, %c2_753] : memref<8x342xf32, #tpu.memory_space<vmem>>, vector<8x288xf32>
    %c88 = arith.constant 88 : index
    %c0_754 = arith.constant 0 : index
    %706 = vector.load %arg34[%c88, %c0_754] : memref<288x288xf32, #tpu.memory_space<vmem>>, vector<8x288xf32>
    tpu.vector_store %arg34[%c88, %c0_754], %705 {strides = array<i32>} : memref<288x288xf32, #tpu.memory_space<vmem>>, vector<8x288xf32>,
    %c0_755 = arith.constant 0 : index
    %c18_756 = arith.constant 18 : index
    %707 = vector.load %arg28[%c0_755, %c18_756] : memref<8x342xf32, #tpu.memory_space<vmem>>, vector<8x288xf32>
    %c96_757 = arith.constant 96 : index
    %c0_758 = arith.constant 0 : index
    %708 = vector.load %arg34[%c96_757, %c0_758] : memref<288x288xf32, #tpu.memory_space<vmem>>, vector<8x288xf32>
    tpu.vector_store %arg34[%c96_757, %c0_758], %707 {strides = array<i32>} : memref<288x288xf32, #tpu.memory_space<vmem>>, vector<8x288xf32>,
    %c0_759 = arith.constant 0 : index
    %c19_760 = arith.constant 19 : index
    %709 = vector.load %arg28[%c0_759, %c19_760] : memref<8x342xf32, #tpu.memory_space<vmem>>, vector<8x288xf32>
    %c104 = arith.constant 104 : index
    %c0_761 = arith.constant 0 : index
    %710 = vector.load %arg34[%c104, %c0_761] : memref<288x288xf32, #tpu.memory_space<vmem>>, vector<8x288xf32>
    tpu.vector_store %arg34[%c104, %c0_761], %709 {strides = array<i32>} : memref<288x288xf32, #tpu.memory_space<vmem>>, vector<8x288xf32>,
    %c0_762 = arith.constant 0 : index
    %c20_763 = arith.constant 20 : index
    %711 = vector.load %arg28[%c0_762, %c20_763] : memref<8x342xf32, #tpu.memory_space<vmem>>, vector<8x288xf32>
    %c112_764 = arith.constant 112 : index
    %c0_765 = arith.constant 0 : index
    %712 = vector.load %arg34[%c112_764, %c0_765] : memref<288x288xf32, #tpu.memory_space<vmem>>, vector<8x288xf32>
    tpu.vector_store %arg34[%c112_764, %c0_765], %711 {strides = array<i32>} : memref<288x288xf32, #tpu.memory_space<vmem>>, vector<8x288xf32>,
    %c0_766 = arith.constant 0 : index
    %c36_767 = arith.constant 36 : index
    %713 = vector.load %arg28[%c0_766, %c36_767] : memref<8x342xf32, #tpu.memory_space<vmem>>, vector<8x288xf32>
    %c120 = arith.constant 120 : index
    %c0_768 = arith.constant 0 : index
    %714 = vector.load %arg34[%c120, %c0_768] : memref<288x288xf32, #tpu.memory_space<vmem>>, vector<8x288xf32>
    tpu.vector_store %arg34[%c120, %c0_768], %713 {strides = array<i32>} : memref<288x288xf32, #tpu.memory_space<vmem>>, vector<8x288xf32>,
    %c0_769 = arith.constant 0 : index
    %c37_770 = arith.constant 37 : index
    %715 = vector.load %arg28[%c0_769, %c37_770] : memref<8x342xf32, #tpu.memory_space<vmem>>, vector<8x288xf32>
    %c128_771 = arith.constant 128 : index
    %c0_772 = arith.constant 0 : index
    %716 = vector.load %arg34[%c128_771, %c0_772] : memref<288x288xf32, #tpu.memory_space<vmem>>, vector<8x288xf32>
    tpu.vector_store %arg34[%c128_771, %c0_772], %715 {strides = array<i32>} : memref<288x288xf32, #tpu.memory_space<vmem>>, vector<8x288xf32>,
    %c0_773 = arith.constant 0 : index
    %c38_774 = arith.constant 38 : index
    %717 = vector.load %arg28[%c0_773, %c38_774] : memref<8x342xf32, #tpu.memory_space<vmem>>, vector<8x288xf32>
    %c136 = arith.constant 136 : index
    %c0_775 = arith.constant 0 : index
    %718 = vector.load %arg34[%c136, %c0_775] : memref<288x288xf32, #tpu.memory_space<vmem>>, vector<8x288xf32>
    tpu.vector_store %arg34[%c136, %c0_775], %717 {strides = array<i32>} : memref<288x288xf32, #tpu.memory_space<vmem>>, vector<8x288xf32>,
    %c0_776 = arith.constant 0 : index
    %c0_777 = arith.constant 0 : index
    %719 = vector.load %arg22[%c0_776, %c0_777] : memref<8x144xf32, #tpu.memory_space<vmem>>, vector<8x144xf32>
    %c0_778 = arith.constant 0 : index
    %c0_779 = arith.constant 0 : index
    %720 = vector.load %arg34[%c0_778, %c0_779] : memref<288x288xf32, #tpu.memory_space<vmem>>, vector<144x288xf32>
    %cst_780 = arith.constant dense<0.000000e+00> : vector<8x288xf32>
    %721 = tpu.matmul %719, %720, %cst_780 {dimension_numbers = #tpu.dot_dimension_numbers<[1], [0], [0], [1], [0, 0, 1, 1], [], []>} : vector<8x144xf32>, vector<144x288xf32>, vector<8x288xf32> -> vector<8x288xf32>
    %c0_781 = arith.constant 0 : index
    %c0_782 = arith.constant 0 : index
    %722 = vector.load %arg23[%c0_781, %c0_782] : memref<8x1xf32, #tpu.memory_space<vmem>>, vector<8x1xf32>
    %723 = vector.broadcast %722 : vector<8x1xf32> to vector<8x288xf32>
    %724 = arith.addf %721, %723 : vector<8x288xf32>
    %cst_783 = arith.constant 0.000000e+00 : f32
    %725 = vector.broadcast %cst_783 : f32 to vector<8x288xf32>
    %726 = arith.maximumf %724, %725 : vector<8x288xf32>
    %c0_784 = arith.constant 0 : index
    %c0_785 = arith.constant 0 : index
    %727 = vector.load %arg4[%c0_784, %c0_785] : memref<1x288xf32, #tpu.memory_space<vmem>>, vector<1x288xf32>
    %728 = vector.broadcast %727 : vector<1x288xf32> to vector<8x288xf32>
    %729 = arith.mulf %726, %728 : vector<8x288xf32>
    %c0_786 = arith.constant 0 : index
    %c19_787 = arith.constant 19 : index
    %730 = vector.load %arg33[%c0_786, %c19_787] : memref<8x342xf32, #tpu.memory_space<vmem>>, vector<8x288xf32>
    tpu.vector_store %arg33[%c0_786, %c19_787], %729 {strides = array<i32>} : memref<8x342xf32, #tpu.memory_space<vmem>>, vector<8x288xf32>,
    %c0_788 = arith.constant 0 : index
    %c0_789 = arith.constant 0 : index
    %731 = vector.load %arg33[%c0_788, %c0_789] : memref<8x342xf32, #tpu.memory_space<vmem>>, vector<8x288xf32>
    %c0_790 = arith.constant 0 : index
    %c0_791 = arith.constant 0 : index
    %732 = vector.load %arg34[%c0_790, %c0_791] : memref<288x288xf32, #tpu.memory_space<vmem>>, vector<8x288xf32>
    tpu.vector_store %arg34[%c0_790, %c0_791], %731 {strides = array<i32>} : memref<288x288xf32, #tpu.memory_space<vmem>>, vector<8x288xf32>,
    %c0_792 = arith.constant 0 : index
    %c1_793 = arith.constant 1 : index
    %733 = vector.load %arg33[%c0_792, %c1_793] : memref<8x342xf32, #tpu.memory_space<vmem>>, vector<8x288xf32>
    %c8_794 = arith.constant 8 : index
    %c0_795 = arith.constant 0 : index
    %734 = vector.load %arg34[%c8_794, %c0_795] : memref<288x288xf32, #tpu.memory_space<vmem>>, vector<8x288xf32>
    tpu.vector_store %arg34[%c8_794, %c0_795], %733 {strides = array<i32>} : memref<288x288xf32, #tpu.memory_space<vmem>>, vector<8x288xf32>,
    %c0_796 = arith.constant 0 : index
    %c2_797 = arith.constant 2 : index
    %735 = vector.load %arg33[%c0_796, %c2_797] : memref<8x342xf32, #tpu.memory_space<vmem>>, vector<8x288xf32>
    %c16_798 = arith.constant 16 : index
    %c0_799 = arith.constant 0 : index
    %736 = vector.load %arg34[%c16_798, %c0_799] : memref<288x288xf32, #tpu.memory_space<vmem>>, vector<8x288xf32>
    tpu.vector_store %arg34[%c16_798, %c0_799], %735 {strides = array<i32>} : memref<288x288xf32, #tpu.memory_space<vmem>>, vector<8x288xf32>,
    %c0_800 = arith.constant 0 : index
    %c18_801 = arith.constant 18 : index
    %737 = vector.load %arg33[%c0_800, %c18_801] : memref<8x342xf32, #tpu.memory_space<vmem>>, vector<8x288xf32>
    %c24_802 = arith.constant 24 : index
    %c0_803 = arith.constant 0 : index
    %738 = vector.load %arg34[%c24_802, %c0_803] : memref<288x288xf32, #tpu.memory_space<vmem>>, vector<8x288xf32>
    tpu.vector_store %arg34[%c24_802, %c0_803], %737 {strides = array<i32>} : memref<288x288xf32, #tpu.memory_space<vmem>>, vector<8x288xf32>,
    %c0_804 = arith.constant 0 : index
    %c19_805 = arith.constant 19 : index
    %739 = vector.load %arg33[%c0_804, %c19_805] : memref<8x342xf32, #tpu.memory_space<vmem>>, vector<8x288xf32>
    %c32_806 = arith.constant 32 : index
    %c0_807 = arith.constant 0 : index
    %740 = vector.load %arg34[%c32_806, %c0_807] : memref<288x288xf32, #tpu.memory_space<vmem>>, vector<8x288xf32>
    tpu.vector_store %arg34[%c32_806, %c0_807], %739 {strides = array<i32>} : memref<288x288xf32, #tpu.memory_space<vmem>>, vector<8x288xf32>,
    %c0_808 = arith.constant 0 : index
    %c20_809 = arith.constant 20 : index
    %741 = vector.load %arg33[%c0_808, %c20_809] : memref<8x342xf32, #tpu.memory_space<vmem>>, vector<8x288xf32>
    %c40_810 = arith.constant 40 : index
    %c0_811 = arith.constant 0 : index
    %742 = vector.load %arg34[%c40_810, %c0_811] : memref<288x288xf32, #tpu.memory_space<vmem>>, vector<8x288xf32>
    tpu.vector_store %arg34[%c40_810, %c0_811], %741 {strides = array<i32>} : memref<288x288xf32, #tpu.memory_space<vmem>>, vector<8x288xf32>,
    %c0_812 = arith.constant 0 : index
    %c36_813 = arith.constant 36 : index
    %743 = vector.load %arg33[%c0_812, %c36_813] : memref<8x342xf32, #tpu.memory_space<vmem>>, vector<8x288xf32>
    %c48_814 = arith.constant 48 : index
    %c0_815 = arith.constant 0 : index
    %744 = vector.load %arg34[%c48_814, %c0_815] : memref<288x288xf32, #tpu.memory_space<vmem>>, vector<8x288xf32>
    tpu.vector_store %arg34[%c48_814, %c0_815], %743 {strides = array<i32>} : memref<288x288xf32, #tpu.memory_space<vmem>>, vector<8x288xf32>,
    %c0_816 = arith.constant 0 : index
    %c37_817 = arith.constant 37 : index
    %745 = vector.load %arg33[%c0_816, %c37_817] : memref<8x342xf32, #tpu.memory_space<vmem>>, vector<8x288xf32>
    %c56_818 = arith.constant 56 : index
    %c0_819 = arith.constant 0 : index
    %746 = vector.load %arg34[%c56_818, %c0_819] : memref<288x288xf32, #tpu.memory_space<vmem>>, vector<8x288xf32>
    tpu.vector_store %arg34[%c56_818, %c0_819], %745 {strides = array<i32>} : memref<288x288xf32, #tpu.memory_space<vmem>>, vector<8x288xf32>,
    %c0_820 = arith.constant 0 : index
    %c38_821 = arith.constant 38 : index
    %747 = vector.load %arg33[%c0_820, %c38_821] : memref<8x342xf32, #tpu.memory_space<vmem>>, vector<8x288xf32>
    %c64_822 = arith.constant 64 : index
    %c0_823 = arith.constant 0 : index
    %748 = vector.load %arg34[%c64_822, %c0_823] : memref<288x288xf32, #tpu.memory_space<vmem>>, vector<8x288xf32>
    tpu.vector_store %arg34[%c64_822, %c0_823], %747 {strides = array<i32>} : memref<288x288xf32, #tpu.memory_space<vmem>>, vector<8x288xf32>,
    %c0_824 = arith.constant 0 : index
    %c0_825 = arith.constant 0 : index
    %749 = vector.load %arg24[%c0_824, %c0_825] : memref<1x72xf32, #tpu.memory_space<vmem>>, vector<1x72xf32>
    %c0_826 = arith.constant 0 : index
    %c0_827 = arith.constant 0 : index
    %750 = vector.load %arg34[%c0_826, %c0_827] : memref<288x288xf32, #tpu.memory_space<vmem>>, vector<72x288xf32>
    %cst_828 = arith.constant dense<0.000000e+00> : vector<1x288xf32>
    %751 = tpu.matmul %749, %750, %cst_828 {dimension_numbers = #tpu.dot_dimension_numbers<[1], [0], [0], [1], [0, 0, 1, 1], [], []>} : vector<1x72xf32>, vector<72x288xf32>, vector<1x288xf32> -> vector<1x288xf32>
    %c0_829 = arith.constant 0 : index
    %c0_830 = arith.constant 0 : index
    %752 = vector.load %arg25[%c0_829, %c0_830] : memref<1x1xf32, #tpu.memory_space<vmem>>, vector<1x1xf32>
    %753 = vector.broadcast %752 : vector<1x1xf32> to vector<1x288xf32>
    %754 = arith.addf %751, %753 : vector<1x288xf32>
    %755 = vector.extract_strided_slice %754 {offsets = [0, 0], sizes = [1, 16], strides = [1, 1]} : vector<1x288xf32> to vector<1x16xf32>
    %c0_831 = arith.constant 0 : index
    %c0_832 = arith.constant 0 : index
    %c0_833 = arith.constant 0 : index
    %756 = vector.load %arg26[%c0_831, %c0_832, %c0_833] : memref<1x1x256xf32, #tpu.memory_space<vmem>>, vector<1x1x16xf32>
    %757 = vector.shape_cast %756 : vector<1x1x16xf32> to vector<1x16xf32>
    %758 = vector.shape_cast %755 : vector<1x16xf32> to vector<1x1x16xf32>
    tpu.vector_store %arg26[%c0_831, %c0_832, %c0_833], %758 {strides = array<i32>} : memref<1x1x256xf32, #tpu.memory_space<vmem>>, vector<1x1x16xf32>,
    %759 = vector.extract_strided_slice %754 {offsets = [0, 18], sizes = [1, 16], strides = [1, 1]} : vector<1x288xf32> to vector<1x16xf32>
    %c0_834 = arith.constant 0 : index
    %c0_835 = arith.constant 0 : index
    %c16_836 = arith.constant 16 : index
    %760 = vector.load %arg26[%c0_834, %c0_835, %c16_836] : memref<1x1x256xf32, #tpu.memory_space<vmem>>, vector<1x1x16xf32>
    %761 = vector.shape_cast %760 : vector<1x1x16xf32> to vector<1x16xf32>
    %762 = vector.shape_cast %759 : vector<1x16xf32> to vector<1x1x16xf32>
    tpu.vector_store %arg26[%c0_834, %c0_835, %c16_836], %762 {strides = array<i32>} : memref<1x1x256xf32, #tpu.memory_space<vmem>>, vector<1x1x16xf32>,
    %763 = vector.extract_strided_slice %754 {offsets = [0, 36], sizes = [1, 16], strides = [1, 1]} : vector<1x288xf32> to vector<1x16xf32>
    %c0_837 = arith.constant 0 : index
    %c0_838 = arith.constant 0 : index
    %c32_839 = arith.constant 32 : index
    %764 = vector.load %arg26[%c0_837, %c0_838, %c32_839] : memref<1x1x256xf32, #tpu.memory_space<vmem>>, vector<1x1x16xf32>
    %765 = vector.shape_cast %764 : vector<1x1x16xf32> to vector<1x16xf32>
    %766 = vector.shape_cast %763 : vector<1x16xf32> to vector<1x1x16xf32>
    tpu.vector_store %arg26[%c0_837, %c0_838, %c32_839], %766 {strides = array<i32>} : memref<1x1x256xf32, #tpu.memory_space<vmem>>, vector<1x1x16xf32>,
    %767 = vector.extract_strided_slice %754 {offsets = [0, 54], sizes = [1, 16], strides = [1, 1]} : vector<1x288xf32> to vector<1x16xf32>
    %c0_840 = arith.constant 0 : index
    %c0_841 = arith.constant 0 : index
    %c48_842 = arith.constant 48 : index
    %768 = vector.load %arg26[%c0_840, %c0_841, %c48_842] : memref<1x1x256xf32, #tpu.memory_space<vmem>>, vector<1x1x16xf32>
    %769 = vector.shape_cast %768 : vector<1x1x16xf32> to vector<1x16xf32>
    %770 = vector.shape_cast %767 : vector<1x16xf32> to vector<1x1x16xf32>
    tpu.vector_store %arg26[%c0_840, %c0_841, %c48_842], %770 {strides = array<i32>} : memref<1x1x256xf32, #tpu.memory_space<vmem>>, vector<1x1x16xf32>,
    %771 = vector.extract_strided_slice %754 {offsets = [0, 72], sizes = [1, 16], strides = [1, 1]} : vector<1x288xf32> to vector<1x16xf32>
    %c0_843 = arith.constant 0 : index
    %c0_844 = arith.constant 0 : index
    %c64_845 = arith.constant 64 : index
    %772 = vector.load %arg26[%c0_843, %c0_844, %c64_845] : memref<1x1x256xf32, #tpu.memory_space<vmem>>, vector<1x1x16xf32>
    %773 = vector.shape_cast %772 : vector<1x1x16xf32> to vector<1x16xf32>
    %774 = vector.shape_cast %771 : vector<1x16xf32> to vector<1x1x16xf32>
    tpu.vector_store %arg26[%c0_843, %c0_844, %c64_845], %774 {strides = array<i32>} : memref<1x1x256xf32, #tpu.memory_space<vmem>>, vector<1x1x16xf32>,
    %775 = vector.extract_strided_slice %754 {offsets = [0, 90], sizes = [1, 16], strides = [1, 1]} : vector<1x288xf32> to vector<1x16xf32>
    %c0_846 = arith.constant 0 : index
    %c0_847 = arith.constant 0 : index
    %c80_848 = arith.constant 80 : index
    %776 = vector.load %arg26[%c0_846, %c0_847, %c80_848] : memref<1x1x256xf32, #tpu.memory_space<vmem>>, vector<1x1x16xf32>
    %777 = vector.shape_cast %776 : vector<1x1x16xf32> to vector<1x16xf32>
    %778 = vector.shape_cast %775 : vector<1x16xf32> to vector<1x1x16xf32>
    tpu.vector_store %arg26[%c0_846, %c0_847, %c80_848], %778 {strides = array<i32>} : memref<1x1x256xf32, #tpu.memory_space<vmem>>, vector<1x1x16xf32>,
    %779 = vector.extract_strided_slice %754 {offsets = [0, 108], sizes = [1, 16], strides = [1, 1]} : vector<1x288xf32> to vector<1x16xf32>
    %c0_849 = arith.constant 0 : index
    %c0_850 = arith.constant 0 : index
    %c96_851 = arith.constant 96 : index
    %780 = vector.load %arg26[%c0_849, %c0_850, %c96_851] : memref<1x1x256xf32, #tpu.memory_space<vmem>>, vector<1x1x16xf32>
    %781 = vector.shape_cast %780 : vector<1x1x16xf32> to vector<1x16xf32>
    %782 = vector.shape_cast %779 : vector<1x16xf32> to vector<1x1x16xf32>
    tpu.vector_store %arg26[%c0_849, %c0_850, %c96_851], %782 {strides = array<i32>} : memref<1x1x256xf32, #tpu.memory_space<vmem>>, vector<1x1x16xf32>,
    %783 = vector.extract_strided_slice %754 {offsets = [0, 126], sizes = [1, 16], strides = [1, 1]} : vector<1x288xf32> to vector<1x16xf32>
    %c0_852 = arith.constant 0 : index
    %c0_853 = arith.constant 0 : index
    %c112_854 = arith.constant 112 : index
    %784 = vector.load %arg26[%c0_852, %c0_853, %c112_854] : memref<1x1x256xf32, #tpu.memory_space<vmem>>, vector<1x1x16xf32>
    %785 = vector.shape_cast %784 : vector<1x1x16xf32> to vector<1x16xf32>
    %786 = vector.shape_cast %783 : vector<1x16xf32> to vector<1x1x16xf32>
    tpu.vector_store %arg26[%c0_852, %c0_853, %c112_854], %786 {strides = array<i32>} : memref<1x1x256xf32, #tpu.memory_space<vmem>>, vector<1x1x16xf32>,
    %787 = vector.extract_strided_slice %754 {offsets = [0, 144], sizes = [1, 16], strides = [1, 1]} : vector<1x288xf32> to vector<1x16xf32>
    %c0_855 = arith.constant 0 : index
    %c0_856 = arith.constant 0 : index
    %c128_857 = arith.constant 128 : index
    %788 = vector.load %arg26[%c0_855, %c0_856, %c128_857] : memref<1x1x256xf32, #tpu.memory_space<vmem>>, vector<1x1x16xf32>
    %789 = vector.shape_cast %788 : vector<1x1x16xf32> to vector<1x16xf32>
    %790 = vector.shape_cast %787 : vector<1x16xf32> to vector<1x1x16xf32>
    tpu.vector_store %arg26[%c0_855, %c0_856, %c128_857], %790 {strides = array<i32>} : memref<1x1x256xf32, #tpu.memory_space<vmem>>, vector<1x1x16xf32>,
    %791 = vector.extract_strided_slice %754 {offsets = [0, 162], sizes = [1, 16], strides = [1, 1]} : vector<1x288xf32> to vector<1x16xf32>
    %c0_858 = arith.constant 0 : index
    %c0_859 = arith.constant 0 : index
    %c144_860 = arith.constant 144 : index
    %792 = vector.load %arg26[%c0_858, %c0_859, %c144_860] : memref<1x1x256xf32, #tpu.memory_space<vmem>>, vector<1x1x16xf32>
    %793 = vector.shape_cast %792 : vector<1x1x16xf32> to vector<1x16xf32>
    %794 = vector.shape_cast %791 : vector<1x16xf32> to vector<1x1x16xf32>
    tpu.vector_store %arg26[%c0_858, %c0_859, %c144_860], %794 {strides = array<i32>} : memref<1x1x256xf32, #tpu.memory_space<vmem>>, vector<1x1x16xf32>,
    %795 = vector.extract_strided_slice %754 {offsets = [0, 180], sizes = [1, 16], strides = [1, 1]} : vector<1x288xf32> to vector<1x16xf32>
    %c0_861 = arith.constant 0 : index
    %c0_862 = arith.constant 0 : index
    %c160_863 = arith.constant 160 : index
    %796 = vector.load %arg26[%c0_861, %c0_862, %c160_863] : memref<1x1x256xf32, #tpu.memory_space<vmem>>, vector<1x1x16xf32>
    %797 = vector.shape_cast %796 : vector<1x1x16xf32> to vector<1x16xf32>
    %798 = vector.shape_cast %795 : vector<1x16xf32> to vector<1x1x16xf32>
    tpu.vector_store %arg26[%c0_861, %c0_862, %c160_863], %798 {strides = array<i32>} : memref<1x1x256xf32, #tpu.memory_space<vmem>>, vector<1x1x16xf32>,
    %799 = vector.extract_strided_slice %754 {offsets = [0, 198], sizes = [1, 16], strides = [1, 1]} : vector<1x288xf32> to vector<1x16xf32>
    %c0_864 = arith.constant 0 : index
    %c0_865 = arith.constant 0 : index
    %c176_866 = arith.constant 176 : index
    %800 = vector.load %arg26[%c0_864, %c0_865, %c176_866] : memref<1x1x256xf32, #tpu.memory_space<vmem>>, vector<1x1x16xf32>
    %801 = vector.shape_cast %800 : vector<1x1x16xf32> to vector<1x16xf32>
    %802 = vector.shape_cast %799 : vector<1x16xf32> to vector<1x1x16xf32>
    tpu.vector_store %arg26[%c0_864, %c0_865, %c176_866], %802 {strides = array<i32>} : memref<1x1x256xf32, #tpu.memory_space<vmem>>, vector<1x1x16xf32>,
    %803 = vector.extract_strided_slice %754 {offsets = [0, 216], sizes = [1, 16], strides = [1, 1]} : vector<1x288xf32> to vector<1x16xf32>
    %c0_867 = arith.constant 0 : index
    %c0_868 = arith.constant 0 : index
    %c192_869 = arith.constant 192 : index
    %804 = vector.load %arg26[%c0_867, %c0_868, %c192_869] : memref<1x1x256xf32, #tpu.memory_space<vmem>>, vector<1x1x16xf32>
    %805 = vector.shape_cast %804 : vector<1x1x16xf32> to vector<1x16xf32>
    %806 = vector.shape_cast %803 : vector<1x16xf32> to vector<1x1x16xf32>
    tpu.vector_store %arg26[%c0_867, %c0_868, %c192_869], %806 {strides = array<i32>} : memref<1x1x256xf32, #tpu.memory_space<vmem>>, vector<1x1x16xf32>,
    %807 = vector.extract_strided_slice %754 {offsets = [0, 234], sizes = [1, 16], strides = [1, 1]} : vector<1x288xf32> to vector<1x16xf32>
    %c0_870 = arith.constant 0 : index
    %c0_871 = arith.constant 0 : index
    %c208_872 = arith.constant 208 : index
    %808 = vector.load %arg26[%c0_870, %c0_871, %c208_872] : memref<1x1x256xf32, #tpu.memory_space<vmem>>, vector<1x1x16xf32>
    %809 = vector.shape_cast %808 : vector<1x1x16xf32> to vector<1x16xf32>
    %810 = vector.shape_cast %807 : vector<1x16xf32> to vector<1x1x16xf32>
    tpu.vector_store %arg26[%c0_870, %c0_871, %c208_872], %810 {strides = array<i32>} : memref<1x1x256xf32, #tpu.memory_space<vmem>>, vector<1x1x16xf32>,
    %811 = vector.extract_strided_slice %754 {offsets = [0, 252], sizes = [1, 16], strides = [1, 1]} : vector<1x288xf32> to vector<1x16xf32>
    %c0_873 = arith.constant 0 : index
    %c0_874 = arith.constant 0 : index
    %c224_875 = arith.constant 224 : index
    %812 = vector.load %arg26[%c0_873, %c0_874, %c224_875] : memref<1x1x256xf32, #tpu.memory_space<vmem>>, vector<1x1x16xf32>
    %813 = vector.shape_cast %812 : vector<1x1x16xf32> to vector<1x16xf32>
    %814 = vector.shape_cast %811 : vector<1x16xf32> to vector<1x1x16xf32>
    tpu.vector_store %arg26[%c0_873, %c0_874, %c224_875], %814 {strides = array<i32>} : memref<1x1x256xf32, #tpu.memory_space<vmem>>, vector<1x1x16xf32>,
    %815 = vector.extract_strided_slice %754 {offsets = [0, 270], sizes = [1, 16], strides = [1, 1]} : vector<1x288xf32> to vector<1x16xf32>
    %c0_876 = arith.constant 0 : index
    %c0_877 = arith.constant 0 : index
    %c240_878 = arith.constant 240 : index
    %816 = vector.load %arg26[%c0_876, %c0_877, %c240_878] : memref<1x1x256xf32, #tpu.memory_space<vmem>>, vector<1x1x16xf32>
    %817 = vector.shape_cast %816 : vector<1x1x16xf32> to vector<1x16xf32>
    %818 = vector.shape_cast %815 : vector<1x16xf32> to vector<1x1x16xf32>
    tpu.vector_store %arg26[%c0_876, %c0_877, %c240_878], %818 {strides = array<i32>} : memref<1x1x256xf32, #tpu.memory_space<vmem>>, vector<1x1x16xf32>,
    return
  }
  func.func @transform_0(%arg0: i32) -> (i32, i32, i32) {
    %c0_i32 = arith.constant 0 : i32
    %c0_i32_0 = arith.constant 0 : i32
    %c0_i32_1 = arith.constant 0 : i32
    return %arg0, %c0_i32, %c0_i32_0 : i32, i32, i32
  }
  func.func @transform_1(%arg0: i32) -> (i32, i32) {
    %c0_i32 = arith.constant 0 : i32
    %c0_i32_0 = arith.constant 0 : i32
    %c0_i32_1 = arith.constant 0 : i32
    return %c0_i32, %c0_i32_0 : i32, i32
  }
  func.func @transform_2(%arg0: i32) -> (i32, i32) {
    %c0_i32 = arith.constant 0 : i32
    %c0_i32_0 = arith.constant 0 : i32
    %c0_i32_1 = arith.constant 0 : i32
    return %c0_i32, %c0_i32_0 : i32, i32
  }
  func.func @transform_3(%arg0: i32) -> (i32, i32) {
    %c0_i32 = arith.constant 0 : i32
    %c0_i32_0 = arith.constant 0 : i32
    %c0_i32_1 = arith.constant 0 : i32
    return %c0_i32, %c0_i32_0 : i32, i32
  }
  func.func @transform_4(%arg0: i32) -> (i32, i32) {
    %c0_i32 = arith.constant 0 : i32
    %c0_i32_0 = arith.constant 0 : i32
    %c0_i32_1 = arith.constant 0 : i32
    return %c0_i32, %c0_i32_0 : i32, i32
  }
  func.func @transform_5(%arg0: i32) -> (i32, i32) {
    %c0_i32 = arith.constant 0 : i32
    %c0_i32_0 = arith.constant 0 : i32
    %c0_i32_1 = arith.constant 0 : i32
    return %c0_i32, %c0_i32_0 : i32, i32
  }
  func.func @transform_6(%arg0: i32) -> (i32, i32) {
    %c0_i32 = arith.constant 0 : i32
    %c0_i32_0 = arith.constant 0 : i32
    %c0_i32_1 = arith.constant 0 : i32
    return %c0_i32, %c0_i32_0 : i32, i32
  }
  func.func @transform_7(%arg0: i32) -> (i32, i32) {
    %c0_i32 = arith.constant 0 : i32
    %c0_i32_0 = arith.constant 0 : i32
    %c0_i32_1 = arith.constant 0 : i32
    return %c0_i32, %c0_i32_0 : i32, i32
  }
  func.func @transform_8(%arg0: i32) -> (i32, i32) {
    %c0_i32 = arith.constant 0 : i32
    %c0_i32_0 = arith.constant 0 : i32
    %c0_i32_1 = arith.constant 0 : i32
    return %c0_i32, %c0_i32_0 : i32, i32
  }
  func.func @transform_9(%arg0: i32) -> (i32, i32) {
    %c0_i32 = arith.constant 0 : i32
    %c0_i32_0 = arith.constant 0 : i32
    %c0_i32_1 = arith.constant 0 : i32
    return %c0_i32, %c0_i32_0 : i32, i32
  }
  func.func @transform_10(%arg0: i32) -> (i32, i32) {
    %c0_i32 = arith.constant 0 : i32
    %c0_i32_0 = arith.constant 0 : i32
    %c0_i32_1 = arith.constant 0 : i32
    return %c0_i32, %c0_i32_0 : i32, i32
  }
  func.func @transform_11(%arg0: i32) -> (i32, i32) {
    %c0_i32 = arith.constant 0 : i32
    %c0_i32_0 = arith.constant 0 : i32
    %c0_i32_1 = arith.constant 0 : i32
    return %c0_i32, %c0_i32_0 : i32, i32
  }
  func.func @transform_12(%arg0: i32) -> (i32, i32) {
    %c0_i32 = arith.constant 0 : i32
    %c0_i32_0 = arith.constant 0 : i32
    %c0_i32_1 = arith.constant 0 : i32
    return %c0_i32, %c0_i32_0 : i32, i32
  }
  func.func @transform_13(%arg0: i32) -> (i32, i32, i32) {
    %c0_i32 = arith.constant 0 : i32
    %c0_i32_0 = arith.constant 0 : i32
    %c0_i32_1 = arith.constant 0 : i32
    %c0_i32_2 = arith.constant 0 : i32
    return %c0_i32, %c0_i32_0, %c0_i32_1 : i32, i32, i32
  }
  func.func @transform_14(%arg0: i32) -> (i32, i32, i32) {
    %c0_i32 = arith.constant 0 : i32
    %c0_i32_0 = arith.constant 0 : i32
    %c0_i32_1 = arith.constant 0 : i32
    %c0_i32_2 = arith.constant 0 : i32
    return %c0_i32, %c0_i32_0, %c0_i32_1 : i32, i32, i32
  }
  func.func @transform_15(%arg0: i32) -> (i32, i32) {
    %c0_i32 = arith.constant 0 : i32
    %c0_i32_0 = arith.constant 0 : i32
    %c0_i32_1 = arith.constant 0 : i32
    return %c0_i32, %c0_i32_0 : i32, i32
  }
  func.func @transform_16(%arg0: i32) -> (i32, i32) {
    %c0_i32 = arith.constant 0 : i32
    %c0_i32_0 = arith.constant 0 : i32
    %c0_i32_1 = arith.constant 0 : i32
    return %c0_i32, %c0_i32_0 : i32, i32
  }
  func.func @transform_17(%arg0: i32) -> (i32, i32) {
    %c0_i32 = arith.constant 0 : i32
    %c0_i32_0 = arith.constant 0 : i32
    %c0_i32_1 = arith.constant 0 : i32
    return %c0_i32, %c0_i32_0 : i32, i32
  }
  func.func @transform_18(%arg0: i32) -> (i32, i32) {
    %c0_i32 = arith.constant 0 : i32
    %c0_i32_0 = arith.constant 0 : i32
    %c0_i32_1 = arith.constant 0 : i32
    return %c0_i32, %c0_i32_0 : i32, i32
  }
  func.func @transform_19(%arg0: i32) -> (i32, i32, i32) {
    %c0_i32 = arith.constant 0 : i32
    %c0_i32_0 = arith.constant 0 : i32
    %c0_i32_1 = arith.constant 0 : i32
    %c0_i32_2 = arith.constant 0 : i32
    return %c0_i32, %c0_i32_0, %c0_i32_1 : i32, i32, i32
  }
  func.func @transform_20(%arg0: i32) -> (i32, i32, i32) {
    %c0_i32 = arith.constant 0 : i32
    %c0_i32_0 = arith.constant 0 : i32
    %c0_i32_1 = arith.constant 0 : i32
    %c0_i32_2 = arith.constant 0 : i32
    return %c0_i32, %c0_i32_0, %c0_i32_1 : i32, i32, i32
  }
  func.func @transform_21(%arg0: i32) -> (i32, i32) {
    %c0_i32 = arith.constant 0 : i32
    %c0_i32_0 = arith.constant 0 : i32
    %c0_i32_1 = arith.constant 0 : i32
    return %c0_i32, %c0_i32_0 : i32, i32
  }
  func.func @transform_22(%arg0: i32) -> (i32, i32) {
    %c0_i32 = arith.constant 0 : i32
    %c0_i32_0 = arith.constant 0 : i32
    %c0_i32_1 = arith.constant 0 : i32
    return %c0_i32, %c0_i32_0 : i32, i32
  }
  func.func @transform_23(%arg0: i32) -> (i32, i32) {
    %c0_i32 = arith.constant 0 : i32
    %c0_i32_0 = arith.constant 0 : i32
    %c0_i32_1 = arith.constant 0 : i32
    return %c0_i32, %c0_i32_0 : i32, i32
  }
  func.func @transform_24(%arg0: i32) -> (i32, i32) {
    %c0_i32 = arith.constant 0 : i32
    %c0_i32_0 = arith.constant 0 : i32
    %c0_i32_1 = arith.constant 0 : i32
    return %c0_i32, %c0_i32_0 : i32, i32
  }
  func.func @transform_25(%arg0: i32) -> (i32, i32, i32) {
    %c0_i32 = arith.constant 0 : i32
    %c0_i32_0 = arith.constant 0 : i32
    %c0_i32_1 = arith.constant 0 : i32
    return %arg0, %c0_i32, %c0_i32_0 : i32, i32, i32
  }
}

</mosaic_0001>

<llo_original>
// kernel: forward.1
$region0: #{forward.1}
  #allocation0 [shape = 'u32[]', space=smem, size = 0x4, offset = 0x4, fixed_abs, tag = 'smem constant byte address 0x4 - core index']
  #allocation1 [shape = 'u32[72,128]{1,0:T(1,128)}', space=vmem, size = 0x9000, scoped, tag = 'internal scratch']
  #allocation2 [shape = 'f32[8,342]{1,0:T(8,128)}', space=vmem, size = 0x3000, scoped, tag = 'scratch operand']
  #allocation3 [shape = 'f32[8,342]{1,0:T(8,128)}', space=vmem, size = 0x3000, scoped, tag = 'scratch operand']
  #allocation4 [shape = 'f32[16,110]{1,0:T(8,128)}', space=vmem, size = 0x2000, scoped, tag = 'scratch operand']
  #allocation5 [shape = 'f32[16,110]{1,0:T(8,128)}', space=vmem, size = 0x2000, scoped, tag = 'scratch operand']
  #allocation6 [shape = 'f32[16,110]{1,0:T(8,128)}', space=vmem, size = 0x2000, scoped, tag = 'scratch operand']
  #allocation7 [shape = 'f32[16,42]{1,0:T(8,128)}', space=vmem, size = 0x2000, scoped, tag = 'scratch operand']
  #allocation8 [shape = 'f32[8,342]{1,0:T(8,128)}', space=vmem, size = 0x3000, scoped, tag = 'scratch operand']
  #allocation9 [shape = 'f32[288,288]{1,0:T(8,128)}', space=vmem, size = 0x6c000, scoped, tag = 'scratch operand']
  #allocation10 [shape = 'f32[1,1]{1,0:T(1,128)S(1)}', space=vmem, size = 0x200, scoped, tag = 'scoped memory for forward.1']
  %s0 = inlined_call_operand.vmem [shape: f32[2,3,342], index: 0, kind: input, shape index: {}]
  %s1 = inlined_call_operand.vmem [shape: f32[8,27], index: 1, kind: input, shape index: {}]
  %s2 = inlined_call_operand.vmem [shape: f32[8,1], index: 2, kind: input, shape index: {}]
  %s3 = inlined_call_operand.vmem [shape: f32[1,288], index: 3, kind: input, shape index: {}]
  %s4 = inlined_call_operand.vmem [shape: f32[8,72], index: 4, kind: input, shape index: {}]
  %s5 = inlined_call_operand.vmem [shape: f32[8,1], index: 5, kind: input, shape index: {}]
  %s6 = inlined_call_operand.vmem [shape: f32[17,10], index: 6, kind: input, shape index: {}]
  %s7 = inlined_call_operand.vmem [shape: f32[16,72], index: 7, kind: input, shape index: {}]
  %s8 = inlined_call_operand.vmem [shape: f32[16,1], index: 8, kind: input, shape index: {}]
  %s9 = inlined_call_operand.vmem [shape: f32[1,80], index: 9, kind: input, shape index: {}]
  %s10 = inlined_call_operand.vmem [shape: f32[16,144], index: 10, kind: input, shape index: {}]
  %s11 = inlined_call_operand.vmem [shape: f32[16,1], index: 11, kind: input, shape index: {}]
  %s12 = inlined_call_operand.vmem [shape: f32[9,6], index: 12, kind: input, shape index: {}]
  %s13 = inlined_call_operand.vmem [shape: f32[2,4,10], index: 13, kind: input, shape index: {}]
  %s14 = inlined_call_operand.vmem [shape: f32[4,16,64], index: 14, kind: input, shape index: {}]
  %s15 = inlined_call_operand.vmem [shape: f32[16,288], index: 15, kind: input, shape index: {}]
  %s16 = inlined_call_operand.vmem [shape: f32[16,1], index: 16, kind: input, shape index: {}]
  %s17 = inlined_call_operand.vmem [shape: f32[8,144], index: 17, kind: input, shape index: {}]
  %s18 = inlined_call_operand.vmem [shape: f32[8,1], index: 18, kind: input, shape index: {}]
  %s19 = inlined_call_operand.vmem [shape: f32[2,8,18], index: 19, kind: input, shape index: {}]
  %s20 = inlined_call_operand.vmem [shape: f32[4,8,32], index: 20, kind: input, shape index: {}]
  %s21 = inlined_call_operand.vmem [shape: f32[8,144], index: 21, kind: input, shape index: {}]
  %s22 = inlined_call_operand.vmem [shape: f32[8,1], index: 22, kind: input, shape index: {}]
  %s23 = inlined_call_operand.vmem [shape: f32[1,72], index: 23, kind: input, shape index: {}]
  %s24 = inlined_call_operand.<no memory space> [shape: f32[1,1], index: 24, kind: input, shape index: {}]
  %s25 = inlined_call_operand.vmem [shape: f32[2,1,256], index: 25, kind: output, shape index: {}]
  %s26 = sld [smem:[#allocation0]]
  $region133: #{forward.1} parent=0
    _
  %s28 = ssub.s32 1, %s26
  %s29 = scalar_select 0, %s28, %s26
  %v30 = vstv %s24
  %31 = vst [vmem:[#allocation10] sm:$0x1] %v30
  loop: start=0, step=1, limit=4
  $region2: #{forward.1} parent=0 // loop_pre_header
    _
  $region3: #{forward.1} parent=0 // loop_header
    %s33 = sphi 0, %s37
    %p34 = scmp.ge.s32.totalorder %s33, 4
    %s43 = sphi 0, %s45
    %s46 = sphi 0, %s43
    %s47 = sphi 0, %s46
    %s63 = sphi 0, %s47
    %s67 = sphi 0, %s67
    %s69 = sphi 0, %s67
    %s70 = sphi 0, %s69
    %s84 = sphi 0, %s70
    %s88 = sphi 0, %s88
    %s90 = sphi 0, %s88
    %s91 = sphi 0, %s90
    %s105 = sphi 0, %s91
    %s109 = sphi 0, %s109
    %s111 = sphi 0, %s109
    %s112 = sphi 0, %s111
    %s126 = sphi 0, %s112
    %s130 = sphi 0, %s130
    %s132 = sphi 0, %s130
    %s133 = sphi 0, %s132
    %s147 = sphi 0, %s133
    %s151 = sphi 0, %s151
    %s153 = sphi 0, %s151
    %s154 = sphi 0, %s153
    %s168 = sphi 0, %s154
    %s172 = sphi 0, %s172
    %s174 = sphi 0, %s172
    %s175 = sphi 0, %s174
    %s189 = sphi 0, %s175
    %s193 = sphi 0, %s193
    %s195 = sphi 0, %s193
    %s196 = sphi 0, %s195
    %s210 = sphi 0, %s196
    %s214 = sphi 0, %s214
    %s216 = sphi 0, %s214
    %s217 = sphi 0, %s216
    %s231 = sphi 0, %s217
    %s235 = sphi 0, %s235
    %s237 = sphi 0, %s235
    %s238 = sphi 0, %s237
    %s252 = sphi 0, %s238
    %s256 = sphi 0, %s256
    %s258 = sphi 0, %s256
    %s259 = sphi 0, %s258
    %s273 = sphi 0, %s259
    %s277 = sphi 0, %s277
    %s279 = sphi 0, %s277
    %s280 = sphi 0, %s279
    %s294 = sphi 0, %s280
    %s298 = sphi 0, %s298
    %s300 = sphi 0, %s298
    %s301 = sphi 0, %s300
    %s315 = sphi 0, %s301
    %s319 = sphi 0, %s319
    %s321 = sphi 0, %s319
    %s322 = sphi 0, %s321
    %s336 = sphi 0, %s322
    %s340 = sphi 0, %s340
    %s342 = sphi 0, %s340
    %s343 = sphi 0, %s342
    %s357 = sphi 0, %s343
    %s361 = sphi 0, %s361
    %s363 = sphi 0, %s361
    %s364 = sphi 0, %s363
    %s378 = sphi 0, %s364
    %s382 = sphi 0, %s382
    %s384 = sphi 0, %s382
    %s385 = sphi 0, %s384
    %s399 = sphi 0, %s385
    %s403 = sphi 0, %s403
    %s405 = sphi 0, %s403
    %s406 = sphi 0, %s405
    %s420 = sphi 0, %s406
    %s424 = sphi 0, %s424
    %s426 = sphi 0, %s424
    %s427 = sphi 0, %s426
    %s441 = sphi 0, %s427
    %s445 = sphi 0, %s445
    %s447 = sphi 0, %s445
    %s448 = sphi 0, %s447
    %s462 = sphi 0, %s448
    %s466 = sphi 0, %s466
    %s468 = sphi 0, %s466
    %s469 = sphi 0, %s468
    %s483 = sphi 0, %s469
    %s487 = sphi 0, %s487
    %s489 = sphi 0, %s487
    %s490 = sphi 0, %s489
    %s504 = sphi 0, %s490
    %s508 = sphi 0, %s508
    %s510 = sphi 0, %s508
    %s511 = sphi 0, %s510
    %s525 = sphi 0, %s511
    %s529 = sphi 0, %s529
    %s531 = sphi 0, %s529
    %s532 = sphi 0, %s531
    %s546 = sphi 0, %s532
    %s550 = sphi 0, %s550
    %s552 = sphi 0, %s550
    %s553 = sphi 0, %s552
    %s567 = sphi 0, %s553
    %s573 = sphi 0, %s575
    %s576 = sphi 0, %s573
    %s577 = sphi 0, %s576
    %s593 = sphi 0, %s577
  $region4: #{forward.1} parent=0 // loop_header_branch
    %36 = sbr.rel (%p34) target = $region8
  $region5: #{forward.1} parent=0 // loop_body
    %s38 = ssub.s32 %s33, 1
    %s39 = ssub.s32 %s33, 2
    %s40 = sadd.s32 %s33, 1
    %s41 = ssub.s32 %s33, %s40
    %p42 = scmp.eq.s32.totalorder %s41, 0
    %s44 = sadd.s32 %s43, 1
    %s45 = scalar_select %p42, %s43, %s44
    %p48 = pneg %p42
    %p49 = scmp.eq.s32.totalorder %s33, 1
    %p50 = por %p48, %p49
    %p51 = scmp.ne.s32.totalorder %s43, %s46
    %p52 = scmp.eq.s32.totalorder %s33, 0
    %p53 = por %p51, %p52
    %p54 = scmp.ne.s32.totalorder %s43, %s46
    %p55 = scmp.eq.s32.totalorder %s38, 1
    %p56 = por %p54, %p55
    %p57 = scmp.ne.s32.totalorder %s46, %s47
    %p58 = scmp.eq.s32.totalorder %s38, 0
    %p59 = por %p57, %p58
    %p60 = scmp.ne.s32.totalorder %s46, %s47
    %p61 = scmp.eq.s32.totalorder %s39, 1
    %p62 = por %p60, %p61
    %p64 = scmp.ne.s32.totalorder %s47, %s63
    %p65 = scmp.eq.s32.totalorder %s39, 0
    %p66 = por %p64, %p65
    %s68 = sadd.s32 %s67, 1
    %p71 = scmp.eq.s32.totalorder %s33, 1
    %p72 = scmp.ne.s32.totalorder %s67, %s69
    %p73 = scmp.eq.s32.totalorder %s33, 0
    %p74 = por %p72, %p73
    %p75 = scmp.ne.s32.totalorder %s67, %s69
    %p76 = scmp.eq.s32.totalorder %s38, 1
    %p77 = por %p75, %p76
    %p78 = scmp.ne.s32.totalorder %s69, %s70
    %p79 = scmp.eq.s32.totalorder %s38, 0
    %p80 = por %p78, %p79
    %p81 = scmp.ne.s32.totalorder %s69, %s70
    %p82 = scmp.eq.s32.totalorder %s39, 1
    %p83 = por %p81, %p82
    %p85 = scmp.ne.s32.totalorder %s70, %s84
    %p86 = scmp.eq.s32.totalorder %s39, 0
    %p87 = por %p85, %p86
    %s89 = sadd.s32 %s88, 1
    %p92 = scmp.eq.s32.totalorder %s33, 1
    %p93 = scmp.ne.s32.totalorder %s88, %s90
    %p94 = scmp.eq.s32.totalorder %s33, 0
    %p95 = por %p93, %p94
    %p96 = scmp.ne.s32.totalorder %s88, %s90
    %p97 = scmp.eq.s32.totalorder %s38, 1
    %p98 = por %p96, %p97
    %p99 = scmp.ne.s32.totalorder %s90, %s91
    %p100 = scmp.eq.s32.totalorder %s38, 0
    %p101 = por %p99, %p100
    %p102 = scmp.ne.s32.totalorder %s90, %s91
    %p103 = scmp.eq.s32.totalorder %s39, 1
    %p104 = por %p102, %p103
    %p106 = scmp.ne.s32.totalorder %s91, %s105
    %p107 = scmp.eq.s32.totalorder %s39, 0
    %p108 = por %p106, %p107
    %s110 = sadd.s32 %s109, 1
    %p113 = scmp.eq.s32.totalorder %s33, 1
    %p114 = scmp.ne.s32.totalorder %s109, %s111
    %p115 = scmp.eq.s32.totalorder %s33, 0
    %p116 = por %p114, %p115
    %p117 = scmp.ne.s32.totalorder %s109, %s111
    %p118 = scmp.eq.s32.totalorder %s38, 1
    %p119 = por %p117, %p118
    %p120 = scmp.ne.s32.totalorder %s111, %s112
    %p121 = scmp.eq.s32.totalorder %s38, 0
    %p122 = por %p120, %p121
    %p123 = scmp.ne.s32.totalorder %s111, %s112
    %p124 = scmp.eq.s32.totalorder %s39, 1
    %p125 = por %p123, %p124
    %p127 = scmp.ne.s32.totalorder %s112, %s126
    %p128 = scmp.eq.s32.totalorder %s39, 0
    %p129 = por %p127, %p128
    %s131 = sadd.s32 %s130, 1
    %p134 = scmp.eq.s32.totalorder %s33, 1
    %p135 = scmp.ne.s32.totalorder %s130, %s132
    %p136 = scmp.eq.s32.totalorder %s33, 0
    %p137 = por %p135, %p136
    %p138 = scmp.ne.s32.totalorder %s130, %s132
    %p139 = scmp.eq.s32.totalorder %s38, 1
    %p140 = por %p138, %p139
    %p141 = scmp.ne.s32.totalorder %s132, %s133
    %p142 = scmp.eq.s32.totalorder %s38, 0
    %p143 = por %p141, %p142
    %p144 = scmp.ne.s32.totalorder %s132, %s133
    %p145 = scmp.eq.s32.totalorder %s39, 1
    %p146 = por %p144, %p145
    %p148 = scmp.ne.s32.totalorder %s133, %s147
    %p149 = scmp.eq.s32.totalorder %s39, 0
    %p150 = por %p148, %p149
    %s152 = sadd.s32 %s151, 1
    %p155 = scmp.eq.s32.totalorder %s33, 1
    %p156 = scmp.ne.s32.totalorder %s151, %s153
    %p157 = scmp.eq.s32.totalorder %s33, 0
    %p158 = por %p156, %p157
    %p159 = scmp.ne.s32.totalorder %s151, %s153
    %p160 = scmp.eq.s32.totalorder %s38, 1
    %p161 = por %p159, %p160
    %p162 = scmp.ne.s32.totalorder %s153, %s154
    %p163 = scmp.eq.s32.totalorder %s38, 0
    %p164 = por %p162, %p163
    %p165 = scmp.ne.s32.totalorder %s153, %s154
    %p166 = scmp.eq.s32.totalorder %s39, 1
    %p167 = por %p165, %p166
    %p169 = scmp.ne.s32.totalorder %s154, %s168
    %p170 = scmp.eq.s32.totalorder %s39, 0
    %p171 = por %p169, %p170
    %s173 = sadd.s32 %s172, 1
    %p176 = scmp.eq.s32.totalorder %s33, 1
    %p177 = scmp.ne.s32.totalorder %s172, %s174
    %p178 = scmp.eq.s32.totalorder %s33, 0
    %p179 = por %p177, %p178
    %p180 = scmp.ne.s32.totalorder %s172, %s174
    %p181 = scmp.eq.s32.totalorder %s38, 1
    %p182 = por %p180, %p181
    %p183 = scmp.ne.s32.totalorder %s174, %s175
    %p184 = scmp.eq.s32.totalorder %s38, 0
    %p185 = por %p183, %p184
    %p186 = scmp.ne.s32.totalorder %s174, %s175
    %p187 = scmp.eq.s32.totalorder %s39, 1
    %p188 = por %p186, %p187
    %p190 = scmp.ne.s32.totalorder %s175, %s189
    %p191 = scmp.eq.s32.totalorder %s39, 0
    %p192 = por %p190, %p191
    %s194 = sadd.s32 %s193, 1
    %p197 = scmp.eq.s32.totalorder %s33, 1
    %p198 = scmp.ne.s32.totalorder %s193, %s195
    %p199 = scmp.eq.s32.totalorder %s33, 0
    %p200 = por %p198, %p199
    %p201 = scmp.ne.s32.totalorder %s193, %s195
    %p202 = scmp.eq.s32.totalorder %s38, 1
    %p203 = por %p201, %p202
    %p204 = scmp.ne.s32.totalorder %s195, %s196
    %p205 = scmp.eq.s32.totalorder %s38, 0
    %p206 = por %p204, %p205
    %p207 = scmp.ne.s32.totalorder %s195, %s196
    %p208 = scmp.eq.s32.totalorder %s39, 1
    %p209 = por %p207, %p208
    %p211 = scmp.ne.s32.totalorder %s196, %s210
    %p212 = scmp.eq.s32.totalorder %s39, 0
    %p213 = por %p211, %p212
    %s215 = sadd.s32 %s214, 1
    %p218 = scmp.eq.s32.totalorder %s33, 1
    %p219 = scmp.ne.s32.totalorder %s214, %s216
    %p220 = scmp.eq.s32.totalorder %s33, 0
    %p221 = por %p219, %p220
    %p222 = scmp.ne.s32.totalorder %s214, %s216
    %p223 = scmp.eq.s32.totalorder %s38, 1
    %p224 = por %p222, %p223
    %p225 = scmp.ne.s32.totalorder %s216, %s217
    %p226 = scmp.eq.s32.totalorder %s38, 0
    %p227 = por %p225, %p226
    %p228 = scmp.ne.s32.totalorder %s216, %s217
    %p229 = scmp.eq.s32.totalorder %s39, 1
    %p230 = por %p228, %p229
    %p232 = scmp.ne.s32.totalorder %s217, %s231
    %p233 = scmp.eq.s32.totalorder %s39, 0
    %p234 = por %p232, %p233
    %s236 = sadd.s32 %s235, 1
    %p239 = scmp.eq.s32.totalorder %s33, 1
    %p240 = scmp.ne.s32.totalorder %s235, %s237
    %p241 = scmp.eq.s32.totalorder %s33, 0
    %p242 = por %p240, %p241
    %p243 = scmp.ne.s32.totalorder %s235, %s237
    %p244 = scmp.eq.s32.totalorder %s38, 1
    %p245 = por %p243, %p244
    %p246 = scmp.ne.s32.totalorder %s237, %s238
    %p247 = scmp.eq.s32.totalorder %s38, 0
    %p248 = por %p246, %p247
    %p249 = scmp.ne.s32.totalorder %s237, %s238
    %p250 = scmp.eq.s32.totalorder %s39, 1
    %p251 = por %p249, %p250
    %p253 = scmp.ne.s32.totalorder %s238, %s252
    %p254 = scmp.eq.s32.totalorder %s39, 0
    %p255 = por %p253, %p254
    %s257 = sadd.s32 %s256, 1
    %p260 = scmp.eq.s32.totalorder %s33, 1
    %p261 = scmp.ne.s32.totalorder %s256, %s258
    %p262 = scmp.eq.s32.totalorder %s33, 0
    %p263 = por %p261, %p262
    %p264 = scmp.ne.s32.totalorder %s256, %s258
    %p265 = scmp.eq.s32.totalorder %s38, 1
    %p266 = por %p264, %p265
    %p267 = scmp.ne.s32.totalorder %s258, %s259
    %p268 = scmp.eq.s32.totalorder %s38, 0
    %p269 = por %p267, %p268
    %p270 = scmp.ne.s32.totalorder %s258, %s259
    %p271 = scmp.eq.s32.totalorder %s39, 1
    %p272 = por %p270, %p271
    %p274 = scmp.ne.s32.totalorder %s259, %s273
    %p275 = scmp.eq.s32.totalorder %s39, 0
    %p276 = por %p274, %p275
    %s278 = sadd.s32 %s277, 1
    %p281 = scmp.eq.s32.totalorder %s33, 1
    %p282 = scmp.ne.s32.totalorder %s277, %s279
    %p283 = scmp.eq.s32.totalorder %s33, 0
    %p284 = por %p282, %p283
    %p285 = scmp.ne.s32.totalorder %s277, %s279
    %p286 = scmp.eq.s32.totalorder %s38, 1
    %p287 = por %p285, %p286
    %p288 = scmp.ne.s32.totalorder %s279, %s280
    %p289 = scmp.eq.s32.totalorder %s38, 0
    %p290 = por %p288, %p289
    %p291 = scmp.ne.s32.totalorder %s279, %s280
    %p292 = scmp.eq.s32.totalorder %s39, 1
    %p293 = por %p291, %p292
    %p295 = scmp.ne.s32.totalorder %s280, %s294
    %p296 = scmp.eq.s32.totalorder %s39, 0
    %p297 = por %p295, %p296
    %s299 = sadd.s32 %s298, 1
    %p302 = scmp.eq.s32.totalorder %s33, 1
    %p303 = scmp.ne.s32.totalorder %s298, %s300
    %p304 = scmp.eq.s32.totalorder %s33, 0
    %p305 = por %p303, %p304
    %p306 = scmp.ne.s32.totalorder %s298, %s300
    %p307 = scmp.eq.s32.totalorder %s38, 1
    %p308 = por %p306, %p307
    %p309 = scmp.ne.s32.totalorder %s300, %s301
    %p310 = scmp.eq.s32.totalorder %s38, 0
    %p311 = por %p309, %p310
    %p312 = scmp.ne.s32.totalorder %s300, %s301
    %p313 = scmp.eq.s32.totalorder %s39, 1
    %p314 = por %p312, %p313
    %p316 = scmp.ne.s32.totalorder %s301, %s315
    %p317 = scmp.eq.s32.totalorder %s39, 0
    %p318 = por %p316, %p317
    %s320 = sadd.s32 %s319, 1
    %p323 = scmp.eq.s32.totalorder %s33, 1
    %p324 = scmp.ne.s32.totalorder %s319, %s321
    %p325 = scmp.eq.s32.totalorder %s33, 0
    %p326 = por %p324, %p325
    %p327 = scmp.ne.s32.totalorder %s319, %s321
    %p328 = scmp.eq.s32.totalorder %s38, 1
    %p329 = por %p327, %p328
    %p330 = scmp.ne.s32.totalorder %s321, %s322
    %p331 = scmp.eq.s32.totalorder %s38, 0
    %p332 = por %p330, %p331
    %p333 = scmp.ne.s32.totalorder %s321, %s322
    %p334 = scmp.eq.s32.totalorder %s39, 1
    %p335 = por %p333, %p334
    %p337 = scmp.ne.s32.totalorder %s322, %s336
    %p338 = scmp.eq.s32.totalorder %s39, 0
    %p339 = por %p337, %p338
    %s341 = sadd.s32 %s340, 1
    %p344 = scmp.eq.s32.totalorder %s33, 1
    %p345 = scmp.ne.s32.totalorder %s340, %s342
    %p346 = scmp.eq.s32.totalorder %s33, 0
    %p347 = por %p345, %p346
    %p348 = scmp.ne.s32.totalorder %s340, %s342
    %p349 = scmp.eq.s32.totalorder %s38, 1
    %p350 = por %p348, %p349
    %p351 = scmp.ne.s32.totalorder %s342, %s343
    %p352 = scmp.eq.s32.totalorder %s38, 0
    %p353 = por %p351, %p352
    %p354 = scmp.ne.s32.totalorder %s342, %s343
    %p355 = scmp.eq.s32.totalorder %s39, 1
    %p356 = por %p354, %p355
    %p358 = scmp.ne.s32.totalorder %s343, %s357
    %p359 = scmp.eq.s32.totalorder %s39, 0
    %p360 = por %p358, %p359
    %s362 = sadd.s32 %s361, 1
    %p365 = scmp.eq.s32.totalorder %s33, 1
    %p366 = scmp.ne.s32.totalorder %s361, %s363
    %p367 = scmp.eq.s32.totalorder %s33, 0
    %p368 = por %p366, %p367
    %p369 = scmp.ne.s32.totalorder %s361, %s363
    %p370 = scmp.eq.s32.totalorder %s38, 1
    %p371 = por %p369, %p370
    %p372 = scmp.ne.s32.totalorder %s363, %s364
    %p373 = scmp.eq.s32.totalorder %s38, 0
    %p374 = por %p372, %p373
    %p375 = scmp.ne.s32.totalorder %s363, %s364
    %p376 = scmp.eq.s32.totalorder %s39, 1
    %p377 = por %p375, %p376
    %p379 = scmp.ne.s32.totalorder %s364, %s378
    %p380 = scmp.eq.s32.totalorder %s39, 0
    %p381 = por %p379, %p380
    %s383 = sadd.s32 %s382, 1
    %p386 = scmp.eq.s32.totalorder %s33, 1
    %p387 = scmp.ne.s32.totalorder %s382, %s384
    %p388 = scmp.eq.s32.totalorder %s33, 0
    %p389 = por %p387, %p388
    %p390 = scmp.ne.s32.totalorder %s382, %s384
    %p391 = scmp.eq.s32.totalorder %s38, 1
    %p392 = por %p390, %p391
    %p393 = scmp.ne.s32.totalorder %s384, %s385
    %p394 = scmp.eq.s32.totalorder %s38, 0
    %p395 = por %p393, %p394
    %p396 = scmp.ne.s32.totalorder %s384, %s385
    %p397 = scmp.eq.s32.totalorder %s39, 1
    %p398 = por %p396, %p397
    %p400 = scmp.ne.s32.totalorder %s385, %s399
    %p401 = scmp.eq.s32.totalorder %s39, 0
    %p402 = por %p400, %p401
    %s404 = sadd.s32 %s403, 1
    %p407 = scmp.eq.s32.totalorder %s33, 1
    %p408 = scmp.ne.s32.totalorder %s403, %s405
    %p409 = scmp.eq.s32.totalorder %s33, 0
    %p410 = por %p408, %p409
    %p411 = scmp.ne.s32.totalorder %s403, %s405
    %p412 = scmp.eq.s32.totalorder %s38, 1
    %p413 = por %p411, %p412
    %p414 = scmp.ne.s32.totalorder %s405, %s406
    %p415 = scmp.eq.s32.totalorder %s38, 0
    %p416 = por %p414, %p415
    %p417 = scmp.ne.s32.totalorder %s405, %s406
    %p418 = scmp.eq.s32.totalorder %s39, 1
    %p419 = por %p417, %p418
    %p421 = scmp.ne.s32.totalorder %s406, %s420
    %p422 = scmp.eq.s32.totalorder %s39, 0
    %p423 = por %p421, %p422
    %s425 = sadd.s32 %s424, 1
    %p428 = scmp.eq.s32.totalorder %s33, 1
    %p429 = scmp.ne.s32.totalorder %s424, %s426
    %p430 = scmp.eq.s32.totalorder %s33, 0
    %p431 = por %p429, %p430
    %p432 = scmp.ne.s32.totalorder %s424, %s426
    %p433 = scmp.eq.s32.totalorder %s38, 1
    %p434 = por %p432, %p433
    %p435 = scmp.ne.s32.totalorder %s426, %s427
    %p436 = scmp.eq.s32.totalorder %s38, 0
    %p437 = por %p435, %p436
    %p438 = scmp.ne.s32.totalorder %s426, %s427
    %p439 = scmp.eq.s32.totalorder %s39, 1
    %p440 = por %p438, %p439
    %p442 = scmp.ne.s32.totalorder %s427, %s441
    %p443 = scmp.eq.s32.totalorder %s39, 0
    %p444 = por %p442, %p443
    %s446 = sadd.s32 %s445, 1
    %p449 = scmp.eq.s32.totalorder %s33, 1
    %p450 = scmp.ne.s32.totalorder %s445, %s447
    %p451 = scmp.eq.s32.totalorder %s33, 0
    %p452 = por %p450, %p451
    %p453 = scmp.ne.s32.totalorder %s445, %s447
    %p454 = scmp.eq.s32.totalorder %s38, 1
    %p455 = por %p453, %p454
    %p456 = scmp.ne.s32.totalorder %s447, %s448
    %p457 = scmp.eq.s32.totalorder %s38, 0
    %p458 = por %p456, %p457
    %p459 = scmp.ne.s32.totalorder %s447, %s448
    %p460 = scmp.eq.s32.totalorder %s39, 1
    %p461 = por %p459, %p460
    %p463 = scmp.ne.s32.totalorder %s448, %s462
    %p464 = scmp.eq.s32.totalorder %s39, 0
    %p465 = por %p463, %p464
    %s467 = sadd.s32 %s466, 1
    %p470 = scmp.eq.s32.totalorder %s33, 1
    %p471 = scmp.ne.s32.totalorder %s466, %s468
    %p472 = scmp.eq.s32.totalorder %s33, 0
    %p473 = por %p471, %p472
    %p474 = scmp.ne.s32.totalorder %s466, %s468
    %p475 = scmp.eq.s32.totalorder %s38, 1
    %p476 = por %p474, %p475
    %p477 = scmp.ne.s32.totalorder %s468, %s469
    %p478 = scmp.eq.s32.totalorder %s38, 0
    %p479 = por %p477, %p478
    %p480 = scmp.ne.s32.totalorder %s468, %s469
    %p481 = scmp.eq.s32.totalorder %s39, 1
    %p482 = por %p480, %p481
    %p484 = scmp.ne.s32.totalorder %s469, %s483
    %p485 = scmp.eq.s32.totalorder %s39, 0
    %p486 = por %p484, %p485
    %s488 = sadd.s32 %s487, 1
    %p491 = scmp.eq.s32.totalorder %s33, 1
    %p492 = scmp.ne.s32.totalorder %s487, %s489
    %p493 = scmp.eq.s32.totalorder %s33, 0
    %p494 = por %p492, %p493
    %p495 = scmp.ne.s32.totalorder %s487, %s489
    %p496 = scmp.eq.s32.totalorder %s38, 1
    %p497 = por %p495, %p496
    %p498 = scmp.ne.s32.totalorder %s489, %s490
    %p499 = scmp.eq.s32.totalorder %s38, 0
    %p500 = por %p498, %p499
    %p501 = scmp.ne.s32.totalorder %s489, %s490
    %p502 = scmp.eq.s32.totalorder %s39, 1
    %p503 = por %p501, %p502
    %p505 = scmp.ne.s32.totalorder %s490, %s504
    %p506 = scmp.eq.s32.totalorder %s39, 0
    %p507 = por %p505, %p506
    %s509 = sadd.s32 %s508, 1
    %p512 = scmp.eq.s32.totalorder %s33, 1
    %p513 = scmp.ne.s32.totalorder %s508, %s510
    %p514 = scmp.eq.s32.totalorder %s33, 0
    %p515 = por %p513, %p514
    %p516 = scmp.ne.s32.totalorder %s508, %s510
    %p517 = scmp.eq.s32.totalorder %s38, 1
    %p518 = por %p516, %p517
    %p519 = scmp.ne.s32.totalorder %s510, %s511
    %p520 = scmp.eq.s32.totalorder %s38, 0
    %p521 = por %p519, %p520
    %p522 = scmp.ne.s32.totalorder %s510, %s511
    %p523 = scmp.eq.s32.totalorder %s39, 1
    %p524 = por %p522, %p523
    %p526 = scmp.ne.s32.totalorder %s511, %s525
    %p527 = scmp.eq.s32.totalorder %s39, 0
    %p528 = por %p526, %p527
    %s530 = sadd.s32 %s529, 1
    %p533 = scmp.eq.s32.totalorder %s33, 1
    %p534 = scmp.ne.s32.totalorder %s529, %s531
    %p535 = scmp.eq.s32.totalorder %s33, 0
    %p536 = por %p534, %p535
    %p537 = scmp.ne.s32.totalorder %s529, %s531
    %p538 = scmp.eq.s32.totalorder %s38, 1
    %p539 = por %p537, %p538
    %p540 = scmp.ne.s32.totalorder %s531, %s532
    %p541 = scmp.eq.s32.totalorder %s38, 0
    %p542 = por %p540, %p541
    %p543 = scmp.ne.s32.totalorder %s531, %s532
    %p544 = scmp.eq.s32.totalorder %s39, 1
    %p545 = por %p543, %p544
    %p547 = scmp.ne.s32.totalorder %s532, %s546
    %p548 = scmp.eq.s32.totalorder %s39, 0
    %p549 = por %p547, %p548
    %s551 = sadd.s32 %s550, 1
    %p554 = scmp.eq.s32.totalorder %s33, 1
    %p555 = scmp.ne.s32.totalorder %s550, %s552
    %p556 = scmp.eq.s32.totalorder %s33, 0
    %p557 = por %p555, %p556
    %p558 = scmp.ne.s32.totalorder %s550, %s552
    %p559 = scmp.eq.s32.totalorder %s38, 1
    %p560 = por %p558, %p559
    %p561 = scmp.ne.s32.totalorder %s552, %s553
    %p562 = scmp.eq.s32.totalorder %s38, 0
    %p563 = por %p561, %p562
    %p564 = scmp.ne.s32.totalorder %s552, %s553
    %p565 = scmp.eq.s32.totalorder %s39, 1
    %p566 = por %p564, %p565
    %p568 = scmp.ne.s32.totalorder %s553, %s567
    %p569 = scmp.eq.s32.totalorder %s39, 0
    %p570 = por %p568, %p569
    %s571 = ssub.s32 %s33, %s40
    %p572 = scmp.eq.s32.totalorder %s571, 0
    %s574 = sadd.s32 %s573, 1
    %s575 = scalar_select %p572, %s573, %s574
    %p578 = pneg %p572
    %p579 = scmp.eq.s32.totalorder %s33, 1
    %p580 = por %p578, %p579
    %p581 = scmp.ne.s32.totalorder %s573, %s576
    %p582 = scmp.eq.s32.totalorder %s33, 0
    %p583 = por %p581, %p582
    %p584 = scmp.ne.s32.totalorder %s573, %s576
    %p585 = scmp.eq.s32.totalorder %s38, 1
    %p586 = por %p584, %p585
    %p587 = scmp.ne.s32.totalorder %s576, %s577
    %p588 = scmp.eq.s32.totalorder %s38, 0
    %p589 = por %p587, %p588
    %p590 = scmp.ne.s32.totalorder %s576, %s577
    %p591 = scmp.eq.s32.totalorder %s39, 1
    %p592 = por %p590, %p591
    %p594 = scmp.ne.s32.totalorder %s577, %s593
    %p595 = scmp.eq.s32.totalorder %s39, 0
    %p596 = por %p594, %p595
    %p597 = scmp.le.s32.totalorder 1, %s33
    %p598 = scmp.lt.s32.totalorder %s33, 3
    %p599 = pnand %p597, %p598
    %p600 = pneg %p599
    // Predicated region
    $region9: #{forward.1} parent=5 // pred_check
      _
    $region10: #{forward.1} parent=5 // pred_check_branch
      %602 = sbr.rel (%p599) target = $region12
    $region11: #{forward.1} parent=5 // pred_region
      %s603 = ssub.s32 %s33, 1
      // Predicated region
      $region13: #{forward.1} parent=11 // pred_check
        %p604 = pneg %p80
      $region14: #{forward.1} parent=11 // pred_check_branch
        %606 = sbr.rel (%p604) target = $region16
      $region15: #{forward.1} parent=11 // pred_region
        _
      $region16: #{forward.1} parent=11 // pred_fallthru
        _
      // Predicated region
      $region17: #{forward.1} parent=11 // pred_check
        %p607 = pneg %p101
      $region18: #{forward.1} parent=11 // pred_check_branch
        %609 = sbr.rel (%p607) target = $region20
      $region19: #{forward.1} parent=11 // pred_region
        _
      $region20: #{forward.1} parent=11 // pred_fallthru
        _
      // Predicated region
      $region21: #{forward.1} parent=11 // pred_check
        %p610 = pneg %p122
      $region22: #{forward.1} parent=11 // pred_check_branch
        %612 = sbr.rel (%p610) target = $region24
      $region23: #{forward.1} parent=11 // pred_region
        _
      $region24: #{forward.1} parent=11 // pred_fallthru
        _
      // Predicated region
      $region25: #{forward.1} parent=11 // pred_check
        %p613 = pneg %p143
      $region26: #{forward.1} parent=11 // pred_check_branch
        %615 = sbr.rel (%p613) target = $region28
      $region27: #{forward.1} parent=11 // pred_region
        _
      $region28: #{forward.1} parent=11 // pred_fallthru
        _
      // Predicated region
      $region29: #{forward.1} parent=11 // pred_check
        %p616 = pneg %p164
      $region30: #{forward.1} parent=11 // pred_check_branch
        %618 = sbr.rel (%p616) target = $region32
      $region31: #{forward.1} parent=11 // pred_region
        _
      $region32: #{forward.1} parent=11 // pred_fallthru
        _
      // Predicated region
      $region33: #{forward.1} parent=11 // pred_check
        %p619 = pneg %p185
      $region34: #{forward.1} parent=11 // pred_check_branch
        %621 = sbr.rel (%p619) target = $region36
      $region35: #{forward.1} parent=11 // pred_region
        _
      $region36: #{forward.1} parent=11 // pred_fallthru
        _
      // Predicated region
      $region37: #{forward.1} parent=11 // pred_check
        %p622 = pneg %p206
      $region38: #{forward.1} parent=11 // pred_check_branch
        %624 = sbr.rel (%p622) target = $region40
      $region39: #{forward.1} parent=11 // pred_region
        _
      $region40: #{forward.1} parent=11 // pred_fallthru
        _
      // Predicated region
      $region41: #{forward.1} parent=11 // pred_check
        %p625 = pneg %p227
      $region42: #{forward.1} parent=11 // pred_check_branch
        %627 = sbr.rel (%p625) target = $region44
      $region43: #{forward.1} parent=11 // pred_region
        _
      $region44: #{forward.1} parent=11 // pred_fallthru
        _
      // Predicated region
      $region45: #{forward.1} parent=11 // pred_check
        %p628 = pneg %p248
      $region46: #{forward.1} parent=11 // pred_check_branch
        %630 = sbr.rel (%p628) target = $region48
      $region47: #{forward.1} parent=11 // pred_region
        _
      $region48: #{forward.1} parent=11 // pred_fallthru
        _
      // Predicated region
      $region49: #{forward.1} parent=11 // pred_check
        %p631 = pneg %p269
      $region50: #{forward.1} parent=11 // pred_check_branch
        %633 = sbr.rel (%p631) target = $region52
      $region51: #{forward.1} parent=11 // pred_region
        _
      $region52: #{forward.1} parent=11 // pred_fallthru
        _
      // Predicated region
      $region53: #{forward.1} parent=11 // pred_check
        %p634 = pneg %p290
      $region54: #{forward.1} parent=11 // pred_check_branch
        %636 = sbr.rel (%p634) target = $region56
      $region55: #{forward.1} parent=11 // pred_region
        _
      $region56: #{forward.1} parent=11 // pred_fallthru
        _
      // Predicated region
      $region57: #{forward.1} parent=11 // pred_check
        %p637 = pneg %p311
      $region58: #{forward.1} parent=11 // pred_check_branch
        %639 = sbr.rel (%p637) target = $region60
      $region59: #{forward.1} parent=11 // pred_region
        _
      $region60: #{forward.1} parent=11 // pred_fallthru
        _
      // Predicated region
      $region61: #{forward.1} parent=11 // pred_check
        %p640 = pneg %p332
      $region62: #{forward.1} parent=11 // pred_check_branch
        %642 = sbr.rel (%p640) target = $region64
      $region63: #{forward.1} parent=11 // pred_region
        _
      $region64: #{forward.1} parent=11 // pred_fallthru
        _
      // Predicated region
      $region65: #{forward.1} parent=11 // pred_check
        %p643 = pneg %p353
      $region66: #{forward.1} parent=11 // pred_check_branch
        %645 = sbr.rel (%p643) target = $region68
      $region67: #{forward.1} parent=11 // pred_region
        _
      $region68: #{forward.1} parent=11 // pred_fallthru
        _
      // Predicated region
      $region69: #{forward.1} parent=11 // pred_check
        %p646 = pneg %p374
      $region70: #{forward.1} parent=11 // pred_check_branch
        %648 = sbr.rel (%p646) target = $region72
      $region71: #{forward.1} parent=11 // pred_region
        _
      $region72: #{forward.1} parent=11 // pred_fallthru
        _
      // Predicated region
      $region73: #{forward.1} parent=11 // pred_check
        %p649 = pneg %p395
      $region74: #{forward.1} parent=11 // pred_check_branch
        %651 = sbr.rel (%p649) target = $region76
      $region75: #{forward.1} parent=11 // pred_region
        _
      $region76: #{forward.1} parent=11 // pred_fallthru
        _
      // Predicated region
      $region77: #{forward.1} parent=11 // pred_check
        %p652 = pneg %p416
      $region78: #{forward.1} parent=11 // pred_check_branch
        %654 = sbr.rel (%p652) target = $region80
      $region79: #{forward.1} parent=11 // pred_region
        _
      $region80: #{forward.1} parent=11 // pred_fallthru
        _
      // Predicated region
      $region81: #{forward.1} parent=11 // pred_check
        %p655 = pneg %p437
      $region82: #{forward.1} parent=11 // pred_check_branch
        %657 = sbr.rel (%p655) target = $region84
      $region83: #{forward.1} parent=11 // pred_region
        _
      $region84: #{forward.1} parent=11 // pred_fallthru
        _
      // Predicated region
      $region85: #{forward.1} parent=11 // pred_check
        %p658 = pneg %p458
      $region86: #{forward.1} parent=11 // pred_check_branch
        %660 = sbr.rel (%p658) target = $region88
      $region87: #{forward.1} parent=11 // pred_region
        _
      $region88: #{forward.1} parent=11 // pred_fallthru
        _
      // Predicated region
      $region89: #{forward.1} parent=11 // pred_check
        %p661 = pneg %p479
      $region90: #{forward.1} parent=11 // pred_check_branch
        %663 = sbr.rel (%p661) target = $region92
      $region91: #{forward.1} parent=11 // pred_region
        _
      $region92: #{forward.1} parent=11 // pred_fallthru
        _
      // Predicated region
      $region93: #{forward.1} parent=11 // pred_check
        %p664 = pneg %p500
      $region94: #{forward.1} parent=11 // pred_check_branch
        %666 = sbr.rel (%p664) target = $region96
      $region95: #{forward.1} parent=11 // pred_region
        _
      $region96: #{forward.1} parent=11 // pred_fallthru
        _
      // Predicated region
      $region97: #{forward.1} parent=11 // pred_check
        %p667 = pneg %p521
      $region98: #{forward.1} parent=11 // pred_check_branch
        %669 = sbr.rel (%p667) target = $region100
      $region99: #{forward.1} parent=11 // pred_region
        _
      $region100: #{forward.1} parent=11 // pred_fallthru
        _
      // Predicated region
      $region101: #{forward.1} parent=11 // pred_check
        %p670 = pneg %p542
      $region102: #{forward.1} parent=11 // pred_check_branch
        %672 = sbr.rel (%p670) target = $region104
      $region103: #{forward.1} parent=11 // pred_region
        _
      $region104: #{forward.1} parent=11 // pred_fallthru
        _
      // Predicated region
      $region105: #{forward.1} parent=11 // pred_check
        %p673 = pneg %p563
      $region106: #{forward.1} parent=11 // pred_check_branch
        %675 = sbr.rel (%p673) target = $region108
      $region107: #{forward.1} parent=11 // pred_region
        _
      $region108: #{forward.1} parent=11 // pred_fallthru
        _
    $region12: #{forward.1} parent=5 // pred_fallthru
      _
    %p676 = scmp.lt.s32.totalorder %s33, 2
    // Predicated region
    $region109: #{forward.1} parent=5 // pred_check
      %p677 = pneg %p676
    $region110: #{forward.1} parent=5 // pred_check_branch
      %679 = sbr.rel (%p677) target = $region112
    $region111: #{forward.1} parent=5 // pred_region
      // Predicated region
      $region113: #{forward.1} parent=111 // pred_check
        %p680 = pneg %p53
      $region114: #{forward.1} parent=111 // pred_check_branch
        %682 = sbr.rel (%p680) target = $region116
      $region115: #{forward.1} parent=111 // pred_region
        %p683 = scmp.lt.s32.totalorder %s33, 1
        %s684 = scalar_select %p683, %s33, 1
        %s685 = smul.addr %s684, 3
        %s686 = smul.addr %s685, 4
        %s687 = scalar_lea.vmem %s0, %s686
      $region116: #{forward.1} parent=111 // pred_fallthru
        _
    $region112: #{forward.1} parent=5 // pred_fallthru
      _
    %p688 = scmp.le.s32.totalorder 1, %s33
    %p689 = scmp.lt.s32.totalorder %s33, 3
    %p690 = pnand %p688, %p689
    %p691 = pneg %p690
    // Predicated region
    $region117: #{forward.1} parent=5 // pred_check
      _
    $region118: #{forward.1} parent=5 // pred_check_branch
      %693 = sbr.rel (%p690) target = $region120
    $region119: #{forward.1} parent=5 // pred_region
      %s694 = ssub.s32 %s33, 1
      %p695 = scmp.lt.s32.totalorder %s38, 1
      %s696 = scalar_select %p695, %s38, 1
      %s697 = smul.addr %s696, 3
      %s698 = smul.addr %s697, 4
      %s699 = scalar_lea.vmem %s0, %s698
      %p700 = pneg %p59
      %p701 = pneg %p56
      %p702 = pneg %p80
      %p703 = pneg %p77
      %p704 = pneg %p101
      %p705 = pneg %p98
      %p706 = pneg %p122
      %p707 = pneg %p119
      %p708 = pneg %p143
      %p709 = pneg %p140
      %p710 = pneg %p164
      %p711 = pneg %p161
      %p712 = pneg %p185
      %p713 = pneg %p182
      %p714 = pneg %p206
      %p715 = pneg %p203
      %p716 = pneg %p227
      %p717 = pneg %p224
      %p718 = pneg %p248
      %p719 = pneg %p245
      %p720 = pneg %p269
      %p721 = pneg %p266
      %p722 = pneg %p290
      %p723 = pneg %p287
      %p724 = pneg %p311
      %p725 = pneg %p308
      %p726 = pneg %p332
      %p727 = pneg %p329
      %p728 = pneg %p353
      %p729 = pneg %p350
      %p730 = pneg %p374
      %p731 = pneg %p371
      %p732 = pneg %p395
      %p733 = pneg %p392
      %p734 = pneg %p416
      %p735 = pneg %p413
      %p736 = pneg %p437
      %p737 = pneg %p434
      %p738 = pneg %p458
      %p739 = pneg %p455
      %p740 = pneg %p479
      %p741 = pneg %p476
      %p742 = pneg %p500
      %p743 = pneg %p497
      %p744 = pneg %p521
      %p745 = pneg %p518
      %p746 = pneg %p542
      %p747 = pneg %p539
      %p748 = pneg %p563
      %p749 = pneg %p560
      %p750 = pneg %p589
      %p751 = pneg %p586
      %p752 = scmp.lt.s32.totalorder %s38, 1
      %s753 = scalar_select %p752, %s38, 1
      %s754 = smul.addr %s753, 2
      %s755 = scalar_lea.vmem %s25, %s754
      %p756 = scmp.lt.s32.totalorder %s38, 1
      %s757 = scalar_select %p756, %s38, 1
      %s758 = smul.addr %s757, 3
      %s759 = smul.addr %s758, 4
      %s760 = scalar_lea.vmem %s0, %s759
      %p761 = scmp.lt.s32.totalorder %s38, 1
      %s762 = scalar_select %p761, %s38, 1
      %s763 = smul.addr %s762, 2
      %s764 = scalar_lea.vmem %s25, %s763
      %vm765 = vcmask 154624
      %766 = vst.msk [vmem:[#allocation2] sm:$0xff] %vm765, 0.0
      %vm767 = vcmask 703888
      %768 = vst.msk [vmem:[#allocation2 + $0x10] sm:$0xff] %vm767, 0.0
      %769 = vst.msk [vmem:[#allocation3] sm:$0xff] %vm765, 0.0
      %770 = vst.msk [vmem:[#allocation3 + $0x10] sm:$0xff] %vm767, 0.0
      %vm771 = vcmask 89088
      %772 = vst.msk [vmem:[#allocation4] sm:$0xff] %vm771, 0.0
      %773 = vst.msk [vmem:[#allocation4 + $0x8] sm:$0xff] %vm771, 0.0
      %vm774 = vcmask 900816
      %775 = vst.msk [vmem:[#allocation4] sm:$0xff] %vm774, 0.0
      %776 = vst.msk [vmem:[#allocation4 + $0x8] sm:$0xff] %vm774, 0.0
      %777 = vst.msk [vmem:[#allocation5] sm:$0xff] %vm771, 0.0
      %778 = vst.msk [vmem:[#allocation5 + $0x8] sm:$0xff] %vm771, 0.0
      %779 = vst.msk [vmem:[#allocation5] sm:$0xff] %vm774, 0.0
      %780 = vst.msk [vmem:[#allocation5 + $0x8] sm:$0xff] %vm774, 0.0
      %781 = vst.msk [vmem:[#allocation6] sm:$0xff] %vm771, 0.0
      %782 = vst.msk [vmem:[#allocation6 + $0x8] sm:$0xff] %vm771, 0.0
      %783 = vst.msk [vmem:[#allocation6] sm:$0xff] %vm774, 0.0
      %784 = vst.msk [vmem:[#allocation6 + $0x8] sm:$0xff] %vm774, 0.0
      %vm785 = vcmask 56320
      %786 = vst.msk [vmem:[#allocation7] sm:$0xff] %vm785, 0.0
      %787 = vst.msk [vmem:[#allocation7 + $0x8] sm:$0xff] %vm785, 0.0
      %vm788 = vcmask 343280
      %789 = vst.msk [vmem:[#allocation7] sm:$0xff] %vm788, 0.0
      %790 = vst.msk [vmem:[#allocation7 + $0x8] sm:$0xff] %vm788, 0.0
      %791 = vst.msk [vmem:[#allocation8] sm:$0xff] %vm765, 0.0
      %792 = vst.msk [vmem:[#allocation8 + $0x10] sm:$0xff] %vm767, 0.0
      %v793 = vld [vmem:[%s760] sm:$0x77]
      %v794 = vld [vmem:[%s760 + $0x8] sm:$0x7]
      %797 = vst [vmem:[#allocation1] ss:$2 sm:$0xff] %v793
      %s798 = scalar_lea.vmem [#allocation1], 16
      %799 = vst [vmem:[%s798] ss:$2 sm:$0xff] %v794
      %v800 = vld.sshfl [vmem:[#allocation1] sm:$0xff pattern:$0x75316420]
      %v801 = vld.sshfl [vmem:[#allocation1 + $0x8] sm:$0xff pattern:$0x75316420]
      %v802 = vld.sshfl [vmem:[#allocation1 + $0x10] sm:$0xff pattern:$0x75316420]
      %806 = vst [vmem:[#allocation9] sm:$0x7] %v800
      %807 = vst [vmem:[#allocation9 + $0x8] sm:$0x7] %v801
      %vm808 = vcmask 256000
      %809 = vst.msk [vmem:[#allocation9 + $0x10] sm:$0x7] %vm808, %v802
      %v810 = vld [vmem:[%s760] sm:$0x77]
      %v811 = vld [vmem:[%s760 + $0x8] sm:$0x7]
      %814 = vst [vmem:[#allocation1] ss:$2 sm:$0xff] %v810
      %s815 = scalar_lea.vmem [#allocation1], 16
      %816 = vst [vmem:[%s815] ss:$2 sm:$0xff] %v811
      %v817 = vld.sshfl [vmem:[#allocation1] sm:$0xff pattern:$0x75316420]
      %v818 = vld.sshfl [vmem:[#allocation1 + $0x8] sm:$0xff pattern:$0x75316420]
      %v819 = vld.sshfl [vmem:[#allocation1 + $0x10] sm:$0xff pattern:$0x75316420]
      %v820 = vrot.slane %v817, 5
      %v821 = vrot.slane %v818, 5
      %v822 = vrot.slane %v819, 5
      %823 = vrot.lane.b32.xlu0 %v820, 127
      %v824 = vpop.permute.xlu0 %823
      %825 = vrot.lane.b32.xlu0 %v821, 127
      %v826 = vpop.permute.xlu0 %825
      %827 = vrot.lane.b32.xlu0 %v822, 127
      %v828 = vpop.permute.xlu0 %827
      %vm829 = vcmask 1039360
      %v830 = vsel %vm829, %v824, %v826
      %v831 = vsel %vm829, %v826, %v828
      %835 = vst [vmem:[#allocation9] sm:$0x38] %v830
      %836 = vst [vmem:[#allocation9 + $0x8] sm:$0x38] %v831
      %vm837 = vcmask 259075
      %838 = vst.msk [vmem:[#allocation9 + $0x10] sm:$0x38] %vm837, %v828
      %v839 = vld [vmem:[%s760] sm:$0x77]
      %v840 = vld [vmem:[%s760 + $0x8] sm:$0x7]
      %843 = vst [vmem:[#allocation1] ss:$2 sm:$0xff] %v839
      %s844 = scalar_lea.vmem [#allocation1], 16
      %845 = vst [vmem:[%s844] ss:$2 sm:$0xff] %v840
      %v846 = vld.sshfl [vmem:[#allocation1] sm:$0xff pattern:$0x75316420]
      %v847 = vld.sshfl [vmem:[#allocation1 + $0x8] sm:$0xff pattern:$0x75316420]
      %v848 = vld.sshfl [vmem:[#allocation1 + $0x10] sm:$0xff pattern:$0x75316420]
      %v849 = vrot.slane %v846, 2
      %v850 = vrot.slane %v847, 2
      %v851 = vrot.slane %v848, 2
      %852 = vrot.lane.b32.xlu0 %v849, 126
      %v853 = vpop.permute.xlu0 %852
      %854 = vrot.lane.b32.xlu0 %v850, 126
      %v855 = vpop.permute.xlu0 %854
      %856 = vrot.lane.b32.xlu0 %v851, 126
      %v857 = vpop.permute.xlu0 %856
      %vm858 = vcmask 1031168
      %v859 = vsel %vm858, %v853, %v855
      %v860 = vsel %vm858, %v855, %v857
      %864 = vst [vmem:[#allocation9] sm:$0xc0] %v859
      %865 = vst [vmem:[#allocation9 + $0x8] sm:$0xc0] %v860
      %vm866 = vcmask 261126
      %867 = vst.msk [vmem:[#allocation9 + $0x10] sm:$0xc0] %vm866, %v857
      %868 = vst [vmem:[#allocation9 + $0x18] sm:$0x1] %v859
      %869 = vst [vmem:[#allocation9 + $0x20] sm:$0x1] %v860
      %vm870 = vcmask 253952
      %871 = vst.msk [vmem:[#allocation9 + $0x28] sm:$0x1] %vm870, %v857
      %v872 = vld [vmem:[%s760] sm:$0x77]
      %v873 = vld [vmem:[%s760 + $0x8] sm:$0x7]
      %876 = vst [vmem:[#allocation1] ss:$2 sm:$0xff] %v872
      %s877 = scalar_lea.vmem [#allocation1], 16
      %878 = vst [vmem:[%s877] ss:$2 sm:$0xff] %v873
      %v879 = vld.sshfl [vmem:[#allocation1] sm:$0xff pattern:$0x75316420]
      %v880 = vld.sshfl [vmem:[#allocation1 + $0x8] sm:$0xff pattern:$0x75316420]
      %v881 = vld.sshfl [vmem:[#allocation1 + $0x10] sm:$0xff pattern:$0x75316420]
      %v882 = vrot.slane %v879, 7
      %v883 = vrot.slane %v880, 7
      %v884 = vrot.slane %v881, 7
      %885 = vrot.lane.b32.xlu0 %v882, 110
      %v886 = vpop.permute.xlu0 %885
      %887 = vrot.lane.b32.xlu0 %v883, 110
      %v888 = vpop.permute.xlu0 %887
      %889 = vrot.lane.b32.xlu0 %v884, 110
      %v890 = vpop.permute.xlu0 %889
      %vm891 = vcmask 900096
      %v892 = vsel %vm891, %v886, %v888
      %v893 = vsel %vm891, %v888, %v890
      %897 = vst [vmem:[#allocation9 + $0x18] sm:$0xe] %v892
      %898 = vst [vmem:[#allocation9 + $0x20] sm:$0xe] %v893
      %vm899 = vcmask 257025
      %900 = vst.msk [vmem:[#allocation9 + $0x28] sm:$0xe] %vm899, %v890
      %v901 = vld [vmem:[%s760] sm:$0x77]
      %v902 = vld [vmem:[%s760 + $0x8] sm:$0x7]
      %s905 = scalar_lea.vmem [#allocation1], 1
      %906 = vst [vmem:[%s905] ss:$2 sm:$0xff] %v901
      %s907 = scalar_lea.vmem [#allocation1], 17
      %908 = vst [vmem:[%s907] ss:$2 sm:$0xff] %v902
      %v909 = vld.sshfl [vmem:[#allocation1] sm:$0xff pattern:$0x75316420]
      %v910 = vld.sshfl [vmem:[#allocation1 + $0x8] sm:$0xff pattern:$0x75316420]
      %v911 = vld.sshfl [vmem:[#allocation1 + $0x10] sm:$0xff pattern:$0x75316420]
      %912 = vrot.lane.b32.xlu0 %v909, 109
      %v913 = vpop.permute.xlu0 %912
      %914 = vrot.lane.b32.xlu0 %v910, 109
      %v915 = vpop.permute.xlu0 %914
      %916 = vrot.lane.b32.xlu0 %v911, 109
      %v917 = vpop.permute.xlu0 %916
      %vm918 = vcmask 891904
      %v919 = vsel %vm918, %v913, %v915
      %v920 = vsel %vm918, %v915, %v917
      %924 = vst [vmem:[#allocation9 + $0x18] sm:$0x70] %v919
      %925 = vst [vmem:[#allocation9 + $0x20] sm:$0x70] %v920
      %vm926 = vcmask 260100
      %927 = vst.msk [vmem:[#allocation9 + $0x28] sm:$0x70] %vm926, %v917
      %v928 = vld [vmem:[%s760] sm:$0x77]
      %v929 = vld [vmem:[%s760 + $0x8] sm:$0x7]
      %932 = vst [vmem:[#allocation1] ss:$2 sm:$0xff] %v928
      %s933 = scalar_lea.vmem [#allocation1], 16
      %934 = vst [vmem:[%s933] ss:$2 sm:$0xff] %v929
      %v935 = vld.sshfl [vmem:[#allocation1] sm:$0xff pattern:$0x75316420]
      %v936 = vld.sshfl [vmem:[#allocation1 + $0x8] sm:$0xff pattern:$0x75316420]
      %v937 = vld.sshfl [vmem:[#allocation1 + $0x10] sm:$0xff pattern:$0x75316420]
      %v938 = vrot.slane %v935, 1
      %v939 = vrot.slane %v936, 1
      %v940 = vrot.slane %v937, 1
      %941 = vrot.lane.b32.xlu0 %v938, 108
      %v942 = vpop.permute.xlu0 %941
      %943 = vrot.lane.b32.xlu0 %v939, 108
      %v944 = vpop.permute.xlu0 %943
      %945 = vrot.lane.b32.xlu0 %v940, 108
      %v946 = vpop.permute.xlu0 %945
      %vm947 = vcmask 883712
      %v948 = vsel %vm947, %v942, %v944
      %v949 = vsel %vm947, %v944, %v946
      %953 = vst [vmem:[#allocation9 + $0x18] sm:$0x80] %v948
      %954 = vst [vmem:[#allocation9 + $0x20] sm:$0x80] %v949
      %vm955 = vcmask 261127
      %956 = vst.msk [vmem:[#allocation9 + $0x28] sm:$0x80] %vm955, %v946
      %957 = vst [vmem:[#allocation9 + $0x30] sm:$0x3] %v948
      %958 = vst [vmem:[#allocation9 + $0x38] sm:$0x3] %v949
      %vm959 = vcmask 254976
      %960 = vst.msk [vmem:[#allocation9 + $0x40] sm:$0x3] %vm959, %v946
      %v961 = vld [vmem:[%s760] sm:$0x77]
      %v962 = vld [vmem:[%s760 + $0x8] sm:$0x7]
      %965 = vst [vmem:[#allocation1] ss:$2 sm:$0xff] %v961
      %s966 = scalar_lea.vmem [#allocation1], 16
      %967 = vst [vmem:[%s966] ss:$2 sm:$0xff] %v962
      %v968 = vld.sshfl [vmem:[#allocation1] sm:$0xff pattern:$0x75316420]
      %v969 = vld.sshfl [vmem:[#allocation1 + $0x8] sm:$0xff pattern:$0x75316420]
      %v970 = vld.sshfl [vmem:[#allocation1 + $0x10] sm:$0xff pattern:$0x75316420]
      %v971 = vrot.slane %v968, 6
      %v972 = vrot.slane %v969, 6
      %v973 = vrot.slane %v970, 6
      %974 = vrot.lane.b32.xlu0 %v971, 92
      %v975 = vpop.permute.xlu0 %974
      %976 = vrot.lane.b32.xlu0 %v972, 92
      %v977 = vpop.permute.xlu0 %976
      %978 = vrot.lane.b32.xlu0 %v973, 92
      %v979 = vpop.permute.xlu0 %978
      %vm980 = vcmask 752640
      %v981 = vsel %vm980, %v975, %v977
      %v982 = vsel %vm980, %v977, %v979
      %986 = vst [vmem:[#allocation9 + $0x30] sm:$0x1c] %v981
      %987 = vst [vmem:[#allocation9 + $0x38] sm:$0x1c] %v982
      %vm988 = vcmask 258050
      %989 = vst.msk [vmem:[#allocation9 + $0x40] sm:$0x1c] %vm988, %v979
      %v990 = vld [vmem:[%s760] sm:$0x77]
      %v991 = vld [vmem:[%s760 + $0x8] sm:$0x7]
      %994 = vst [vmem:[#allocation1] ss:$2 sm:$0xff] %v990
      %s995 = scalar_lea.vmem [#allocation1], 16
      %996 = vst [vmem:[%s995] ss:$2 sm:$0xff] %v991
      %v997 = vld.sshfl [vmem:[#allocation1] sm:$0xff pattern:$0x75316420]
      %v998 = vld.sshfl [vmem:[#allocation1 + $0x8] sm:$0xff pattern:$0x75316420]
      %v999 = vld.sshfl [vmem:[#allocation1 + $0x10] sm:$0xff pattern:$0x75316420]
      %v1000 = vrot.slane %v997, 3
      %v1001 = vrot.slane %v998, 3
      %v1002 = vrot.slane %v999, 3
      %1003 = vrot.lane.b32.xlu0 %v1000, 91
      %v1004 = vpop.permute.xlu0 %1003
      %1005 = vrot.lane.b32.xlu0 %v1001, 91
      %v1006 = vpop.permute.xlu0 %1005
      %1007 = vrot.lane.b32.xlu0 %v1002, 91
      %v1008 = vpop.permute.xlu0 %1007
      %vm1009 = vcmask 744448
      %v1010 = vsel %vm1009, %v1004, %v1006
      %v1011 = vsel %vm1009, %v1006, %v1008
      %1015 = vst [vmem:[#allocation9 + $0x30] sm:$0xe0] %v1010
      %1016 = vst [vmem:[#allocation9 + $0x38] sm:$0xe0] %v1011
      %vm1017 = vcmask 261125
      %1018 = vst.msk [vmem:[#allocation9 + $0x40] sm:$0xe0] %vm1017, %v1008
      %v1019 = vld [vmem:[%s760] sm:$0x77]
      %v1020 = vld [vmem:[%s760 + $0x8] sm:$0x7]
      %1023 = vst [vmem:[#allocation1] ss:$2 sm:$0xff] %v1019
      %s1024 = scalar_lea.vmem [#allocation1], 16
      %1025 = vst [vmem:[%s1024] ss:$2 sm:$0xff] %v1020
      %v1026 = vld.sshfl [vmem:[#allocation1] sm:$0xff pattern:$0x75316420]
      %v1027 = vld.sshfl [vmem:[#allocation1 + $0x8] sm:$0xff pattern:$0x75316420]
      %v1028 = vld.sshfl [vmem:[#allocation1 + $0x10] sm:$0xff pattern:$0x75316420]
      %1029 = vrot.lane.b32.xlu0 %v1026, 90
      %v1030 = vpop.permute.xlu0 %1029
      %1031 = vrot.lane.b32.xlu0 %v1027, 90
      %v1032 = vpop.permute.xlu0 %1031
      %1033 = vrot.lane.b32.xlu0 %v1028, 90
      %v1034 = vpop.permute.xlu0 %1033
      %vm1035 = vcmask 736256
      %v1036 = vsel %vm1035, %v1030, %v1032
      %v1037 = vsel %vm1035, %v1032, %v1034
      %1041 = vst [vmem:[#allocation9 + $0x48] sm:$0x7] %v1036
      %1042 = vst [vmem:[#allocation9 + $0x50] sm:$0x7] %v1037
      %1043 = vst.msk [vmem:[#allocation9 + $0x58] sm:$0x7] %vm808, %v1034
      %v1044 = vld [vmem:[%s1] sm:$0xff]
      %v1045 = vld [vmem:[#allocation9] sm:$0xff]
      %v1046 = vld [vmem:[#allocation9 + $0x8] sm:$0xff]
      %v1047 = vld [vmem:[#allocation9 + $0x10] sm:$0xff]
      %v1048 = vld [vmem:[#allocation9 + $0x18] sm:$0xff]
      %v1049 = vld [vmem:[#allocation9 + $0x20] sm:$0xff]
      %v1050 = vld [vmem:[#allocation9 + $0x28] sm:$0xff]
      %v1051 = vld [vmem:[#allocation9 + $0x30] sm:$0xff]
      %v1052 = vld [vmem:[#allocation9 + $0x38] sm:$0xff]
      %v1053 = vld [vmem:[#allocation9 + $0x40] sm:$0xff]
      %v1054 = vld [vmem:[#allocation9 + $0x48] sm:$0x7]
      %v1055 = vld [vmem:[#allocation9 + $0x50] sm:$0x7]
      %v1056 = vld [vmem:[#allocation9 + $0x58] sm:$0x7]
      %v1057 = vld [vmem:[%s2] sm:$0xff]
      %1059 = vset.pattern.permute.xlu0 0
      %1060 = vperm.xlu0 %1059, %v1057
      %v1061 = vpop.permute.xlu0 %1060
      %vm1063 = vcmask 220160
      %v1065 = vsel %vm1063, %v1044, 0
      %vm1067 = vcmask 1042432
      %v1069 = vsel %vm1067, %v1054, 0
      %v1072 = vsel %vm1067, %v1055, 0
      %v1075 = vsel %vm1067, %v1056, 0
      %1077 = vmatpush.msra.mxu0 0.0
      %1078 = vmatpush.msra.mxu0 0.0
      %1079 = vmatpush.msra.mxu0 0.0
      %1080 = vmatpush.msra.mxu0 0.0
      %1081 = vmatpush.msra.mxu0 0.0
      %1082 = vmatpush.msra.mxu0 0.0
      %1083 = vmatpush.msra.mxu0 0.0
      %1084 = vmatpush.msra.mxu0 0.0
      %1085 = vmatpush.msra.mxu0 0.0
      %1086 = vmatpush.msra.mxu0 0.0
      %1087 = vmatpush.msra.mxu0 0.0
      %1088 = vmatpush.msra.mxu0 0.0
      %1089 = vmatpush.msra.mxu0 %v1069
      %1090 = vmatpush.msra.mxu0 %v1051
      %1091 = vmatpush.msra.mxu0 %v1048
      %1092 = vmatpush.msra.mxu0 %v1045
      %1093 = vmatmul.f32.gmra.mxu0 %v1065
      %v1094 = vpop.f32.mrf.mxu0
      %v1095 = vadd.f32 %v1061, %v1094
      %1096 = vdwg.mxu0
      %1097 = vmatpush.msra.mxu0 0.0
      %1098 = vmatpush.msra.mxu0 0.0
      %1099 = vmatpush.msra.mxu0 0.0
      %1100 = vmatpush.msra.mxu0 0.0
      %1101 = vmatpush.msra.mxu0 0.0
      %1102 = vmatpush.msra.mxu0 0.0
      %1103 = vmatpush.msra.mxu0 0.0
      %1104 = vmatpush.msra.mxu0 0.0
      %1105 = vmatpush.msra.mxu0 0.0
      %1106 = vmatpush.msra.mxu0 0.0
      %1107 = vmatpush.msra.mxu0 0.0
      %1108 = vmatpush.msra.mxu0 0.0
      %1109 = vmatpush.msra.mxu0 %v1072
      %1110 = vmatpush.msra.mxu0 %v1052
      %1111 = vmatpush.msra.mxu0 %v1049
      %1112 = vmatpush.msra.mxu0 %v1046
      %1113 = vmatmul.f32.gmra.mxu0 %v1065
      %v1114 = vpop.f32.mrf.mxu0
      %v1115 = vadd.f32 %v1061, %v1114
      %1116 = vdwg.mxu0
      %1117 = vmatpush.msra.mxu0 0.0
      %1118 = vmatpush.msra.mxu0 0.0
      %1119 = vmatpush.msra.mxu0 0.0
      %1120 = vmatpush.msra.mxu0 0.0
      %1121 = vmatpush.msra.mxu0 0.0
      %1122 = vmatpush.msra.mxu0 0.0
      %1123 = vmatpush.msra.mxu0 0.0
      %1124 = vmatpush.msra.mxu0 0.0
      %1125 = vmatpush.msra.mxu0 0.0
      %1126 = vmatpush.msra.mxu0 0.0
      %1127 = vmatpush.msra.mxu0 0.0
      %1128 = vmatpush.msra.mxu0 0.0
      %1129 = vmatpush.msra.mxu0 %v1075
      %1130 = vmatpush.msra.mxu0 %v1053
      %1131 = vmatpush.msra.mxu0 %v1050
      %1132 = vmatpush.msra.mxu0 %v1047
      %1133 = vmatmul.f32.gmra.mxu0 %v1065
      %v1134 = vpop.f32.mrf.mxu0
      %v1135 = vadd.f32 %v1061, %v1134
      %1136 = vdwg.mxu0
      %v1137 = vmax.f32 %v1095, 0.0
      %v1138 = vmax.f32 %v1115, 0.0
      %v1139 = vmax.f32 %v1135, 0.0
      %v1140 = vld [vmem:[%s3] sm:$0x7]
      %v1142 = vperm.slane %v1140, 0
      %v1143 = vperm.slane %v1140, 1
      %v1144 = vperm.slane %v1140, 2
      %v1148 = vmul.f32 %v1137, %v1142
      %v1149 = vmul.f32 %v1138, %v1143
      %v1150 = vmul.f32 %v1139, %v1144
      %1154 = vrot.lane.b32.xlu0 %v1148, 19
      %v1155 = vpop.permute.xlu0 %1154
      %1156 = vrot.lane.b32.xlu0 %v1149, 19
      %v1157 = vpop.permute.xlu0 %1156
      %1158 = vrot.lane.b32.xlu0 %v1150, 19
      %v1159 = vpop.permute.xlu0 %1158
      %v1160 = vsel %vm765, %v1155, %v1157
      %v1161 = vsel %vm765, %v1157, %v1159
      %vm1165 = vcmask 1047704
      %1166 = vst.msk [vmem:[#allocation2] sm:$0xff] %vm1165, %v1155
      %1167 = vst [vmem:[#allocation2 + $0x8] sm:$0xff] %v1160
      %vm1168 = vcmask 416768
      %1169 = vst.msk [vmem:[#allocation2 + $0x10] sm:$0xff] %vm1168, %v1161
      %v1170 = vld [vmem:[#allocation2] sm:$0xff]
      %v1171 = vld [vmem:[#allocation2 + $0x8] sm:$0xff]
      %v1172 = vld [vmem:[#allocation2 + $0x10] sm:$0xff]
      %1173 = vst [vmem:[#allocation9] sm:$0xff] %v1170
      %1174 = vst [vmem:[#allocation9 + $0x8] sm:$0xff] %v1171
      %vm1175 = vcmask 261120
      %1176 = vst.msk [vmem:[#allocation9 + $0x10] sm:$0xff] %vm1175, %v1172
      %v1177 = vld [vmem:[#allocation2] sm:$0xff]
      %v1178 = vld [vmem:[#allocation2 + $0x8] sm:$0xff]
      %v1179 = vld [vmem:[#allocation2 + $0x10] sm:$0xff]
      %1183 = vrot.lane.b32.xlu0 %v1177, 127
      %v1184 = vpop.permute.xlu0 %1183
      %1185 = vrot.lane.b32.xlu0 %v1178, 127
      %v1186 = vpop.permute.xlu0 %1185
      %1187 = vrot.lane.b32.xlu0 %v1179, 127
      %v1188 = vpop.permute.xlu0 %1187
      %v1189 = vsel %vm829, %v1184, %v1186
      %v1190 = vsel %vm829, %v1186, %v1188
      %1194 = vst [vmem:[#allocation9 + $0x18] sm:$0xff] %v1189
      %1195 = vst [vmem:[#allocation9 + $0x20] sm:$0xff] %v1190
      %1196 = vst.msk [vmem:[#allocation9 + $0x28] sm:$0xff] %vm1175, %v1188
      %v1197 = vld [vmem:[#allocation2] sm:$0xff]
      %v1198 = vld [vmem:[#allocation2 + $0x8] sm:$0xff]
      %v1199 = vld [vmem:[#allocation2 + $0x10] sm:$0xff]
      %1203 = vrot.lane.b32.xlu0 %v1197, 126
      %v1204 = vpop.permute.xlu0 %1203
      %1205 = vrot.lane.b32.xlu0 %v1198, 126
      %v1206 = vpop.permute.xlu0 %1205
      %1207 = vrot.lane.b32.xlu0 %v1199, 126
      %v1208 = vpop.permute.xlu0 %1207
      %v1209 = vsel %vm858, %v1204, %v1206
      %v1210 = vsel %vm858, %v1206, %v1208
      %1214 = vst [vmem:[#allocation9 + $0x30] sm:$0xff] %v1209
      %1215 = vst [vmem:[#allocation9 + $0x38] sm:$0xff] %v1210
      %1216 = vst.msk [vmem:[#allocation9 + $0x40] sm:$0xff] %vm1175, %v1208
      %v1217 = vld [vmem:[#allocation2] sm:$0xff]
      %v1218 = vld [vmem:[#allocation2 + $0x8] sm:$0xff]
      %v1219 = vld [vmem:[#allocation2 + $0x10] sm:$0xff]
      %1223 = vrot.lane.b32.xlu0 %v1217, 110
      %v1224 = vpop.permute.xlu0 %1223
      %1225 = vrot.lane.b32.xlu0 %v1218, 110
      %v1226 = vpop.permute.xlu0 %1225
      %1227 = vrot.lane.b32.xlu0 %v1219, 110
      %v1228 = vpop.permute.xlu0 %1227
      %v1229 = vsel %vm891, %v1224, %v1226
      %v1230 = vsel %vm891, %v1226, %v1228
      %1234 = vst [vmem:[#allocation9 + $0x48] sm:$0xff] %v1229
      %1235 = vst [vmem:[#allocation9 + $0x50] sm:$0xff] %v1230
      %1236 = vst.msk [vmem:[#allocation9 + $0x58] sm:$0xff] %vm1175, %v1228
      %v1237 = vld [vmem:[#allocation2] sm:$0xff]
      %v1238 = vld [vmem:[#allocation2 + $0x8] sm:$0xff]
      %v1239 = vld [vmem:[#allocation2 + $0x10] sm:$0xff]
      %1243 = vrot.lane.b32.xlu0 %v1237, 109
      %v1244 = vpop.permute.xlu0 %1243
      %1245 = vrot.lane.b32.xlu0 %v1238, 109
      %v1246 = vpop.permute.xlu0 %1245
      %1247 = vrot.lane.b32.xlu0 %v1239, 109
      %v1248 = vpop.permute.xlu0 %1247
      %v1249 = vsel %vm918, %v1244, %v1246
      %v1250 = vsel %vm918, %v1246, %v1248
      %1254 = vst [vmem:[#allocation9 + $0x60] sm:$0xff] %v1249
      %1255 = vst [vmem:[#allocation9 + $0x68] sm:$0xff] %v1250
      %1256 = vst.msk [vmem:[#allocation9 + $0x70] sm:$0xff] %vm1175, %v1248
      %v1257 = vld [vmem:[#allocation2] sm:$0xff]
      %v1258 = vld [vmem:[#allocation2 + $0x8] sm:$0xff]
      %v1259 = vld [vmem:[#allocation2 + $0x10] sm:$0xff]
      %1263 = vrot.lane.b32.xlu0 %v1257, 108
      %v1264 = vpop.permute.xlu0 %1263
      %1265 = vrot.lane.b32.xlu0 %v1258, 108
      %v1266 = vpop.permute.xlu0 %1265
      %1267 = vrot.lane.b32.xlu0 %v1259, 108
      %v1268 = vpop.permute.xlu0 %1267
      %v1269 = vsel %vm947, %v1264, %v1266
      %v1270 = vsel %vm947, %v1266, %v1268
      %1274 = vst [vmem:[#allocation9 + $0x78] sm:$0xff] %v1269
      %1275 = vst [vmem:[#allocation9 + $0x80] sm:$0xff] %v1270
      %1276 = vst.msk [vmem:[#allocation9 + $0x88] sm:$0xff] %vm1175, %v1268
      %v1277 = vld [vmem:[#allocation2] sm:$0xff]
      %v1278 = vld [vmem:[#allocation2 + $0x8] sm:$0xff]
      %v1279 = vld [vmem:[#allocation2 + $0x10] sm:$0xff]
      %1283 = vrot.lane.b32.xlu0 %v1277, 92
      %v1284 = vpop.permute.xlu0 %1283
      %1285 = vrot.lane.b32.xlu0 %v1278, 92
      %v1286 = vpop.permute.xlu0 %1285
      %1287 = vrot.lane.b32.xlu0 %v1279, 92
      %v1288 = vpop.permute.xlu0 %1287
      %v1289 = vsel %vm980, %v1284, %v1286
      %v1290 = vsel %vm980, %v1286, %v1288
      %1294 = vst [vmem:[#allocation9 + $0x90] sm:$0xff] %v1289
      %1295 = vst [vmem:[#allocation9 + $0x98] sm:$0xff] %v1290
      %1296 = vst.msk [vmem:[#allocation9 + $0xa0] sm:$0xff] %vm1175, %v1288
      %v1297 = vld [vmem:[#allocation2] sm:$0xff]
      %v1298 = vld [vmem:[#allocation2 + $0x8] sm:$0xff]
      %v1299 = vld [vmem:[#allocation2 + $0x10] sm:$0xff]
      %1303 = vrot.lane.b32.xlu0 %v1297, 91
      %v1304 = vpop.permute.xlu0 %1303
      %1305 = vrot.lane.b32.xlu0 %v1298, 91
      %v1306 = vpop.permute.xlu0 %1305
      %1307 = vrot.lane.b32.xlu0 %v1299, 91
      %v1308 = vpop.permute.xlu0 %1307
      %v1309 = vsel %vm1009, %v1304, %v1306
      %v1310 = vsel %vm1009, %v1306, %v1308
      %1314 = vst [vmem:[#allocation9 + $0xa8] sm:$0xff] %v1309
      %1315 = vst [vmem:[#allocation9 + $0xb0] sm:$0xff] %v1310
      %1316 = vst.msk [vmem:[#allocation9 + $0xb8] sm:$0xff] %vm1175, %v1308
      %v1317 = vld [vmem:[#allocation2] sm:$0xff]
      %v1318 = vld [vmem:[#allocation2 + $0x8] sm:$0xff]
      %v1319 = vld [vmem:[#allocation2 + $0x10] sm:$0xff]
      %1323 = vrot.lane.b32.xlu0 %v1317, 90
      %v1324 = vpop.permute.xlu0 %1323
      %1325 = vrot.lane.b32.xlu0 %v1318, 90
      %v1326 = vpop.permute.xlu0 %1325
      %1327 = vrot.lane.b32.xlu0 %v1319, 90
      %v1328 = vpop.permute.xlu0 %1327
      %v1329 = vsel %vm1035, %v1324, %v1326
      %v1330 = vsel %vm1035, %v1326, %v1328
      %1334 = vst [vmem:[#allocation9 + $0xc0] sm:$0xff] %v1329
      %1335 = vst [vmem:[#allocation9 + $0xc8] sm:$0xff] %v1330
      %1336 = vst.msk [vmem:[#allocation9 + $0xd0] sm:$0xff] %vm1175, %v1328
      %v1337 = vld [vmem:[%s4] sm:$0xff]
      %v1338 = vld [vmem:[#allocation9] sm:$0xff]
      %v1339 = vld [vmem:[#allocation9 + $0x8] sm:$0xff]
      %v1340 = vld [vmem:[#allocation9 + $0x10] sm:$0xff]
      %v1341 = vld [vmem:[#allocation9 + $0x18] sm:$0xff]
      %v1342 = vld [vmem:[#allocation9 + $0x20] sm:$0xff]
      %v1343 = vld [vmem:[#allocation9 + $0x28] sm:$0xff]
      %v1344 = vld [vmem:[#allocation9 + $0x30] sm:$0xff]
      %v1345 = vld [vmem:[#allocation9 + $0x38] sm:$0xff]
      %v1346 = vld [vmem:[#allocation9 + $0x40] sm:$0xff]
      %v1347 = vld [vmem:[#allocation9 + $0x48] sm:$0xff]
      %v1348 = vld [vmem:[#allocation9 + $0x50] sm:$0xff]
      %v1349 = vld [vmem:[#allocation9 + $0x58] sm:$0xff]
      %v1350 = vld [vmem:[#allocation9 + $0x60] sm:$0xff]
      %v1351 = vld [vmem:[#allocation9 + $0x68] sm:$0xff]
      %v1352 = vld [vmem:[#allocation9 + $0x70] sm:$0xff]
      %v1353 = vld [vmem:[#allocation9 + $0x78] sm:$0xff]
      %v1354 = vld [vmem:[#allocation9 + $0x80] sm:$0xff]
      %v1355 = vld [vmem:[#allocation9 + $0x88] sm:$0xff]
      %v1356 = vld [vmem:[#allocation9 + $0x90] sm:$0xff]
      %v1357 = vld [vmem:[#allocation9 + $0x98] sm:$0xff]
      %v1358 = vld [vmem:[#allocation9 + $0xa0] sm:$0xff]
      %v1359 = vld [vmem:[#allocation9 + $0xa8] sm:$0xff]
      %v1360 = vld [vmem:[#allocation9 + $0xb0] sm:$0xff]
      %v1361 = vld [vmem:[#allocation9 + $0xb8] sm:$0xff]
      %v1362 = vld [vmem:[#allocation9 + $0xc0] sm:$0xff]
      %v1363 = vld [vmem:[#allocation9 + $0xc8] sm:$0xff]
      %v1364 = vld [vmem:[#allocation9 + $0xd0] sm:$0xff]
      %v1365 = vld [vmem:[%s5] sm:$0xff]
      %1367 = vset.pattern.permute.xlu0 0
      %1368 = vperm.xlu0 %1367, %v1365
      %v1369 = vpop.permute.xlu0 %1368
      %vm1371 = vcmask 588800
      %v1373 = vsel %vm1371, %v1337, 0
      %1375 = vmatpush.msra.mxu0 0.0
      %1376 = vmatpush.msra.mxu0 0.0
      %1377 = vmatpush.msra.mxu0 0.0
      %1378 = vmatpush.msra.mxu0 0.0
      %1379 = vmatpush.msra.mxu0 0.0
      %1380 = vmatpush.msra.mxu0 0.0
      %1381 = vmatpush.msra.mxu0 0.0
      %1382 = vmatpush.msra.mxu0 %v1362
      %1383 = vmatpush.msra.mxu0 %v1359
      %1384 = vmatpush.msra.mxu0 %v1356
      %1385 = vmatpush.msra.mxu0 %v1353
      %1386 = vmatpush.msra.mxu0 %v1350
      %1387 = vmatpush.msra.mxu0 %v1347
      %1388 = vmatpush.msra.mxu0 %v1344
      %1389 = vmatpush.msra.mxu0 %v1341
      %1390 = vmatpush.msra.mxu0 %v1338
      %1391 = vmatmul.f32.gmra.mxu0 %v1373
      %v1392 = vpop.f32.mrf.mxu0
      %v1393 = vadd.f32 %v1369, %v1392
      %1394 = vdwg.mxu0
      %1395 = vmatpush.msra.mxu0 0.0
      %1396 = vmatpush.msra.mxu0 0.0
      %1397 = vmatpush.msra.mxu0 0.0
      %1398 = vmatpush.msra.mxu0 0.0
      %1399 = vmatpush.msra.mxu0 0.0
      %1400 = vmatpush.msra.mxu0 0.0
      %1401 = vmatpush.msra.mxu0 0.0
      %1402 = vmatpush.msra.mxu0 %v1363
      %1403 = vmatpush.msra.mxu0 %v1360
      %1404 = vmatpush.msra.mxu0 %v1357
      %1405 = vmatpush.msra.mxu0 %v1354
      %1406 = vmatpush.msra.mxu0 %v1351
      %1407 = vmatpush.msra.mxu0 %v1348
      %1408 = vmatpush.msra.mxu0 %v1345
      %1409 = vmatpush.msra.mxu0 %v1342
      %1410 = vmatpush.msra.mxu0 %v1339
      %1411 = vmatmul.f32.gmra.mxu0 %v1373
      %v1412 = vpop.f32.mrf.mxu0
      %v1413 = vadd.f32 %v1369, %v1412
      %1414 = vdwg.mxu0
      %1415 = vmatpush.msra.mxu0 0.0
      %1416 = vmatpush.msra.mxu0 0.0
      %1417 = vmatpush.msra.mxu0 0.0
      %1418 = vmatpush.msra.mxu0 0.0
      %1419 = vmatpush.msra.mxu0 0.0
      %1420 = vmatpush.msra.mxu0 0.0
      %1421 = vmatpush.msra.mxu0 0.0
      %1422 = vmatpush.msra.mxu0 %v1364
      %1423 = vmatpush.msra.mxu0 %v1361
      %1424 = vmatpush.msra.mxu0 %v1358
      %1425 = vmatpush.msra.mxu0 %v1355
      %1426 = vmatpush.msra.mxu0 %v1352
      %1427 = vmatpush.msra.mxu0 %v1349
      %1428 = vmatpush.msra.mxu0 %v1346
      %1429 = vmatpush.msra.mxu0 %v1343
      %1430 = vmatpush.msra.mxu0 %v1340
      %1431 = vmatmul.f32.gmra.mxu0 %v1373
      %v1432 = vpop.f32.mrf.mxu0
      %v1433 = vadd.f32 %v1369, %v1432
      %1434 = vdwg.mxu0
      %v1435 = vmax.f32 %v1393, 0.0
      %v1436 = vmax.f32 %v1413, 0.0
      %v1437 = vmax.f32 %v1433, 0.0
      %v1438 = vld [vmem:[%s3] sm:$0x7]
      %v1440 = vperm.slane %v1438, 0
      %v1441 = vperm.slane %v1438, 1
      %v1442 = vperm.slane %v1438, 2
      %v1446 = vmul.f32 %v1435, %v1440
      %v1447 = vmul.f32 %v1436, %v1441
      %v1448 = vmul.f32 %v1437, %v1442
      %1452 = vrot.lane.b32.xlu0 %v1446, 19
      %v1453 = vpop.permute.xlu0 %1452
      %1454 = vrot.lane.b32.xlu0 %v1447, 19
      %v1455 = vpop.permute.xlu0 %1454
      %1456 = vrot.lane.b32.xlu0 %v1448, 19
      %v1457 = vpop.permute.xlu0 %1456
      %v1458 = vsel %vm765, %v1453, %v1455
      %v1459 = vsel %vm765, %v1455, %v1457
      %1463 = vst.msk [vmem:[#allocation3] sm:$0xff] %vm1165, %v1453
      %1464 = vst [vmem:[#allocation3 + $0x8] sm:$0xff] %v1458
      %1465 = vst.msk [vmem:[#allocation3 + $0x10] sm:$0xff] %vm1168, %v1459
      %v1466 = vld [vmem:[%s6] sm:$0xff]
      %v1467 = vld [vmem:[%s6 + $0x8] sm:$0xff]
      %v1468 = vld [vmem:[%s6 + $0x10] sm:$0x1]
      %v1469 = vld [vmem:[#allocation3] sm:$0xff]
      %1471 = vrot.lane.b32.xlu0 %v1469, 127
      %v1472 = vpop.permute.xlu0 %1471
      %v1474 = vmax.f32 %v1469, %v1472
      %1475 = vrot.lane.b32.xlu0 %v1469, 110
      %v1476 = vpop.permute.xlu0 %1475
      %v1478 = vmax.f32 %v1474, %v1476
      %1479 = vrot.lane.b32.xlu0 %v1469, 109
      %v1480 = vpop.permute.xlu0 %1479
      %v1482 = vmax.f32 %v1478, %v1480
      %1484 = vrot.lane.b32.xlu0 %v1482, 110
      %v1485 = vpop.permute.xlu0 %1484
      %vm1486 = vcmask 138240
      %v1487 = vsel %vm1486, %v1485, 0
      %vm1489 = vcmask 1040384
      %v1491 = vsel %vm1489, %v1468, 0
      %1493 = vmatpush.msra.mxu0 0.0
      %1494 = vmatpush.msra.mxu0 0.0
      %1495 = vmatpush.msra.mxu0 0.0
      %1496 = vmatpush.msra.mxu0 0.0
      %1497 = vmatpush.msra.mxu0 0.0
      %1498 = vmatpush.msra.mxu0 0.0
      %1499 = vmatpush.msra.mxu0 0.0
      %1500 = vmatpush.msra.mxu0 0.0
      %1501 = vmatpush.msra.mxu0 0.0
      %1502 = vmatpush.msra.mxu0 0.0
      %1503 = vmatpush.msra.mxu0 0.0
      %1504 = vmatpush.msra.mxu0 0.0
      %1505 = vmatpush.msra.mxu0 0.0
      %1506 = vmatpush.msra.mxu0 %v1491
      %1507 = vmatpush.msra.mxu0 %v1467
      %1508 = vmatpush.msra.mxu0 %v1466
      %1509 = vmatmul.f32.gmra.mxu0 %v1487
      %v1510 = vpop.f32.mrf.mxu0
      %v1511 = vadd.f32 0.0, %v1510
      %1512 = vdwg.mxu0
      %1514 = vrot.lane.b32.xlu0 %v1511, 10
      %v1515 = vpop.permute.xlu0 %1514
      %vm1517 = vcmask 162896
      %1518 = vst.msk [vmem:[#allocation4] sm:$0xff] %vm1517, %v1515
      %v1519 = vld [vmem:[#allocation3] sm:$0xff]
      %1521 = vrot.lane.b32.xlu0 %v1519, 127
      %v1522 = vpop.permute.xlu0 %1521
      %v1524 = vmax.f32 %v1519, %v1522
      %1525 = vrot.lane.b32.xlu0 %v1519, 110
      %v1526 = vpop.permute.xlu0 %1525
      %v1528 = vmax.f32 %v1524, %v1526
      %1529 = vrot.lane.b32.xlu0 %v1519, 109
      %v1530 = vpop.permute.xlu0 %1529
      %v1532 = vmax.f32 %v1528, %v1530
      %1534 = vrot.lane.b32.xlu0 %v1532, 74
      %v1535 = vpop.permute.xlu0 %1534
      %v1536 = vsel %vm1486, %v1535, 0
      %1538 = vmatpush.msra.mxu0 0.0
      %1539 = vmatpush.msra.mxu0 0.0
      %1540 = vmatpush.msra.mxu0 0.0
      %1541 = vmatpush.msra.mxu0 0.0
      %1542 = vmatpush.msra.mxu0 0.0
      %1543 = vmatpush.msra.mxu0 0.0
      %1544 = vmatpush.msra.mxu0 0.0
      %1545 = vmatpush.msra.mxu0 0.0
      %1546 = vmatpush.msra.mxu0 0.0
      %1547 = vmatpush.msra.mxu0 0.0
      %1548 = vmatpush.msra.mxu0 0.0
      %1549 = vmatpush.msra.mxu0 0.0
      %1550 = vmatpush.msra.mxu0 0.0
      %1551 = vmatpush.msra.mxu0 %v1491
      %1552 = vmatpush.msra.mxu0 %v1467
      %1553 = vmatpush.msra.mxu0 %v1466
      %1554 = vmatmul.f32.gmra.mxu0 %v1536
      %v1555 = vpop.f32.mrf.mxu0
      %v1556 = vadd.f32 0.0, %v1555
      %1557 = vdwg.mxu0
      %1559 = vrot.lane.b32.xlu0 %v1556, 20
      %v1560 = vpop.permute.xlu0 %1559
      %vm1562 = vcmask 244896
      %1563 = vst.msk [vmem:[#allocation4] sm:$0xff] %vm1562, %v1560
      %v1564 = vld [vmem:[#allocation3] sm:$0xff]
      %1566 = vrot.lane.b32.xlu0 %v1564, 127
      %v1567 = vpop.permute.xlu0 %1566
      %v1569 = vmax.f32 %v1564, %v1567
      %1570 = vrot.lane.b32.xlu0 %v1564, 110
      %v1571 = vpop.permute.xlu0 %1570
      %v1573 = vmax.f32 %v1569, %v1571
      %1574 = vrot.lane.b32.xlu0 %v1564, 109
      %v1575 = vpop.permute.xlu0 %1574
      %v1577 = vmax.f32 %v1573, %v1575
      %1579 = vrot.lane.b32.xlu0 %v1577, 38
      %v1580 = vpop.permute.xlu0 %1579
      %v1581 = vsel %vm1486, %v1580, 0
      %1583 = vmatpush.msra.mxu0 0.0
      %1584 = vmatpush.msra.mxu0 0.0
      %1585 = vmatpush.msra.mxu0 0.0
      %1586 = vmatpush.msra.mxu0 0.0
      %1587 = vmatpush.msra.mxu0 0.0
      %1588 = vmatpush.msra.mxu0 0.0
      %1589 = vmatpush.msra.mxu0 0.0
      %1590 = vmatpush.msra.mxu0 0.0
      %1591 = vmatpush.msra.mxu0 0.0
      %1592 = vmatpush.msra.mxu0 0.0
      %1593 = vmatpush.msra.mxu0 0.0
      %1594 = vmatpush.msra.mxu0 0.0
      %1595 = vmatpush.msra.mxu0 0.0
      %1596 = vmatpush.msra.mxu0 %v1491
      %1597 = vmatpush.msra.mxu0 %v1467
      %1598 = vmatpush.msra.mxu0 %v1466
      %1599 = vmatmul.f32.gmra.mxu0 %v1581
      %v1600 = vpop.f32.mrf.mxu0
      %v1601 = vadd.f32 0.0, %v1600
      %1602 = vdwg.mxu0
      %1604 = vrot.lane.b32.xlu0 %v1601, 30
      %v1605 = vpop.permute.xlu0 %1604
      %vm1607 = vcmask 326896
      %1608 = vst.msk [vmem:[#allocation4] sm:$0xff] %vm1607, %v1605
      %v1609 = vld [vmem:[#allocation3] sm:$0xff]
      %v1610 = vld [vmem:[#allocation3 + $0x8] sm:$0xff]
      %1613 = vrot.lane.b32.xlu0 %v1609, 127
      %v1614 = vpop.permute.xlu0 %1613
      %1615 = vrot.lane.b32.xlu0 %v1610, 127
      %v1616 = vpop.permute.xlu0 %1615
      %v1617 = vsel %vm829, %v1614, %v1616
      %v1620 = vmax.f32 %v1609, %v1617
      %v1621 = vmax.f32 %v1610, %v1616
      %1622 = vrot.lane.b32.xlu0 %v1610, 110
      %v1623 = vpop.permute.xlu0 %1622
      %v1625 = vmax.f32 %v1620, %v1623
      %v1626 = vmax.f32 %v1621, %v1623
      %1627 = vrot.lane.b32.xlu0 %v1610, 109
      %v1628 = vpop.permute.xlu0 %1627
      %v1630 = vmax.f32 %v1625, %v1628
      %v1631 = vmax.f32 %v1626, %v1628
      %1634 = vrot.lane.b32.xlu0 %v1630, 2
      %v1635 = vpop.permute.xlu0 %1634
      %1636 = vrot.lane.b32.xlu0 %v1631, 2
      %v1637 = vpop.permute.xlu0 %1636
      %vm1638 = vcmask 15360
      %v1639 = vsel %vm1638, %v1635, %v1637
      %v1640 = vsel %vm1486, %v1639, 0
      %1642 = vmatpush.msra.mxu0 0.0
      %1643 = vmatpush.msra.mxu0 0.0
      %1644 = vmatpush.msra.mxu0 0.0
      %1645 = vmatpush.msra.mxu0 0.0
      %1646 = vmatpush.msra.mxu0 0.0
      %1647 = vmatpush.msra.mxu0 0.0
      %1648 = vmatpush.msra.mxu0 0.0
      %1649 = vmatpush.msra.mxu0 0.0
      %1650 = vmatpush.msra.mxu0 0.0
      %1651 = vmatpush.msra.mxu0 0.0
      %1652 = vmatpush.msra.mxu0 0.0
      %1653 = vmatpush.msra.mxu0 0.0
      %1654 = vmatpush.msra.mxu0 0.0
      %1655 = vmatpush.msra.mxu0 %v1491
      %1656 = vmatpush.msra.mxu0 %v1467
      %1657 = vmatpush.msra.mxu0 %v1466
      %1658 = vmatmul.f32.gmra.mxu0 %v1640
      %v1659 = vpop.f32.mrf.mxu0
      %v1660 = vadd.f32 0.0, %v1659
      %1661 = vdwg.mxu0
      %1663 = vrot.lane.b32.xlu0 %v1660, 40
      %v1664 = vpop.permute.xlu0 %1663
      %vm1666 = vcmask 408896
      %1667 = vst.msk [vmem:[#allocation4] sm:$0xff] %vm1666, %v1664
      %v1668 = vld [vmem:[#allocation3 + $0x8] sm:$0xff]
      %1670 = vrot.lane.b32.xlu0 %v1668, 127
      %v1671 = vpop.permute.xlu0 %1670
      %v1673 = vmax.f32 %v1668, %v1671
      %1674 = vrot.lane.b32.xlu0 %v1668, 110
      %v1675 = vpop.permute.xlu0 %1674
      %v1677 = vmax.f32 %v1673, %v1675
      %1678 = vrot.lane.b32.xlu0 %v1668, 109
      %v1679 = vpop.permute.xlu0 %1678
      %v1681 = vmax.f32 %v1677, %v1679
      %1683 = vrot.lane.b32.xlu0 %v1681, 94
      %v1684 = vpop.permute.xlu0 %1683
      %v1685 = vsel %vm1486, %v1684, 0
      %1687 = vmatpush.msra.mxu0 0.0
      %1688 = vmatpush.msra.mxu0 0.0
      %1689 = vmatpush.msra.mxu0 0.0
      %1690 = vmatpush.msra.mxu0 0.0
      %1691 = vmatpush.msra.mxu0 0.0
      %1692 = vmatpush.msra.mxu0 0.0
      %1693 = vmatpush.msra.mxu0 0.0
      %1694 = vmatpush.msra.mxu0 0.0
      %1695 = vmatpush.msra.mxu0 0.0
      %1696 = vmatpush.msra.mxu0 0.0
      %1697 = vmatpush.msra.mxu0 0.0
      %1698 = vmatpush.msra.mxu0 0.0
      %1699 = vmatpush.msra.mxu0 0.0
      %1700 = vmatpush.msra.mxu0 %v1491
      %1701 = vmatpush.msra.mxu0 %v1467
      %1702 = vmatpush.msra.mxu0 %v1466
      %1703 = vmatmul.f32.gmra.mxu0 %v1685
      %v1704 = vpop.f32.mrf.mxu0
      %v1705 = vadd.f32 0.0, %v1704
      %1706 = vdwg.mxu0
      %1708 = vrot.lane.b32.xlu0 %v1705, 50
      %v1709 = vpop.permute.xlu0 %1708
      %vm1711 = vcmask 490896
      %1712 = vst.msk [vmem:[#allocation4] sm:$0xff] %vm1711, %v1709
      %v1713 = vld [vmem:[#allocation3 + $0x8] sm:$0xff]
      %1715 = vrot.lane.b32.xlu0 %v1713, 127
      %v1716 = vpop.permute.xlu0 %1715
      %v1718 = vmax.f32 %v1713, %v1716
      %1719 = vrot.lane.b32.xlu0 %v1713, 110
      %v1720 = vpop.permute.xlu0 %1719
      %v1722 = vmax.f32 %v1718, %v1720
      %1723 = vrot.lane.b32.xlu0 %v1713, 109
      %v1724 = vpop.permute.xlu0 %1723
      %v1726 = vmax.f32 %v1722, %v1724
      %1728 = vrot.lane.b32.xlu0 %v1726, 58
      %v1729 = vpop.permute.xlu0 %1728
      %v1730 = vsel %vm1486, %v1729, 0
      %1732 = vmatpush.msra.mxu0 0.0
      %1733 = vmatpush.msra.mxu0 0.0
      %1734 = vmatpush.msra.mxu0 0.0
      %1735 = vmatpush.msra.mxu0 0.0
      %1736 = vmatpush.msra.mxu0 0.0
      %1737 = vmatpush.msra.mxu0 0.0
      %1738 = vmatpush.msra.mxu0 0.0
      %1739 = vmatpush.msra.mxu0 0.0
      %1740 = vmatpush.msra.mxu0 0.0
      %1741 = vmatpush.msra.mxu0 0.0
      %1742 = vmatpush.msra.mxu0 0.0
      %1743 = vmatpush.msra.mxu0 0.0
      %1744 = vmatpush.msra.mxu0 0.0
      %1745 = vmatpush.msra.mxu0 %v1491
      %1746 = vmatpush.msra.mxu0 %v1467
      %1747 = vmatpush.msra.mxu0 %v1466
      %1748 = vmatmul.f32.gmra.mxu0 %v1730
      %v1749 = vpop.f32.mrf.mxu0
      %v1750 = vadd.f32 0.0, %v1749
      %1751 = vdwg.mxu0
      %1753 = vrot.lane.b32.xlu0 %v1750, 60
      %v1754 = vpop.permute.xlu0 %1753
      %vm1756 = vcmask 572896
      %1757 = vst.msk [vmem:[#allocation4] sm:$0xff] %vm1756, %v1754
      %v1758 = vld [vmem:[#allocation3 + $0x8] sm:$0xff]
      %1760 = vrot.lane.b32.xlu0 %v1758, 127
      %v1761 = vpop.permute.xlu0 %1760
      %v1763 = vmax.f32 %v1758, %v1761
      %v1764 = vld [vmem:[#allocation3 + $0x10] sm:$0xff]
      %1766 = vrot.lane.b32.xlu0 %v1758, 110
      %v1767 = vpop.permute.xlu0 %1766
      %1768 = vrot.lane.b32.xlu0 %v1764, 110
      %v1769 = vpop.permute.xlu0 %1768
      %v1770 = vsel %vm891, %v1767, %v1769
      %v1772 = vmax.f32 %v1763, %v1770
      %1773 = vrot.lane.b32.xlu0 %v1758, 109
      %v1774 = vpop.permute.xlu0 %1773
      %1775 = vrot.lane.b32.xlu0 %v1764, 109
      %v1776 = vpop.permute.xlu0 %1775
      %v1777 = vsel %vm918, %v1774, %v1776
      %v1779 = vmax.f32 %v1772, %v1777
      %1781 = vrot.lane.b32.xlu0 %v1779, 22
      %v1782 = vpop.permute.xlu0 %1781
      %v1783 = vsel %vm1486, %v1782, 0
      %1785 = vmatpush.msra.mxu0 0.0
      %1786 = vmatpush.msra.mxu0 0.0
      %1787 = vmatpush.msra.mxu0 0.0
      %1788 = vmatpush.msra.mxu0 0.0
      %1789 = vmatpush.msra.mxu0 0.0
      %1790 = vmatpush.msra.mxu0 0.0
      %1791 = vmatpush.msra.mxu0 0.0
      %1792 = vmatpush.msra.mxu0 0.0
      %1793 = vmatpush.msra.mxu0 0.0
      %1794 = vmatpush.msra.mxu0 0.0
      %1795 = vmatpush.msra.mxu0 0.0
      %1796 = vmatpush.msra.mxu0 0.0
      %1797 = vmatpush.msra.mxu0 0.0
      %1798 = vmatpush.msra.mxu0 %v1491
      %1799 = vmatpush.msra.mxu0 %v1467
      %1800 = vmatpush.msra.mxu0 %v1466
      %1801 = vmatmul.f32.gmra.mxu0 %v1783
      %v1802 = vpop.f32.mrf.mxu0
      %v1803 = vadd.f32 0.0, %v1802
      %1804 = vdwg.mxu0
      %1806 = vrot.lane.b32.xlu0 %v1803, 70
      %v1807 = vpop.permute.xlu0 %1806
      %vm1809 = vcmask 654896
      %1810 = vst.msk [vmem:[#allocation4] sm:$0xff] %vm1809, %v1807
      %v1811 = vld [vmem:[#allocation3 + $0x10] sm:$0xff]
      %1813 = vrot.lane.b32.xlu0 %v1811, 127
      %v1814 = vpop.permute.xlu0 %1813
      %v1816 = vmax.f32 %v1811, %v1814
      %1817 = vrot.lane.b32.xlu0 %v1811, 110
      %v1818 = vpop.permute.xlu0 %1817
      %v1820 = vmax.f32 %v1816, %v1818
      %1821 = vrot.lane.b32.xlu0 %v1811, 109
      %v1822 = vpop.permute.xlu0 %1821
      %v1824 = vmax.f32 %v1820, %v1822
      %1826 = vrot.lane.b32.xlu0 %v1824, 114
      %v1827 = vpop.permute.xlu0 %1826
      %v1828 = vsel %vm1486, %v1827, 0
      %1830 = vmatpush.msra.mxu0 0.0
      %1831 = vmatpush.msra.mxu0 0.0
      %1832 = vmatpush.msra.mxu0 0.0
      %1833 = vmatpush.msra.mxu0 0.0
      %1834 = vmatpush.msra.mxu0 0.0
      %1835 = vmatpush.msra.mxu0 0.0
      %1836 = vmatpush.msra.mxu0 0.0
      %1837 = vmatpush.msra.mxu0 0.0
      %1838 = vmatpush.msra.mxu0 0.0
      %1839 = vmatpush.msra.mxu0 0.0
      %1840 = vmatpush.msra.mxu0 0.0
      %1841 = vmatpush.msra.mxu0 0.0
      %1842 = vmatpush.msra.mxu0 0.0
      %1843 = vmatpush.msra.mxu0 %v1491
      %1844 = vmatpush.msra.mxu0 %v1467
      %1845 = vmatpush.msra.mxu0 %v1466
      %1846 = vmatmul.f32.gmra.mxu0 %v1828
      %v1847 = vpop.f32.mrf.mxu0
      %v1848 = vadd.f32 0.0, %v1847
      %1849 = vdwg.mxu0
      %1851 = vrot.lane.b32.xlu0 %v1848, 80
      %v1852 = vpop.permute.xlu0 %1851
      %vm1854 = vcmask 736896
      %1855 = vst.msk [vmem:[#allocation4] sm:$0xff] %vm1854, %v1852
      %v1856 = vld [vmem:[#allocation4] sm:$0xff]
      %vm1857 = vcmask 654336
      %1858 = vst.msk [vmem:[#allocation9] sm:$0xff] %vm1857, %v1856
      %v1859 = vld [vmem:[#allocation4] sm:$0xff]
      %1861 = vrot.lane.b32.xlu0 %v1859, 127
      %v1862 = vpop.permute.xlu0 %1861
      %1864 = vst.msk [vmem:[#allocation9 + $0x18] sm:$0xff] %vm1857, %v1862
      %v1865 = vld [vmem:[#allocation4] sm:$0xff]
      %1867 = vrot.lane.b32.xlu0 %v1865, 126
      %v1868 = vpop.permute.xlu0 %1867
      %1870 = vst.msk [vmem:[#allocation9 + $0x30] sm:$0xff] %vm1857, %v1868
      %v1871 = vld [vmem:[#allocation4] sm:$0xff]
      %1873 = vrot.lane.b32.xlu0 %v1871, 118
      %v1874 = vpop.permute.xlu0 %1873
      %1876 = vst.msk [vmem:[#allocation9 + $0x48] sm:$0xff] %vm1857, %v1874
      %v1877 = vld [vmem:[#allocation4] sm:$0xff]
      %1879 = vrot.lane.b32.xlu0 %v1877, 117
      %v1880 = vpop.permute.xlu0 %1879
      %1882 = vst.msk [vmem:[#allocation9 + $0x60] sm:$0xff] %vm1857, %v1880
      %v1883 = vld [vmem:[#allocation4] sm:$0xff]
      %1885 = vrot.lane.b32.xlu0 %v1883, 116
      %v1886 = vpop.permute.xlu0 %1885
      %1888 = vst.msk [vmem:[#allocation9 + $0x78] sm:$0xff] %vm1857, %v1886
      %v1889 = vld [vmem:[#allocation4] sm:$0xff]
      %1891 = vrot.lane.b32.xlu0 %v1889, 108
      %v1892 = vpop.permute.xlu0 %1891
      %1894 = vst.msk [vmem:[#allocation9 + $0x90] sm:$0xff] %vm1857, %v1892
      %v1895 = vld [vmem:[#allocation4] sm:$0xff]
      %1897 = vrot.lane.b32.xlu0 %v1895, 107
      %v1898 = vpop.permute.xlu0 %1897
      %1900 = vst.msk [vmem:[#allocation9 + $0xa8] sm:$0xff] %vm1857, %v1898
      %v1901 = vld [vmem:[#allocation4] sm:$0xff]
      %1903 = vrot.lane.b32.xlu0 %v1901, 106
      %v1904 = vpop.permute.xlu0 %1903
      %1906 = vst.msk [vmem:[#allocation9 + $0xc0] sm:$0xff] %vm1857, %v1904
      %v1907 = vld [vmem:[%s7] sm:$0xff]
      %v1908 = vld [vmem:[%s7 + $0x8] sm:$0xff]
      %v1909 = vld [vmem:[#allocation9] sm:$0xff]
      %v1910 = vld [vmem:[#allocation9 + $0x18] sm:$0xff]
      %v1911 = vld [vmem:[#allocation9 + $0x30] sm:$0xff]
      %v1912 = vld [vmem:[#allocation9 + $0x48] sm:$0xff]
      %v1913 = vld [vmem:[#allocation9 + $0x60] sm:$0xff]
      %v1914 = vld [vmem:[#allocation9 + $0x78] sm:$0xff]
      %v1915 = vld [vmem:[#allocation9 + $0x90] sm:$0xff]
      %v1916 = vld [vmem:[#allocation9 + $0xa8] sm:$0xff]
      %v1917 = vld [vmem:[#allocation9 + $0xc0] sm:$0xff]
      %v1918 = vld [vmem:[%s8] sm:$0xff]
      %v1919 = vld [vmem:[%s8 + $0x8] sm:$0xff]
      %1921 = vset.pattern.permute.xlu0 0
      %1922 = vperm.xlu0 %1921, %v1918
      %v1923 = vpop.permute.xlu0 %1922
      %1926 = vset.pattern.permute.xlu0 0
      %1927 = vperm.xlu0 %1926, %v1919
      %v1928 = vpop.permute.xlu0 %1927
      %v1931 = vsel %vm1371, %v1907, 0
      %v1934 = vsel %vm1371, %v1908, 0
      %1936 = vmatpush.msra.mxu0 0.0
      %1937 = vmatpush.msra.mxu0 0.0
      %1938 = vmatpush.msra.mxu0 0.0
      %1939 = vmatpush.msra.mxu0 0.0
      %1940 = vmatpush.msra.mxu0 0.0
      %1941 = vmatpush.msra.mxu0 0.0
      %1942 = vmatpush.msra.mxu0 0.0
      %1943 = vmatpush.msra.mxu0 %v1917
      %1944 = vmatpush.msra.mxu0 %v1916
      %1945 = vmatpush.msra.mxu0 %v1915
      %1946 = vmatpush.msra.mxu0 %v1914
      %1947 = vmatpush.msra.mxu0 %v1913
      %1948 = vmatpush.msra.mxu0 %v1912
      %1949 = vmatpush.msra.mxu0 %v1911
      %1950 = vmatpush.msra.mxu0 %v1910
      %1951 = vmatpush.msra.mxu0 %v1909
      %1952 = vmatmul.f32.gmra.mxu0 %v1931
      %v1953 = vpop.f32.mrf.mxu0
      %v1954 = vadd.f32 %v1923, %v1953
      %1955 = vmatmul.f32.gmra.mxu0 %v1934
      %v1956 = vpop.f32.mrf.mxu0
      %v1957 = vadd.f32 %v1928, %v1956
      %1958 = vdwg.mxu0
      %v1959 = vmax.f32 %v1954, 0.0
      %v1960 = vmax.f32 %v1957, 0.0
      %v1961 = vld [vmem:[%s9] sm:$0x1]
      %v1963 = vperm.slane %v1961, 0
      %v1965 = vmul.f32 %v1959, %v1963
      %v1966 = vmul.f32 %v1960, %v1963
      %1969 = vrot.lane.b32.xlu0 %v1965, 11
      %v1970 = vpop.permute.xlu0 %1969
      %1971 = vrot.lane.b32.xlu0 %v1966, 11
      %v1972 = vpop.permute.xlu0 %1971
      %vm1975 = vcmask 744536
      %1976 = vst.msk [vmem:[#allocation5] sm:$0xff] %vm1975, %v1970
      %1977 = vst.msk [vmem:[#allocation5 + $0x8] sm:$0xff] %vm1975, %v1972
      %v1978 = vld [vmem:[#allocation5] sm:$0xff]
      %v1979 = vld [vmem:[#allocation5 + $0x8] sm:$0xff]
      %1980 = vst.msk [vmem:[#allocation9] sm:$0xff] %vm1857, %v1978
      %1981 = vst.msk [vmem:[#allocation9 + $0x18] sm:$0xff] %vm1857, %v1979
      %v1982 = vld [vmem:[#allocation5] sm:$0xff]
      %v1983 = vld [vmem:[#allocation5 + $0x8] sm:$0xff]
      %1986 = vrot.lane.b32.xlu0 %v1982, 127
      %v1987 = vpop.permute.xlu0 %1986
      %1988 = vrot.lane.b32.xlu0 %v1983, 127
      %v1989 = vpop.permute.xlu0 %1988
      %1992 = vst.msk [vmem:[#allocation9 + $0x30] sm:$0xff] %vm1857, %v1987
      %1993 = vst.msk [vmem:[#allocation9 + $0x48] sm:$0xff] %vm1857, %v1989
      %v1994 = vld [vmem:[#allocation5] sm:$0xff]
      %v1995 = vld [vmem:[#allocation5 + $0x8] sm:$0xff]
      %1998 = vrot.lane.b32.xlu0 %v1994, 126
      %v1999 = vpop.permute.xlu0 %1998
      %2000 = vrot.lane.b32.xlu0 %v1995, 126
      %v2001 = vpop.permute.xlu0 %2000
      %2004 = vst.msk [vmem:[#allocation9 + $0x60] sm:$0xff] %vm1857, %v1999
      %2005 = vst.msk [vmem:[#allocation9 + $0x78] sm:$0xff] %vm1857, %v2001
      %v2006 = vld [vmem:[#allocation5] sm:$0xff]
      %v2007 = vld [vmem:[#allocation5 + $0x8] sm:$0xff]
      %2010 = vrot.lane.b32.xlu0 %v2006, 118
      %v2011 = vpop.permute.xlu0 %2010
      %2012 = vrot.lane.b32.xlu0 %v2007, 118
      %v2013 = vpop.permute.xlu0 %2012
      %2016 = vst.msk [vmem:[#allocation9 + $0x90] sm:$0xff] %vm1857, %v2011
      %2017 = vst.msk [vmem:[#allocation9 + $0xa8] sm:$0xff] %vm1857, %v2013
      %v2018 = vld [vmem:[#allocation5] sm:$0xff]
      %v2019 = vld [vmem:[#allocation5 + $0x8] sm:$0xff]
      %2022 = vrot.lane.b32.xlu0 %v2018, 117
      %v2023 = vpop.permute.xlu0 %2022
      %2024 = vrot.lane.b32.xlu0 %v2019, 117
      %v2025 = vpop.permute.xlu0 %2024
      %2028 = vst.msk [vmem:[#allocation9 + $0xc0] sm:$0xff] %vm1857, %v2023
      %2029 = vst.msk [vmem:[#allocation9 + $0xd8] sm:$0xff] %vm1857, %v2025
      %v2030 = vld [vmem:[#allocation5] sm:$0xff]
      %v2031 = vld [vmem:[#allocation5 + $0x8] sm:$0xff]
      %2034 = vrot.lane.b32.xlu0 %v2030, 116
      %v2035 = vpop.permute.xlu0 %2034
      %2036 = vrot.lane.b32.xlu0 %v2031, 116
      %v2037 = vpop.permute.xlu0 %2036
      %2040 = vst.msk [vmem:[#allocation9 + $0xf0] sm:$0xff] %vm1857, %v2035
      %2041 = vst.msk [vmem:[#allocation9 + $0x108] sm:$0xff] %vm1857, %v2037
      %v2042 = vld [vmem:[#allocation5] sm:$0xff]
      %v2043 = vld [vmem:[#allocation5 + $0x8] sm:$0xff]
      %2046 = vrot.lane.b32.xlu0 %v2042, 108
      %v2047 = vpop.permute.xlu0 %2046
      %2048 = vrot.lane.b32.xlu0 %v2043, 108
      %v2049 = vpop.permute.xlu0 %2048
      %2052 = vst.msk [vmem:[#allocation9 + $0x120] sm:$0xff] %vm1857, %v2047
      %2053 = vst.msk [vmem:[#allocation9 + $0x138] sm:$0xff] %vm1857, %v2049
      %v2054 = vld [vmem:[#allocation5] sm:$0xff]
      %v2055 = vld [vmem:[#allocation5 + $0x8] sm:$0xff]
      %2058 = vrot.lane.b32.xlu0 %v2054, 107
      %v2059 = vpop.permute.xlu0 %2058
      %2060 = vrot.lane.b32.xlu0 %v2055, 107
      %v2061 = vpop.permute.xlu0 %2060
      %2064 = vst.msk [vmem:[#allocation9 + $0x150] sm:$0xff] %vm1857, %v2059
      %2065 = vst.msk [vmem:[#allocation9 + $0x168] sm:$0xff] %vm1857, %v2061
      %v2066 = vld [vmem:[#allocation5] sm:$0xff]
      %v2067 = vld [vmem:[#allocation5 + $0x8] sm:$0xff]
      %2070 = vrot.lane.b32.xlu0 %v2066, 106
      %v2071 = vpop.permute.xlu0 %2070
      %2072 = vrot.lane.b32.xlu0 %v2067, 106
      %v2073 = vpop.permute.xlu0 %2072
      %2076 = vst.msk [vmem:[#allocation9 + $0x180] sm:$0xff] %vm1857, %v2071
      %2077 = vst.msk [vmem:[#allocation9 + $0x198] sm:$0xff] %vm1857, %v2073
      %v2078 = vld [vmem:[%s10] sm:$0xff]
      %v2079 = vld [vmem:[%s10 + $0x8] sm:$0xff]
      %v2080 = vld [vmem:[%s10 + $0x10] sm:$0xff]
      %v2081 = vld [vmem:[%s10 + $0x18] sm:$0xff]
      %v2082 = vld [vmem:[#allocation9] sm:$0xff]
      %v2083 = vld [vmem:[#allocation9 + $0x18] sm:$0xff]
      %v2084 = vld [vmem:[#allocation9 + $0x30] sm:$0xff]
      %v2085 = vld [vmem:[#allocation9 + $0x48] sm:$0xff]
      %v2086 = vld [vmem:[#allocation9 + $0x60] sm:$0xff]
      %v2087 = vld [vmem:[#allocation9 + $0x78] sm:$0xff]
      %v2088 = vld [vmem:[#allocation9 + $0x90] sm:$0xff]
      %v2089 = vld [vmem:[#allocation9 + $0xa8] sm:$0xff]
      %v2090 = vld [vmem:[#allocation9 + $0xc0] sm:$0xff]
      %v2091 = vld [vmem:[#allocation9 + $0xd8] sm:$0xff]
      %v2092 = vld [vmem:[#allocation9 + $0xf0] sm:$0xff]
      %v2093 = vld [vmem:[#allocation9 + $0x108] sm:$0xff]
      %v2094 = vld [vmem:[#allocation9 + $0x120] sm:$0xff]
      %v2095 = vld [vmem:[#allocation9 + $0x138] sm:$0xff]
      %v2096 = vld [vmem:[#allocation9 + $0x150] sm:$0xff]
      %v2097 = vld [vmem:[#allocation9 + $0x168] sm:$0xff]
      %v2098 = vld [vmem:[#allocation9 + $0x180] sm:$0xff]
      %v2099 = vld [vmem:[#allocation9 + $0x198] sm:$0xff]
      %v2100 = vld [vmem:[%s11] sm:$0xff]
      %v2101 = vld [vmem:[%s11 + $0x8] sm:$0xff]
      %2103 = vset.pattern.permute.xlu0 0
      %2104 = vperm.xlu0 %2103, %v2100
      %v2105 = vpop.permute.xlu0 %2104
      %2108 = vset.pattern.permute.xlu0 0
      %2109 = vperm.xlu0 %2108, %v2101
      %v2110 = vpop.permute.xlu0 %2109
      %vm2112 = vcmask 130048
      %v2114 = vsel %vm2112, %v2079, 0
      %v2117 = vsel %vm2112, %v2081, 0
      %2119 = vmatpush.msra.mxu0 %v2097
      %2120 = vmatpush.msra.mxu0 %v2096
      %2121 = vmatpush.msra.mxu0 %v2095
      %2122 = vmatpush.msra.mxu0 %v2094
      %2123 = vmatpush.msra.mxu0 %v2093
      %2124 = vmatpush.msra.mxu0 %v2092
      %2125 = vmatpush.msra.mxu0 %v2091
      %2126 = vmatpush.msra.mxu0 %v2090
      %2127 = vmatpush.msra.mxu0 %v2089
      %2128 = vmatpush.msra.mxu0 %v2088
      %2129 = vmatpush.msra.mxu0 %v2087
      %2130 = vmatpush.msra.mxu0 %v2086
      %2131 = vmatpush.msra.mxu0 %v2085
      %2132 = vmatpush.msra.mxu0 %v2084
      %2133 = vmatpush.msra.mxu0 %v2083
      %2134 = vmatpush.msra.mxu0 %v2082
      %2135 = vmatmul.f32.gmra.mxu0 %v2078
      %v2136 = vpop.f32.mrf.mxu0
      %v2137 = vadd.f32 %v2105, %v2136
      %2138 = vmatmul.f32.gmra.mxu0 %v2080
      %v2139 = vpop.f32.mrf.mxu0
      %v2140 = vadd.f32 %v2110, %v2139
      %2141 = vdwg.mxu0
      %2142 = vmatpush.msra.mxu0 0.0
      %2143 = vmatpush.msra.mxu0 0.0
      %2144 = vmatpush.msra.mxu0 0.0
      %2145 = vmatpush.msra.mxu0 0.0
      %2146 = vmatpush.msra.mxu0 0.0
      %2147 = vmatpush.msra.mxu0 0.0
      %2148 = vmatpush.msra.mxu0 0.0
      %2149 = vmatpush.msra.mxu0 0.0
      %2150 = vmatpush.msra.mxu0 0.0
      %2151 = vmatpush.msra.mxu0 0.0
      %2152 = vmatpush.msra.mxu0 0.0
      %2153 = vmatpush.msra.mxu0 0.0
      %2154 = vmatpush.msra.mxu0 0.0
      %2155 = vmatpush.msra.mxu0 0.0
      %2156 = vmatpush.msra.mxu0 %v2099
      %2157 = vmatpush.msra.mxu0 %v2098
      %2158 = vmatmul.f32.gmra.mxu0 %v2114
      %v2159 = vpop.f32.mrf.mxu0
      %v2160 = vadd.f32 %v2137, %v2159
      %2161 = vmatmul.f32.gmra.mxu0 %v2117
      %v2162 = vpop.f32.mrf.mxu0
      %v2163 = vadd.f32 %v2140, %v2162
      %2164 = vdwg.mxu0
      %v2165 = vmax.f32 %v2160, 0.0
      %v2166 = vmax.f32 %v2163, 0.0
      %v2167 = vld [vmem:[%s9] sm:$0x1]
      %v2169 = vperm.slane %v2167, 0
      %v2171 = vmul.f32 %v2165, %v2169
      %v2172 = vmul.f32 %v2166, %v2169
      %2175 = vrot.lane.b32.xlu0 %v2171, 11
      %v2176 = vpop.permute.xlu0 %2175
      %2177 = vrot.lane.b32.xlu0 %v2172, 11
      %v2178 = vpop.permute.xlu0 %2177
      %2181 = vst.msk [vmem:[#allocation6] sm:$0xff] %vm1975, %v2176
      %2182 = vst.msk [vmem:[#allocation6 + $0x8] sm:$0xff] %vm1975, %v2178
      %v2183 = vld [vmem:[%s12] sm:$0xff]
      %v2184 = vld [vmem:[%s12 + $0x8] sm:$0x1]
      %v2185 = vld [vmem:[#allocation6] sm:$0xff]
      %v2186 = vld [vmem:[#allocation6 + $0x8] sm:$0xff]
      %2189 = vrot.lane.b32.xlu0 %v2185, 127
      %v2190 = vpop.permute.xlu0 %2189
      %2191 = vrot.lane.b32.xlu0 %v2186, 127
      %v2192 = vpop.permute.xlu0 %2191
      %v2195 = vmax.f32 %v2185, %v2190
      %v2196 = vmax.f32 %v2186, %v2192
      %2197 = vrot.lane.b32.xlu0 %v2185, 118
      %v2198 = vpop.permute.xlu0 %2197
      %2199 = vrot.lane.b32.xlu0 %v2186, 118
      %v2200 = vpop.permute.xlu0 %2199
      %v2203 = vmax.f32 %v2195, %v2198
      %v2204 = vmax.f32 %v2196, %v2200
      %2205 = vrot.lane.b32.xlu0 %v2185, 117
      %v2206 = vpop.permute.xlu0 %2205
      %2207 = vrot.lane.b32.xlu0 %v2186, 117
      %v2208 = vpop.permute.xlu0 %2207
      %v2211 = vmax.f32 %v2203, %v2206
      %v2212 = vmax.f32 %v2204, %v2208
      %2215 = vrot.lane.b32.xlu0 %v2211, 118
      %v2216 = vpop.permute.xlu0 %2215
      %2217 = vrot.lane.b32.xlu0 %v2212, 118
      %v2218 = vpop.permute.xlu0 %2217
      %vm2219 = vcmask 72704
      %v2220 = vsel %vm2219, %v2216, 0
      %v2222 = vsel %vm2219, %v2218, 0
      %v2225 = vsel %vm1489, %v2184, 0
      %2227 = vmatpush.msra.mxu0 0.0
      %2228 = vmatpush.msra.mxu0 0.0
      %2229 = vmatpush.msra.mxu0 0.0
      %2230 = vmatpush.msra.mxu0 0.0
      %2231 = vmatpush.msra.mxu0 0.0
      %2232 = vmatpush.msra.mxu0 0.0
      %2233 = vmatpush.msra.mxu0 0.0
      %2234 = vmatpush.msra.mxu0 0.0
      %2235 = vmatpush.msra.mxu0 0.0
      %2236 = vmatpush.msra.mxu0 0.0
      %2237 = vmatpush.msra.mxu0 0.0
      %2238 = vmatpush.msra.mxu0 0.0
      %2239 = vmatpush.msra.mxu0 0.0
      %2240 = vmatpush.msra.mxu0 0.0
      %2241 = vmatpush.msra.mxu0 %v2225
      %2242 = vmatpush.msra.mxu0 %v2183
      %2243 = vmatmul.f32.gmra.mxu0 %v2220
      %v2244 = vpop.f32.mrf.mxu0
      %v2245 = vadd.f32 0.0, %v2244
      %2246 = vmatmul.f32.gmra.mxu0 %v2222
      %v2247 = vpop.f32.mrf.mxu0
      %v2248 = vadd.f32 0.0, %v2247
      %2249 = vdwg.mxu0
      %2252 = vrot.lane.b32.xlu0 %v2245, 6
      %v2253 = vpop.permute.xlu0 %2252
      %2254 = vrot.lane.b32.xlu0 %v2248, 6
      %v2255 = vpop.permute.xlu0 %2254
      %vm2258 = vcmask 97328
      %2259 = vst.msk [vmem:[#allocation7] sm:$0xff] %vm2258, %v2253
      %2260 = vst.msk [vmem:[#allocation7 + $0x8] sm:$0xff] %vm2258, %v2255
      %v2261 = vld [vmem:[#allocation6] sm:$0xff]
      %v2262 = vld [vmem:[#allocation6 + $0x8] sm:$0xff]
      %2265 = vrot.lane.b32.xlu0 %v2261, 127
      %v2266 = vpop.permute.xlu0 %2265
      %2267 = vrot.lane.b32.xlu0 %v2262, 127
      %v2268 = vpop.permute.xlu0 %2267
      %v2271 = vmax.f32 %v2261, %v2266
      %v2272 = vmax.f32 %v2262, %v2268
      %2273 = vrot.lane.b32.xlu0 %v2261, 118
      %v2274 = vpop.permute.xlu0 %2273
      %2275 = vrot.lane.b32.xlu0 %v2262, 118
      %v2276 = vpop.permute.xlu0 %2275
      %v2279 = vmax.f32 %v2271, %v2274
      %v2280 = vmax.f32 %v2272, %v2276
      %2281 = vrot.lane.b32.xlu0 %v2261, 117
      %v2282 = vpop.permute.xlu0 %2281
      %2283 = vrot.lane.b32.xlu0 %v2262, 117
      %v2284 = vpop.permute.xlu0 %2283
      %v2287 = vmax.f32 %v2279, %v2282
      %v2288 = vmax.f32 %v2280, %v2284
      %2291 = vrot.lane.b32.xlu0 %v2287, 98
      %v2292 = vpop.permute.xlu0 %2291
      %2293 = vrot.lane.b32.xlu0 %v2288, 98
      %v2294 = vpop.permute.xlu0 %2293
      %v2295 = vsel %vm2219, %v2292, 0
      %v2297 = vsel %vm2219, %v2294, 0
      %2299 = vmatpush.msra.mxu0 0.0
      %2300 = vmatpush.msra.mxu0 0.0
      %2301 = vmatpush.msra.mxu0 0.0
      %2302 = vmatpush.msra.mxu0 0.0
      %2303 = vmatpush.msra.mxu0 0.0
      %2304 = vmatpush.msra.mxu0 0.0
      %2305 = vmatpush.msra.mxu0 0.0
      %2306 = vmatpush.msra.mxu0 0.0
      %2307 = vmatpush.msra.mxu0 0.0
      %2308 = vmatpush.msra.mxu0 0.0
      %2309 = vmatpush.msra.mxu0 0.0
      %2310 = vmatpush.msra.mxu0 0.0
      %2311 = vmatpush.msra.mxu0 0.0
      %2312 = vmatpush.msra.mxu0 0.0
      %2313 = vmatpush.msra.mxu0 %v2225
      %2314 = vmatpush.msra.mxu0 %v2183
      %2315 = vmatmul.f32.gmra.mxu0 %v2295
      %v2316 = vpop.f32.mrf.mxu0
      %v2317 = vadd.f32 0.0, %v2316
      %2318 = vmatmul.f32.gmra.mxu0 %v2297
      %v2319 = vpop.f32.mrf.mxu0
      %v2320 = vadd.f32 0.0, %v2319
      %2321 = vdwg.mxu0
      %2324 = vrot.lane.b32.xlu0 %v2317, 12
      %v2325 = vpop.permute.xlu0 %2324
      %2326 = vrot.lane.b32.xlu0 %v2320, 12
      %v2327 = vpop.permute.xlu0 %2326
      %vm2330 = vcmask 146528
      %2331 = vst.msk [vmem:[#allocation7] sm:$0xff] %vm2330, %v2325
      %2332 = vst.msk [vmem:[#allocation7 + $0x8] sm:$0xff] %vm2330, %v2327
      %v2333 = vld [vmem:[#allocation6] sm:$0xff]
      %v2334 = vld [vmem:[#allocation6 + $0x8] sm:$0xff]
      %2337 = vrot.lane.b32.xlu0 %v2333, 127
      %v2338 = vpop.permute.xlu0 %2337
      %2339 = vrot.lane.b32.xlu0 %v2334, 127
      %v2340 = vpop.permute.xlu0 %2339
      %v2343 = vmax.f32 %v2333, %v2338
      %v2344 = vmax.f32 %v2334, %v2340
      %2345 = vrot.lane.b32.xlu0 %v2333, 118
      %v2346 = vpop.permute.xlu0 %2345
      %2347 = vrot.lane.b32.xlu0 %v2334, 118
      %v2348 = vpop.permute.xlu0 %2347
      %v2351 = vmax.f32 %v2343, %v2346
      %v2352 = vmax.f32 %v2344, %v2348
      %2353 = vrot.lane.b32.xlu0 %v2333, 117
      %v2354 = vpop.permute.xlu0 %2353
      %2355 = vrot.lane.b32.xlu0 %v2334, 117
      %v2356 = vpop.permute.xlu0 %2355
      %v2359 = vmax.f32 %v2351, %v2354
      %v2360 = vmax.f32 %v2352, %v2356
      %2363 = vrot.lane.b32.xlu0 %v2359, 78
      %v2364 = vpop.permute.xlu0 %2363
      %2365 = vrot.lane.b32.xlu0 %v2360, 78
      %v2366 = vpop.permute.xlu0 %2365
      %v2367 = vsel %vm2219, %v2364, 0
      %v2369 = vsel %vm2219, %v2366, 0
      %2371 = vmatpush.msra.mxu0 0.0
      %2372 = vmatpush.msra.mxu0 0.0
      %2373 = vmatpush.msra.mxu0 0.0
      %2374 = vmatpush.msra.mxu0 0.0
      %2375 = vmatpush.msra.mxu0 0.0
      %2376 = vmatpush.msra.mxu0 0.0
      %2377 = vmatpush.msra.mxu0 0.0
      %2378 = vmatpush.msra.mxu0 0.0
      %2379 = vmatpush.msra.mxu0 0.0
      %2380 = vmatpush.msra.mxu0 0.0
      %2381 = vmatpush.msra.mxu0 0.0
      %2382 = vmatpush.msra.mxu0 0.0
      %2383 = vmatpush.msra.mxu0 0.0
      %2384 = vmatpush.msra.mxu0 0.0
      %2385 = vmatpush.msra.mxu0 %v2225
      %2386 = vmatpush.msra.mxu0 %v2183
      %2387 = vmatmul.f32.gmra.mxu0 %v2367
      %v2388 = vpop.f32.mrf.mxu0
      %v2389 = vadd.f32 0.0, %v2388
      %2390 = vmatmul.f32.gmra.mxu0 %v2369
      %v2391 = vpop.f32.mrf.mxu0
      %v2392 = vadd.f32 0.0, %v2391
      %2393 = vdwg.mxu0
      %2396 = vrot.lane.b32.xlu0 %v2389, 18
      %v2397 = vpop.permute.xlu0 %2396
      %2398 = vrot.lane.b32.xlu0 %v2392, 18
      %v2399 = vpop.permute.xlu0 %2398
      %vm2402 = vcmask 195728
      %2403 = vst.msk [vmem:[#allocation7] sm:$0xff] %vm2402, %v2397
      %2404 = vst.msk [vmem:[#allocation7 + $0x8] sm:$0xff] %vm2402, %v2399
      %v2405 = vld [vmem:[#allocation6] sm:$0xff]
      %v2406 = vld [vmem:[#allocation6 + $0x8] sm:$0xff]
      %2409 = vrot.lane.b32.xlu0 %v2405, 127
      %v2410 = vpop.permute.xlu0 %2409
      %2411 = vrot.lane.b32.xlu0 %v2406, 127
      %v2412 = vpop.permute.xlu0 %2411
      %v2415 = vmax.f32 %v2405, %v2410
      %v2416 = vmax.f32 %v2406, %v2412
      %2417 = vrot.lane.b32.xlu0 %v2405, 118
      %v2418 = vpop.permute.xlu0 %2417
      %2419 = vrot.lane.b32.xlu0 %v2406, 118
      %v2420 = vpop.permute.xlu0 %2419
      %v2423 = vmax.f32 %v2415, %v2418
      %v2424 = vmax.f32 %v2416, %v2420
      %2425 = vrot.lane.b32.xlu0 %v2405, 117
      %v2426 = vpop.permute.xlu0 %2425
      %2427 = vrot.lane.b32.xlu0 %v2406, 117
      %v2428 = vpop.permute.xlu0 %2427
      %v2431 = vmax.f32 %v2423, %v2426
      %v2432 = vmax.f32 %v2424, %v2428
      %2435 = vrot.lane.b32.xlu0 %v2431, 58
      %v2436 = vpop.permute.xlu0 %2435
      %2437 = vrot.lane.b32.xlu0 %v2432, 58
      %v2438 = vpop.permute.xlu0 %2437
      %v2439 = vsel %vm2219, %v2436, 0
      %v2441 = vsel %vm2219, %v2438, 0
      %2443 = vmatpush.msra.mxu0 0.0
      %2444 = vmatpush.msra.mxu0 0.0
      %2445 = vmatpush.msra.mxu0 0.0
      %2446 = vmatpush.msra.mxu0 0.0
      %2447 = vmatpush.msra.mxu0 0.0
      %2448 = vmatpush.msra.mxu0 0.0
      %2449 = vmatpush.msra.mxu0 0.0
      %2450 = vmatpush.msra.mxu0 0.0
      %2451 = vmatpush.msra.mxu0 0.0
      %2452 = vmatpush.msra.mxu0 0.0
      %2453 = vmatpush.msra.mxu0 0.0
      %2454 = vmatpush.msra.mxu0 0.0
      %2455 = vmatpush.msra.mxu0 0.0
      %2456 = vmatpush.msra.mxu0 0.0
      %2457 = vmatpush.msra.mxu0 %v2225
      %2458 = vmatpush.msra.mxu0 %v2183
      %2459 = vmatmul.f32.gmra.mxu0 %v2439
      %v2460 = vpop.f32.mrf.mxu0
      %v2461 = vadd.f32 0.0, %v2460
      %2462 = vmatmul.f32.gmra.mxu0 %v2441
      %v2463 = vpop.f32.mrf.mxu0
      %v2464 = vadd.f32 0.0, %v2463
      %2465 = vdwg.mxu0
      %2468 = vrot.lane.b32.xlu0 %v2461, 24
      %v2469 = vpop.permute.xlu0 %2468
      %2470 = vrot.lane.b32.xlu0 %v2464, 24
      %v2471 = vpop.permute.xlu0 %2470
      %vm2474 = vcmask 244928
      %2475 = vst.msk [vmem:[#allocation7] sm:$0xff] %vm2474, %v2469
      %2476 = vst.msk [vmem:[#allocation7 + $0x8] sm:$0xff] %vm2474, %v2471
      %v2477 = vld [vmem:[%s13] sm:$0xf]
      %v2478 = vld [vmem:[%s13 + $0x4] sm:$0xf]
      %v2479 = vld [vmem:[#allocation7] sm:$0xff]
      %v2480 = vld [vmem:[#allocation7 + $0x8] sm:$0xff]
      %vm2481 = vcmask 195584
      %2482 = vst.msk [vmem:[#allocation9] sm:$0xff] %vm2481, %v2479
      %2483 = vst.msk [vmem:[#allocation9 + $0x18] sm:$0xff] %vm2481, %v2480
      %v2484 = vld [vmem:[#allocation7] sm:$0xff]
      %v2485 = vld [vmem:[#allocation7 + $0x8] sm:$0xff]
      %2488 = vrot.lane.b32.xlu0 %v2484, 127
      %v2489 = vpop.permute.xlu0 %2488
      %2490 = vrot.lane.b32.xlu0 %v2485, 127
      %v2491 = vpop.permute.xlu0 %2490
      %2494 = vst.msk [vmem:[#allocation9 + $0x30] sm:$0xff] %vm2481, %v2489
      %2495 = vst.msk [vmem:[#allocation9 + $0x48] sm:$0xff] %vm2481, %v2491
      %v2496 = vld [vmem:[#allocation7] sm:$0xff]
      %v2497 = vld [vmem:[#allocation7 + $0x8] sm:$0xff]
      %2500 = vrot.lane.b32.xlu0 %v2496, 122
      %v2501 = vpop.permute.xlu0 %2500
      %2502 = vrot.lane.b32.xlu0 %v2497, 122
      %v2503 = vpop.permute.xlu0 %2502
      %2506 = vst.msk [vmem:[#allocation9 + $0x60] sm:$0xff] %vm2481, %v2501
      %2507 = vst.msk [vmem:[#allocation9 + $0x78] sm:$0xff] %vm2481, %v2503
      %v2508 = vld [vmem:[#allocation7] sm:$0xff]
      %v2509 = vld [vmem:[#allocation7 + $0x8] sm:$0xff]
      %2512 = vrot.lane.b32.xlu0 %v2508, 121
      %v2513 = vpop.permute.xlu0 %2512
      %2514 = vrot.lane.b32.xlu0 %v2509, 121
      %v2515 = vpop.permute.xlu0 %2514
      %2518 = vst.msk [vmem:[#allocation9 + $0x90] sm:$0xff] %vm2481, %v2513
      %2519 = vst.msk [vmem:[#allocation9 + $0xa8] sm:$0xff] %vm2481, %v2515
      %v2520 = vld [vmem:[%s14] sm:$0xff]
      %v2521 = vld [vmem:[%s14 + $0x8] sm:$0xff]
      %v2522 = vld [vmem:[#allocation9] sm:$0xff]
      %v2523 = vld [vmem:[#allocation9 + $0x18] sm:$0xff]
      %v2524 = vld [vmem:[#allocation9 + $0x30] sm:$0xff]
      %v2525 = vld [vmem:[#allocation9 + $0x48] sm:$0xff]
      %v2526 = vld [vmem:[#allocation9 + $0x60] sm:$0xff]
      %v2527 = vld [vmem:[#allocation9 + $0x78] sm:$0xff]
      %v2528 = vld [vmem:[#allocation9 + $0x90] sm:$0xff]
      %v2529 = vld [vmem:[#allocation9 + $0xa8] sm:$0xff]
      %vm2530 = vcmask 523264
      %v2532 = vsel %vm2530, %v2520, 0
      %v2535 = vsel %vm2530, %v2521, 0
      %2537 = vmatpush.msra.mxu0 0.0
      %2538 = vmatpush.msra.mxu0 0.0
      %2539 = vmatpush.msra.mxu0 0.0
      %2540 = vmatpush.msra.mxu0 0.0
      %2541 = vmatpush.msra.mxu0 0.0
      %2542 = vmatpush.msra.mxu0 0.0
      %2543 = vmatpush.msra.mxu0 0.0
      %2544 = vmatpush.msra.mxu0 0.0
      %2545 = vmatpush.msra.mxu0 %v2529
      %2546 = vmatpush.msra.mxu0 %v2528
      %2547 = vmatpush.msra.mxu0 %v2527
      %2548 = vmatpush.msra.mxu0 %v2526
      %2549 = vmatpush.msra.mxu0 %v2525
      %2550 = vmatpush.msra.mxu0 %v2524
      %2551 = vmatpush.msra.mxu0 %v2523
      %2552 = vmatpush.msra.mxu0 %v2522
      %2553 = vmatmul.f32.gmra.mxu0 %v2532
      %v2554 = vpop.f32.mrf.mxu0
      %v2555 = vadd.f32 0.0, %v2554
      %2556 = vmatmul.f32.gmra.mxu0 %v2535
      %v2557 = vpop.f32.mrf.mxu0
      %v2558 = vadd.f32 0.0, %v2557
      %2559 = vdwg.mxu0
      %v2560 = vld [vmem:[#allocation7] sm:$0xff]
      %v2561 = vld [vmem:[#allocation7 + $0x8] sm:$0xff]
      %2564 = vrot.lane.b32.xlu0 %v2560, 127
      %v2565 = vpop.permute.xlu0 %2564
      %2566 = vrot.lane.b32.xlu0 %v2561, 127
      %v2567 = vpop.permute.xlu0 %2566
      %2570 = vst.msk [vmem:[#allocation9] sm:$0xff] %vm2481, %v2565
      %2571 = vst.msk [vmem:[#allocation9 + $0x18] sm:$0xff] %vm2481, %v2567
      %v2572 = vld [vmem:[#allocation7] sm:$0xff]
      %v2573 = vld [vmem:[#allocation7 + $0x8] sm:$0xff]
      %2576 = vrot.lane.b32.xlu0 %v2572, 126
      %v2577 = vpop.permute.xlu0 %2576
      %2578 = vrot.lane.b32.xlu0 %v2573, 126
      %v2579 = vpop.permute.xlu0 %2578
      %2582 = vst.msk [vmem:[#allocation9 + $0x30] sm:$0xff] %vm2481, %v2577
      %2583 = vst.msk [vmem:[#allocation9 + $0x48] sm:$0xff] %vm2481, %v2579
      %v2584 = vld [vmem:[#allocation7] sm:$0xff]
      %v2585 = vld [vmem:[#allocation7 + $0x8] sm:$0xff]
      %2588 = vrot.lane.b32.xlu0 %v2584, 121
      %v2589 = vpop.permute.xlu0 %2588
      %2590 = vrot.lane.b32.xlu0 %v2585, 121
      %v2591 = vpop.permute.xlu0 %2590
      %2594 = vst.msk [vmem:[#allocation9 + $0x60] sm:$0xff] %vm2481, %v2589
      %2595 = vst.msk [vmem:[#allocation9 + $0x78] sm:$0xff] %vm2481, %v2591
      %v2596 = vld [vmem:[#allocation7] sm:$0xff]
      %v2597 = vld [vmem:[#allocation7 + $0x8] sm:$0xff]
      %2600 = vrot.lane.b32.xlu0 %v2596, 120
      %v2601 = vpop.permute.xlu0 %2600
      %2602 = vrot.lane.b32.xlu0 %v2597, 120
      %v2603 = vpop.permute.xlu0 %2602
      %2606 = vst.msk [vmem:[#allocation9 + $0x90] sm:$0xff] %vm2481, %v2601
      %2607 = vst.msk [vmem:[#allocation9 + $0xa8] sm:$0xff] %vm2481, %v2603
      %s2608 = scalar_lea.vmem %s14, 16
      %v2609 = vld [vmem:[%s2608] sm:$0xff]
      %v2610 = vld [vmem:[%s2608 + $0x8] sm:$0xff]
      %v2611 = vld [vmem:[#allocation9] sm:$0xff]
      %v2612 = vld [vmem:[#allocation9 + $0x18] sm:$0xff]
      %v2613 = vld [vmem:[#allocation9 + $0x30] sm:$0xff]
      %v2614 = vld [vmem:[#allocation9 + $0x48] sm:$0xff]
      %v2615 = vld [vmem:[#allocation9 + $0x60] sm:$0xff]
      %v2616 = vld [vmem:[#allocation9 + $0x78] sm:$0xff]
      %v2617 = vld [vmem:[#allocation9 + $0x90] sm:$0xff]
      %v2618 = vld [vmem:[#allocation9 + $0xa8] sm:$0xff]
      %v2620 = vsel %vm2530, %v2609, 0
      %v2623 = vsel %vm2530, %v2610, 0
      %2625 = vmatpush.msra.mxu0 0.0
      %2626 = vmatpush.msra.mxu0 0.0
      %2627 = vmatpush.msra.mxu0 0.0
      %2628 = vmatpush.msra.mxu0 0.0
      %2629 = vmatpush.msra.mxu0 0.0
      %2630 = vmatpush.msra.mxu0 0.0
      %2631 = vmatpush.msra.mxu0 0.0
      %2632 = vmatpush.msra.mxu0 0.0
      %2633 = vmatpush.msra.mxu0 %v2618
      %2634 = vmatpush.msra.mxu0 %v2617
      %2635 = vmatpush.msra.mxu0 %v2616
      %2636 = vmatpush.msra.mxu0 %v2615
      %2637 = vmatpush.msra.mxu0 %v2614
      %2638 = vmatpush.msra.mxu0 %v2613
      %2639 = vmatpush.msra.mxu0 %v2612
      %2640 = vmatpush.msra.mxu0 %v2611
      %2641 = vmatmul.f32.gmra.mxu0 %v2620
      %v2642 = vpop.f32.mrf.mxu0
      %v2643 = vadd.f32 0.0, %v2642
      %2644 = vmatmul.f32.gmra.mxu0 %v2623
      %v2645 = vpop.f32.mrf.mxu0
      %v2646 = vadd.f32 0.0, %v2645
      %2647 = vdwg.mxu0
      %vm2648 = vcmask 31744
      %v2650 = vsel %vm2648, %v2643, 0
      %v2653 = vsel %vm2648, %v2646, 0
      %vm2655 = vcmask 1043456
      %v2657 = vsel %vm2655, %v2478, 0
      %2659 = vmatpush.msra.mxu0 0.0
      %2660 = vmatpush.msra.mxu0 0.0
      %2661 = vmatpush.msra.mxu0 0.0
      %2662 = vmatpush.msra.mxu0 0.0
      %2663 = vmatpush.msra.mxu0 0.0
      %2664 = vmatpush.msra.mxu0 0.0
      %2665 = vmatpush.msra.mxu0 0.0
      %2666 = vmatpush.msra.mxu0 0.0
      %2667 = vmatpush.msra.mxu0 0.0
      %2668 = vmatpush.msra.mxu0 0.0
      %2669 = vmatpush.msra.mxu0 0.0
      %2670 = vmatpush.msra.mxu0 0.0
      %2671 = vmatpush.msra.mxu0 0.0
      %2672 = vmatpush.msra.mxu0 0.0
      %2673 = vmatpush.msra.mxu0 0.0
      %2674 = vmatpush.msra.mxu0 %v2657
      %2675 = vmatmul.f32.gmra.mxu0 %v2650
      %v2676 = vpop.f32.mrf.mxu0
      %v2677 = vadd.f32 0.0, %v2676
      %2678 = vmatmul.f32.gmra.mxu0 %v2653
      %v2679 = vpop.f32.mrf.mxu0
      %v2680 = vadd.f32 0.0, %v2679
      %2681 = vdwg.mxu0
      %v2683 = vsel %vm2648, %v2555, 0
      %v2686 = vsel %vm2648, %v2558, 0
      %v2689 = vsel %vm2655, %v2477, 0
      %2691 = vmatpush.msra.mxu0 0.0
      %2692 = vmatpush.msra.mxu0 0.0
      %2693 = vmatpush.msra.mxu0 0.0
      %2694 = vmatpush.msra.mxu0 0.0
      %2695 = vmatpush.msra.mxu0 0.0
      %2696 = vmatpush.msra.mxu0 0.0
      %2697 = vmatpush.msra.mxu0 0.0
      %2698 = vmatpush.msra.mxu0 0.0
      %2699 = vmatpush.msra.mxu0 0.0
      %2700 = vmatpush.msra.mxu0 0.0
      %2701 = vmatpush.msra.mxu0 0.0
      %2702 = vmatpush.msra.mxu0 0.0
      %2703 = vmatpush.msra.mxu0 0.0
      %2704 = vmatpush.msra.mxu0 0.0
      %2705 = vmatpush.msra.mxu0 0.0
      %2706 = vmatpush.msra.mxu0 %v2689
      %2707 = vmatmul.f32.gmra.mxu0 %v2683
      %v2708 = vpop.f32.mrf.mxu0
      %v2709 = vadd.f32 %v2677, %v2708
      %2710 = vmatmul.f32.gmra.mxu0 %v2686
      %v2711 = vpop.f32.mrf.mxu0
      %v2712 = vadd.f32 %v2680, %v2711
      %2713 = vdwg.mxu0
      %2716 = vrot.lane.b32.xlu0 %v2709, 10
      %v2717 = vpop.permute.xlu0 %2716
      %2718 = vrot.lane.b32.xlu0 %v2712, 10
      %v2719 = vpop.permute.xlu0 %2718
      %2722 = vst.msk [vmem:[#allocation4] sm:$0xff] %vm1517, %v2717
      %2723 = vst.msk [vmem:[#allocation4 + $0x8] sm:$0xff] %vm1517, %v2719
      %2724 = vrot.lane.b32.xlu0 %v2643, 122
      %v2725 = vpop.permute.xlu0 %2724
      %2726 = vrot.lane.b32.xlu0 %v2646, 122
      %v2727 = vpop.permute.xlu0 %2726
      %v2728 = vsel %vm2648, %v2725, 0
      %v2730 = vsel %vm2648, %v2727, 0
      %2732 = vmatpush.msra.mxu0 0.0
      %2733 = vmatpush.msra.mxu0 0.0
      %2734 = vmatpush.msra.mxu0 0.0
      %2735 = vmatpush.msra.mxu0 0.0
      %2736 = vmatpush.msra.mxu0 0.0
      %2737 = vmatpush.msra.mxu0 0.0
      %2738 = vmatpush.msra.mxu0 0.0
      %2739 = vmatpush.msra.mxu0 0.0
      %2740 = vmatpush.msra.mxu0 0.0
      %2741 = vmatpush.msra.mxu0 0.0
      %2742 = vmatpush.msra.mxu0 0.0
      %2743 = vmatpush.msra.mxu0 0.0
      %2744 = vmatpush.msra.mxu0 0.0
      %2745 = vmatpush.msra.mxu0 0.0
      %2746 = vmatpush.msra.mxu0 0.0
      %2747 = vmatpush.msra.mxu0 %v2657
      %2748 = vmatmul.f32.gmra.mxu0 %v2728
      %v2749 = vpop.f32.mrf.mxu0
      %v2750 = vadd.f32 0.0, %v2749
      %2751 = vmatmul.f32.gmra.mxu0 %v2730
      %v2752 = vpop.f32.mrf.mxu0
      %v2753 = vadd.f32 0.0, %v2752
      %2754 = vdwg.mxu0
      %2755 = vrot.lane.b32.xlu0 %v2555, 122
      %v2756 = vpop.permute.xlu0 %2755
      %2757 = vrot.lane.b32.xlu0 %v2558, 122
      %v2758 = vpop.permute.xlu0 %2757
      %v2759 = vsel %vm2648, %v2756, 0
      %v2761 = vsel %vm2648, %v2758, 0
      %2763 = vmatpush.msra.mxu0 0.0
      %2764 = vmatpush.msra.mxu0 0.0
      %2765 = vmatpush.msra.mxu0 0.0
      %2766 = vmatpush.msra.mxu0 0.0
      %2767 = vmatpush.msra.mxu0 0.0
      %2768 = vmatpush.msra.mxu0 0.0
      %2769 = vmatpush.msra.mxu0 0.0
      %2770 = vmatpush.msra.mxu0 0.0
      %2771 = vmatpush.msra.mxu0 0.0
      %2772 = vmatpush.msra.mxu0 0.0
      %2773 = vmatpush.msra.mxu0 0.0
      %2774 = vmatpush.msra.mxu0 0.0
      %2775 = vmatpush.msra.mxu0 0.0
      %2776 = vmatpush.msra.mxu0 0.0
      %2777 = vmatpush.msra.mxu0 0.0
      %2778 = vmatpush.msra.mxu0 %v2689
      %2779 = vmatmul.f32.gmra.mxu0 %v2759
      %v2780 = vpop.f32.mrf.mxu0
      %v2781 = vadd.f32 %v2750, %v2780
      %2782 = vmatmul.f32.gmra.mxu0 %v2761
      %v2783 = vpop.f32.mrf.mxu0
      %v2784 = vadd.f32 %v2753, %v2783
      %2785 = vdwg.mxu0
      %2788 = vrot.lane.b32.xlu0 %v2781, 30
      %v2789 = vpop.permute.xlu0 %2788
      %2790 = vrot.lane.b32.xlu0 %v2784, 30
      %v2791 = vpop.permute.xlu0 %2790
      %2794 = vst.msk [vmem:[#allocation4] sm:$0xff] %vm1607, %v2789
      %2795 = vst.msk [vmem:[#allocation4 + $0x8] sm:$0xff] %vm1607, %v2791
      %2796 = vrot.lane.b32.xlu0 %v2643, 116
      %v2797 = vpop.permute.xlu0 %2796
      %2798 = vrot.lane.b32.xlu0 %v2646, 116
      %v2799 = vpop.permute.xlu0 %2798
      %v2800 = vsel %vm2648, %v2797, 0
      %v2802 = vsel %vm2648, %v2799, 0
      %2804 = vmatpush.msra.mxu0 0.0
      %2805 = vmatpush.msra.mxu0 0.0
      %2806 = vmatpush.msra.mxu0 0.0
      %2807 = vmatpush.msra.mxu0 0.0
      %2808 = vmatpush.msra.mxu0 0.0
      %2809 = vmatpush.msra.mxu0 0.0
      %2810 = vmatpush.msra.mxu0 0.0
      %2811 = vmatpush.msra.mxu0 0.0
      %2812 = vmatpush.msra.mxu0 0.0
      %2813 = vmatpush.msra.mxu0 0.0
      %2814 = vmatpush.msra.mxu0 0.0
      %2815 = vmatpush.msra.mxu0 0.0
      %2816 = vmatpush.msra.mxu0 0.0
      %2817 = vmatpush.msra.mxu0 0.0
      %2818 = vmatpush.msra.mxu0 0.0
      %2819 = vmatpush.msra.mxu0 %v2657
      %2820 = vmatmul.f32.gmra.mxu0 %v2800
      %v2821 = vpop.f32.mrf.mxu0
      %v2822 = vadd.f32 0.0, %v2821
      %2823 = vmatmul.f32.gmra.mxu0 %v2802
      %v2824 = vpop.f32.mrf.mxu0
      %v2825 = vadd.f32 0.0, %v2824
      %2826 = vdwg.mxu0
      %2827 = vrot.lane.b32.xlu0 %v2555, 116
      %v2828 = vpop.permute.xlu0 %2827
      %2829 = vrot.lane.b32.xlu0 %v2558, 116
      %v2830 = vpop.permute.xlu0 %2829
      %v2831 = vsel %vm2648, %v2828, 0
      %v2833 = vsel %vm2648, %v2830, 0
      %2835 = vmatpush.msra.mxu0 0.0
      %2836 = vmatpush.msra.mxu0 0.0
      %2837 = vmatpush.msra.mxu0 0.0
      %2838 = vmatpush.msra.mxu0 0.0
      %2839 = vmatpush.msra.mxu0 0.0
      %2840 = vmatpush.msra.mxu0 0.0
      %2841 = vmatpush.msra.mxu0 0.0
      %2842 = vmatpush.msra.mxu0 0.0
      %2843 = vmatpush.msra.mxu0 0.0
      %2844 = vmatpush.msra.mxu0 0.0
      %2845 = vmatpush.msra.mxu0 0.0
      %2846 = vmatpush.msra.mxu0 0.0
      %2847 = vmatpush.msra.mxu0 0.0
      %2848 = vmatpush.msra.mxu0 0.0
      %2849 = vmatpush.msra.mxu0 0.0
      %2850 = vmatpush.msra.mxu0 %v2689
      %2851 = vmatmul.f32.gmra.mxu0 %v2831
      %v2852 = vpop.f32.mrf.mxu0
      %v2853 = vadd.f32 %v2822, %v2852
      %2854 = vmatmul.f32.gmra.mxu0 %v2833
      %v2855 = vpop.f32.mrf.mxu0
      %v2856 = vadd.f32 %v2825, %v2855
      %2857 = vdwg.mxu0
      %2860 = vrot.lane.b32.xlu0 %v2853, 50
      %v2861 = vpop.permute.xlu0 %2860
      %2862 = vrot.lane.b32.xlu0 %v2856, 50
      %v2863 = vpop.permute.xlu0 %2862
      %2866 = vst.msk [vmem:[#allocation4] sm:$0xff] %vm1711, %v2861
      %2867 = vst.msk [vmem:[#allocation4 + $0x8] sm:$0xff] %vm1711, %v2863
      %2868 = vrot.lane.b32.xlu0 %v2643, 110
      %v2869 = vpop.permute.xlu0 %2868
      %2870 = vrot.lane.b32.xlu0 %v2646, 110
      %v2871 = vpop.permute.xlu0 %2870
      %v2872 = vsel %vm2648, %v2869, 0
      %v2874 = vsel %vm2648, %v2871, 0
      %2876 = vmatpush.msra.mxu0 0.0
      %2877 = vmatpush.msra.mxu0 0.0
      %2878 = vmatpush.msra.mxu0 0.0
      %2879 = vmatpush.msra.mxu0 0.0
      %2880 = vmatpush.msra.mxu0 0.0
      %2881 = vmatpush.msra.mxu0 0.0
      %2882 = vmatpush.msra.mxu0 0.0
      %2883 = vmatpush.msra.mxu0 0.0
      %2884 = vmatpush.msra.mxu0 0.0
      %2885 = vmatpush.msra.mxu0 0.0
      %2886 = vmatpush.msra.mxu0 0.0
      %2887 = vmatpush.msra.mxu0 0.0
      %2888 = vmatpush.msra.mxu0 0.0
      %2889 = vmatpush.msra.mxu0 0.0
      %2890 = vmatpush.msra.mxu0 0.0
      %2891 = vmatpush.msra.mxu0 %v2657
      %2892 = vmatmul.f32.gmra.mxu0 %v2872
      %v2893 = vpop.f32.mrf.mxu0
      %v2894 = vadd.f32 0.0, %v2893
      %2895 = vmatmul.f32.gmra.mxu0 %v2874
      %v2896 = vpop.f32.mrf.mxu0
      %v2897 = vadd.f32 0.0, %v2896
      %2898 = vdwg.mxu0
      %2899 = vrot.lane.b32.xlu0 %v2555, 110
      %v2900 = vpop.permute.xlu0 %2899
      %2901 = vrot.lane.b32.xlu0 %v2558, 110
      %v2902 = vpop.permute.xlu0 %2901
      %v2903 = vsel %vm2648, %v2900, 0
      %v2905 = vsel %vm2648, %v2902, 0
      %2907 = vmatpush.msra.mxu0 0.0
      %2908 = vmatpush.msra.mxu0 0.0
      %2909 = vmatpush.msra.mxu0 0.0
      %2910 = vmatpush.msra.mxu0 0.0
      %2911 = vmatpush.msra.mxu0 0.0
      %2912 = vmatpush.msra.mxu0 0.0
      %2913 = vmatpush.msra.mxu0 0.0
      %2914 = vmatpush.msra.mxu0 0.0
      %2915 = vmatpush.msra.mxu0 0.0
      %2916 = vmatpush.msra.mxu0 0.0
      %2917 = vmatpush.msra.mxu0 0.0
      %2918 = vmatpush.msra.mxu0 0.0
      %2919 = vmatpush.msra.mxu0 0.0
      %2920 = vmatpush.msra.mxu0 0.0
      %2921 = vmatpush.msra.mxu0 0.0
      %2922 = vmatpush.msra.mxu0 %v2689
      %2923 = vmatmul.f32.gmra.mxu0 %v2903
      %v2924 = vpop.f32.mrf.mxu0
      %v2925 = vadd.f32 %v2894, %v2924
      %2926 = vmatmul.f32.gmra.mxu0 %v2905
      %v2927 = vpop.f32.mrf.mxu0
      %v2928 = vadd.f32 %v2897, %v2927
      %2929 = vdwg.mxu0
      %2932 = vrot.lane.b32.xlu0 %v2925, 70
      %v2933 = vpop.permute.xlu0 %2932
      %2934 = vrot.lane.b32.xlu0 %v2928, 70
      %v2935 = vpop.permute.xlu0 %2934
      %2938 = vst.msk [vmem:[#allocation4] sm:$0xff] %vm1809, %v2933
      %2939 = vst.msk [vmem:[#allocation4 + $0x8] sm:$0xff] %vm1809, %v2935
      %v2940 = vld [vmem:[#allocation7] sm:$0xff]
      %v2941 = vld [vmem:[#allocation7 + $0x8] sm:$0xff]
      %2944 = vrot.lane.b32.xlu0 %v2940, 122
      %v2945 = vpop.permute.xlu0 %2944
      %2946 = vrot.lane.b32.xlu0 %v2941, 122
      %v2947 = vpop.permute.xlu0 %2946
      %2950 = vst.msk [vmem:[#allocation9] sm:$0xff] %vm2481, %v2945
      %2951 = vst.msk [vmem:[#allocation9 + $0x18] sm:$0xff] %vm2481, %v2947
      %v2952 = vld [vmem:[#allocation7] sm:$0xff]
      %v2953 = vld [vmem:[#allocation7 + $0x8] sm:$0xff]
      %2956 = vrot.lane.b32.xlu0 %v2952, 121
      %v2957 = vpop.permute.xlu0 %2956
      %2958 = vrot.lane.b32.xlu0 %v2953, 121
      %v2959 = vpop.permute.xlu0 %2958
      %2962 = vst.msk [vmem:[#allocation9 + $0x30] sm:$0xff] %vm2481, %v2957
      %2963 = vst.msk [vmem:[#allocation9 + $0x48] sm:$0xff] %vm2481, %v2959
      %v2964 = vld [vmem:[#allocation7] sm:$0xff]
      %v2965 = vld [vmem:[#allocation7 + $0x8] sm:$0xff]
      %2968 = vrot.lane.b32.xlu0 %v2964, 116
      %v2969 = vpop.permute.xlu0 %2968
      %2970 = vrot.lane.b32.xlu0 %v2965, 116
      %v2971 = vpop.permute.xlu0 %2970
      %2974 = vst.msk [vmem:[#allocation9 + $0x60] sm:$0xff] %vm2481, %v2969
      %2975 = vst.msk [vmem:[#allocation9 + $0x78] sm:$0xff] %vm2481, %v2971
      %v2976 = vld [vmem:[#allocation7] sm:$0xff]
      %v2977 = vld [vmem:[#allocation7 + $0x8] sm:$0xff]
      %2980 = vrot.lane.b32.xlu0 %v2976, 115
      %v2981 = vpop.permute.xlu0 %2980
      %2982 = vrot.lane.b32.xlu0 %v2977, 115
      %v2983 = vpop.permute.xlu0 %2982
      %2986 = vst.msk [vmem:[#allocation9 + $0x90] sm:$0xff] %vm2481, %v2981
      %2987 = vst.msk [vmem:[#allocation9 + $0xa8] sm:$0xff] %vm2481, %v2983
      %s2988 = scalar_lea.vmem %s14, 32
      %v2989 = vld [vmem:[%s2988] sm:$0xff]
      %v2990 = vld [vmem:[%s2988 + $0x8] sm:$0xff]
      %v2991 = vld [vmem:[#allocation9] sm:$0xff]
      %v2992 = vld [vmem:[#allocation9 + $0x18] sm:$0xff]
      %v2993 = vld [vmem:[#allocation9 + $0x30] sm:$0xff]
      %v2994 = vld [vmem:[#allocation9 + $0x48] sm:$0xff]
      %v2995 = vld [vmem:[#allocation9 + $0x60] sm:$0xff]
      %v2996 = vld [vmem:[#allocation9 + $0x78] sm:$0xff]
      %v2997 = vld [vmem:[#allocation9 + $0x90] sm:$0xff]
      %v2998 = vld [vmem:[#allocation9 + $0xa8] sm:$0xff]
      %v3000 = vsel %vm2530, %v2989, 0
      %v3003 = vsel %vm2530, %v2990, 0
      %3005 = vmatpush.msra.mxu0 0.0
      %3006 = vmatpush.msra.mxu0 0.0
      %3007 = vmatpush.msra.mxu0 0.0
      %3008 = vmatpush.msra.mxu0 0.0
      %3009 = vmatpush.msra.mxu0 0.0
      %3010 = vmatpush.msra.mxu0 0.0
      %3011 = vmatpush.msra.mxu0 0.0
      %3012 = vmatpush.msra.mxu0 0.0
      %3013 = vmatpush.msra.mxu0 %v2998
      %3014 = vmatpush.msra.mxu0 %v2997
      %3015 = vmatpush.msra.mxu0 %v2996
      %3016 = vmatpush.msra.mxu0 %v2995
      %3017 = vmatpush.msra.mxu0 %v2994
      %3018 = vmatpush.msra.mxu0 %v2993
      %3019 = vmatpush.msra.mxu0 %v2992
      %3020 = vmatpush.msra.mxu0 %v2991
      %3021 = vmatmul.f32.gmra.mxu0 %v3000
      %v3022 = vpop.f32.mrf.mxu0
      %v3023 = vadd.f32 0.0, %v3022
      %3024 = vmatmul.f32.gmra.mxu0 %v3003
      %v3025 = vpop.f32.mrf.mxu0
      %v3026 = vadd.f32 0.0, %v3025
      %3027 = vdwg.mxu0
      %v3028 = vld [vmem:[#allocation7] sm:$0xff]
      %v3029 = vld [vmem:[#allocation7 + $0x8] sm:$0xff]
      %3032 = vrot.lane.b32.xlu0 %v3028, 121
      %v3033 = vpop.permute.xlu0 %3032
      %3034 = vrot.lane.b32.xlu0 %v3029, 121
      %v3035 = vpop.permute.xlu0 %3034
      %3038 = vst.msk [vmem:[#allocation9] sm:$0xff] %vm2481, %v3033
      %3039 = vst.msk [vmem:[#allocation9 + $0x18] sm:$0xff] %vm2481, %v3035
      %v3040 = vld [vmem:[#allocation7] sm:$0xff]
      %v3041 = vld [vmem:[#allocation7 + $0x8] sm:$0xff]
      %3044 = vrot.lane.b32.xlu0 %v3040, 120
      %v3045 = vpop.permute.xlu0 %3044
      %3046 = vrot.lane.b32.xlu0 %v3041, 120
      %v3047 = vpop.permute.xlu0 %3046
      %3050 = vst.msk [vmem:[#allocation9 + $0x30] sm:$0xff] %vm2481, %v3045
      %3051 = vst.msk [vmem:[#allocation9 + $0x48] sm:$0xff] %vm2481, %v3047
      %v3052 = vld [vmem:[#allocation7] sm:$0xff]
      %v3053 = vld [vmem:[#allocation7 + $0x8] sm:$0xff]
      %3056 = vrot.lane.b32.xlu0 %v3052, 115
      %v3057 = vpop.permute.xlu0 %3056
      %3058 = vrot.lane.b32.xlu0 %v3053, 115
      %v3059 = vpop.permute.xlu0 %3058
      %3062 = vst.msk [vmem:[#allocation9 + $0x60] sm:$0xff] %vm2481, %v3057
      %3063 = vst.msk [vmem:[#allocation9 + $0x78] sm:$0xff] %vm2481, %v3059
      %v3064 = vld [vmem:[#allocation7] sm:$0xff]
      %v3065 = vld [vmem:[#allocation7 + $0x8] sm:$0xff]
      %3068 = vrot.lane.b32.xlu0 %v3064, 114
      %v3069 = vpop.permute.xlu0 %3068
      %3070 = vrot.lane.b32.xlu0 %v3065, 114
      %v3071 = vpop.permute.xlu0 %3070
      %3074 = vst.msk [vmem:[#allocation9 + $0x90] sm:$0xff] %vm2481, %v3069
      %3075 = vst.msk [vmem:[#allocation9 + $0xa8] sm:$0xff] %vm2481, %v3071
      %s3076 = scalar_lea.vmem %s14, 48
      %v3077 = vld [vmem:[%s3076] sm:$0xff]
      %v3078 = vld [vmem:[%s3076 + $0x8] sm:$0xff]
      %v3079 = vld [vmem:[#allocation9] sm:$0xff]
      %v3080 = vld [vmem:[#allocation9 + $0x18] sm:$0xff]
      %v3081 = vld [vmem:[#allocation9 + $0x30] sm:$0xff]
      %v3082 = vld [vmem:[#allocation9 + $0x48] sm:$0xff]
      %v3083 = vld [vmem:[#allocation9 + $0x60] sm:$0xff]
      %v3084 = vld [vmem:[#allocation9 + $0x78] sm:$0xff]
      %v3085 = vld [vmem:[#allocation9 + $0x90] sm:$0xff]
      %v3086 = vld [vmem:[#allocation9 + $0xa8] sm:$0xff]
      %v3088 = vsel %vm2530, %v3077, 0
      %v3091 = vsel %vm2530, %v3078, 0
      %3093 = vmatpush.msra.mxu0 0.0
      %3094 = vmatpush.msra.mxu0 0.0
      %3095 = vmatpush.msra.mxu0 0.0
      %3096 = vmatpush.msra.mxu0 0.0
      %3097 = vmatpush.msra.mxu0 0.0
      %3098 = vmatpush.msra.mxu0 0.0
      %3099 = vmatpush.msra.mxu0 0.0
      %3100 = vmatpush.msra.mxu0 0.0
      %3101 = vmatpush.msra.mxu0 %v3086
      %3102 = vmatpush.msra.mxu0 %v3085
      %3103 = vmatpush.msra.mxu0 %v3084
      %3104 = vmatpush.msra.mxu0 %v3083
      %3105 = vmatpush.msra.mxu0 %v3082
      %3106 = vmatpush.msra.mxu0 %v3081
      %3107 = vmatpush.msra.mxu0 %v3080
      %3108 = vmatpush.msra.mxu0 %v3079
      %3109 = vmatmul.f32.gmra.mxu0 %v3088
      %v3110 = vpop.f32.mrf.mxu0
      %v3111 = vadd.f32 0.0, %v3110
      %3112 = vmatmul.f32.gmra.mxu0 %v3091
      %v3113 = vpop.f32.mrf.mxu0
      %v3114 = vadd.f32 0.0, %v3113
      %3115 = vdwg.mxu0
      %v3117 = vsel %vm2648, %v3111, 0
      %v3120 = vsel %vm2648, %v3114, 0
      %3122 = vmatpush.msra.mxu0 0.0
      %3123 = vmatpush.msra.mxu0 0.0
      %3124 = vmatpush.msra.mxu0 0.0
      %3125 = vmatpush.msra.mxu0 0.0
      %3126 = vmatpush.msra.mxu0 0.0
      %3127 = vmatpush.msra.mxu0 0.0
      %3128 = vmatpush.msra.mxu0 0.0
      %3129 = vmatpush.msra.mxu0 0.0
      %3130 = vmatpush.msra.mxu0 0.0
      %3131 = vmatpush.msra.mxu0 0.0
      %3132 = vmatpush.msra.mxu0 0.0
      %3133 = vmatpush.msra.mxu0 0.0
      %3134 = vmatpush.msra.mxu0 0.0
      %3135 = vmatpush.msra.mxu0 0.0
      %3136 = vmatpush.msra.mxu0 0.0
      %3137 = vmatpush.msra.mxu0 %v2657
      %3138 = vmatmul.f32.gmra.mxu0 %v3117
      %v3139 = vpop.f32.mrf.mxu0
      %v3140 = vadd.f32 0.0, %v3139
      %3141 = vmatmul.f32.gmra.mxu0 %v3120
      %v3142 = vpop.f32.mrf.mxu0
      %v3143 = vadd.f32 0.0, %v3142
      %3144 = vdwg.mxu0
      %v3146 = vsel %vm2648, %v3023, 0
      %v3149 = vsel %vm2648, %v3026, 0
      %3151 = vmatpush.msra.mxu0 0.0
      %3152 = vmatpush.msra.mxu0 0.0
      %3153 = vmatpush.msra.mxu0 0.0
      %3154 = vmatpush.msra.mxu0 0.0
      %3155 = vmatpush.msra.mxu0 0.0
      %3156 = vmatpush.msra.mxu0 0.0
      %3157 = vmatpush.msra.mxu0 0.0
      %3158 = vmatpush.msra.mxu0 0.0
      %3159 = vmatpush.msra.mxu0 0.0
      %3160 = vmatpush.msra.mxu0 0.0
      %3161 = vmatpush.msra.mxu0 0.0
      %3162 = vmatpush.msra.mxu0 0.0
      %3163 = vmatpush.msra.mxu0 0.0
      %3164 = vmatpush.msra.mxu0 0.0
      %3165 = vmatpush.msra.mxu0 0.0
      %3166 = vmatpush.msra.mxu0 %v2689
      %3167 = vmatmul.f32.gmra.mxu0 %v3146
      %v3168 = vpop.f32.mrf.mxu0
      %v3169 = vadd.f32 %v3140, %v3168
      %3170 = vmatmul.f32.gmra.mxu0 %v3149
      %v3171 = vpop.f32.mrf.mxu0
      %v3172 = vadd.f32 %v3143, %v3171
      %3173 = vdwg.mxu0
      %3176 = vrot.lane.b32.xlu0 %v3169, 20
      %v3177 = vpop.permute.xlu0 %3176
      %3178 = vrot.lane.b32.xlu0 %v3172, 20
      %v3179 = vpop.permute.xlu0 %3178
      %3182 = vst.msk [vmem:[#allocation4] sm:$0xff] %vm1562, %v3177
      %3183 = vst.msk [vmem:[#allocation4 + $0x8] sm:$0xff] %vm1562, %v3179
      %3184 = vrot.lane.b32.xlu0 %v3111, 122
      %v3185 = vpop.permute.xlu0 %3184
      %3186 = vrot.lane.b32.xlu0 %v3114, 122
      %v3187 = vpop.permute.xlu0 %3186
      %v3188 = vsel %vm2648, %v3185, 0
      %v3190 = vsel %vm2648, %v3187, 0
      %3192 = vmatpush.msra.mxu0 0.0
      %3193 = vmatpush.msra.mxu0 0.0
      %3194 = vmatpush.msra.mxu0 0.0
      %3195 = vmatpush.msra.mxu0 0.0
      %3196 = vmatpush.msra.mxu0 0.0
      %3197 = vmatpush.msra.mxu0 0.0
      %3198 = vmatpush.msra.mxu0 0.0
      %3199 = vmatpush.msra.mxu0 0.0
      %3200 = vmatpush.msra.mxu0 0.0
      %3201 = vmatpush.msra.mxu0 0.0
      %3202 = vmatpush.msra.mxu0 0.0
      %3203 = vmatpush.msra.mxu0 0.0
      %3204 = vmatpush.msra.mxu0 0.0
      %3205 = vmatpush.msra.mxu0 0.0
      %3206 = vmatpush.msra.mxu0 0.0
      %3207 = vmatpush.msra.mxu0 %v2657
      %3208 = vmatmul.f32.gmra.mxu0 %v3188
      %v3209 = vpop.f32.mrf.mxu0
      %v3210 = vadd.f32 0.0, %v3209
      %3211 = vmatmul.f32.gmra.mxu0 %v3190
      %v3212 = vpop.f32.mrf.mxu0
      %v3213 = vadd.f32 0.0, %v3212
      %3214 = vdwg.mxu0
      %3215 = vrot.lane.b32.xlu0 %v3023, 122
      %v3216 = vpop.permute.xlu0 %3215
      %3217 = vrot.lane.b32.xlu0 %v3026, 122
      %v3218 = vpop.permute.xlu0 %3217
      %v3219 = vsel %vm2648, %v3216, 0
      %v3221 = vsel %vm2648, %v3218, 0
      %3223 = vmatpush.msra.mxu0 0.0
      %3224 = vmatpush.msra.mxu0 0.0
      %3225 = vmatpush.msra.mxu0 0.0
      %3226 = vmatpush.msra.mxu0 0.0
      %3227 = vmatpush.msra.mxu0 0.0
      %3228 = vmatpush.msra.mxu0 0.0
      %3229 = vmatpush.msra.mxu0 0.0
      %3230 = vmatpush.msra.mxu0 0.0
      %3231 = vmatpush.msra.mxu0 0.0
      %3232 = vmatpush.msra.mxu0 0.0
      %3233 = vmatpush.msra.mxu0 0.0
      %3234 = vmatpush.msra.mxu0 0.0
      %3235 = vmatpush.msra.mxu0 0.0
      %3236 = vmatpush.msra.mxu0 0.0
      %3237 = vmatpush.msra.mxu0 0.0
      %3238 = vmatpush.msra.mxu0 %v2689
      %3239 = vmatmul.f32.gmra.mxu0 %v3219
      %v3240 = vpop.f32.mrf.mxu0
      %v3241 = vadd.f32 %v3210, %v3240
      %3242 = vmatmul.f32.gmra.mxu0 %v3221
      %v3243 = vpop.f32.mrf.mxu0
      %v3244 = vadd.f32 %v3213, %v3243
      %3245 = vdwg.mxu0
      %3248 = vrot.lane.b32.xlu0 %v3241, 40
      %v3249 = vpop.permute.xlu0 %3248
      %3250 = vrot.lane.b32.xlu0 %v3244, 40
      %v3251 = vpop.permute.xlu0 %3250
      %3254 = vst.msk [vmem:[#allocation4] sm:$0xff] %vm1666, %v3249
      %3255 = vst.msk [vmem:[#allocation4 + $0x8] sm:$0xff] %vm1666, %v3251
      %3256 = vrot.lane.b32.xlu0 %v3111, 116
      %v3257 = vpop.permute.xlu0 %3256
      %3258 = vrot.lane.b32.xlu0 %v3114, 116
      %v3259 = vpop.permute.xlu0 %3258
      %v3260 = vsel %vm2648, %v3257, 0
      %v3262 = vsel %vm2648, %v3259, 0
      %3264 = vmatpush.msra.mxu0 0.0
      %3265 = vmatpush.msra.mxu0 0.0
      %3266 = vmatpush.msra.mxu0 0.0
      %3267 = vmatpush.msra.mxu0 0.0
      %3268 = vmatpush.msra.mxu0 0.0
      %3269 = vmatpush.msra.mxu0 0.0
      %3270 = vmatpush.msra.mxu0 0.0
      %3271 = vmatpush.msra.mxu0 0.0
      %3272 = vmatpush.msra.mxu0 0.0
      %3273 = vmatpush.msra.mxu0 0.0
      %3274 = vmatpush.msra.mxu0 0.0
      %3275 = vmatpush.msra.mxu0 0.0
      %3276 = vmatpush.msra.mxu0 0.0
      %3277 = vmatpush.msra.mxu0 0.0
      %3278 = vmatpush.msra.mxu0 0.0
      %3279 = vmatpush.msra.mxu0 %v2657
      %3280 = vmatmul.f32.gmra.mxu0 %v3260
      %v3281 = vpop.f32.mrf.mxu0
      %v3282 = vadd.f32 0.0, %v3281
      %3283 = vmatmul.f32.gmra.mxu0 %v3262
      %v3284 = vpop.f32.mrf.mxu0
      %v3285 = vadd.f32 0.0, %v3284
      %3286 = vdwg.mxu0
      %3287 = vrot.lane.b32.xlu0 %v3023, 116
      %v3288 = vpop.permute.xlu0 %3287
      %3289 = vrot.lane.b32.xlu0 %v3026, 116
      %v3290 = vpop.permute.xlu0 %3289
      %v3291 = vsel %vm2648, %v3288, 0
      %v3293 = vsel %vm2648, %v3290, 0
      %3295 = vmatpush.msra.mxu0 0.0
      %3296 = vmatpush.msra.mxu0 0.0
      %3297 = vmatpush.msra.mxu0 0.0
      %3298 = vmatpush.msra.mxu0 0.0
      %3299 = vmatpush.msra.mxu0 0.0
      %3300 = vmatpush.msra.mxu0 0.0
      %3301 = vmatpush.msra.mxu0 0.0
      %3302 = vmatpush.msra.mxu0 0.0
      %3303 = vmatpush.msra.mxu0 0.0
      %3304 = vmatpush.msra.mxu0 0.0
      %3305 = vmatpush.msra.mxu0 0.0
      %3306 = vmatpush.msra.mxu0 0.0
      %3307 = vmatpush.msra.mxu0 0.0
      %3308 = vmatpush.msra.mxu0 0.0
      %3309 = vmatpush.msra.mxu0 0.0
      %3310 = vmatpush.msra.mxu0 %v2689
      %3311 = vmatmul.f32.gmra.mxu0 %v3291
      %v3312 = vpop.f32.mrf.mxu0
      %v3313 = vadd.f32 %v3282, %v3312
      %3314 = vmatmul.f32.gmra.mxu0 %v3293
      %v3315 = vpop.f32.mrf.mxu0
      %v3316 = vadd.f32 %v3285, %v3315
      %3317 = vdwg.mxu0
      %3320 = vrot.lane.b32.xlu0 %v3313, 60
      %v3321 = vpop.permute.xlu0 %3320
      %3322 = vrot.lane.b32.xlu0 %v3316, 60
      %v3323 = vpop.permute.xlu0 %3322
      %3326 = vst.msk [vmem:[#allocation4] sm:$0xff] %vm1756, %v3321
      %3327 = vst.msk [vmem:[#allocation4 + $0x8] sm:$0xff] %vm1756, %v3323
      %3328 = vrot.lane.b32.xlu0 %v3111, 110
      %v3329 = vpop.permute.xlu0 %3328
      %3330 = vrot.lane.b32.xlu0 %v3114, 110
      %v3331 = vpop.permute.xlu0 %3330
      %v3332 = vsel %vm2648, %v3329, 0
      %v3334 = vsel %vm2648, %v3331, 0
      %3336 = vmatpush.msra.mxu0 0.0
      %3337 = vmatpush.msra.mxu0 0.0
      %3338 = vmatpush.msra.mxu0 0.0
      %3339 = vmatpush.msra.mxu0 0.0
      %3340 = vmatpush.msra.mxu0 0.0
      %3341 = vmatpush.msra.mxu0 0.0
      %3342 = vmatpush.msra.mxu0 0.0
      %3343 = vmatpush.msra.mxu0 0.0
      %3344 = vmatpush.msra.mxu0 0.0
      %3345 = vmatpush.msra.mxu0 0.0
      %3346 = vmatpush.msra.mxu0 0.0
      %3347 = vmatpush.msra.mxu0 0.0
      %3348 = vmatpush.msra.mxu0 0.0
      %3349 = vmatpush.msra.mxu0 0.0
      %3350 = vmatpush.msra.mxu0 0.0
      %3351 = vmatpush.msra.mxu0 %v2657
      %3352 = vmatmul.f32.gmra.mxu0 %v3332
      %v3353 = vpop.f32.mrf.mxu0
      %v3354 = vadd.f32 0.0, %v3353
      %3355 = vmatmul.f32.gmra.mxu0 %v3334
      %v3356 = vpop.f32.mrf.mxu0
      %v3357 = vadd.f32 0.0, %v3356
      %3358 = vdwg.mxu0
      %3359 = vrot.lane.b32.xlu0 %v3023, 110
      %v3360 = vpop.permute.xlu0 %3359
      %3361 = vrot.lane.b32.xlu0 %v3026, 110
      %v3362 = vpop.permute.xlu0 %3361
      %v3363 = vsel %vm2648, %v3360, 0
      %v3365 = vsel %vm2648, %v3362, 0
      %3367 = vmatpush.msra.mxu0 0.0
      %3368 = vmatpush.msra.mxu0 0.0
      %3369 = vmatpush.msra.mxu0 0.0
      %3370 = vmatpush.msra.mxu0 0.0
      %3371 = vmatpush.msra.mxu0 0.0
      %3372 = vmatpush.msra.mxu0 0.0
      %3373 = vmatpush.msra.mxu0 0.0
      %3374 = vmatpush.msra.mxu0 0.0
      %3375 = vmatpush.msra.mxu0 0.0
      %3376 = vmatpush.msra.mxu0 0.0
      %3377 = vmatpush.msra.mxu0 0.0
      %3378 = vmatpush.msra.mxu0 0.0
      %3379 = vmatpush.msra.mxu0 0.0
      %3380 = vmatpush.msra.mxu0 0.0
      %3381 = vmatpush.msra.mxu0 0.0
      %3382 = vmatpush.msra.mxu0 %v2689
      %3383 = vmatmul.f32.gmra.mxu0 %v3363
      %v3384 = vpop.f32.mrf.mxu0
      %v3385 = vadd.f32 %v3354, %v3384
      %3386 = vmatmul.f32.gmra.mxu0 %v3365
      %v3387 = vpop.f32.mrf.mxu0
      %v3388 = vadd.f32 %v3357, %v3387
      %3389 = vdwg.mxu0
      %3392 = vrot.lane.b32.xlu0 %v3385, 80
      %v3393 = vpop.permute.xlu0 %3392
      %3394 = vrot.lane.b32.xlu0 %v3388, 80
      %v3395 = vpop.permute.xlu0 %3394
      %3398 = vst.msk [vmem:[#allocation4] sm:$0xff] %vm1854, %v3393
      %3399 = vst.msk [vmem:[#allocation4 + $0x8] sm:$0xff] %vm1854, %v3395
      %v3400 = vld [vmem:[#allocation4] sm:$0xff]
      %v3401 = vld [vmem:[#allocation4 + $0x8] sm:$0xff]
      %3402 = vst.msk [vmem:[#allocation9] sm:$0xff] %vm1857, %v3400
      %3403 = vst.msk [vmem:[#allocation9 + $0x18] sm:$0xff] %vm1857, %v3401
      %v3404 = vld [vmem:[#allocation4] sm:$0xff]
      %v3405 = vld [vmem:[#allocation4 + $0x8] sm:$0xff]
      %3408 = vrot.lane.b32.xlu0 %v3404, 127
      %v3409 = vpop.permute.xlu0 %3408
      %3410 = vrot.lane.b32.xlu0 %v3405, 127
      %v3411 = vpop.permute.xlu0 %3410
      %3414 = vst.msk [vmem:[#allocation9 + $0x30] sm:$0xff] %vm1857, %v3409
      %3415 = vst.msk [vmem:[#allocation9 + $0x48] sm:$0xff] %vm1857, %v3411
      %v3416 = vld [vmem:[#allocation4] sm:$0xff]
      %v3417 = vld [vmem:[#allocation4 + $0x8] sm:$0xff]
      %3420 = vrot.lane.b32.xlu0 %v3416, 126
      %v3421 = vpop.permute.xlu0 %3420
      %3422 = vrot.lane.b32.xlu0 %v3417, 126
      %v3423 = vpop.permute.xlu0 %3422
      %3426 = vst.msk [vmem:[#allocation9 + $0x60] sm:$0xff] %vm1857, %v3421
      %3427 = vst.msk [vmem:[#allocation9 + $0x78] sm:$0xff] %vm1857, %v3423
      %v3428 = vld [vmem:[#allocation4] sm:$0xff]
      %v3429 = vld [vmem:[#allocation4 + $0x8] sm:$0xff]
      %3432 = vrot.lane.b32.xlu0 %v3428, 118
      %v3433 = vpop.permute.xlu0 %3432
      %3434 = vrot.lane.b32.xlu0 %v3429, 118
      %v3435 = vpop.permute.xlu0 %3434
      %3438 = vst.msk [vmem:[#allocation9 + $0x90] sm:$0xff] %vm1857, %v3433
      %3439 = vst.msk [vmem:[#allocation9 + $0xa8] sm:$0xff] %vm1857, %v3435
      %v3440 = vld [vmem:[#allocation4] sm:$0xff]
      %v3441 = vld [vmem:[#allocation4 + $0x8] sm:$0xff]
      %3444 = vrot.lane.b32.xlu0 %v3440, 117
      %v3445 = vpop.permute.xlu0 %3444
      %3446 = vrot.lane.b32.xlu0 %v3441, 117
      %v3447 = vpop.permute.xlu0 %3446
      %3450 = vst.msk [vmem:[#allocation9 + $0xc0] sm:$0xff] %vm1857, %v3445
      %3451 = vst.msk [vmem:[#allocation9 + $0xd8] sm:$0xff] %vm1857, %v3447
      %v3452 = vld [vmem:[#allocation4] sm:$0xff]
      %v3453 = vld [vmem:[#allocation4 + $0x8] sm:$0xff]
      %3456 = vrot.lane.b32.xlu0 %v3452, 116
      %v3457 = vpop.permute.xlu0 %3456
      %3458 = vrot.lane.b32.xlu0 %v3453, 116
      %v3459 = vpop.permute.xlu0 %3458
      %3462 = vst.msk [vmem:[#allocation9 + $0xf0] sm:$0xff] %vm1857, %v3457
      %3463 = vst.msk [vmem:[#allocation9 + $0x108] sm:$0xff] %vm1857, %v3459
      %v3464 = vld [vmem:[#allocation4] sm:$0xff]
      %v3465 = vld [vmem:[#allocation4 + $0x8] sm:$0xff]
      %3468 = vrot.lane.b32.xlu0 %v3464, 108
      %v3469 = vpop.permute.xlu0 %3468
      %3470 = vrot.lane.b32.xlu0 %v3465, 108
      %v3471 = vpop.permute.xlu0 %3470
      %3474 = vst.msk [vmem:[#allocation9 + $0x120] sm:$0xff] %vm1857, %v3469
      %3475 = vst.msk [vmem:[#allocation9 + $0x138] sm:$0xff] %vm1857, %v3471
      %v3476 = vld [vmem:[#allocation4] sm:$0xff]
      %v3477 = vld [vmem:[#allocation4 + $0x8] sm:$0xff]
      %3480 = vrot.lane.b32.xlu0 %v3476, 107
      %v3481 = vpop.permute.xlu0 %3480
      %3482 = vrot.lane.b32.xlu0 %v3477, 107
      %v3483 = vpop.permute.xlu0 %3482
      %3486 = vst.msk [vmem:[#allocation9 + $0x150] sm:$0xff] %vm1857, %v3481
      %3487 = vst.msk [vmem:[#allocation9 + $0x168] sm:$0xff] %vm1857, %v3483
      %v3488 = vld [vmem:[#allocation4] sm:$0xff]
      %v3489 = vld [vmem:[#allocation4 + $0x8] sm:$0xff]
      %3492 = vrot.lane.b32.xlu0 %v3488, 106
      %v3493 = vpop.permute.xlu0 %3492
      %3494 = vrot.lane.b32.xlu0 %v3489, 106
      %v3495 = vpop.permute.xlu0 %3494
      %3498 = vst.msk [vmem:[#allocation9 + $0x180] sm:$0xff] %vm1857, %v3493
      %3499 = vst.msk [vmem:[#allocation9 + $0x198] sm:$0xff] %vm1857, %v3495
      %v3500 = vld [vmem:[#allocation6] sm:$0xff]
      %v3501 = vld [vmem:[#allocation6 + $0x8] sm:$0xff]
      %3502 = vst.msk [vmem:[#allocation9 + $0x1b0] sm:$0xff] %vm1857, %v3500
      %3503 = vst.msk [vmem:[#allocation9 + $0x1c8] sm:$0xff] %vm1857, %v3501
      %v3504 = vld [vmem:[#allocation6] sm:$0xff]
      %v3505 = vld [vmem:[#allocation6 + $0x8] sm:$0xff]
      %3508 = vrot.lane.b32.xlu0 %v3504, 127
      %v3509 = vpop.permute.xlu0 %3508
      %3510 = vrot.lane.b32.xlu0 %v3505, 127
      %v3511 = vpop.permute.xlu0 %3510
      %3514 = vst.msk [vmem:[#allocation9 + $0x1e0] sm:$0xff] %vm1857, %v3509
      %3515 = vst.msk [vmem:[#allocation9 + $0x1f8] sm:$0xff] %vm1857, %v3511
      %v3516 = vld [vmem:[#allocation6] sm:$0xff]
      %v3517 = vld [vmem:[#allocation6 + $0x8] sm:$0xff]
      %3520 = vrot.lane.b32.xlu0 %v3516, 126
      %v3521 = vpop.permute.xlu0 %3520
      %3522 = vrot.lane.b32.xlu0 %v3517, 126
      %v3523 = vpop.permute.xlu0 %3522
      %3526 = vst.msk [vmem:[#allocation9 + $0x210] sm:$0xff] %vm1857, %v3521
      %3527 = vst.msk [vmem:[#allocation9 + $0x228] sm:$0xff] %vm1857, %v3523
      %v3528 = vld [vmem:[#allocation6] sm:$0xff]
      %v3529 = vld [vmem:[#allocation6 + $0x8] sm:$0xff]
      %3532 = vrot.lane.b32.xlu0 %v3528, 118
      %v3533 = vpop.permute.xlu0 %3532
      %3534 = vrot.lane.b32.xlu0 %v3529, 118
      %v3535 = vpop.permute.xlu0 %3534
      %3538 = vst.msk [vmem:[#allocation9 + $0x240] sm:$0xff] %vm1857, %v3533
      %3539 = vst.msk [vmem:[#allocation9 + $0x258] sm:$0xff] %vm1857, %v3535
      %v3540 = vld [vmem:[#allocation6] sm:$0xff]
      %v3541 = vld [vmem:[#allocation6 + $0x8] sm:$0xff]
      %3544 = vrot.lane.b32.xlu0 %v3540, 117
      %v3545 = vpop.permute.xlu0 %3544
      %3546 = vrot.lane.b32.xlu0 %v3541, 117
      %v3547 = vpop.permute.xlu0 %3546
      %3550 = vst.msk [vmem:[#allocation9 + $0x270] sm:$0xff] %vm1857, %v3545
      %3551 = vst.msk [vmem:[#allocation9 + $0x288] sm:$0xff] %vm1857, %v3547
      %v3552 = vld [vmem:[#allocation6] sm:$0xff]
      %v3553 = vld [vmem:[#allocation6 + $0x8] sm:$0xff]
      %3556 = vrot.lane.b32.xlu0 %v3552, 116
      %v3557 = vpop.permute.xlu0 %3556
      %3558 = vrot.lane.b32.xlu0 %v3553, 116
      %v3559 = vpop.permute.xlu0 %3558
      %3562 = vst.msk [vmem:[#allocation9 + $0x2a0] sm:$0xff] %vm1857, %v3557
      %3563 = vst.msk [vmem:[#allocation9 + $0x2b8] sm:$0xff] %vm1857, %v3559
      %v3564 = vld [vmem:[#allocation6] sm:$0xff]
      %v3565 = vld [vmem:[#allocation6 + $0x8] sm:$0xff]
      %3568 = vrot.lane.b32.xlu0 %v3564, 108
      %v3569 = vpop.permute.xlu0 %3568
      %3570 = vrot.lane.b32.xlu0 %v3565, 108
      %v3571 = vpop.permute.xlu0 %3570
      %3574 = vst.msk [vmem:[#allocation9 + $0x2d0] sm:$0xff] %vm1857, %v3569
      %3575 = vst.msk [vmem:[#allocation9 + $0x2e8] sm:$0xff] %vm1857, %v3571
      %v3576 = vld [vmem:[#allocation6] sm:$0xff]
      %v3577 = vld [vmem:[#allocation6 + $0x8] sm:$0xff]
      %3580 = vrot.lane.b32.xlu0 %v3576, 107
      %v3581 = vpop.permute.xlu0 %3580
      %3582 = vrot.lane.b32.xlu0 %v3577, 107
      %v3583 = vpop.permute.xlu0 %3582
      %3586 = vst.msk [vmem:[#allocation9 + $0x300] sm:$0xff] %vm1857, %v3581
      %3587 = vst.msk [vmem:[#allocation9 + $0x318] sm:$0xff] %vm1857, %v3583
      %v3588 = vld [vmem:[#allocation6] sm:$0xff]
      %v3589 = vld [vmem:[#allocation6 + $0x8] sm:$0xff]
      %3592 = vrot.lane.b32.xlu0 %v3588, 106
      %v3593 = vpop.permute.xlu0 %3592
      %3594 = vrot.lane.b32.xlu0 %v3589, 106
      %v3595 = vpop.permute.xlu0 %3594
      %3598 = vst.msk [vmem:[#allocation9 + $0x330] sm:$0xff] %vm1857, %v3593
      %3599 = vst.msk [vmem:[#allocation9 + $0x348] sm:$0xff] %vm1857, %v3595
      %v3600 = vld [vmem:[%s15] sm:$0xff]
      %v3601 = vld [vmem:[%s15 + $0x8] sm:$0xff]
      %v3602 = vld [vmem:[%s15 + $0x10] sm:$0xff]
      %v3603 = vld [vmem:[%s15 + $0x18] sm:$0xff]
      %v3604 = vld [vmem:[%s15 + $0x20] sm:$0xff]
      %v3605 = vld [vmem:[%s15 + $0x28] sm:$0xff]
      %v3606 = vld [vmem:[#allocation9] sm:$0xff]
      %v3607 = vld [vmem:[#allocation9 + $0x18] sm:$0xff]
      %v3608 = vld [vmem:[#allocation9 + $0x30] sm:$0xff]
      %v3609 = vld [vmem:[#allocation9 + $0x48] sm:$0xff]
      %v3610 = vld [vmem:[#allocation9 + $0x60] sm:$0xff]
      %v3611 = vld [vmem:[#allocation9 + $0x78] sm:$0xff]
      %v3612 = vld [vmem:[#allocation9 + $0x90] sm:$0xff]
      %v3613 = vld [vmem:[#allocation9 + $0xa8] sm:$0xff]
      %v3614 = vld [vmem:[#allocation9 + $0xc0] sm:$0xff]
      %v3615 = vld [vmem:[#allocation9 + $0xd8] sm:$0xff]
      %v3616 = vld [vmem:[#allocation9 + $0xf0] sm:$0xff]
      %v3617 = vld [vmem:[#allocation9 + $0x108] sm:$0xff]
      %v3618 = vld [vmem:[#allocation9 + $0x120] sm:$0xff]
      %v3619 = vld [vmem:[#allocation9 + $0x138] sm:$0xff]
      %v3620 = vld [vmem:[#allocation9 + $0x150] sm:$0xff]
      %v3621 = vld [vmem:[#allocation9 + $0x168] sm:$0xff]
      %v3622 = vld [vmem:[#allocation9 + $0x180] sm:$0xff]
      %v3623 = vld [vmem:[#allocation9 + $0x198] sm:$0xff]
      %v3624 = vld [vmem:[#allocation9 + $0x1b0] sm:$0xff]
      %v3625 = vld [vmem:[#allocation9 + $0x1c8] sm:$0xff]
      %v3626 = vld [vmem:[#allocation9 + $0x1e0] sm:$0xff]
      %v3627 = vld [vmem:[#allocation9 + $0x1f8] sm:$0xff]
      %v3628 = vld [vmem:[#allocation9 + $0x210] sm:$0xff]
      %v3629 = vld [vmem:[#allocation9 + $0x228] sm:$0xff]
      %v3630 = vld [vmem:[#allocation9 + $0x240] sm:$0xff]
      %v3631 = vld [vmem:[#allocation9 + $0x258] sm:$0xff]
      %v3632 = vld [vmem:[#allocation9 + $0x270] sm:$0xff]
      %v3633 = vld [vmem:[#allocation9 + $0x288] sm:$0xff]
      %v3634 = vld [vmem:[#allocation9 + $0x2a0] sm:$0xff]
      %v3635 = vld [vmem:[#allocation9 + $0x2b8] sm:$0xff]
      %v3636 = vld [vmem:[#allocation9 + $0x2d0] sm:$0xff]
      %v3637 = vld [vmem:[#allocation9 + $0x2e8] sm:$0xff]
      %v3638 = vld [vmem:[#allocation9 + $0x300] sm:$0xff]
      %v3639 = vld [vmem:[#allocation9 + $0x318] sm:$0xff]
      %v3640 = vld [vmem:[#allocation9 + $0x330] sm:$0xff]
      %v3641 = vld [vmem:[#allocation9 + $0x348] sm:$0xff]
      %v3642 = vld [vmem:[%s16] sm:$0xff]
      %v3643 = vld [vmem:[%s16 + $0x8] sm:$0xff]
      %3645 = vset.pattern.permute.xlu0 0
      %3646 = vperm.xlu0 %3645, %v3642
      %v3647 = vpop.permute.xlu0 %3646
      %3650 = vset.pattern.permute.xlu0 0
      %3651 = vperm.xlu0 %3650, %v3643
      %v3652 = vpop.permute.xlu0 %3651
      %v3655 = vsel %vm1175, %v3602, 0
      %v3658 = vsel %vm1175, %v3605, 0
      %3660 = vmatpush.msra.mxu0 %v3621
      %3661 = vmatpush.msra.mxu0 %v3620
      %3662 = vmatpush.msra.mxu0 %v3619
      %3663 = vmatpush.msra.mxu0 %v3618
      %3664 = vmatpush.msra.mxu0 %v3617
      %3665 = vmatpush.msra.mxu0 %v3616
      %3666 = vmatpush.msra.mxu0 %v3615
      %3667 = vmatpush.msra.mxu0 %v3614
      %3668 = vmatpush.msra.mxu0 %v3613
      %3669 = vmatpush.msra.mxu0 %v3612
      %3670 = vmatpush.msra.mxu0 %v3611
      %3671 = vmatpush.msra.mxu0 %v3610
      %3672 = vmatpush.msra.mxu0 %v3609
      %3673 = vmatpush.msra.mxu0 %v3608
      %3674 = vmatpush.msra.mxu0 %v3607
      %3675 = vmatpush.msra.mxu0 %v3606
      %3676 = vmatmul.f32.gmra.mxu0 %v3600
      %v3677 = vpop.f32.mrf.mxu0
      %v3678 = vadd.f32 %v3647, %v3677
      %3679 = vmatmul.f32.gmra.mxu0 %v3603
      %v3680 = vpop.f32.mrf.mxu0
      %v3681 = vadd.f32 %v3652, %v3680
      %3682 = vdwg.mxu0
      %3683 = vmatpush.msra.mxu0 %v3637
      %3684 = vmatpush.msra.mxu0 %v3636
      %3685 = vmatpush.msra.mxu0 %v3635
      %3686 = vmatpush.msra.mxu0 %v3634
      %3687 = vmatpush.msra.mxu0 %v3633
      %3688 = vmatpush.msra.mxu0 %v3632
      %3689 = vmatpush.msra.mxu0 %v3631
      %3690 = vmatpush.msra.mxu0 %v3630
      %3691 = vmatpush.msra.mxu0 %v3629
      %3692 = vmatpush.msra.mxu0 %v3628
      %3693 = vmatpush.msra.mxu0 %v3627
      %3694 = vmatpush.msra.mxu0 %v3626
      %3695 = vmatpush.msra.mxu0 %v3625
      %3696 = vmatpush.msra.mxu0 %v3624
      %3697 = vmatpush.msra.mxu0 %v3623
      %3698 = vmatpush.msra.mxu0 %v3622
      %3699 = vmatmul.f32.gmra.mxu0 %v3601
      %v3700 = vpop.f32.mrf.mxu0
      %v3701 = vadd.f32 %v3678, %v3700
      %3702 = vmatmul.f32.gmra.mxu0 %v3604
      %v3703 = vpop.f32.mrf.mxu0
      %v3704 = vadd.f32 %v3681, %v3703
      %3705 = vdwg.mxu0
      %3706 = vmatpush.msra.mxu0 0.0
      %3707 = vmatpush.msra.mxu0 0.0
      %3708 = vmatpush.msra.mxu0 0.0
      %3709 = vmatpush.msra.mxu0 0.0
      %3710 = vmatpush.msra.mxu0 0.0
      %3711 = vmatpush.msra.mxu0 0.0
      %3712 = vmatpush.msra.mxu0 0.0
      %3713 = vmatpush.msra.mxu0 0.0
      %3714 = vmatpush.msra.mxu0 0.0
      %3715 = vmatpush.msra.mxu0 0.0
      %3716 = vmatpush.msra.mxu0 0.0
      %3717 = vmatpush.msra.mxu0 0.0
      %3718 = vmatpush.msra.mxu0 %v3641
      %3719 = vmatpush.msra.mxu0 %v3640
      %3720 = vmatpush.msra.mxu0 %v3639
      %3721 = vmatpush.msra.mxu0 %v3638
      %3722 = vmatmul.f32.gmra.mxu0 %v3655
      %v3723 = vpop.f32.mrf.mxu0
      %v3724 = vadd.f32 %v3701, %v3723
      %3725 = vmatmul.f32.gmra.mxu0 %v3658
      %v3726 = vpop.f32.mrf.mxu0
      %v3727 = vadd.f32 %v3704, %v3726
      %3728 = vdwg.mxu0
      %v3729 = vmax.f32 %v3724, 0.0
      %v3730 = vmax.f32 %v3727, 0.0
      %v3731 = vld [vmem:[%s9] sm:$0x1]
      %v3733 = vperm.slane %v3731, 0
      %v3735 = vmul.f32 %v3729, %v3733
      %v3736 = vmul.f32 %v3730, %v3733
      %3739 = vrot.lane.b32.xlu0 %v3735, 11
      %v3740 = vpop.permute.xlu0 %3739
      %3741 = vrot.lane.b32.xlu0 %v3736, 11
      %v3742 = vpop.permute.xlu0 %3741
      %3745 = vst.msk [vmem:[#allocation5] sm:$0xff] %vm1975, %v3740
      %3746 = vst.msk [vmem:[#allocation5 + $0x8] sm:$0xff] %vm1975, %v3742
      %v3747 = vld [vmem:[#allocation5] sm:$0xff]
      %v3748 = vld [vmem:[#allocation5 + $0x8] sm:$0xff]
      %3749 = vst.msk [vmem:[#allocation9] sm:$0xff] %vm1857, %v3747
      %3750 = vst.msk [vmem:[#allocation9 + $0x18] sm:$0xff] %vm1857, %v3748
      %v3751 = vld [vmem:[#allocation5] sm:$0xff]
      %v3752 = vld [vmem:[#allocation5 + $0x8] sm:$0xff]
      %3755 = vrot.lane.b32.xlu0 %v3751, 127
      %v3756 = vpop.permute.xlu0 %3755
      %3757 = vrot.lane.b32.xlu0 %v3752, 127
      %v3758 = vpop.permute.xlu0 %3757
      %3761 = vst.msk [vmem:[#allocation9 + $0x30] sm:$0xff] %vm1857, %v3756
      %3762 = vst.msk [vmem:[#allocation9 + $0x48] sm:$0xff] %vm1857, %v3758
      %v3763 = vld [vmem:[#allocation5] sm:$0xff]
      %v3764 = vld [vmem:[#allocation5 + $0x8] sm:$0xff]
      %3767 = vrot.lane.b32.xlu0 %v3763, 126
      %v3768 = vpop.permute.xlu0 %3767
      %3769 = vrot.lane.b32.xlu0 %v3764, 126
      %v3770 = vpop.permute.xlu0 %3769
      %3773 = vst.msk [vmem:[#allocation9 + $0x60] sm:$0xff] %vm1857, %v3768
      %3774 = vst.msk [vmem:[#allocation9 + $0x78] sm:$0xff] %vm1857, %v3770
      %v3775 = vld [vmem:[#allocation5] sm:$0xff]
      %v3776 = vld [vmem:[#allocation5 + $0x8] sm:$0xff]
      %3779 = vrot.lane.b32.xlu0 %v3775, 118
      %v3780 = vpop.permute.xlu0 %3779
      %3781 = vrot.lane.b32.xlu0 %v3776, 118
      %v3782 = vpop.permute.xlu0 %3781
      %3785 = vst.msk [vmem:[#allocation9 + $0x90] sm:$0xff] %vm1857, %v3780
      %3786 = vst.msk [vmem:[#allocation9 + $0xa8] sm:$0xff] %vm1857, %v3782
      %v3787 = vld [vmem:[#allocation5] sm:$0xff]
      %v3788 = vld [vmem:[#allocation5 + $0x8] sm:$0xff]
      %3791 = vrot.lane.b32.xlu0 %v3787, 117
      %v3792 = vpop.permute.xlu0 %3791
      %3793 = vrot.lane.b32.xlu0 %v3788, 117
      %v3794 = vpop.permute.xlu0 %3793
      %3797 = vst.msk [vmem:[#allocation9 + $0xc0] sm:$0xff] %vm1857, %v3792
      %3798 = vst.msk [vmem:[#allocation9 + $0xd8] sm:$0xff] %vm1857, %v3794
      %v3799 = vld [vmem:[#allocation5] sm:$0xff]
      %v3800 = vld [vmem:[#allocation5 + $0x8] sm:$0xff]
      %3803 = vrot.lane.b32.xlu0 %v3799, 116
      %v3804 = vpop.permute.xlu0 %3803
      %3805 = vrot.lane.b32.xlu0 %v3800, 116
      %v3806 = vpop.permute.xlu0 %3805
      %3809 = vst.msk [vmem:[#allocation9 + $0xf0] sm:$0xff] %vm1857, %v3804
      %3810 = vst.msk [vmem:[#allocation9 + $0x108] sm:$0xff] %vm1857, %v3806
      %v3811 = vld [vmem:[#allocation5] sm:$0xff]
      %v3812 = vld [vmem:[#allocation5 + $0x8] sm:$0xff]
      %3815 = vrot.lane.b32.xlu0 %v3811, 108
      %v3816 = vpop.permute.xlu0 %3815
      %3817 = vrot.lane.b32.xlu0 %v3812, 108
      %v3818 = vpop.permute.xlu0 %3817
      %3821 = vst.msk [vmem:[#allocation9 + $0x120] sm:$0xff] %vm1857, %v3816
      %3822 = vst.msk [vmem:[#allocation9 + $0x138] sm:$0xff] %vm1857, %v3818
      %v3823 = vld [vmem:[#allocation5] sm:$0xff]
      %v3824 = vld [vmem:[#allocation5 + $0x8] sm:$0xff]
      %3827 = vrot.lane.b32.xlu0 %v3823, 107
      %v3828 = vpop.permute.xlu0 %3827
      %3829 = vrot.lane.b32.xlu0 %v3824, 107
      %v3830 = vpop.permute.xlu0 %3829
      %3833 = vst.msk [vmem:[#allocation9 + $0x150] sm:$0xff] %vm1857, %v3828
      %3834 = vst.msk [vmem:[#allocation9 + $0x168] sm:$0xff] %vm1857, %v3830
      %v3835 = vld [vmem:[#allocation5] sm:$0xff]
      %v3836 = vld [vmem:[#allocation5 + $0x8] sm:$0xff]
      %3839 = vrot.lane.b32.xlu0 %v3835, 106
      %v3840 = vpop.permute.xlu0 %3839
      %3841 = vrot.lane.b32.xlu0 %v3836, 106
      %v3842 = vpop.permute.xlu0 %3841
      %3845 = vst.msk [vmem:[#allocation9 + $0x180] sm:$0xff] %vm1857, %v3840
      %3846 = vst.msk [vmem:[#allocation9 + $0x198] sm:$0xff] %vm1857, %v3842
      %v3847 = vld [vmem:[%s17] sm:$0xff]
      %v3848 = vld [vmem:[%s17 + $0x8] sm:$0xff]
      %v3849 = vld [vmem:[#allocation9] sm:$0xff]
      %v3850 = vld [vmem:[#allocation9 + $0x18] sm:$0xff]
      %v3851 = vld [vmem:[#allocation9 + $0x30] sm:$0xff]
      %v3852 = vld [vmem:[#allocation9 + $0x48] sm:$0xff]
      %v3853 = vld [vmem:[#allocation9 + $0x60] sm:$0xff]
      %v3854 = vld [vmem:[#allocation9 + $0x78] sm:$0xff]
      %v3855 = vld [vmem:[#allocation9 + $0x90] sm:$0xff]
      %v3856 = vld [vmem:[#allocation9 + $0xa8] sm:$0xff]
      %v3857 = vld [vmem:[#allocation9 + $0xc0] sm:$0xff]
      %v3858 = vld [vmem:[#allocation9 + $0xd8] sm:$0xff]
      %v3859 = vld [vmem:[#allocation9 + $0xf0] sm:$0xff]
      %v3860 = vld [vmem:[#allocation9 + $0x108] sm:$0xff]
      %v3861 = vld [vmem:[#allocation9 + $0x120] sm:$0xff]
      %v3862 = vld [vmem:[#allocation9 + $0x138] sm:$0xff]
      %v3863 = vld [vmem:[#allocation9 + $0x150] sm:$0xff]
      %v3864 = vld [vmem:[#allocation9 + $0x168] sm:$0xff]
      %v3865 = vld [vmem:[#allocation9 + $0x180] sm:$0xff]
      %v3866 = vld [vmem:[#allocation9 + $0x198] sm:$0xff]
      %v3867 = vld [vmem:[%s18] sm:$0xff]
      %3869 = vset.pattern.permute.xlu0 0
      %3870 = vperm.xlu0 %3869, %v3867
      %v3871 = vpop.permute.xlu0 %3870
      %v3874 = vsel %vm2112, %v3848, 0
      %3876 = vmatpush.msra.mxu0 %v3864
      %3877 = vmatpush.msra.mxu0 %v3863
      %3878 = vmatpush.msra.mxu0 %v3862
      %3879 = vmatpush.msra.mxu0 %v3861
      %3880 = vmatpush.msra.mxu0 %v3860
      %3881 = vmatpush.msra.mxu0 %v3859
      %3882 = vmatpush.msra.mxu0 %v3858
      %3883 = vmatpush.msra.mxu0 %v3857
      %3884 = vmatpush.msra.mxu0 %v3856
      %3885 = vmatpush.msra.mxu0 %v3855
      %3886 = vmatpush.msra.mxu0 %v3854
      %3887 = vmatpush.msra.mxu0 %v3853
      %3888 = vmatpush.msra.mxu0 %v3852
      %3889 = vmatpush.msra.mxu0 %v3851
      %3890 = vmatpush.msra.mxu0 %v3850
      %3891 = vmatpush.msra.mxu0 %v3849
      %3892 = vmatmul.f32.gmra.mxu0 %v3847
      %v3893 = vpop.f32.mrf.mxu0
      %v3894 = vadd.f32 %v3871, %v3893
      %3895 = vdwg.mxu0
      %3896 = vmatpush.msra.mxu0 0.0
      %3897 = vmatpush.msra.mxu0 0.0
      %3898 = vmatpush.msra.mxu0 0.0
      %3899 = vmatpush.msra.mxu0 0.0
      %3900 = vmatpush.msra.mxu0 0.0
      %3901 = vmatpush.msra.mxu0 0.0
      %3902 = vmatpush.msra.mxu0 0.0
      %3903 = vmatpush.msra.mxu0 0.0
      %3904 = vmatpush.msra.mxu0 0.0
      %3905 = vmatpush.msra.mxu0 0.0
      %3906 = vmatpush.msra.mxu0 0.0
      %3907 = vmatpush.msra.mxu0 0.0
      %3908 = vmatpush.msra.mxu0 0.0
      %3909 = vmatpush.msra.mxu0 0.0
      %3910 = vmatpush.msra.mxu0 %v3866
      %3911 = vmatpush.msra.mxu0 %v3865
      %3912 = vmatmul.f32.gmra.mxu0 %v3874
      %v3913 = vpop.f32.mrf.mxu0
      %v3914 = vadd.f32 %v3894, %v3913
      %3915 = vdwg.mxu0
      %v3916 = vmax.f32 %v3914, 0.0
      %v3917 = vld [vmem:[%s9] sm:$0x1]
      %v3919 = vperm.slane %v3917, 0
      %v3921 = vmul.f32 %v3916, %v3919
      %3923 = vrot.lane.b32.xlu0 %v3921, 11
      %v3924 = vpop.permute.xlu0 %3923
      %3926 = vst.msk [vmem:[#allocation4] sm:$0xff] %vm1975, %v3924
      %v3927 = vld [vmem:[%s19] sm:$0xff]
      %v3928 = vld [vmem:[%s19 + $0x8] sm:$0xff]
      %v3929 = vld [vmem:[#allocation4] sm:$0xff]
      %3930 = vst.msk [vmem:[#allocation9] sm:$0xff] %vm1857, %v3929
      %v3931 = vld [vmem:[#allocation4] sm:$0xff]
      %3933 = vrot.lane.b32.xlu0 %v3931, 127
      %v3934 = vpop.permute.xlu0 %3933
      %3936 = vst.msk [vmem:[#allocation9 + $0x18] sm:$0xff] %vm1857, %v3934
      %v3937 = vld [vmem:[#allocation4] sm:$0xff]
      %3939 = vrot.lane.b32.xlu0 %v3937, 118
      %v3940 = vpop.permute.xlu0 %3939
      %3942 = vst.msk [vmem:[#allocation9 + $0x30] sm:$0xff] %vm1857, %v3940
      %v3943 = vld [vmem:[#allocation4] sm:$0xff]
      %3945 = vrot.lane.b32.xlu0 %v3943, 117
      %v3946 = vpop.permute.xlu0 %3945
      %3948 = vst.msk [vmem:[#allocation9 + $0x48] sm:$0xff] %vm1857, %v3946
      %v3949 = vld [vmem:[%s20] sm:$0xff]
      %v3950 = vld [vmem:[#allocation9] sm:$0xff]
      %v3951 = vld [vmem:[#allocation9 + $0x18] sm:$0xff]
      %v3952 = vld [vmem:[#allocation9 + $0x30] sm:$0xff]
      %v3953 = vld [vmem:[#allocation9 + $0x48] sm:$0xff]
      %v3955 = vsel %vm1175, %v3949, 0
      %3957 = vmatpush.msra.mxu0 0.0
      %3958 = vmatpush.msra.mxu0 0.0
      %3959 = vmatpush.msra.mxu0 0.0
      %3960 = vmatpush.msra.mxu0 0.0
      %3961 = vmatpush.msra.mxu0 0.0
      %3962 = vmatpush.msra.mxu0 0.0
      %3963 = vmatpush.msra.mxu0 0.0
      %3964 = vmatpush.msra.mxu0 0.0
      %3965 = vmatpush.msra.mxu0 0.0
      %3966 = vmatpush.msra.mxu0 0.0
      %3967 = vmatpush.msra.mxu0 0.0
      %3968 = vmatpush.msra.mxu0 0.0
      %3969 = vmatpush.msra.mxu0 %v3953
      %3970 = vmatpush.msra.mxu0 %v3952
      %3971 = vmatpush.msra.mxu0 %v3951
      %3972 = vmatpush.msra.mxu0 %v3950
      %3973 = vmatmul.f32.gmra.mxu0 %v3955
      %v3974 = vpop.f32.mrf.mxu0
      %v3975 = vadd.f32 0.0, %v3974
      %3976 = vdwg.mxu0
      %v3977 = vld [vmem:[#allocation4] sm:$0xff]
      %3979 = vrot.lane.b32.xlu0 %v3977, 127
      %v3980 = vpop.permute.xlu0 %3979
      %3982 = vst.msk [vmem:[#allocation9] sm:$0xff] %vm1857, %v3980
      %v3983 = vld [vmem:[#allocation4] sm:$0xff]
      %3985 = vrot.lane.b32.xlu0 %v3983, 126
      %v3986 = vpop.permute.xlu0 %3985
      %3988 = vst.msk [vmem:[#allocation9 + $0x18] sm:$0xff] %vm1857, %v3986
      %v3989 = vld [vmem:[#allocation4] sm:$0xff]
      %3991 = vrot.lane.b32.xlu0 %v3989, 117
      %v3992 = vpop.permute.xlu0 %3991
      %3994 = vst.msk [vmem:[#allocation9 + $0x30] sm:$0xff] %vm1857, %v3992
      %v3995 = vld [vmem:[#allocation4] sm:$0xff]
      %3997 = vrot.lane.b32.xlu0 %v3995, 116
      %v3998 = vpop.permute.xlu0 %3997
      %4000 = vst.msk [vmem:[#allocation9 + $0x48] sm:$0xff] %vm1857, %v3998
      %s4001 = scalar_lea.vmem %s20, 8
      %v4002 = vld [vmem:[%s4001] sm:$0xff]
      %v4003 = vld [vmem:[#allocation9] sm:$0xff]
      %v4004 = vld [vmem:[#allocation9 + $0x18] sm:$0xff]
      %v4005 = vld [vmem:[#allocation9 + $0x30] sm:$0xff]
      %v4006 = vld [vmem:[#allocation9 + $0x48] sm:$0xff]
      %v4008 = vsel %vm1175, %v4002, 0
      %4010 = vmatpush.msra.mxu0 0.0
      %4011 = vmatpush.msra.mxu0 0.0
      %4012 = vmatpush.msra.mxu0 0.0
      %4013 = vmatpush.msra.mxu0 0.0
      %4014 = vmatpush.msra.mxu0 0.0
      %4015 = vmatpush.msra.mxu0 0.0
      %4016 = vmatpush.msra.mxu0 0.0
      %4017 = vmatpush.msra.mxu0 0.0
      %4018 = vmatpush.msra.mxu0 0.0
      %4019 = vmatpush.msra.mxu0 0.0
      %4020 = vmatpush.msra.mxu0 0.0
      %4021 = vmatpush.msra.mxu0 0.0
      %4022 = vmatpush.msra.mxu0 %v4006
      %4023 = vmatpush.msra.mxu0 %v4005
      %4024 = vmatpush.msra.mxu0 %v4004
      %4025 = vmatpush.msra.mxu0 %v4003
      %4026 = vmatmul.f32.gmra.mxu0 %v4008
      %v4027 = vpop.f32.mrf.mxu0
      %v4028 = vadd.f32 0.0, %v4027
      %4029 = vdwg.mxu0
      %vm4030 = vcmask 64512
      %v4032 = vsel %vm4030, %v4028, 0
      %4034 = vmatpush.msra.mxu0 0.0
      %4035 = vmatpush.msra.mxu0 0.0
      %4036 = vmatpush.msra.mxu0 0.0
      %4037 = vmatpush.msra.mxu0 0.0
      %4038 = vmatpush.msra.mxu0 0.0
      %4039 = vmatpush.msra.mxu0 0.0
      %4040 = vmatpush.msra.mxu0 0.0
      %4041 = vmatpush.msra.mxu0 0.0
      %4042 = vmatpush.msra.mxu0 0.0
      %4043 = vmatpush.msra.mxu0 0.0
      %4044 = vmatpush.msra.mxu0 0.0
      %4045 = vmatpush.msra.mxu0 0.0
      %4046 = vmatpush.msra.mxu0 0.0
      %4047 = vmatpush.msra.mxu0 0.0
      %4048 = vmatpush.msra.mxu0 0.0
      %4049 = vmatpush.msra.mxu0 %v3928
      %4050 = vmatmul.f32.gmra.mxu0 %v4032
      %v4051 = vpop.f32.mrf.mxu0
      %v4052 = vadd.f32 0.0, %v4051
      %4053 = vdwg.mxu0
      %v4055 = vsel %vm4030, %v3975, 0
      %4057 = vmatpush.msra.mxu0 0.0
      %4058 = vmatpush.msra.mxu0 0.0
      %4059 = vmatpush.msra.mxu0 0.0
      %4060 = vmatpush.msra.mxu0 0.0
      %4061 = vmatpush.msra.mxu0 0.0
      %4062 = vmatpush.msra.mxu0 0.0
      %4063 = vmatpush.msra.mxu0 0.0
      %4064 = vmatpush.msra.mxu0 0.0
      %4065 = vmatpush.msra.mxu0 0.0
      %4066 = vmatpush.msra.mxu0 0.0
      %4067 = vmatpush.msra.mxu0 0.0
      %4068 = vmatpush.msra.mxu0 0.0
      %4069 = vmatpush.msra.mxu0 0.0
      %4070 = vmatpush.msra.mxu0 0.0
      %4071 = vmatpush.msra.mxu0 0.0
      %4072 = vmatpush.msra.mxu0 %v3927
      %4073 = vmatmul.f32.gmra.mxu0 %v4055
      %v4074 = vpop.f32.mrf.mxu0
      %v4075 = vadd.f32 %v4052, %v4074
      %4076 = vdwg.mxu0
      %4078 = vrot.lane.b32.xlu0 %v4075, 18
      %v4079 = vpop.permute.xlu0 %4078
      %vm4081 = vcmask 294032
      %4082 = vst.msk [vmem:[#allocation2] sm:$0xff] %vm4081, %v4079
      %4083 = vrot.lane.b32.xlu0 %v4028, 118
      %v4084 = vpop.permute.xlu0 %4083
      %v4085 = vsel %vm4030, %v4084, 0
      %4087 = vmatpush.msra.mxu0 0.0
      %4088 = vmatpush.msra.mxu0 0.0
      %4089 = vmatpush.msra.mxu0 0.0
      %4090 = vmatpush.msra.mxu0 0.0
      %4091 = vmatpush.msra.mxu0 0.0
      %4092 = vmatpush.msra.mxu0 0.0
      %4093 = vmatpush.msra.mxu0 0.0
      %4094 = vmatpush.msra.mxu0 0.0
      %4095 = vmatpush.msra.mxu0 0.0
      %4096 = vmatpush.msra.mxu0 0.0
      %4097 = vmatpush.msra.mxu0 0.0
      %4098 = vmatpush.msra.mxu0 0.0
      %4099 = vmatpush.msra.mxu0 0.0
      %4100 = vmatpush.msra.mxu0 0.0
      %4101 = vmatpush.msra.mxu0 0.0
      %4102 = vmatpush.msra.mxu0 %v3928
      %4103 = vmatmul.f32.gmra.mxu0 %v4085
      %v4104 = vpop.f32.mrf.mxu0
      %v4105 = vadd.f32 0.0, %v4104
      %4106 = vdwg.mxu0
      %4107 = vrot.lane.b32.xlu0 %v3975, 118
      %v4108 = vpop.permute.xlu0 %4107
      %v4109 = vsel %vm4030, %v4108, 0
      %4111 = vmatpush.msra.mxu0 0.0
      %4112 = vmatpush.msra.mxu0 0.0
      %4113 = vmatpush.msra.mxu0 0.0
      %4114 = vmatpush.msra.mxu0 0.0
      %4115 = vmatpush.msra.mxu0 0.0
      %4116 = vmatpush.msra.mxu0 0.0
      %4117 = vmatpush.msra.mxu0 0.0
      %4118 = vmatpush.msra.mxu0 0.0
      %4119 = vmatpush.msra.mxu0 0.0
      %4120 = vmatpush.msra.mxu0 0.0
      %4121 = vmatpush.msra.mxu0 0.0
      %4122 = vmatpush.msra.mxu0 0.0
      %4123 = vmatpush.msra.mxu0 0.0
      %4124 = vmatpush.msra.mxu0 0.0
      %4125 = vmatpush.msra.mxu0 0.0
      %4126 = vmatpush.msra.mxu0 %v3927
      %4127 = vmatmul.f32.gmra.mxu0 %v4109
      %v4128 = vpop.f32.mrf.mxu0
      %v4129 = vadd.f32 %v4105, %v4128
      %4130 = vdwg.mxu0
      %4132 = vrot.lane.b32.xlu0 %v4129, 54
      %v4133 = vpop.permute.xlu0 %4132
      %vm4135 = vcmask 589232
      %4136 = vst.msk [vmem:[#allocation2] sm:$0xff] %vm4135, %v4133
      %4137 = vrot.lane.b32.xlu0 %v4028, 108
      %v4138 = vpop.permute.xlu0 %4137
      %v4139 = vsel %vm4030, %v4138, 0
      %4141 = vmatpush.msra.mxu0 0.0
      %4142 = vmatpush.msra.mxu0 0.0
      %4143 = vmatpush.msra.mxu0 0.0
      %4144 = vmatpush.msra.mxu0 0.0
      %4145 = vmatpush.msra.mxu0 0.0
      %4146 = vmatpush.msra.mxu0 0.0
      %4147 = vmatpush.msra.mxu0 0.0
      %4148 = vmatpush.msra.mxu0 0.0
      %4149 = vmatpush.msra.mxu0 0.0
      %4150 = vmatpush.msra.mxu0 0.0
      %4151 = vmatpush.msra.mxu0 0.0
      %4152 = vmatpush.msra.mxu0 0.0
      %4153 = vmatpush.msra.mxu0 0.0
      %4154 = vmatpush.msra.mxu0 0.0
      %4155 = vmatpush.msra.mxu0 0.0
      %4156 = vmatpush.msra.mxu0 %v3928
      %4157 = vmatmul.f32.gmra.mxu0 %v4139
      %v4158 = vpop.f32.mrf.mxu0
      %v4159 = vadd.f32 0.0, %v4158
      %4160 = vdwg.mxu0
      %4161 = vrot.lane.b32.xlu0 %v3975, 108
      %v4162 = vpop.permute.xlu0 %4161
      %v4163 = vsel %vm4030, %v4162, 0
      %4165 = vmatpush.msra.mxu0 0.0
      %4166 = vmatpush.msra.mxu0 0.0
      %4167 = vmatpush.msra.mxu0 0.0
      %4168 = vmatpush.msra.mxu0 0.0
      %4169 = vmatpush.msra.mxu0 0.0
      %4170 = vmatpush.msra.mxu0 0.0
      %4171 = vmatpush.msra.mxu0 0.0
      %4172 = vmatpush.msra.mxu0 0.0
      %4173 = vmatpush.msra.mxu0 0.0
      %4174 = vmatpush.msra.mxu0 0.0
      %4175 = vmatpush.msra.mxu0 0.0
      %4176 = vmatpush.msra.mxu0 0.0
      %4177 = vmatpush.msra.mxu0 0.0
      %4178 = vmatpush.msra.mxu0 0.0
      %4179 = vmatpush.msra.mxu0 0.0
      %4180 = vmatpush.msra.mxu0 %v3927
      %4181 = vmatmul.f32.gmra.mxu0 %v4163
      %v4182 = vpop.f32.mrf.mxu0
      %v4183 = vadd.f32 %v4159, %v4182
      %4184 = vdwg.mxu0
      %4186 = vrot.lane.b32.xlu0 %v4183, 90
      %v4187 = vpop.permute.xlu0 %4186
      %vm4189 = vcmask 884432
      %4190 = vst.msk [vmem:[#allocation2] sm:$0xff] %vm4189, %v4187
      %4191 = vrot.lane.b32.xlu0 %v4028, 98
      %v4192 = vpop.permute.xlu0 %4191
      %v4193 = vsel %vm4030, %v4192, 0
      %4195 = vmatpush.msra.mxu0 0.0
      %4196 = vmatpush.msra.mxu0 0.0
      %4197 = vmatpush.msra.mxu0 0.0
      %4198 = vmatpush.msra.mxu0 0.0
      %4199 = vmatpush.msra.mxu0 0.0
      %4200 = vmatpush.msra.mxu0 0.0
      %4201 = vmatpush.msra.mxu0 0.0
      %4202 = vmatpush.msra.mxu0 0.0
      %4203 = vmatpush.msra.mxu0 0.0
      %4204 = vmatpush.msra.mxu0 0.0
      %4205 = vmatpush.msra.mxu0 0.0
      %4206 = vmatpush.msra.mxu0 0.0
      %4207 = vmatpush.msra.mxu0 0.0
      %4208 = vmatpush.msra.mxu0 0.0
      %4209 = vmatpush.msra.mxu0 0.0
      %4210 = vmatpush.msra.mxu0 %v3928
      %4211 = vmatmul.f32.gmra.mxu0 %v4193
      %v4212 = vpop.f32.mrf.mxu0
      %v4213 = vadd.f32 0.0, %v4212
      %4214 = vdwg.mxu0
      %4215 = vrot.lane.b32.xlu0 %v3975, 98
      %v4216 = vpop.permute.xlu0 %4215
      %v4217 = vsel %vm4030, %v4216, 0
      %4219 = vmatpush.msra.mxu0 0.0
      %4220 = vmatpush.msra.mxu0 0.0
      %4221 = vmatpush.msra.mxu0 0.0
      %4222 = vmatpush.msra.mxu0 0.0
      %4223 = vmatpush.msra.mxu0 0.0
      %4224 = vmatpush.msra.mxu0 0.0
      %4225 = vmatpush.msra.mxu0 0.0
      %4226 = vmatpush.msra.mxu0 0.0
      %4227 = vmatpush.msra.mxu0 0.0
      %4228 = vmatpush.msra.mxu0 0.0
      %4229 = vmatpush.msra.mxu0 0.0
      %4230 = vmatpush.msra.mxu0 0.0
      %4231 = vmatpush.msra.mxu0 0.0
      %4232 = vmatpush.msra.mxu0 0.0
      %4233 = vmatpush.msra.mxu0 0.0
      %4234 = vmatpush.msra.mxu0 %v3927
      %4235 = vmatmul.f32.gmra.mxu0 %v4217
      %v4236 = vpop.f32.mrf.mxu0
      %v4237 = vadd.f32 %v4213, %v4236
      %4238 = vdwg.mxu0
      %4240 = vrot.lane.b32.xlu0 %v4237, 126
      %v4241 = vpop.permute.xlu0 %4240
      %vm4243 = vcmask 1048560
      %4244 = vst.msk [vmem:[#allocation2] sm:$0xff] %vm4243, %v4241
      %4245 = vst.msk [vmem:[#allocation2 + $0x8] sm:$0xff] %vm2112, %v4241
      %4246 = vrot.lane.b32.xlu0 %v4028, 88
      %v4247 = vpop.permute.xlu0 %4246
      %v4248 = vsel %vm4030, %v4247, 0
      %4250 = vmatpush.msra.mxu0 0.0
      %4251 = vmatpush.msra.mxu0 0.0
      %4252 = vmatpush.msra.mxu0 0.0
      %4253 = vmatpush.msra.mxu0 0.0
      %4254 = vmatpush.msra.mxu0 0.0
      %4255 = vmatpush.msra.mxu0 0.0
      %4256 = vmatpush.msra.mxu0 0.0
      %4257 = vmatpush.msra.mxu0 0.0
      %4258 = vmatpush.msra.mxu0 0.0
      %4259 = vmatpush.msra.mxu0 0.0
      %4260 = vmatpush.msra.mxu0 0.0
      %4261 = vmatpush.msra.mxu0 0.0
      %4262 = vmatpush.msra.mxu0 0.0
      %4263 = vmatpush.msra.mxu0 0.0
      %4264 = vmatpush.msra.mxu0 0.0
      %4265 = vmatpush.msra.mxu0 %v3928
      %4266 = vmatmul.f32.gmra.mxu0 %v4248
      %v4267 = vpop.f32.mrf.mxu0
      %v4268 = vadd.f32 0.0, %v4267
      %4269 = vdwg.mxu0
      %4270 = vrot.lane.b32.xlu0 %v3975, 88
      %v4271 = vpop.permute.xlu0 %4270
      %v4272 = vsel %vm4030, %v4271, 0
      %4274 = vmatpush.msra.mxu0 0.0
      %4275 = vmatpush.msra.mxu0 0.0
      %4276 = vmatpush.msra.mxu0 0.0
      %4277 = vmatpush.msra.mxu0 0.0
      %4278 = vmatpush.msra.mxu0 0.0
      %4279 = vmatpush.msra.mxu0 0.0
      %4280 = vmatpush.msra.mxu0 0.0
      %4281 = vmatpush.msra.mxu0 0.0
      %4282 = vmatpush.msra.mxu0 0.0
      %4283 = vmatpush.msra.mxu0 0.0
      %4284 = vmatpush.msra.mxu0 0.0
      %4285 = vmatpush.msra.mxu0 0.0
      %4286 = vmatpush.msra.mxu0 0.0
      %4287 = vmatpush.msra.mxu0 0.0
      %4288 = vmatpush.msra.mxu0 0.0
      %4289 = vmatpush.msra.mxu0 %v3927
      %4290 = vmatmul.f32.gmra.mxu0 %v4272
      %v4291 = vpop.f32.mrf.mxu0
      %v4292 = vadd.f32 %v4268, %v4291
      %4293 = vdwg.mxu0
      %4295 = vrot.lane.b32.xlu0 %v4292, 34
      %v4296 = vpop.permute.xlu0 %4295
      %vm4298 = vcmask 425232
      %4299 = vst.msk [vmem:[#allocation2 + $0x8] sm:$0xff] %vm4298, %v4296
      %4300 = vrot.lane.b32.xlu0 %v4028, 78
      %v4301 = vpop.permute.xlu0 %4300
      %v4302 = vsel %vm4030, %v4301, 0
      %4304 = vmatpush.msra.mxu0 0.0
      %4305 = vmatpush.msra.mxu0 0.0
      %4306 = vmatpush.msra.mxu0 0.0
      %4307 = vmatpush.msra.mxu0 0.0
      %4308 = vmatpush.msra.mxu0 0.0
      %4309 = vmatpush.msra.mxu0 0.0
      %4310 = vmatpush.msra.mxu0 0.0
      %4311 = vmatpush.msra.mxu0 0.0
      %4312 = vmatpush.msra.mxu0 0.0
      %4313 = vmatpush.msra.mxu0 0.0
      %4314 = vmatpush.msra.mxu0 0.0
      %4315 = vmatpush.msra.mxu0 0.0
      %4316 = vmatpush.msra.mxu0 0.0
      %4317 = vmatpush.msra.mxu0 0.0
      %4318 = vmatpush.msra.mxu0 0.0
      %4319 = vmatpush.msra.mxu0 %v3928
      %4320 = vmatmul.f32.gmra.mxu0 %v4302
      %v4321 = vpop.f32.mrf.mxu0
      %v4322 = vadd.f32 0.0, %v4321
      %4323 = vdwg.mxu0
      %4324 = vrot.lane.b32.xlu0 %v3975, 78
      %v4325 = vpop.permute.xlu0 %4324
      %v4326 = vsel %vm4030, %v4325, 0
      %4328 = vmatpush.msra.mxu0 0.0
      %4329 = vmatpush.msra.mxu0 0.0
      %4330 = vmatpush.msra.mxu0 0.0
      %4331 = vmatpush.msra.mxu0 0.0
      %4332 = vmatpush.msra.mxu0 0.0
      %4333 = vmatpush.msra.mxu0 0.0
      %4334 = vmatpush.msra.mxu0 0.0
      %4335 = vmatpush.msra.mxu0 0.0
      %4336 = vmatpush.msra.mxu0 0.0
      %4337 = vmatpush.msra.mxu0 0.0
      %4338 = vmatpush.msra.mxu0 0.0
      %4339 = vmatpush.msra.mxu0 0.0
      %4340 = vmatpush.msra.mxu0 0.0
      %4341 = vmatpush.msra.mxu0 0.0
      %4342 = vmatpush.msra.mxu0 0.0
      %4343 = vmatpush.msra.mxu0 %v3927
      %4344 = vmatmul.f32.gmra.mxu0 %v4326
      %v4345 = vpop.f32.mrf.mxu0
      %v4346 = vadd.f32 %v4322, %v4345
      %4347 = vdwg.mxu0
      %4349 = vrot.lane.b32.xlu0 %v4346, 70
      %v4350 = vpop.permute.xlu0 %4349
      %vm4352 = vcmask 720432
      %4353 = vst.msk [vmem:[#allocation2 + $0x8] sm:$0xff] %vm4352, %v4350
      %4354 = vrot.lane.b32.xlu0 %v4028, 68
      %v4355 = vpop.permute.xlu0 %4354
      %v4356 = vsel %vm4030, %v4355, 0
      %4358 = vmatpush.msra.mxu0 0.0
      %4359 = vmatpush.msra.mxu0 0.0
      %4360 = vmatpush.msra.mxu0 0.0
      %4361 = vmatpush.msra.mxu0 0.0
      %4362 = vmatpush.msra.mxu0 0.0
      %4363 = vmatpush.msra.mxu0 0.0
      %4364 = vmatpush.msra.mxu0 0.0
      %4365 = vmatpush.msra.mxu0 0.0
      %4366 = vmatpush.msra.mxu0 0.0
      %4367 = vmatpush.msra.mxu0 0.0
      %4368 = vmatpush.msra.mxu0 0.0
      %4369 = vmatpush.msra.mxu0 0.0
      %4370 = vmatpush.msra.mxu0 0.0
      %4371 = vmatpush.msra.mxu0 0.0
      %4372 = vmatpush.msra.mxu0 0.0
      %4373 = vmatpush.msra.mxu0 %v3928
      %4374 = vmatmul.f32.gmra.mxu0 %v4356
      %v4375 = vpop.f32.mrf.mxu0
      %v4376 = vadd.f32 0.0, %v4375
      %4377 = vdwg.mxu0
      %4378 = vrot.lane.b32.xlu0 %v3975, 68
      %v4379 = vpop.permute.xlu0 %4378
      %v4380 = vsel %vm4030, %v4379, 0
      %4382 = vmatpush.msra.mxu0 0.0
      %4383 = vmatpush.msra.mxu0 0.0
      %4384 = vmatpush.msra.mxu0 0.0
      %4385 = vmatpush.msra.mxu0 0.0
      %4386 = vmatpush.msra.mxu0 0.0
      %4387 = vmatpush.msra.mxu0 0.0
      %4388 = vmatpush.msra.mxu0 0.0
      %4389 = vmatpush.msra.mxu0 0.0
      %4390 = vmatpush.msra.mxu0 0.0
      %4391 = vmatpush.msra.mxu0 0.0
      %4392 = vmatpush.msra.mxu0 0.0
      %4393 = vmatpush.msra.mxu0 0.0
      %4394 = vmatpush.msra.mxu0 0.0
      %4395 = vmatpush.msra.mxu0 0.0
      %4396 = vmatpush.msra.mxu0 0.0
      %4397 = vmatpush.msra.mxu0 %v3927
      %4398 = vmatmul.f32.gmra.mxu0 %v4380
      %v4399 = vpop.f32.mrf.mxu0
      %v4400 = vadd.f32 %v4376, %v4399
      %4401 = vdwg.mxu0
      %4403 = vrot.lane.b32.xlu0 %v4400, 106
      %v4404 = vpop.permute.xlu0 %4403
      %vm4406 = vcmask 1015632
      %4407 = vst.msk [vmem:[#allocation2 + $0x8] sm:$0xff] %vm4406, %v4404
      %4408 = vrot.lane.b32.xlu0 %v4028, 58
      %v4409 = vpop.permute.xlu0 %4408
      %v4410 = vsel %vm4030, %v4409, 0
      %4412 = vmatpush.msra.mxu0 0.0
      %4413 = vmatpush.msra.mxu0 0.0
      %4414 = vmatpush.msra.mxu0 0.0
      %4415 = vmatpush.msra.mxu0 0.0
      %4416 = vmatpush.msra.mxu0 0.0
      %4417 = vmatpush.msra.mxu0 0.0
      %4418 = vmatpush.msra.mxu0 0.0
      %4419 = vmatpush.msra.mxu0 0.0
      %4420 = vmatpush.msra.mxu0 0.0
      %4421 = vmatpush.msra.mxu0 0.0
      %4422 = vmatpush.msra.mxu0 0.0
      %4423 = vmatpush.msra.mxu0 0.0
      %4424 = vmatpush.msra.mxu0 0.0
      %4425 = vmatpush.msra.mxu0 0.0
      %4426 = vmatpush.msra.mxu0 0.0
      %4427 = vmatpush.msra.mxu0 %v3928
      %4428 = vmatmul.f32.gmra.mxu0 %v4410
      %v4429 = vpop.f32.mrf.mxu0
      %v4430 = vadd.f32 0.0, %v4429
      %4431 = vdwg.mxu0
      %4432 = vrot.lane.b32.xlu0 %v3975, 58
      %v4433 = vpop.permute.xlu0 %4432
      %v4434 = vsel %vm4030, %v4433, 0
      %4436 = vmatpush.msra.mxu0 0.0
      %4437 = vmatpush.msra.mxu0 0.0
      %4438 = vmatpush.msra.mxu0 0.0
      %4439 = vmatpush.msra.mxu0 0.0
      %4440 = vmatpush.msra.mxu0 0.0
      %4441 = vmatpush.msra.mxu0 0.0
      %4442 = vmatpush.msra.mxu0 0.0
      %4443 = vmatpush.msra.mxu0 0.0
      %4444 = vmatpush.msra.mxu0 0.0
      %4445 = vmatpush.msra.mxu0 0.0
      %4446 = vmatpush.msra.mxu0 0.0
      %4447 = vmatpush.msra.mxu0 0.0
      %4448 = vmatpush.msra.mxu0 0.0
      %4449 = vmatpush.msra.mxu0 0.0
      %4450 = vmatpush.msra.mxu0 0.0
      %4451 = vmatpush.msra.mxu0 %v3927
      %4452 = vmatmul.f32.gmra.mxu0 %v4434
      %v4453 = vpop.f32.mrf.mxu0
      %v4454 = vadd.f32 %v4430, %v4453
      %4455 = vdwg.mxu0
      %4457 = vrot.lane.b32.xlu0 %v4454, 14
      %v4458 = vpop.permute.xlu0 %4457
      %vm4460 = vcmask 261232
      %4461 = vst.msk [vmem:[#allocation2 + $0x10] sm:$0xff] %vm4460, %v4458
      %v4462 = vld [vmem:[#allocation4] sm:$0xff]
      %4464 = vrot.lane.b32.xlu0 %v4462, 118
      %v4465 = vpop.permute.xlu0 %4464
      %4467 = vst.msk [vmem:[#allocation9] sm:$0xff] %vm1857, %v4465
      %v4468 = vld [vmem:[#allocation4] sm:$0xff]
      %4470 = vrot.lane.b32.xlu0 %v4468, 117
      %v4471 = vpop.permute.xlu0 %4470
      %4473 = vst.msk [vmem:[#allocation9 + $0x18] sm:$0xff] %vm1857, %v4471
      %v4474 = vld [vmem:[#allocation4] sm:$0xff]
      %4476 = vrot.lane.b32.xlu0 %v4474, 108
      %v4477 = vpop.permute.xlu0 %4476
      %4479 = vst.msk [vmem:[#allocation9 + $0x30] sm:$0xff] %vm1857, %v4477
      %v4480 = vld [vmem:[#allocation4] sm:$0xff]
      %4482 = vrot.lane.b32.xlu0 %v4480, 107
      %v4483 = vpop.permute.xlu0 %4482
      %4485 = vst.msk [vmem:[#allocation9 + $0x48] sm:$0xff] %vm1857, %v4483
      %s4486 = scalar_lea.vmem %s20, 16
      %v4487 = vld [vmem:[%s4486] sm:$0xff]
      %v4488 = vld [vmem:[#allocation9] sm:$0xff]
      %v4489 = vld [vmem:[#allocation9 + $0x18] sm:$0xff]
      %v4490 = vld [vmem:[#allocation9 + $0x30] sm:$0xff]
      %v4491 = vld [vmem:[#allocation9 + $0x48] sm:$0xff]
      %v4493 = vsel %vm1175, %v4487, 0
      %4495 = vmatpush.msra.mxu0 0.0
      %4496 = vmatpush.msra.mxu0 0.0
      %4497 = vmatpush.msra.mxu0 0.0
      %4498 = vmatpush.msra.mxu0 0.0
      %4499 = vmatpush.msra.mxu0 0.0
      %4500 = vmatpush.msra.mxu0 0.0
      %4501 = vmatpush.msra.mxu0 0.0
      %4502 = vmatpush.msra.mxu0 0.0
      %4503 = vmatpush.msra.mxu0 0.0
      %4504 = vmatpush.msra.mxu0 0.0
      %4505 = vmatpush.msra.mxu0 0.0
      %4506 = vmatpush.msra.mxu0 0.0
      %4507 = vmatpush.msra.mxu0 %v4491
      %4508 = vmatpush.msra.mxu0 %v4490
      %4509 = vmatpush.msra.mxu0 %v4489
      %4510 = vmatpush.msra.mxu0 %v4488
      %4511 = vmatmul.f32.gmra.mxu0 %v4493
      %v4512 = vpop.f32.mrf.mxu0
      %v4513 = vadd.f32 0.0, %v4512
      %4514 = vdwg.mxu0
      %v4515 = vld [vmem:[#allocation4] sm:$0xff]
      %4517 = vrot.lane.b32.xlu0 %v4515, 117
      %v4518 = vpop.permute.xlu0 %4517
      %4520 = vst.msk [vmem:[#allocation9] sm:$0xff] %vm1857, %v4518
      %v4521 = vld [vmem:[#allocation4] sm:$0xff]
      %4523 = vrot.lane.b32.xlu0 %v4521, 116
      %v4524 = vpop.permute.xlu0 %4523
      %4526 = vst.msk [vmem:[#allocation9 + $0x18] sm:$0xff] %vm1857, %v4524
      %v4527 = vld [vmem:[#allocation4] sm:$0xff]
      %4529 = vrot.lane.b32.xlu0 %v4527, 107
      %v4530 = vpop.permute.xlu0 %4529
      %4532 = vst.msk [vmem:[#allocation9 + $0x30] sm:$0xff] %vm1857, %v4530
      %v4533 = vld [vmem:[#allocation4] sm:$0xff]
      %4535 = vrot.lane.b32.xlu0 %v4533, 106
      %v4536 = vpop.permute.xlu0 %4535
      %4538 = vst.msk [vmem:[#allocation9 + $0x48] sm:$0xff] %vm1857, %v4536
      %s4539 = scalar_lea.vmem %s20, 24
      %v4540 = vld [vmem:[%s4539] sm:$0xff]
      %v4541 = vld [vmem:[#allocation9] sm:$0xff]
      %v4542 = vld [vmem:[#allocation9 + $0x18] sm:$0xff]
      %v4543 = vld [vmem:[#allocation9 + $0x30] sm:$0xff]
      %v4544 = vld [vmem:[#allocation9 + $0x48] sm:$0xff]
      %v4546 = vsel %vm1175, %v4540, 0
      %4548 = vmatpush.msra.mxu0 0.0
      %4549 = vmatpush.msra.mxu0 0.0
      %4550 = vmatpush.msra.mxu0 0.0
      %4551 = vmatpush.msra.mxu0 0.0
      %4552 = vmatpush.msra.mxu0 0.0
      %4553 = vmatpush.msra.mxu0 0.0
      %4554 = vmatpush.msra.mxu0 0.0
      %4555 = vmatpush.msra.mxu0 0.0
      %4556 = vmatpush.msra.mxu0 0.0
      %4557 = vmatpush.msra.mxu0 0.0
      %4558 = vmatpush.msra.mxu0 0.0
      %4559 = vmatpush.msra.mxu0 0.0
      %4560 = vmatpush.msra.mxu0 %v4544
      %4561 = vmatpush.msra.mxu0 %v4543
      %4562 = vmatpush.msra.mxu0 %v4542
      %4563 = vmatpush.msra.mxu0 %v4541
      %4564 = vmatmul.f32.gmra.mxu0 %v4546
      %v4565 = vpop.f32.mrf.mxu0
      %v4566 = vadd.f32 0.0, %v4565
      %4567 = vdwg.mxu0
      %v4569 = vsel %vm4030, %v4566, 0
      %4571 = vmatpush.msra.mxu0 0.0
      %4572 = vmatpush.msra.mxu0 0.0
      %4573 = vmatpush.msra.mxu0 0.0
      %4574 = vmatpush.msra.mxu0 0.0
      %4575 = vmatpush.msra.mxu0 0.0
      %4576 = vmatpush.msra.mxu0 0.0
      %4577 = vmatpush.msra.mxu0 0.0
      %4578 = vmatpush.msra.mxu0 0.0
      %4579 = vmatpush.msra.mxu0 0.0
      %4580 = vmatpush.msra.mxu0 0.0
      %4581 = vmatpush.msra.mxu0 0.0
      %4582 = vmatpush.msra.mxu0 0.0
      %4583 = vmatpush.msra.mxu0 0.0
      %4584 = vmatpush.msra.mxu0 0.0
      %4585 = vmatpush.msra.mxu0 0.0
      %4586 = vmatpush.msra.mxu0 %v3928
      %4587 = vmatmul.f32.gmra.mxu0 %v4569
      %v4588 = vpop.f32.mrf.mxu0
      %v4589 = vadd.f32 0.0, %v4588
      %4590 = vdwg.mxu0
      %v4592 = vsel %vm4030, %v4513, 0
      %4594 = vmatpush.msra.mxu0 0.0
      %4595 = vmatpush.msra.mxu0 0.0
      %4596 = vmatpush.msra.mxu0 0.0
      %4597 = vmatpush.msra.mxu0 0.0
      %4598 = vmatpush.msra.mxu0 0.0
      %4599 = vmatpush.msra.mxu0 0.0
      %4600 = vmatpush.msra.mxu0 0.0
      %4601 = vmatpush.msra.mxu0 0.0
      %4602 = vmatpush.msra.mxu0 0.0
      %4603 = vmatpush.msra.mxu0 0.0
      %4604 = vmatpush.msra.mxu0 0.0
      %4605 = vmatpush.msra.mxu0 0.0
      %4606 = vmatpush.msra.mxu0 0.0
      %4607 = vmatpush.msra.mxu0 0.0
      %4608 = vmatpush.msra.mxu0 0.0
      %4609 = vmatpush.msra.mxu0 %v3927
      %4610 = vmatmul.f32.gmra.mxu0 %v4592
      %v4611 = vpop.f32.mrf.mxu0
      %v4612 = vadd.f32 %v4589, %v4611
      %4613 = vdwg.mxu0
      %4615 = vrot.lane.b32.xlu0 %v4612, 36
      %v4616 = vpop.permute.xlu0 %4615
      %vm4618 = vcmask 441632
      %4619 = vst.msk [vmem:[#allocation2] sm:$0xff] %vm4618, %v4616
      %4620 = vrot.lane.b32.xlu0 %v4566, 118
      %v4621 = vpop.permute.xlu0 %4620
      %v4622 = vsel %vm4030, %v4621, 0
      %4624 = vmatpush.msra.mxu0 0.0
      %4625 = vmatpush.msra.mxu0 0.0
      %4626 = vmatpush.msra.mxu0 0.0
      %4627 = vmatpush.msra.mxu0 0.0
      %4628 = vmatpush.msra.mxu0 0.0
      %4629 = vmatpush.msra.mxu0 0.0
      %4630 = vmatpush.msra.mxu0 0.0
      %4631 = vmatpush.msra.mxu0 0.0
      %4632 = vmatpush.msra.mxu0 0.0
      %4633 = vmatpush.msra.mxu0 0.0
      %4634 = vmatpush.msra.mxu0 0.0
      %4635 = vmatpush.msra.mxu0 0.0
      %4636 = vmatpush.msra.mxu0 0.0
      %4637 = vmatpush.msra.mxu0 0.0
      %4638 = vmatpush.msra.mxu0 0.0
      %4639 = vmatpush.msra.mxu0 %v3928
      %4640 = vmatmul.f32.gmra.mxu0 %v4622
      %v4641 = vpop.f32.mrf.mxu0
      %v4642 = vadd.f32 0.0, %v4641
      %4643 = vdwg.mxu0
      %4644 = vrot.lane.b32.xlu0 %v4513, 118
      %v4645 = vpop.permute.xlu0 %4644
      %v4646 = vsel %vm4030, %v4645, 0
      %4648 = vmatpush.msra.mxu0 0.0
      %4649 = vmatpush.msra.mxu0 0.0
      %4650 = vmatpush.msra.mxu0 0.0
      %4651 = vmatpush.msra.mxu0 0.0
      %4652 = vmatpush.msra.mxu0 0.0
      %4653 = vmatpush.msra.mxu0 0.0
      %4654 = vmatpush.msra.mxu0 0.0
      %4655 = vmatpush.msra.mxu0 0.0
      %4656 = vmatpush.msra.mxu0 0.0
      %4657 = vmatpush.msra.mxu0 0.0
      %4658 = vmatpush.msra.mxu0 0.0
      %4659 = vmatpush.msra.mxu0 0.0
      %4660 = vmatpush.msra.mxu0 0.0
      %4661 = vmatpush.msra.mxu0 0.0
      %4662 = vmatpush.msra.mxu0 0.0
      %4663 = vmatpush.msra.mxu0 %v3927
      %4664 = vmatmul.f32.gmra.mxu0 %v4646
      %v4665 = vpop.f32.mrf.mxu0
      %v4666 = vadd.f32 %v4642, %v4665
      %4667 = vdwg.mxu0
      %4669 = vrot.lane.b32.xlu0 %v4666, 72
      %v4670 = vpop.permute.xlu0 %4669
      %vm4672 = vcmask 736832
      %4673 = vst.msk [vmem:[#allocation2] sm:$0xff] %vm4672, %v4670
      %4674 = vrot.lane.b32.xlu0 %v4566, 108
      %v4675 = vpop.permute.xlu0 %4674
      %v4676 = vsel %vm4030, %v4675, 0
      %4678 = vmatpush.msra.mxu0 0.0
      %4679 = vmatpush.msra.mxu0 0.0
      %4680 = vmatpush.msra.mxu0 0.0
      %4681 = vmatpush.msra.mxu0 0.0
      %4682 = vmatpush.msra.mxu0 0.0
      %4683 = vmatpush.msra.mxu0 0.0
      %4684 = vmatpush.msra.mxu0 0.0
      %4685 = vmatpush.msra.mxu0 0.0
      %4686 = vmatpush.msra.mxu0 0.0
      %4687 = vmatpush.msra.mxu0 0.0
      %4688 = vmatpush.msra.mxu0 0.0
      %4689 = vmatpush.msra.mxu0 0.0
      %4690 = vmatpush.msra.mxu0 0.0
      %4691 = vmatpush.msra.mxu0 0.0
      %4692 = vmatpush.msra.mxu0 0.0
      %4693 = vmatpush.msra.mxu0 %v3928
      %4694 = vmatmul.f32.gmra.mxu0 %v4676
      %v4695 = vpop.f32.mrf.mxu0
      %v4696 = vadd.f32 0.0, %v4695
      %4697 = vdwg.mxu0
      %4698 = vrot.lane.b32.xlu0 %v4513, 108
      %v4699 = vpop.permute.xlu0 %4698
      %v4700 = vsel %vm4030, %v4699, 0
      %4702 = vmatpush.msra.mxu0 0.0
      %4703 = vmatpush.msra.mxu0 0.0
      %4704 = vmatpush.msra.mxu0 0.0
      %4705 = vmatpush.msra.mxu0 0.0
      %4706 = vmatpush.msra.mxu0 0.0
      %4707 = vmatpush.msra.mxu0 0.0
      %4708 = vmatpush.msra.mxu0 0.0
      %4709 = vmatpush.msra.mxu0 0.0
      %4710 = vmatpush.msra.mxu0 0.0
      %4711 = vmatpush.msra.mxu0 0.0
      %4712 = vmatpush.msra.mxu0 0.0
      %4713 = vmatpush.msra.mxu0 0.0
      %4714 = vmatpush.msra.mxu0 0.0
      %4715 = vmatpush.msra.mxu0 0.0
      %4716 = vmatpush.msra.mxu0 0.0
      %4717 = vmatpush.msra.mxu0 %v3927
      %4718 = vmatmul.f32.gmra.mxu0 %v4700
      %v4719 = vpop.f32.mrf.mxu0
      %v4720 = vadd.f32 %v4696, %v4719
      %4721 = vdwg.mxu0
      %4723 = vrot.lane.b32.xlu0 %v4720, 108
      %v4724 = vpop.permute.xlu0 %4723
      %vm4726 = vcmask 1032032
      %4727 = vst.msk [vmem:[#allocation2] sm:$0xff] %vm4726, %v4724
      %4728 = vrot.lane.b32.xlu0 %v4566, 98
      %v4729 = vpop.permute.xlu0 %4728
      %v4730 = vsel %vm4030, %v4729, 0
      %4732 = vmatpush.msra.mxu0 0.0
      %4733 = vmatpush.msra.mxu0 0.0
      %4734 = vmatpush.msra.mxu0 0.0
      %4735 = vmatpush.msra.mxu0 0.0
      %4736 = vmatpush.msra.mxu0 0.0
      %4737 = vmatpush.msra.mxu0 0.0
      %4738 = vmatpush.msra.mxu0 0.0
      %4739 = vmatpush.msra.mxu0 0.0
      %4740 = vmatpush.msra.mxu0 0.0
      %4741 = vmatpush.msra.mxu0 0.0
      %4742 = vmatpush.msra.mxu0 0.0
      %4743 = vmatpush.msra.mxu0 0.0
      %4744 = vmatpush.msra.mxu0 0.0
      %4745 = vmatpush.msra.mxu0 0.0
      %4746 = vmatpush.msra.mxu0 0.0
      %4747 = vmatpush.msra.mxu0 %v3928
      %4748 = vmatmul.f32.gmra.mxu0 %v4730
      %v4749 = vpop.f32.mrf.mxu0
      %v4750 = vadd.f32 0.0, %v4749
      %4751 = vdwg.mxu0
      %4752 = vrot.lane.b32.xlu0 %v4513, 98
      %v4753 = vpop.permute.xlu0 %4752
      %v4754 = vsel %vm4030, %v4753, 0
      %4756 = vmatpush.msra.mxu0 0.0
      %4757 = vmatpush.msra.mxu0 0.0
      %4758 = vmatpush.msra.mxu0 0.0
      %4759 = vmatpush.msra.mxu0 0.0
      %4760 = vmatpush.msra.mxu0 0.0
      %4761 = vmatpush.msra.mxu0 0.0
      %4762 = vmatpush.msra.mxu0 0.0
      %4763 = vmatpush.msra.mxu0 0.0
      %4764 = vmatpush.msra.mxu0 0.0
      %4765 = vmatpush.msra.mxu0 0.0
      %4766 = vmatpush.msra.mxu0 0.0
      %4767 = vmatpush.msra.mxu0 0.0
      %4768 = vmatpush.msra.mxu0 0.0
      %4769 = vmatpush.msra.mxu0 0.0
      %4770 = vmatpush.msra.mxu0 0.0
      %4771 = vmatpush.msra.mxu0 %v3927
      %4772 = vmatmul.f32.gmra.mxu0 %v4754
      %v4773 = vpop.f32.mrf.mxu0
      %v4774 = vadd.f32 %v4750, %v4773
      %4775 = vdwg.mxu0
      %4777 = vrot.lane.b32.xlu0 %v4774, 16
      %v4778 = vpop.permute.xlu0 %4777
      %vm4780 = vcmask 277632
      %4781 = vst.msk [vmem:[#allocation2 + $0x8] sm:$0xff] %vm4780, %v4778
      %4782 = vrot.lane.b32.xlu0 %v4566, 88
      %v4783 = vpop.permute.xlu0 %4782
      %v4784 = vsel %vm4030, %v4783, 0
      %4786 = vmatpush.msra.mxu0 0.0
      %4787 = vmatpush.msra.mxu0 0.0
      %4788 = vmatpush.msra.mxu0 0.0
      %4789 = vmatpush.msra.mxu0 0.0
      %4790 = vmatpush.msra.mxu0 0.0
      %4791 = vmatpush.msra.mxu0 0.0
      %4792 = vmatpush.msra.mxu0 0.0
      %4793 = vmatpush.msra.mxu0 0.0
      %4794 = vmatpush.msra.mxu0 0.0
      %4795 = vmatpush.msra.mxu0 0.0
      %4796 = vmatpush.msra.mxu0 0.0
      %4797 = vmatpush.msra.mxu0 0.0
      %4798 = vmatpush.msra.mxu0 0.0
      %4799 = vmatpush.msra.mxu0 0.0
      %4800 = vmatpush.msra.mxu0 0.0
      %4801 = vmatpush.msra.mxu0 %v3928
      %4802 = vmatmul.f32.gmra.mxu0 %v4784
      %v4803 = vpop.f32.mrf.mxu0
      %v4804 = vadd.f32 0.0, %v4803
      %4805 = vdwg.mxu0
      %4806 = vrot.lane.b32.xlu0 %v4513, 88
      %v4807 = vpop.permute.xlu0 %4806
      %v4808 = vsel %vm4030, %v4807, 0
      %4810 = vmatpush.msra.mxu0 0.0
      %4811 = vmatpush.msra.mxu0 0.0
      %4812 = vmatpush.msra.mxu0 0.0
      %4813 = vmatpush.msra.mxu0 0.0
      %4814 = vmatpush.msra.mxu0 0.0
      %4815 = vmatpush.msra.mxu0 0.0
      %4816 = vmatpush.msra.mxu0 0.0
      %4817 = vmatpush.msra.mxu0 0.0
      %4818 = vmatpush.msra.mxu0 0.0
      %4819 = vmatpush.msra.mxu0 0.0
      %4820 = vmatpush.msra.mxu0 0.0
      %4821 = vmatpush.msra.mxu0 0.0
      %4822 = vmatpush.msra.mxu0 0.0
      %4823 = vmatpush.msra.mxu0 0.0
      %4824 = vmatpush.msra.mxu0 0.0
      %4825 = vmatpush.msra.mxu0 %v3927
      %4826 = vmatmul.f32.gmra.mxu0 %v4808
      %v4827 = vpop.f32.mrf.mxu0
      %v4828 = vadd.f32 %v4804, %v4827
      %4829 = vdwg.mxu0
      %4831 = vrot.lane.b32.xlu0 %v4828, 52
      %v4832 = vpop.permute.xlu0 %4831
      %vm4834 = vcmask 572832
      %4835 = vst.msk [vmem:[#allocation2 + $0x8] sm:$0xff] %vm4834, %v4832
      %4836 = vrot.lane.b32.xlu0 %v4566, 78
      %v4837 = vpop.permute.xlu0 %4836
      %v4838 = vsel %vm4030, %v4837, 0
      %4840 = vmatpush.msra.mxu0 0.0
      %4841 = vmatpush.msra.mxu0 0.0
      %4842 = vmatpush.msra.mxu0 0.0
      %4843 = vmatpush.msra.mxu0 0.0
      %4844 = vmatpush.msra.mxu0 0.0
      %4845 = vmatpush.msra.mxu0 0.0
      %4846 = vmatpush.msra.mxu0 0.0
      %4847 = vmatpush.msra.mxu0 0.0
      %4848 = vmatpush.msra.mxu0 0.0
      %4849 = vmatpush.msra.mxu0 0.0
      %4850 = vmatpush.msra.mxu0 0.0
      %4851 = vmatpush.msra.mxu0 0.0
      %4852 = vmatpush.msra.mxu0 0.0
      %4853 = vmatpush.msra.mxu0 0.0
      %4854 = vmatpush.msra.mxu0 0.0
      %4855 = vmatpush.msra.mxu0 %v3928
      %4856 = vmatmul.f32.gmra.mxu0 %v4838
      %v4857 = vpop.f32.mrf.mxu0
      %v4858 = vadd.f32 0.0, %v4857
      %4859 = vdwg.mxu0
      %4860 = vrot.lane.b32.xlu0 %v4513, 78
      %v4861 = vpop.permute.xlu0 %4860
      %v4862 = vsel %vm4030, %v4861, 0
      %4864 = vmatpush.msra.mxu0 0.0
      %4865 = vmatpush.msra.mxu0 0.0
      %4866 = vmatpush.msra.mxu0 0.0
      %4867 = vmatpush.msra.mxu0 0.0
      %4868 = vmatpush.msra.mxu0 0.0
      %4869 = vmatpush.msra.mxu0 0.0
      %4870 = vmatpush.msra.mxu0 0.0
      %4871 = vmatpush.msra.mxu0 0.0
      %4872 = vmatpush.msra.mxu0 0.0
      %4873 = vmatpush.msra.mxu0 0.0
      %4874 = vmatpush.msra.mxu0 0.0
      %4875 = vmatpush.msra.mxu0 0.0
      %4876 = vmatpush.msra.mxu0 0.0
      %4877 = vmatpush.msra.mxu0 0.0
      %4878 = vmatpush.msra.mxu0 0.0
      %4879 = vmatpush.msra.mxu0 %v3927
      %4880 = vmatmul.f32.gmra.mxu0 %v4862
      %v4881 = vpop.f32.mrf.mxu0
      %v4882 = vadd.f32 %v4858, %v4881
      %4883 = vdwg.mxu0
      %4885 = vrot.lane.b32.xlu0 %v4882, 88
      %v4886 = vpop.permute.xlu0 %4885
      %vm4888 = vcmask 868032
      %4889 = vst.msk [vmem:[#allocation2 + $0x8] sm:$0xff] %vm4888, %v4886
      %4890 = vrot.lane.b32.xlu0 %v4566, 68
      %v4891 = vpop.permute.xlu0 %4890
      %v4892 = vsel %vm4030, %v4891, 0
      %4894 = vmatpush.msra.mxu0 0.0
      %4895 = vmatpush.msra.mxu0 0.0
      %4896 = vmatpush.msra.mxu0 0.0
      %4897 = vmatpush.msra.mxu0 0.0
      %4898 = vmatpush.msra.mxu0 0.0
      %4899 = vmatpush.msra.mxu0 0.0
      %4900 = vmatpush.msra.mxu0 0.0
      %4901 = vmatpush.msra.mxu0 0.0
      %4902 = vmatpush.msra.mxu0 0.0
      %4903 = vmatpush.msra.mxu0 0.0
      %4904 = vmatpush.msra.mxu0 0.0
      %4905 = vmatpush.msra.mxu0 0.0
      %4906 = vmatpush.msra.mxu0 0.0
      %4907 = vmatpush.msra.mxu0 0.0
      %4908 = vmatpush.msra.mxu0 0.0
      %4909 = vmatpush.msra.mxu0 %v3928
      %4910 = vmatmul.f32.gmra.mxu0 %v4892
      %v4911 = vpop.f32.mrf.mxu0
      %v4912 = vadd.f32 0.0, %v4911
      %4913 = vdwg.mxu0
      %4914 = vrot.lane.b32.xlu0 %v4513, 68
      %v4915 = vpop.permute.xlu0 %4914
      %v4916 = vsel %vm4030, %v4915, 0
      %4918 = vmatpush.msra.mxu0 0.0
      %4919 = vmatpush.msra.mxu0 0.0
      %4920 = vmatpush.msra.mxu0 0.0
      %4921 = vmatpush.msra.mxu0 0.0
      %4922 = vmatpush.msra.mxu0 0.0
      %4923 = vmatpush.msra.mxu0 0.0
      %4924 = vmatpush.msra.mxu0 0.0
      %4925 = vmatpush.msra.mxu0 0.0
      %4926 = vmatpush.msra.mxu0 0.0
      %4927 = vmatpush.msra.mxu0 0.0
      %4928 = vmatpush.msra.mxu0 0.0
      %4929 = vmatpush.msra.mxu0 0.0
      %4930 = vmatpush.msra.mxu0 0.0
      %4931 = vmatpush.msra.mxu0 0.0
      %4932 = vmatpush.msra.mxu0 0.0
      %4933 = vmatpush.msra.mxu0 %v3927
      %4934 = vmatmul.f32.gmra.mxu0 %v4916
      %v4935 = vpop.f32.mrf.mxu0
      %v4936 = vadd.f32 %v4912, %v4935
      %4937 = vdwg.mxu0
      %4939 = vrot.lane.b32.xlu0 %v4936, 124
      %v4940 = vpop.permute.xlu0 %4939
      %vm4942 = vcmask 1048544
      %4943 = vst.msk [vmem:[#allocation2 + $0x8] sm:$0xff] %vm4942, %v4940
      %vm4944 = vcmask 113664
      %4945 = vst.msk [vmem:[#allocation2 + $0x10] sm:$0xff] %vm4944, %v4940
      %4946 = vrot.lane.b32.xlu0 %v4566, 58
      %v4947 = vpop.permute.xlu0 %4946
      %v4948 = vsel %vm4030, %v4947, 0
      %4950 = vmatpush.msra.mxu0 0.0
      %4951 = vmatpush.msra.mxu0 0.0
      %4952 = vmatpush.msra.mxu0 0.0
      %4953 = vmatpush.msra.mxu0 0.0
      %4954 = vmatpush.msra.mxu0 0.0
      %4955 = vmatpush.msra.mxu0 0.0
      %4956 = vmatpush.msra.mxu0 0.0
      %4957 = vmatpush.msra.mxu0 0.0
      %4958 = vmatpush.msra.mxu0 0.0
      %4959 = vmatpush.msra.mxu0 0.0
      %4960 = vmatpush.msra.mxu0 0.0
      %4961 = vmatpush.msra.mxu0 0.0
      %4962 = vmatpush.msra.mxu0 0.0
      %4963 = vmatpush.msra.mxu0 0.0
      %4964 = vmatpush.msra.mxu0 0.0
      %4965 = vmatpush.msra.mxu0 %v3928
      %4966 = vmatmul.f32.gmra.mxu0 %v4948
      %v4967 = vpop.f32.mrf.mxu0
      %v4968 = vadd.f32 0.0, %v4967
      %4969 = vdwg.mxu0
      %4970 = vrot.lane.b32.xlu0 %v4513, 58
      %v4971 = vpop.permute.xlu0 %4970
      %v4972 = vsel %vm4030, %v4971, 0
      %4974 = vmatpush.msra.mxu0 0.0
      %4975 = vmatpush.msra.mxu0 0.0
      %4976 = vmatpush.msra.mxu0 0.0
      %4977 = vmatpush.msra.mxu0 0.0
      %4978 = vmatpush.msra.mxu0 0.0
      %4979 = vmatpush.msra.mxu0 0.0
      %4980 = vmatpush.msra.mxu0 0.0
      %4981 = vmatpush.msra.mxu0 0.0
      %4982 = vmatpush.msra.mxu0 0.0
      %4983 = vmatpush.msra.mxu0 0.0
      %4984 = vmatpush.msra.mxu0 0.0
      %4985 = vmatpush.msra.mxu0 0.0
      %4986 = vmatpush.msra.mxu0 0.0
      %4987 = vmatpush.msra.mxu0 0.0
      %4988 = vmatpush.msra.mxu0 0.0
      %4989 = vmatpush.msra.mxu0 %v3927
      %4990 = vmatmul.f32.gmra.mxu0 %v4972
      %v4991 = vpop.f32.mrf.mxu0
      %v4992 = vadd.f32 %v4968, %v4991
      %4993 = vdwg.mxu0
      %4995 = vrot.lane.b32.xlu0 %v4992, 32
      %v4996 = vpop.permute.xlu0 %4995
      %vm4998 = vcmask 408832
      %4999 = vst.msk [vmem:[#allocation2 + $0x10] sm:$0xff] %vm4998, %v4996
      %v5000 = vld [vmem:[#allocation2] sm:$0xff]
      %v5001 = vld [vmem:[#allocation2 + $0x8] sm:$0xff]
      %v5002 = vld [vmem:[#allocation2 + $0x10] sm:$0xff]
      %5003 = vst [vmem:[#allocation9] sm:$0xff] %v5000
      %5004 = vst [vmem:[#allocation9 + $0x8] sm:$0xff] %v5001
      %5005 = vst.msk [vmem:[#allocation9 + $0x10] sm:$0xff] %vm1175, %v5002
      %v5006 = vld [vmem:[#allocation2] sm:$0xff]
      %v5007 = vld [vmem:[#allocation2 + $0x8] sm:$0xff]
      %v5008 = vld [vmem:[#allocation2 + $0x10] sm:$0xff]
      %5012 = vrot.lane.b32.xlu0 %v5006, 127
      %v5013 = vpop.permute.xlu0 %5012
      %5014 = vrot.lane.b32.xlu0 %v5007, 127
      %v5015 = vpop.permute.xlu0 %5014
      %5016 = vrot.lane.b32.xlu0 %v5008, 127
      %v5017 = vpop.permute.xlu0 %5016
      %v5018 = vsel %vm829, %v5013, %v5015
      %v5019 = vsel %vm829, %v5015, %v5017
      %5023 = vst [vmem:[#allocation9 + $0x18] sm:$0xff] %v5018
      %5024 = vst [vmem:[#allocation9 + $0x20] sm:$0xff] %v5019
      %5025 = vst.msk [vmem:[#allocation9 + $0x28] sm:$0xff] %vm1175, %v5017
      %v5026 = vld [vmem:[#allocation2] sm:$0xff]
      %v5027 = vld [vmem:[#allocation2 + $0x8] sm:$0xff]
      %v5028 = vld [vmem:[#allocation2 + $0x10] sm:$0xff]
      %5032 = vrot.lane.b32.xlu0 %v5026, 126
      %v5033 = vpop.permute.xlu0 %5032
      %5034 = vrot.lane.b32.xlu0 %v5027, 126
      %v5035 = vpop.permute.xlu0 %5034
      %5036 = vrot.lane.b32.xlu0 %v5028, 126
      %v5037 = vpop.permute.xlu0 %5036
      %v5038 = vsel %vm858, %v5033, %v5035
      %v5039 = vsel %vm858, %v5035, %v5037
      %5043 = vst [vmem:[#allocation9 + $0x30] sm:$0xff] %v5038
      %5044 = vst [vmem:[#allocation9 + $0x38] sm:$0xff] %v5039
      %5045 = vst.msk [vmem:[#allocation9 + $0x40] sm:$0xff] %vm1175, %v5037
      %v5046 = vld [vmem:[#allocation2] sm:$0xff]
      %v5047 = vld [vmem:[#allocation2 + $0x8] sm:$0xff]
      %v5048 = vld [vmem:[#allocation2 + $0x10] sm:$0xff]
      %5052 = vrot.lane.b32.xlu0 %v5046, 110
      %v5053 = vpop.permute.xlu0 %5052
      %5054 = vrot.lane.b32.xlu0 %v5047, 110
      %v5055 = vpop.permute.xlu0 %5054
      %5056 = vrot.lane.b32.xlu0 %v5048, 110
      %v5057 = vpop.permute.xlu0 %5056
      %v5058 = vsel %vm891, %v5053, %v5055
      %v5059 = vsel %vm891, %v5055, %v5057
      %5063 = vst [vmem:[#allocation9 + $0x48] sm:$0xff] %v5058
      %5064 = vst [vmem:[#allocation9 + $0x50] sm:$0xff] %v5059
      %5065 = vst.msk [vmem:[#allocation9 + $0x58] sm:$0xff] %vm1175, %v5057
      %v5066 = vld [vmem:[#allocation2] sm:$0xff]
      %v5067 = vld [vmem:[#allocation2 + $0x8] sm:$0xff]
      %v5068 = vld [vmem:[#allocation2 + $0x10] sm:$0xff]
      %5072 = vrot.lane.b32.xlu0 %v5066, 109
      %v5073 = vpop.permute.xlu0 %5072
      %5074 = vrot.lane.b32.xlu0 %v5067, 109
      %v5075 = vpop.permute.xlu0 %5074
      %5076 = vrot.lane.b32.xlu0 %v5068, 109
      %v5077 = vpop.permute.xlu0 %5076
      %v5078 = vsel %vm918, %v5073, %v5075
      %v5079 = vsel %vm918, %v5075, %v5077
      %5083 = vst [vmem:[#allocation9 + $0x60] sm:$0xff] %v5078
      %5084 = vst [vmem:[#allocation9 + $0x68] sm:$0xff] %v5079
      %5085 = vst.msk [vmem:[#allocation9 + $0x70] sm:$0xff] %vm1175, %v5077
      %v5086 = vld [vmem:[#allocation2] sm:$0xff]
      %v5087 = vld [vmem:[#allocation2 + $0x8] sm:$0xff]
      %v5088 = vld [vmem:[#allocation2 + $0x10] sm:$0xff]
      %5092 = vrot.lane.b32.xlu0 %v5086, 108
      %v5093 = vpop.permute.xlu0 %5092
      %5094 = vrot.lane.b32.xlu0 %v5087, 108
      %v5095 = vpop.permute.xlu0 %5094
      %5096 = vrot.lane.b32.xlu0 %v5088, 108
      %v5097 = vpop.permute.xlu0 %5096
      %v5098 = vsel %vm947, %v5093, %v5095
      %v5099 = vsel %vm947, %v5095, %v5097
      %5103 = vst [vmem:[#allocation9 + $0x78] sm:$0xff] %v5098
      %5104 = vst [vmem:[#allocation9 + $0x80] sm:$0xff] %v5099
      %5105 = vst.msk [vmem:[#allocation9 + $0x88] sm:$0xff] %vm1175, %v5097
      %v5106 = vld [vmem:[#allocation2] sm:$0xff]
      %v5107 = vld [vmem:[#allocation2 + $0x8] sm:$0xff]
      %v5108 = vld [vmem:[#allocation2 + $0x10] sm:$0xff]
      %5112 = vrot.lane.b32.xlu0 %v5106, 92
      %v5113 = vpop.permute.xlu0 %5112
      %5114 = vrot.lane.b32.xlu0 %v5107, 92
      %v5115 = vpop.permute.xlu0 %5114
      %5116 = vrot.lane.b32.xlu0 %v5108, 92
      %v5117 = vpop.permute.xlu0 %5116
      %v5118 = vsel %vm980, %v5113, %v5115
      %v5119 = vsel %vm980, %v5115, %v5117
      %5123 = vst [vmem:[#allocation9 + $0x90] sm:$0xff] %v5118
      %5124 = vst [vmem:[#allocation9 + $0x98] sm:$0xff] %v5119
      %5125 = vst.msk [vmem:[#allocation9 + $0xa0] sm:$0xff] %vm1175, %v5117
      %v5126 = vld [vmem:[#allocation2] sm:$0xff]
      %v5127 = vld [vmem:[#allocation2 + $0x8] sm:$0xff]
      %v5128 = vld [vmem:[#allocation2 + $0x10] sm:$0xff]
      %5132 = vrot.lane.b32.xlu0 %v5126, 91
      %v5133 = vpop.permute.xlu0 %5132
      %5134 = vrot.lane.b32.xlu0 %v5127, 91
      %v5135 = vpop.permute.xlu0 %5134
      %5136 = vrot.lane.b32.xlu0 %v5128, 91
      %v5137 = vpop.permute.xlu0 %5136
      %v5138 = vsel %vm1009, %v5133, %v5135
      %v5139 = vsel %vm1009, %v5135, %v5137
      %5143 = vst [vmem:[#allocation9 + $0xa8] sm:$0xff] %v5138
      %5144 = vst [vmem:[#allocation9 + $0xb0] sm:$0xff] %v5139
      %5145 = vst.msk [vmem:[#allocation9 + $0xb8] sm:$0xff] %vm1175, %v5137
      %v5146 = vld [vmem:[#allocation2] sm:$0xff]
      %v5147 = vld [vmem:[#allocation2 + $0x8] sm:$0xff]
      %v5148 = vld [vmem:[#allocation2 + $0x10] sm:$0xff]
      %5152 = vrot.lane.b32.xlu0 %v5146, 90
      %v5153 = vpop.permute.xlu0 %5152
      %5154 = vrot.lane.b32.xlu0 %v5147, 90
      %v5155 = vpop.permute.xlu0 %5154
      %5156 = vrot.lane.b32.xlu0 %v5148, 90
      %v5157 = vpop.permute.xlu0 %5156
      %v5158 = vsel %vm1035, %v5153, %v5155
      %v5159 = vsel %vm1035, %v5155, %v5157
      %5163 = vst [vmem:[#allocation9 + $0xc0] sm:$0xff] %v5158
      %5164 = vst [vmem:[#allocation9 + $0xc8] sm:$0xff] %v5159
      %5165 = vst.msk [vmem:[#allocation9 + $0xd0] sm:$0xff] %vm1175, %v5157
      %v5166 = vld [vmem:[#allocation3] sm:$0xff]
      %v5167 = vld [vmem:[#allocation3 + $0x8] sm:$0xff]
      %v5168 = vld [vmem:[#allocation3 + $0x10] sm:$0xff]
      %5169 = vst [vmem:[#allocation9 + $0xd8] sm:$0xff] %v5166
      %5170 = vst [vmem:[#allocation9 + $0xe0] sm:$0xff] %v5167
      %5171 = vst.msk [vmem:[#allocation9 + $0xe8] sm:$0xff] %vm1175, %v5168
      %v5172 = vld [vmem:[#allocation3] sm:$0xff]
      %v5173 = vld [vmem:[#allocation3 + $0x8] sm:$0xff]
      %v5174 = vld [vmem:[#allocation3 + $0x10] sm:$0xff]
      %5178 = vrot.lane.b32.xlu0 %v5172, 127
      %v5179 = vpop.permute.xlu0 %5178
      %5180 = vrot.lane.b32.xlu0 %v5173, 127
      %v5181 = vpop.permute.xlu0 %5180
      %5182 = vrot.lane.b32.xlu0 %v5174, 127
      %v5183 = vpop.permute.xlu0 %5182
      %v5184 = vsel %vm829, %v5179, %v5181
      %v5185 = vsel %vm829, %v5181, %v5183
      %5189 = vst [vmem:[#allocation9 + $0xf0] sm:$0xff] %v5184
      %5190 = vst [vmem:[#allocation9 + $0xf8] sm:$0xff] %v5185
      %5191 = vst.msk [vmem:[#allocation9 + $0x100] sm:$0xff] %vm1175, %v5183
      %v5192 = vld [vmem:[#allocation3] sm:$0xff]
      %v5193 = vld [vmem:[#allocation3 + $0x8] sm:$0xff]
      %v5194 = vld [vmem:[#allocation3 + $0x10] sm:$0xff]
      %5198 = vrot.lane.b32.xlu0 %v5192, 126
      %v5199 = vpop.permute.xlu0 %5198
      %5200 = vrot.lane.b32.xlu0 %v5193, 126
      %v5201 = vpop.permute.xlu0 %5200
      %5202 = vrot.lane.b32.xlu0 %v5194, 126
      %v5203 = vpop.permute.xlu0 %5202
      %v5204 = vsel %vm858, %v5199, %v5201
      %v5205 = vsel %vm858, %v5201, %v5203
      %5209 = vst [vmem:[#allocation9 + $0x108] sm:$0xff] %v5204
      %5210 = vst [vmem:[#allocation9 + $0x110] sm:$0xff] %v5205
      %5211 = vst.msk [vmem:[#allocation9 + $0x118] sm:$0xff] %vm1175, %v5203
      %v5212 = vld [vmem:[#allocation3] sm:$0xff]
      %v5213 = vld [vmem:[#allocation3 + $0x8] sm:$0xff]
      %v5214 = vld [vmem:[#allocation3 + $0x10] sm:$0xff]
      %5218 = vrot.lane.b32.xlu0 %v5212, 110
      %v5219 = vpop.permute.xlu0 %5218
      %5220 = vrot.lane.b32.xlu0 %v5213, 110
      %v5221 = vpop.permute.xlu0 %5220
      %5222 = vrot.lane.b32.xlu0 %v5214, 110
      %v5223 = vpop.permute.xlu0 %5222
      %v5224 = vsel %vm891, %v5219, %v5221
      %v5225 = vsel %vm891, %v5221, %v5223
      %5229 = vst [vmem:[#allocation9 + $0x120] sm:$0xff] %v5224
      %5230 = vst [vmem:[#allocation9 + $0x128] sm:$0xff] %v5225
      %5231 = vst.msk [vmem:[#allocation9 + $0x130] sm:$0xff] %vm1175, %v5223
      %v5232 = vld [vmem:[#allocation3] sm:$0xff]
      %v5233 = vld [vmem:[#allocation3 + $0x8] sm:$0xff]
      %v5234 = vld [vmem:[#allocation3 + $0x10] sm:$0xff]
      %5238 = vrot.lane.b32.xlu0 %v5232, 109
      %v5239 = vpop.permute.xlu0 %5238
      %5240 = vrot.lane.b32.xlu0 %v5233, 109
      %v5241 = vpop.permute.xlu0 %5240
      %5242 = vrot.lane.b32.xlu0 %v5234, 109
      %v5243 = vpop.permute.xlu0 %5242
      %v5244 = vsel %vm918, %v5239, %v5241
      %v5245 = vsel %vm918, %v5241, %v5243
      %5249 = vst [vmem:[#allocation9 + $0x138] sm:$0xff] %v5244
      %5250 = vst [vmem:[#allocation9 + $0x140] sm:$0xff] %v5245
      %5251 = vst.msk [vmem:[#allocation9 + $0x148] sm:$0xff] %vm1175, %v5243
      %v5252 = vld [vmem:[#allocation3] sm:$0xff]
      %v5253 = vld [vmem:[#allocation3 + $0x8] sm:$0xff]
      %v5254 = vld [vmem:[#allocation3 + $0x10] sm:$0xff]
      %5258 = vrot.lane.b32.xlu0 %v5252, 108
      %v5259 = vpop.permute.xlu0 %5258
      %5260 = vrot.lane.b32.xlu0 %v5253, 108
      %v5261 = vpop.permute.xlu0 %5260
      %5262 = vrot.lane.b32.xlu0 %v5254, 108
      %v5263 = vpop.permute.xlu0 %5262
      %v5264 = vsel %vm947, %v5259, %v5261
      %v5265 = vsel %vm947, %v5261, %v5263
      %5269 = vst [vmem:[#allocation9 + $0x150] sm:$0xff] %v5264
      %5270 = vst [vmem:[#allocation9 + $0x158] sm:$0xff] %v5265
      %5271 = vst.msk [vmem:[#allocation9 + $0x160] sm:$0xff] %vm1175, %v5263
      %v5272 = vld [vmem:[#allocation3] sm:$0xff]
      %v5273 = vld [vmem:[#allocation3 + $0x8] sm:$0xff]
      %v5274 = vld [vmem:[#allocation3 + $0x10] sm:$0xff]
      %5278 = vrot.lane.b32.xlu0 %v5272, 92
      %v5279 = vpop.permute.xlu0 %5278
      %5280 = vrot.lane.b32.xlu0 %v5273, 92
      %v5281 = vpop.permute.xlu0 %5280
      %5282 = vrot.lane.b32.xlu0 %v5274, 92
      %v5283 = vpop.permute.xlu0 %5282
      %v5284 = vsel %vm980, %v5279, %v5281
      %v5285 = vsel %vm980, %v5281, %v5283
      %5289 = vst [vmem:[#allocation9 + $0x168] sm:$0xff] %v5284
      %5290 = vst [vmem:[#allocation9 + $0x170] sm:$0xff] %v5285
      %5291 = vst.msk [vmem:[#allocation9 + $0x178] sm:$0xff] %vm1175, %v5283
      %v5292 = vld [vmem:[#allocation3] sm:$0xff]
      %v5293 = vld [vmem:[#allocation3 + $0x8] sm:$0xff]
      %v5294 = vld [vmem:[#allocation3 + $0x10] sm:$0xff]
      %5298 = vrot.lane.b32.xlu0 %v5292, 91
      %v5299 = vpop.permute.xlu0 %5298
      %5300 = vrot.lane.b32.xlu0 %v5293, 91
      %v5301 = vpop.permute.xlu0 %5300
      %5302 = vrot.lane.b32.xlu0 %v5294, 91
      %v5303 = vpop.permute.xlu0 %5302
      %v5304 = vsel %vm1009, %v5299, %v5301
      %v5305 = vsel %vm1009, %v5301, %v5303
      %5309 = vst [vmem:[#allocation9 + $0x180] sm:$0xff] %v5304
      %5310 = vst [vmem:[#allocation9 + $0x188] sm:$0xff] %v5305
      %5311 = vst.msk [vmem:[#allocation9 + $0x190] sm:$0xff] %vm1175, %v5303
      %v5312 = vld [vmem:[#allocation3] sm:$0xff]
      %v5313 = vld [vmem:[#allocation3 + $0x8] sm:$0xff]
      %v5314 = vld [vmem:[#allocation3 + $0x10] sm:$0xff]
      %5318 = vrot.lane.b32.xlu0 %v5312, 90
      %v5319 = vpop.permute.xlu0 %5318
      %5320 = vrot.lane.b32.xlu0 %v5313, 90
      %v5321 = vpop.permute.xlu0 %5320
      %5322 = vrot.lane.b32.xlu0 %v5314, 90
      %v5323 = vpop.permute.xlu0 %5322
      %v5324 = vsel %vm1035, %v5319, %v5321
      %v5325 = vsel %vm1035, %v5321, %v5323
      %5329 = vst [vmem:[#allocation9 + $0x198] sm:$0xff] %v5324
      %5330 = vst [vmem:[#allocation9 + $0x1a0] sm:$0xff] %v5325
      %5331 = vst.msk [vmem:[#allocation9 + $0x1a8] sm:$0xff] %vm1175, %v5323
      %v5332 = vld [vmem:[%s21] sm:$0xff]
      %v5333 = vld [vmem:[%s21 + $0x8] sm:$0xff]
      %v5334 = vld [vmem:[#allocation9] sm:$0xff]
      %v5335 = vld [vmem:[#allocation9 + $0x8] sm:$0xff]
      %v5336 = vld [vmem:[#allocation9 + $0x10] sm:$0xff]
      %v5337 = vld [vmem:[#allocation9 + $0x18] sm:$0xff]
      %v5338 = vld [vmem:[#allocation9 + $0x20] sm:$0xff]
      %v5339 = vld [vmem:[#allocation9 + $0x28] sm:$0xff]
      %v5340 = vld [vmem:[#allocation9 + $0x30] sm:$0xff]
      %v5341 = vld [vmem:[#allocation9 + $0x38] sm:$0xff]
      %v5342 = vld [vmem:[#allocation9 + $0x40] sm:$0xff]
      %v5343 = vld [vmem:[#allocation9 + $0x48] sm:$0xff]
      %v5344 = vld [vmem:[#allocation9 + $0x50] sm:$0xff]
      %v5345 = vld [vmem:[#allocation9 + $0x58] sm:$0xff]
      %v5346 = vld [vmem:[#allocation9 + $0x60] sm:$0xff]
      %v5347 = vld [vmem:[#allocation9 + $0x68] sm:$0xff]
      %v5348 = vld [vmem:[#allocation9 + $0x70] sm:$0xff]
      %v5349 = vld [vmem:[#allocation9 + $0x78] sm:$0xff]
      %v5350 = vld [vmem:[#allocation9 + $0x80] sm:$0xff]
      %v5351 = vld [vmem:[#allocation9 + $0x88] sm:$0xff]
      %v5352 = vld [vmem:[#allocation9 + $0x90] sm:$0xff]
      %v5353 = vld [vmem:[#allocation9 + $0x98] sm:$0xff]
      %v5354 = vld [vmem:[#allocation9 + $0xa0] sm:$0xff]
      %v5355 = vld [vmem:[#allocation9 + $0xa8] sm:$0xff]
      %v5356 = vld [vmem:[#allocation9 + $0xb0] sm:$0xff]
      %v5357 = vld [vmem:[#allocation9 + $0xb8] sm:$0xff]
      %v5358 = vld [vmem:[#allocation9 + $0xc0] sm:$0xff]
      %v5359 = vld [vmem:[#allocation9 + $0xc8] sm:$0xff]
      %v5360 = vld [vmem:[#allocation9 + $0xd0] sm:$0xff]
      %v5361 = vld [vmem:[#allocation9 + $0xd8] sm:$0xff]
      %v5362 = vld [vmem:[#allocation9 + $0xe0] sm:$0xff]
      %v5363 = vld [vmem:[#allocation9 + $0xe8] sm:$0xff]
      %v5364 = vld [vmem:[#allocation9 + $0xf0] sm:$0xff]
      %v5365 = vld [vmem:[#allocation9 + $0xf8] sm:$0xff]
      %v5366 = vld [vmem:[#allocation9 + $0x100] sm:$0xff]
      %v5367 = vld [vmem:[#allocation9 + $0x108] sm:$0xff]
      %v5368 = vld [vmem:[#allocation9 + $0x110] sm:$0xff]
      %v5369 = vld [vmem:[#allocation9 + $0x118] sm:$0xff]
      %v5370 = vld [vmem:[#allocation9 + $0x120] sm:$0xff]
      %v5371 = vld [vmem:[#allocation9 + $0x128] sm:$0xff]
      %v5372 = vld [vmem:[#allocation9 + $0x130] sm:$0xff]
      %v5373 = vld [vmem:[#allocation9 + $0x138] sm:$0xff]
      %v5374 = vld [vmem:[#allocation9 + $0x140] sm:$0xff]
      %v5375 = vld [vmem:[#allocation9 + $0x148] sm:$0xff]
      %v5376 = vld [vmem:[#allocation9 + $0x150] sm:$0xff]
      %v5377 = vld [vmem:[#allocation9 + $0x158] sm:$0xff]
      %v5378 = vld [vmem:[#allocation9 + $0x160] sm:$0xff]
      %v5379 = vld [vmem:[#allocation9 + $0x168] sm:$0xff]
      %v5380 = vld [vmem:[#allocation9 + $0x170] sm:$0xff]
      %v5381 = vld [vmem:[#allocation9 + $0x178] sm:$0xff]
      %v5382 = vld [vmem:[#allocation9 + $0x180] sm:$0xff]
      %v5383 = vld [vmem:[#allocation9 + $0x188] sm:$0xff]
      %v5384 = vld [vmem:[#allocation9 + $0x190] sm:$0xff]
      %v5385 = vld [vmem:[#allocation9 + $0x198] sm:$0xff]
      %v5386 = vld [vmem:[#allocation9 + $0x1a0] sm:$0xff]
      %v5387 = vld [vmem:[#allocation9 + $0x1a8] sm:$0xff]
      %v5388 = vld [vmem:[%s22] sm:$0xff]
      %5390 = vset.pattern.permute.xlu0 0
      %5391 = vperm.xlu0 %5390, %v5388
      %v5392 = vpop.permute.xlu0 %5391
      %v5395 = vsel %vm2112, %v5333, 0
      %5397 = vmatpush.msra.mxu0 %v5379
      %5398 = vmatpush.msra.mxu0 %v5376
      %5399 = vmatpush.msra.mxu0 %v5373
      %5400 = vmatpush.msra.mxu0 %v5370
      %5401 = vmatpush.msra.mxu0 %v5367
      %5402 = vmatpush.msra.mxu0 %v5364
      %5403 = vmatpush.msra.mxu0 %v5361
      %5404 = vmatpush.msra.mxu0 %v5358
      %5405 = vmatpush.msra.mxu0 %v5355
      %5406 = vmatpush.msra.mxu0 %v5352
      %5407 = vmatpush.msra.mxu0 %v5349
      %5408 = vmatpush.msra.mxu0 %v5346
      %5409 = vmatpush.msra.mxu0 %v5343
      %5410 = vmatpush.msra.mxu0 %v5340
      %5411 = vmatpush.msra.mxu0 %v5337
      %5412 = vmatpush.msra.mxu0 %v5334
      %5413 = vmatmul.f32.gmra.mxu0 %v5332
      %v5414 = vpop.f32.mrf.mxu0
      %v5415 = vadd.f32 %v5392, %v5414
      %5416 = vdwg.mxu0
      %5417 = vmatpush.msra.mxu0 0.0
      %5418 = vmatpush.msra.mxu0 0.0
      %5419 = vmatpush.msra.mxu0 0.0
      %5420 = vmatpush.msra.mxu0 0.0
      %5421 = vmatpush.msra.mxu0 0.0
      %5422 = vmatpush.msra.mxu0 0.0
      %5423 = vmatpush.msra.mxu0 0.0
      %5424 = vmatpush.msra.mxu0 0.0
      %5425 = vmatpush.msra.mxu0 0.0
      %5426 = vmatpush.msra.mxu0 0.0
      %5427 = vmatpush.msra.mxu0 0.0
      %5428 = vmatpush.msra.mxu0 0.0
      %5429 = vmatpush.msra.mxu0 0.0
      %5430 = vmatpush.msra.mxu0 0.0
      %5431 = vmatpush.msra.mxu0 %v5385
      %5432 = vmatpush.msra.mxu0 %v5382
      %5433 = vmatmul.f32.gmra.mxu0 %v5395
      %v5434 = vpop.f32.mrf.mxu0
      %v5435 = vadd.f32 %v5415, %v5434
      %5436 = vdwg.mxu0
      %5437 = vmatpush.msra.mxu0 %v5380
      %5438 = vmatpush.msra.mxu0 %v5377
      %5439 = vmatpush.msra.mxu0 %v5374
      %5440 = vmatpush.msra.mxu0 %v5371
      %5441 = vmatpush.msra.mxu0 %v5368
      %5442 = vmatpush.msra.mxu0 %v5365
      %5443 = vmatpush.msra.mxu0 %v5362
      %5444 = vmatpush.msra.mxu0 %v5359
      %5445 = vmatpush.msra.mxu0 %v5356
      %5446 = vmatpush.msra.mxu0 %v5353
      %5447 = vmatpush.msra.mxu0 %v5350
      %5448 = vmatpush.msra.mxu0 %v5347
      %5449 = vmatpush.msra.mxu0 %v5344
      %5450 = vmatpush.msra.mxu0 %v5341
      %5451 = vmatpush.msra.mxu0 %v5338
      %5452 = vmatpush.msra.mxu0 %v5335
      %5453 = vmatmul.f32.gmra.mxu0 %v5332
      %v5454 = vpop.f32.mrf.mxu0
      %v5455 = vadd.f32 %v5392, %v5454
      %5456 = vdwg.mxu0
      %5457 = vmatpush.msra.mxu0 0.0
      %5458 = vmatpush.msra.mxu0 0.0
      %5459 = vmatpush.msra.mxu0 0.0
      %5460 = vmatpush.msra.mxu0 0.0
      %5461 = vmatpush.msra.mxu0 0.0
      %5462 = vmatpush.msra.mxu0 0.0
      %5463 = vmatpush.msra.mxu0 0.0
      %5464 = vmatpush.msra.mxu0 0.0
      %5465 = vmatpush.msra.mxu0 0.0
      %5466 = vmatpush.msra.mxu0 0.0
      %5467 = vmatpush.msra.mxu0 0.0
      %5468 = vmatpush.msra.mxu0 0.0
      %5469 = vmatpush.msra.mxu0 0.0
      %5470 = vmatpush.msra.mxu0 0.0
      %5471 = vmatpush.msra.mxu0 %v5386
      %5472 = vmatpush.msra.mxu0 %v5383
      %5473 = vmatmul.f32.gmra.mxu0 %v5395
      %v5474 = vpop.f32.mrf.mxu0
      %v5475 = vadd.f32 %v5455, %v5474
      %5476 = vdwg.mxu0
      %5477 = vmatpush.msra.mxu0 %v5381
      %5478 = vmatpush.msra.mxu0 %v5378
      %5479 = vmatpush.msra.mxu0 %v5375
      %5480 = vmatpush.msra.mxu0 %v5372
      %5481 = vmatpush.msra.mxu0 %v5369
      %5482 = vmatpush.msra.mxu0 %v5366
      %5483 = vmatpush.msra.mxu0 %v5363
      %5484 = vmatpush.msra.mxu0 %v5360
      %5485 = vmatpush.msra.mxu0 %v5357
      %5486 = vmatpush.msra.mxu0 %v5354
      %5487 = vmatpush.msra.mxu0 %v5351
      %5488 = vmatpush.msra.mxu0 %v5348
      %5489 = vmatpush.msra.mxu0 %v5345
      %5490 = vmatpush.msra.mxu0 %v5342
      %5491 = vmatpush.msra.mxu0 %v5339
      %5492 = vmatpush.msra.mxu0 %v5336
      %5493 = vmatmul.f32.gmra.mxu0 %v5332
      %v5494 = vpop.f32.mrf.mxu0
      %v5495 = vadd.f32 %v5392, %v5494
      %5496 = vdwg.mxu0
      %5497 = vmatpush.msra.mxu0 0.0
      %5498 = vmatpush.msra.mxu0 0.0
      %5499 = vmatpush.msra.mxu0 0.0
      %5500 = vmatpush.msra.mxu0 0.0
      %5501 = vmatpush.msra.mxu0 0.0
      %5502 = vmatpush.msra.mxu0 0.0
      %5503 = vmatpush.msra.mxu0 0.0
      %5504 = vmatpush.msra.mxu0 0.0
      %5505 = vmatpush.msra.mxu0 0.0
      %5506 = vmatpush.msra.mxu0 0.0
      %5507 = vmatpush.msra.mxu0 0.0
      %5508 = vmatpush.msra.mxu0 0.0
      %5509 = vmatpush.msra.mxu0 0.0
      %5510 = vmatpush.msra.mxu0 0.0
      %5511 = vmatpush.msra.mxu0 %v5387
      %5512 = vmatpush.msra.mxu0 %v5384
      %5513 = vmatmul.f32.gmra.mxu0 %v5395
      %v5514 = vpop.f32.mrf.mxu0
      %v5515 = vadd.f32 %v5495, %v5514
      %5516 = vdwg.mxu0
      %v5517 = vmax.f32 %v5435, 0.0
      %v5518 = vmax.f32 %v5475, 0.0
      %v5519 = vmax.f32 %v5515, 0.0
      %v5520 = vld [vmem:[%s3] sm:$0x7]
      %v5522 = vperm.slane %v5520, 0
      %v5523 = vperm.slane %v5520, 1
      %v5524 = vperm.slane %v5520, 2
      %v5528 = vmul.f32 %v5517, %v5522
      %v5529 = vmul.f32 %v5518, %v5523
      %v5530 = vmul.f32 %v5519, %v5524
      %5534 = vrot.lane.b32.xlu0 %v5528, 19
      %v5535 = vpop.permute.xlu0 %5534
      %5536 = vrot.lane.b32.xlu0 %v5529, 19
      %v5537 = vpop.permute.xlu0 %5536
      %5538 = vrot.lane.b32.xlu0 %v5530, 19
      %v5539 = vpop.permute.xlu0 %5538
      %v5540 = vsel %vm765, %v5535, %v5537
      %v5541 = vsel %vm765, %v5537, %v5539
      %5545 = vst.msk [vmem:[#allocation8] sm:$0xff] %vm1165, %v5535
      %5546 = vst [vmem:[#allocation8 + $0x8] sm:$0xff] %v5540
      %5547 = vst.msk [vmem:[#allocation8 + $0x10] sm:$0xff] %vm1168, %v5541
      %v5548 = vld [vmem:[#allocation8] sm:$0xff]
      %v5549 = vld [vmem:[#allocation8 + $0x8] sm:$0xff]
      %v5550 = vld [vmem:[#allocation8 + $0x10] sm:$0xff]
      %5551 = vst [vmem:[#allocation9] sm:$0xff] %v5548
      %5552 = vst [vmem:[#allocation9 + $0x8] sm:$0xff] %v5549
      %5553 = vst.msk [vmem:[#allocation9 + $0x10] sm:$0xff] %vm1175, %v5550
      %v5554 = vld [vmem:[#allocation8] sm:$0xff]
      %v5555 = vld [vmem:[#allocation8 + $0x8] sm:$0xff]
      %v5556 = vld [vmem:[#allocation8 + $0x10] sm:$0xff]
      %5560 = vrot.lane.b32.xlu0 %v5554, 127
      %v5561 = vpop.permute.xlu0 %5560
      %5562 = vrot.lane.b32.xlu0 %v5555, 127
      %v5563 = vpop.permute.xlu0 %5562
      %5564 = vrot.lane.b32.xlu0 %v5556, 127
      %v5565 = vpop.permute.xlu0 %5564
      %v5566 = vsel %vm829, %v5561, %v5563
      %v5567 = vsel %vm829, %v5563, %v5565
      %5571 = vst [vmem:[#allocation9 + $0x18] sm:$0xff] %v5566
      %5572 = vst [vmem:[#allocation9 + $0x20] sm:$0xff] %v5567
      %5573 = vst.msk [vmem:[#allocation9 + $0x28] sm:$0xff] %vm1175, %v5565
      %v5574 = vld [vmem:[#allocation8] sm:$0xff]
      %v5575 = vld [vmem:[#allocation8 + $0x8] sm:$0xff]
      %v5576 = vld [vmem:[#allocation8 + $0x10] sm:$0xff]
      %5580 = vrot.lane.b32.xlu0 %v5574, 126
      %v5581 = vpop.permute.xlu0 %5580
      %5582 = vrot.lane.b32.xlu0 %v5575, 126
      %v5583 = vpop.permute.xlu0 %5582
      %5584 = vrot.lane.b32.xlu0 %v5576, 126
      %v5585 = vpop.permute.xlu0 %5584
      %v5586 = vsel %vm858, %v5581, %v5583
      %v5587 = vsel %vm858, %v5583, %v5585
      %5591 = vst [vmem:[#allocation9 + $0x30] sm:$0xff] %v5586
      %5592 = vst [vmem:[#allocation9 + $0x38] sm:$0xff] %v5587
      %5593 = vst.msk [vmem:[#allocation9 + $0x40] sm:$0xff] %vm1175, %v5585
      %v5594 = vld [vmem:[#allocation8] sm:$0xff]
      %v5595 = vld [vmem:[#allocation8 + $0x8] sm:$0xff]
      %v5596 = vld [vmem:[#allocation8 + $0x10] sm:$0xff]
      %5600 = vrot.lane.b32.xlu0 %v5594, 110
      %v5601 = vpop.permute.xlu0 %5600
      %5602 = vrot.lane.b32.xlu0 %v5595, 110
      %v5603 = vpop.permute.xlu0 %5602
      %5604 = vrot.lane.b32.xlu0 %v5596, 110
      %v5605 = vpop.permute.xlu0 %5604
      %v5606 = vsel %vm891, %v5601, %v5603
      %v5607 = vsel %vm891, %v5603, %v5605
      %5611 = vst [vmem:[#allocation9 + $0x48] sm:$0xff] %v5606
      %5612 = vst [vmem:[#allocation9 + $0x50] sm:$0xff] %v5607
      %5613 = vst.msk [vmem:[#allocation9 + $0x58] sm:$0xff] %vm1175, %v5605
      %v5614 = vld [vmem:[#allocation8] sm:$0xff]
      %v5615 = vld [vmem:[#allocation8 + $0x8] sm:$0xff]
      %v5616 = vld [vmem:[#allocation8 + $0x10] sm:$0xff]
      %5620 = vrot.lane.b32.xlu0 %v5614, 109
      %v5621 = vpop.permute.xlu0 %5620
      %5622 = vrot.lane.b32.xlu0 %v5615, 109
      %v5623 = vpop.permute.xlu0 %5622
      %5624 = vrot.lane.b32.xlu0 %v5616, 109
      %v5625 = vpop.permute.xlu0 %5624
      %v5626 = vsel %vm918, %v5621, %v5623
      %v5627 = vsel %vm918, %v5623, %v5625
      %5631 = vst [vmem:[#allocation9 + $0x60] sm:$0xff] %v5626
      %5632 = vst [vmem:[#allocation9 + $0x68] sm:$0xff] %v5627
      %5633 = vst.msk [vmem:[#allocation9 + $0x70] sm:$0xff] %vm1175, %v5625
      %v5634 = vld [vmem:[#allocation8] sm:$0xff]
      %v5635 = vld [vmem:[#allocation8 + $0x8] sm:$0xff]
      %v5636 = vld [vmem:[#allocation8 + $0x10] sm:$0xff]
      %5640 = vrot.lane.b32.xlu0 %v5634, 108
      %v5641 = vpop.permute.xlu0 %5640
      %5642 = vrot.lane.b32.xlu0 %v5635, 108
      %v5643 = vpop.permute.xlu0 %5642
      %5644 = vrot.lane.b32.xlu0 %v5636, 108
      %v5645 = vpop.permute.xlu0 %5644
      %v5646 = vsel %vm947, %v5641, %v5643
      %v5647 = vsel %vm947, %v5643, %v5645
      %5651 = vst [vmem:[#allocation9 + $0x78] sm:$0xff] %v5646
      %5652 = vst [vmem:[#allocation9 + $0x80] sm:$0xff] %v5647
      %5653 = vst.msk [vmem:[#allocation9 + $0x88] sm:$0xff] %vm1175, %v5645
      %v5654 = vld [vmem:[#allocation8] sm:$0xff]
      %v5655 = vld [vmem:[#allocation8 + $0x8] sm:$0xff]
      %v5656 = vld [vmem:[#allocation8 + $0x10] sm:$0xff]
      %5660 = vrot.lane.b32.xlu0 %v5654, 92
      %v5661 = vpop.permute.xlu0 %5660
      %5662 = vrot.lane.b32.xlu0 %v5655, 92
      %v5663 = vpop.permute.xlu0 %5662
      %5664 = vrot.lane.b32.xlu0 %v5656, 92
      %v5665 = vpop.permute.xlu0 %5664
      %v5666 = vsel %vm980, %v5661, %v5663
      %v5667 = vsel %vm980, %v5663, %v5665
      %5671 = vst [vmem:[#allocation9 + $0x90] sm:$0xff] %v5666
      %5672 = vst [vmem:[#allocation9 + $0x98] sm:$0xff] %v5667
      %5673 = vst.msk [vmem:[#allocation9 + $0xa0] sm:$0xff] %vm1175, %v5665
      %v5674 = vld [vmem:[#allocation8] sm:$0xff]
      %v5675 = vld [vmem:[#allocation8 + $0x8] sm:$0xff]
      %v5676 = vld [vmem:[#allocation8 + $0x10] sm:$0xff]
      %5680 = vrot.lane.b32.xlu0 %v5674, 91
      %v5681 = vpop.permute.xlu0 %5680
      %5682 = vrot.lane.b32.xlu0 %v5675, 91
      %v5683 = vpop.permute.xlu0 %5682
      %5684 = vrot.lane.b32.xlu0 %v5676, 91
      %v5685 = vpop.permute.xlu0 %5684
      %v5686 = vsel %vm1009, %v5681, %v5683
      %v5687 = vsel %vm1009, %v5683, %v5685
      %5691 = vst [vmem:[#allocation9 + $0xa8] sm:$0xff] %v5686
      %5692 = vst [vmem:[#allocation9 + $0xb0] sm:$0xff] %v5687
      %5693 = vst.msk [vmem:[#allocation9 + $0xb8] sm:$0xff] %vm1175, %v5685
      %v5694 = vld [vmem:[#allocation8] sm:$0xff]
      %v5695 = vld [vmem:[#allocation8 + $0x8] sm:$0xff]
      %v5696 = vld [vmem:[#allocation8 + $0x10] sm:$0xff]
      %5700 = vrot.lane.b32.xlu0 %v5694, 90
      %v5701 = vpop.permute.xlu0 %5700
      %5702 = vrot.lane.b32.xlu0 %v5695, 90
      %v5703 = vpop.permute.xlu0 %5702
      %5704 = vrot.lane.b32.xlu0 %v5696, 90
      %v5705 = vpop.permute.xlu0 %5704
      %v5706 = vsel %vm1035, %v5701, %v5703
      %v5707 = vsel %vm1035, %v5703, %v5705
      %5711 = vst [vmem:[#allocation9 + $0xc0] sm:$0xff] %v5706
      %5712 = vst [vmem:[#allocation9 + $0xc8] sm:$0xff] %v5707
      %5713 = vst.msk [vmem:[#allocation9 + $0xd0] sm:$0xff] %vm1175, %v5705
      %v5714 = vld [vmem:[%s23] sm:$0x1]
      %v5715 = vld [vmem:[#allocation9] sm:$0xff]
      %v5716 = vld [vmem:[#allocation9 + $0x8] sm:$0xff]
      %v5717 = vld [vmem:[#allocation9 + $0x10] sm:$0xff]
      %v5718 = vld [vmem:[#allocation9 + $0x18] sm:$0xff]
      %v5719 = vld [vmem:[#allocation9 + $0x20] sm:$0xff]
      %v5720 = vld [vmem:[#allocation9 + $0x28] sm:$0xff]
      %v5721 = vld [vmem:[#allocation9 + $0x30] sm:$0xff]
      %v5722 = vld [vmem:[#allocation9 + $0x38] sm:$0xff]
      %v5723 = vld [vmem:[#allocation9 + $0x40] sm:$0xff]
      %v5724 = vld [vmem:[#allocation9 + $0x48] sm:$0xff]
      %v5725 = vld [vmem:[#allocation9 + $0x50] sm:$0xff]
      %v5726 = vld [vmem:[#allocation9 + $0x58] sm:$0xff]
      %v5727 = vld [vmem:[#allocation9 + $0x60] sm:$0xff]
      %v5728 = vld [vmem:[#allocation9 + $0x68] sm:$0xff]
      %v5729 = vld [vmem:[#allocation9 + $0x70] sm:$0xff]
      %v5730 = vld [vmem:[#allocation9 + $0x78] sm:$0xff]
      %v5731 = vld [vmem:[#allocation9 + $0x80] sm:$0xff]
      %v5732 = vld [vmem:[#allocation9 + $0x88] sm:$0xff]
      %v5733 = vld [vmem:[#allocation9 + $0x90] sm:$0xff]
      %v5734 = vld [vmem:[#allocation9 + $0x98] sm:$0xff]
      %v5735 = vld [vmem:[#allocation9 + $0xa0] sm:$0xff]
      %v5736 = vld [vmem:[#allocation9 + $0xa8] sm:$0xff]
      %v5737 = vld [vmem:[#allocation9 + $0xb0] sm:$0xff]
      %v5738 = vld [vmem:[#allocation9 + $0xb8] sm:$0xff]
      %v5739 = vld [vmem:[#allocation9 + $0xc0] sm:$0xff]
      %v5740 = vld [vmem:[#allocation9 + $0xc8] sm:$0xff]
      %v5741 = vld [vmem:[#allocation9 + $0xd0] sm:$0xff]
      %v5742 = vld [vmem:[#allocation10] sm:$0x1]
      %5744 = vset.pattern.permute.xlu0 0
      %5745 = vperm.xlu0 %5744, %v5742
      %v5746 = vpop.permute.xlu0 %5745
      %v5748 = vperm.slane %v5746, 0
      %v5750 = vsel %vm1371, %v5714, 0
      %5752 = vmatpush.msra.mxu0 0.0
      %5753 = vmatpush.msra.mxu0 0.0
      %5754 = vmatpush.msra.mxu0 0.0
      %5755 = vmatpush.msra.mxu0 0.0
      %5756 = vmatpush.msra.mxu0 0.0
      %5757 = vmatpush.msra.mxu0 0.0
      %5758 = vmatpush.msra.mxu0 0.0
      %5759 = vmatpush.msra.mxu0 %v5739
      %5760 = vmatpush.msra.mxu0 %v5736
      %5761 = vmatpush.msra.mxu0 %v5733
      %5762 = vmatpush.msra.mxu0 %v5730
      %5763 = vmatpush.msra.mxu0 %v5727
      %5764 = vmatpush.msra.mxu0 %v5724
      %5765 = vmatpush.msra.mxu0 %v5721
      %5766 = vmatpush.msra.mxu0 %v5718
      %5767 = vmatpush.msra.mxu0 %v5715
      %5768 = vmatmul.f32.gmra.mxu0 %v5750
      %v5769 = vpop.f32.mrf.mxu0
      %v5770 = vadd.f32 %v5748, %v5769
      %5771 = vdwg.mxu0
      %5772 = vmatpush.msra.mxu0 0.0
      %5773 = vmatpush.msra.mxu0 0.0
      %5774 = vmatpush.msra.mxu0 0.0
      %5775 = vmatpush.msra.mxu0 0.0
      %5776 = vmatpush.msra.mxu0 0.0
      %5777 = vmatpush.msra.mxu0 0.0
      %5778 = vmatpush.msra.mxu0 0.0
      %5779 = vmatpush.msra.mxu0 %v5740
      %5780 = vmatpush.msra.mxu0 %v5737
      %5781 = vmatpush.msra.mxu0 %v5734
      %5782 = vmatpush.msra.mxu0 %v5731
      %5783 = vmatpush.msra.mxu0 %v5728
      %5784 = vmatpush.msra.mxu0 %v5725
      %5785 = vmatpush.msra.mxu0 %v5722
      %5786 = vmatpush.msra.mxu0 %v5719
      %5787 = vmatpush.msra.mxu0 %v5716
      %5788 = vmatmul.f32.gmra.mxu0 %v5750
      %v5789 = vpop.f32.mrf.mxu0
      %v5790 = vadd.f32 %v5748, %v5789
      %5791 = vdwg.mxu0
      %5792 = vmatpush.msra.mxu0 0.0
      %5793 = vmatpush.msra.mxu0 0.0
      %5794 = vmatpush.msra.mxu0 0.0
      %5795 = vmatpush.msra.mxu0 0.0
      %5796 = vmatpush.msra.mxu0 0.0
      %5797 = vmatpush.msra.mxu0 0.0
      %5798 = vmatpush.msra.mxu0 0.0
      %5799 = vmatpush.msra.mxu0 %v5741
      %5800 = vmatpush.msra.mxu0 %v5738
      %5801 = vmatpush.msra.mxu0 %v5735
      %5802 = vmatpush.msra.mxu0 %v5732
      %5803 = vmatpush.msra.mxu0 %v5729
      %5804 = vmatpush.msra.mxu0 %v5726
      %5805 = vmatpush.msra.mxu0 %v5723
      %5806 = vmatpush.msra.mxu0 %v5720
      %5807 = vmatpush.msra.mxu0 %v5717
      %5808 = vmatmul.f32.gmra.mxu0 %v5750
      %v5809 = vpop.f32.mrf.mxu0
      %v5810 = vadd.f32 %v5748, %v5809
      %5811 = vdwg.mxu0
      %v5812 = vlaneseq
      %vm5813 = vcmp.ge.s32.totalorder %v5812, 0
      %vm5814 = vcmp.lt.s32.totalorder %v5812, 16
      %vm5815 = vmand %vm5813, %vm5814
      %5816 = vst.msk [vmem:[%s764] sm:$0x1] %vm5815, %v5770
      %5818 = vrot.lane.b32.xlu0 %v5770, 126
      %v5819 = vpop.permute.xlu0 %5818
      %vm5821 = vcmp.ge.s32.totalorder %v5812, 16
      %vm5822 = vcmp.lt.s32.totalorder %v5812, 32
      %vm5823 = vmand %vm5821, %vm5822
      %5824 = vst.msk [vmem:[%s764] sm:$0x1] %vm5823, %v5819
      %5825 = vrot.lane.b32.xlu0 %v5770, 124
      %v5826 = vpop.permute.xlu0 %5825
      %vm5828 = vcmp.ge.s32.totalorder %v5812, 32
      %vm5829 = vcmp.lt.s32.totalorder %v5812, 48
      %vm5830 = vmand %vm5828, %vm5829
      %5831 = vst.msk [vmem:[%s764] sm:$0x1] %vm5830, %v5826
      %5832 = vrot.lane.b32.xlu0 %v5770, 122
      %v5833 = vpop.permute.xlu0 %5832
      %vm5835 = vcmp.ge.s32.totalorder %v5812, 48
      %vm5836 = vcmp.lt.s32.totalorder %v5812, 64
      %vm5837 = vmand %vm5835, %vm5836
      %5838 = vst.msk [vmem:[%s764] sm:$0x1] %vm5837, %v5833
      %5839 = vrot.lane.b32.xlu0 %v5770, 120
      %v5840 = vpop.permute.xlu0 %5839
      %vm5842 = vcmp.ge.s32.totalorder %v5812, 64
      %vm5843 = vcmp.lt.s32.totalorder %v5812, 80
      %vm5844 = vmand %vm5842, %vm5843
      %5845 = vst.msk [vmem:[%s764] sm:$0x1] %vm5844, %v5840
      %5846 = vrot.lane.b32.xlu0 %v5770, 118
      %v5847 = vpop.permute.xlu0 %5846
      %vm5849 = vcmp.ge.s32.totalorder %v5812, 80
      %vm5850 = vcmp.lt.s32.totalorder %v5812, 96
      %vm5851 = vmand %vm5849, %vm5850
      %5852 = vst.msk [vmem:[%s764] sm:$0x1] %vm5851, %v5847
      %5853 = vrot.lane.b32.xlu0 %v5770, 116
      %v5854 = vpop.permute.xlu0 %5853
      %vm5856 = vcmp.ge.s32.totalorder %v5812, 96
      %vm5857 = vcmp.lt.s32.totalorder %v5812, 112
      %vm5858 = vmand %vm5856, %vm5857
      %5859 = vst.msk [vmem:[%s764] sm:$0x1] %vm5858, %v5854
      %v5861 = vrot.slane %v5790, 7
      %v5862 = vsel %vm1489, %v5770, %v5861
      %5863 = vrot.lane.b32.xlu0 %v5862, 114
      %v5864 = vpop.permute.xlu0 %5863
      %v5865 = vrot.slane %v5864, 1
      %vm5866 = vcmask 932864
      %v5867 = vsel %vm5866, %v5864, %v5865
      %vm5869 = vcmp.ge.s32.totalorder %v5812, 112
      %vm5870 = vcmp.lt.s32.totalorder %v5812, 128
      %vm5871 = vmand %vm5869, %vm5870
      %5872 = vst.msk [vmem:[%s764] sm:$0x1] %vm5871, %v5867
      %5873 = vrot.lane.b32.xlu0 %v5790, 112
      %v5874 = vpop.permute.xlu0 %5873
      %5876 = vst.msk [vmem:[%s764 + $0x1] sm:$0x1] %vm5815, %v5874
      %5877 = vrot.lane.b32.xlu0 %v5790, 110
      %v5878 = vpop.permute.xlu0 %5877
      %5880 = vst.msk [vmem:[%s764 + $0x1] sm:$0x1] %vm5823, %v5878
      %5881 = vrot.lane.b32.xlu0 %v5790, 108
      %v5882 = vpop.permute.xlu0 %5881
      %5884 = vst.msk [vmem:[%s764 + $0x1] sm:$0x1] %vm5830, %v5882
      %5885 = vrot.lane.b32.xlu0 %v5790, 106
      %v5886 = vpop.permute.xlu0 %5885
      %5888 = vst.msk [vmem:[%s764 + $0x1] sm:$0x1] %vm5837, %v5886
      %5889 = vrot.lane.b32.xlu0 %v5790, 104
      %v5890 = vpop.permute.xlu0 %5889
      %5892 = vst.msk [vmem:[%s764 + $0x1] sm:$0x1] %vm5844, %v5890
      %5893 = vrot.lane.b32.xlu0 %v5790, 102
      %v5894 = vpop.permute.xlu0 %5893
      %5896 = vst.msk [vmem:[%s764 + $0x1] sm:$0x1] %vm5851, %v5894
      %v5898 = vrot.slane %v5810, 7
      %v5899 = vsel %vm1489, %v5790, %v5898
      %5900 = vrot.lane.b32.xlu0 %v5899, 100
      %v5901 = vpop.permute.xlu0 %5900
      %v5902 = vrot.slane %v5901, 1
      %vm5903 = vcmask 818176
      %v5904 = vsel %vm5903, %v5901, %v5902
      %5906 = vst.msk [vmem:[%s764 + $0x1] sm:$0x1] %vm5858, %v5904
      %5907 = vrot.lane.b32.xlu0 %v5810, 98
      %v5908 = vpop.permute.xlu0 %5907
      %5910 = vst.msk [vmem:[%s764 + $0x1] sm:$0x1] %vm5871, %v5908
      %p5911 = scmp.lt.s32.totalorder %s38, 1
      %s5912 = scalar_select %p5911, %s38, 1
      %s5913 = smul.addr %s5912, 2
      %s5914 = scalar_lea.vmem %s25, %s5913
      // Predicated region
      $region121: #{forward.1} parent=119 // pred_check
        %p5915 = pneg %p586
      $region122: #{forward.1} parent=119 // pred_check_branch
        %5917 = sbr.rel (%p5915) target = $region124
      $region123: #{forward.1} parent=119 // pred_region
        _
      $region124: #{forward.1} parent=119 // pred_fallthru
        _
    $region120: #{forward.1} parent=5 // pred_fallthru
      _
    %p5918 = scmp.le.s32.totalorder 2, %s33
    // Predicated region
    $region125: #{forward.1} parent=5 // pred_check
      %p5919 = pneg %p5918
    $region126: #{forward.1} parent=5 // pred_check_branch
      %5921 = sbr.rel (%p5919) target = $region128
    $region127: #{forward.1} parent=5 // pred_region
      %s5922 = ssub.s32 %s33, 2
      // Predicated region
      $region129: #{forward.1} parent=127 // pred_check
        %p5923 = pneg %p592
      $region130: #{forward.1} parent=127 // pred_check_branch
        %5925 = sbr.rel (%p5923) target = $region132
      $region131: #{forward.1} parent=127 // pred_region
        %p5926 = scmp.lt.s32.totalorder %s39, 1
        %s5927 = scalar_select %p5926, %s39, 1
        %s5928 = smul.addr %s5927, 2
        %s5929 = scalar_lea.vmem %s25, %s5928
      $region132: #{forward.1} parent=127 // pred_fallthru
        _
    $region128: #{forward.1} parent=5 // pred_fallthru
      _
  $region6: #{forward.1} parent=0 // loop_footer
    %s37 = sadd.s32 1, %s33
  $region7: #{forward.1} parent=0 // loop_footer_branch
    %32 = sbr.rel target = $region3
  $region8: #{forward.1} parent=0 // loop_exit
    _

</llo_original>
